<compile_context>
chip_gen: v5e
topology: v5e:2x2
jax: 0.10.0
libtpu: 0.0.40
codegen_flags: <defaults>
</compile_context>

<pallas_src>
import jax
import jax.numpy as jnp
from jax.experimental import pallas as pl
from jax.experimental.pallas import tpu as pltpu

C_OUT, KH, KW = 32, 3, 3
H_IN, W_IN = 28, 28
H_OUT, W_OUT = H_IN - KH + 1, W_IN - KW + 1        # 26, 26
P_OUT = H_OUT * W_OUT                              # 676 spatial positions
FLAT = C_OUT * P_OUT                               # 21632
HID, NCLS = 128, 10
NTAP = KH * KW                                     # 9

NSPLIT = 2                                         # parallel grid (2 TensorCores on v7x)
CG = C_OUT // NSPLIT                               # 16 conv channels per program


# ---------------- fused conv + ReLU + fc1 + fc2 kernel ----------------
def fused_mnist_kernel(wc_ref, bc_ref, win_ref, w1_ref, b1_ref, w2_ref, b2_ref,
                       o_ref):
    # wc_ref : SMEM (32, 9)  f32       conv weights, tap t = di*3 + dj
    # bc_ref : SMEM (32,)    f32       conv bias
    # win_ref: VMEM (9, N, 676) f32    shifted input windows (resident across programs)
    # w1_ref : VMEM (CG, 676, 128) bf16   this program's half of fc1 weights
    # b1_ref : VMEM (1, 128) f32
    # w2_ref : VMEM (128, 10) f32
    # b2_ref : VMEM (1, 10)  f32
    # o_ref  : VMEM (1, N, 10) f32     partial logits for this channel half
    p = pl.program_id(0)
    c0 = p * CG
    n = win_ref.shape[1]

    acc = jnp.zeros((n, HID), jnp.float32)           # fc1 partial accumulator (1 vreg)
    for cc in range(CG):                             # static unroll: 16 channels
        c = c0 + cc
        # conv for output channel c: 9 scalar * window multiply-adds on the VPU
        a = wc_ref[c, 0] * win_ref[0]
        for t in range(1, NTAP):
            a = a + wc_ref[c, t] * win_ref[t]
        a = jnp.maximum(a + bc_ref[c], 0.0)          # bias + ReLU, (N, 676) f32
        # fc1 contribution of this channel: bf16 MXU matmul, f32 accumulate
        acc = acc + jnp.dot(a.astype(jnp.bfloat16), w1_ref[cc],
                            preferred_element_type=jnp.float32)

    # (h0 + h1 + b1) @ W2 + b2 == h0 @ W2 + (h1 + b1) @ W2 + b2, so fold both biases
    # into program 0 only; the wrapper just sums the two partial logit blocks.
    scale = (p == 0).astype(jnp.float32)
    h = acc + scale * b1_ref[...]
    out = (jnp.dot(h, w2_ref[...], preferred_element_type=jnp.float32)
           + scale * b2_ref[...])
    o_ref[0] = out


def _fused_call(n):
    grid_spec = pltpu.PrefetchScalarGridSpec(
        num_scalar_prefetch=0,
        grid=(NSPLIT,),
        in_specs=[
            pl.BlockSpec(memory_space=pltpu.MemorySpace.SMEM),      # conv_w (32, 9)
            pl.BlockSpec(memory_space=pltpu.MemorySpace.SMEM),      # conv_b (32,)
            pl.BlockSpec((NTAP, n, P_OUT), lambda p: (0, 0, 0)),    # windows (resident)
            pl.BlockSpec((CG, P_OUT, HID), lambda p: (p, 0, 0)),    # w1 half (bf16)
            pl.BlockSpec((1, HID), lambda p: (0, 0)),               # b1
            pl.BlockSpec((HID, NCLS), lambda p: (0, 0)),            # w2
            pl.BlockSpec((1, NCLS), lambda p: (0, 0)),              # b2
        ],
        out_specs=pl.BlockSpec((1, n, NCLS), lambda p: (p, 0, 0)),
    )
    return pl.pallas_call(
        fused_mnist_kernel,
        out_shape=jax.ShapeDtypeStruct((NSPLIT, n, NCLS), jnp.float32),
        grid_spec=grid_spec,
        compiler_params=pltpu.CompilerParams(
            dimension_semantics=("parallel",)),
    )


# ---------------- full forward ----------------
def mnist_forward(x_nchw, params):
    # x_nchw: (N, 1, 28, 28) float32
    n = x_nchw.shape[0]
    xs = x_nchw[:, 0]                                    # (N, 28, 28), C_in == 1
    # im2col windows: pure slicing / layout plumbing (no FLOPs), presents lane-dense
    # (N, 676) slabs to the kernel.  ~48 KiB at N=2.
    wins = jnp.stack(
        [xs[:, di:di + H_OUT, dj:dj + W_OUT].reshape(n, P_OUT)
         for di in range(KH) for dj in range(KW)], axis=0)          # (9, N, 676)
    partials = _fused_call(n)(
        params["conv_w"], params["conv_b"], wins,
        params["w1"], params["b1"], params["w2"], params["b2"])     # (NSPLIT, N, 10)
    return partials.sum(axis=0)                                     # (N, 10)


# ---------------- parameters (synthetic init; layouts documented vs. torch) ----------------
def init_params(key):
    ks = jax.random.split(key, 6)
    return {
        # torch conv1.weight (32,1,3,3) -> (32, 9) with tap index t = di*3 + dj
        "conv_w": 0.1 * jax.random.normal(ks[0], (C_OUT, NTAP), jnp.float32),
        # torch conv1.bias (32,)
        "conv_b": 0.1 * jax.random.normal(ks[1], (C_OUT,), jnp.float32),
        # torch fc1.weight (128, 21632): w1[c, s, k] = fc1.weight[k, c*676 + s]
        # (one-time transpose + reshape at parameter-conversion time), stored bf16.
        "w1": (0.01 * jax.random.normal(ks[2], (C_OUT, P_OUT, HID), jnp.float32)
               ).astype(jnp.bfloat16),
        # torch fc1.bias (128,) -> (1, 128)
        "b1": 0.01 * jax.random.normal(ks[3], (1, HID), jnp.float32),
        # torch fc2.weight (10, 128) -> transposed (128, 10)
        "w2": 0.1 * jax.random.normal(ks[4], (HID, NCLS), jnp.float32),
        # torch fc2.bias (10,) -> (1, 10)
        "b2": 0.01 * jax.random.normal(ks[5], (1, NCLS), jnp.float32),
    }


# ---------------- pure-JAX reference (same parameter layout) ----------------
def mnist_reference(x_nchw, params):
    n = x_nchw.shape[0]
    xs = x_nchw[:, 0]
    wc = params["conv_w"].reshape(C_OUT, KH, KW)
    acc = jnp.zeros((n, C_OUT, H_OUT, W_OUT), jnp.float32)
    for di in range(KH):
        for dj in range(KW):
            acc = acc + (wc[:, di, dj][None, :, None, None]
                         * xs[:, None, di:di + H_OUT, dj:dj + W_OUT])
    act = jnp.maximum(acc + params["conv_b"][None, :, None, None], 0.0)
    flat = act.reshape(n, FLAT)                                  # torch Flatten (C,H,W) order
    w1 = params["w1"].astype(jnp.float32).reshape(FLAT, HID)
    h = flat @ w1 + params["b1"]
    return h @ params["w2"] + params["b2"]


if __name__ == "__main__":
    key = jax.random.PRNGKey(0)
    pkey, xkey = jax.random.split(key)
    params = init_params(pkey)
    # batch=2; spatial 28x28 and C_in=1 are fixed by fc1's 32*26*26 input dimension.
    x = jax.random.normal(xkey, (2, 1, 28, 28), jnp.float32)
    out = jax.jit(mnist_forward)(x, params)
    jax.block_until_ready(out)
    assert out.shape == (2, NCLS) and out.dtype == jnp.float32
    ref = mnist_reference(x, params)
    err = float(jnp.max(jnp.abs(out - ref)))
    assert jnp.allclose(out, ref, atol=2e-2, rtol=2e-2), f"max abs err {err}"
    print("KERNEL_OK")
</pallas_src>

<mosaic_0001>
module attributes {stable_mosaic.version = 11 : i64} {
  func.func @fused_mnist_kernel(%arg0: i32, %arg1: memref<32x9xf32, #tpu.memory_space<smem>>, %arg2: memref<32xf32, #tpu.memory_space<smem>>, %arg3: memref<9x2x676xf32, #tpu.memory_space<vmem>>, %arg4: memref<16x676x128xbf16, #tpu.memory_space<vmem>>, %arg5: memref<1x128xf32, #tpu.memory_space<vmem>>, %arg6: memref<128x10xf32, #tpu.memory_space<vmem>>, %arg7: memref<1x10xf32, #tpu.memory_space<vmem>>, %arg8: memref<1x2x10xf32, #tpu.memory_space<vmem>>) attributes {dimension_semantics = [#tpu.dimension_semantics<parallel>], iteration_bounds = array<i64: 2>, scalar_prefetch = 0 : i64, scratch_operands = 0 : i64, tpu.core_type = #tpu.core_type<tc>, window_params = [{transform_indices = @transform_0, window_bounds = array<i64: 32, 9>}, {transform_indices = @transform_1, window_bounds = array<i64: 32>}, {pipeline_mode = #tpu.pipeline_mode<synchronous>, transform_indices = @transform_2, window_bounds = array<i64: 9, 2, 676>}, {transform_indices = @transform_3, window_bounds = array<i64: 16, 676, 128>}, {pipeline_mode = #tpu.pipeline_mode<synchronous>, transform_indices = @transform_4, window_bounds = array<i64: 1, 128>}, {pipeline_mode = #tpu.pipeline_mode<synchronous>, transform_indices = @transform_5, window_bounds = array<i64: 128, 10>}, {pipeline_mode = #tpu.pipeline_mode<synchronous>, transform_indices = @transform_6, window_bounds = array<i64: 1, 10>}, {transform_indices = @transform_7, window_bounds = array<i64: 1, 2, 10>}]} {
    %c16_i32 = arith.constant 16 : i32
    %0 = arith.muli %arg0, %c16_i32 : i32
    %cst = arith.constant 0.000000e+00 : f32
    %1 = vector.broadcast %cst : f32 to vector<2x128xf32>
    %c0_i32 = arith.constant 0 : i32
    %2 = arith.addi %0, %c0_i32 : i32
    %3 = arith.index_cast %2 : i32 to index
    %c0 = arith.constant 0 : index
    %4 = memref.load %arg1[%3, %c0] : memref<32x9xf32, #tpu.memory_space<smem>>
    %c0_0 = arith.constant 0 : index
    %c0_1 = arith.constant 0 : index
    %c0_2 = arith.constant 0 : index
    %5 = vector.load %arg3[%c0_0, %c0_1, %c0_2] : memref<9x2x676xf32, #tpu.memory_space<vmem>>, vector<1x2x676xf32>
    %6 = vector.shape_cast %5 : vector<1x2x676xf32> to vector<2x676xf32>
    %7 = vector.broadcast %4 : f32 to vector<2x676xf32>
    %8 = arith.mulf %7, %6 : vector<2x676xf32>
    %9 = arith.index_cast %2 : i32 to index
    %c1 = arith.constant 1 : index
    %10 = memref.load %arg1[%9, %c1] : memref<32x9xf32, #tpu.memory_space<smem>>
    %c1_3 = arith.constant 1 : index
    %c0_4 = arith.constant 0 : index
    %c0_5 = arith.constant 0 : index
    %11 = vector.load %arg3[%c1_3, %c0_4, %c0_5] : memref<9x2x676xf32, #tpu.memory_space<vmem>>, vector<1x2x676xf32>
    %12 = vector.shape_cast %11 : vector<1x2x676xf32> to vector<2x676xf32>
    %13 = vector.broadcast %10 : f32 to vector<2x676xf32>
    %14 = arith.mulf %13, %12 : vector<2x676xf32>
    %15 = arith.addf %8, %14 : vector<2x676xf32>
    %16 = arith.index_cast %2 : i32 to index
    %c2 = arith.constant 2 : index
    %17 = memref.load %arg1[%16, %c2] : memref<32x9xf32, #tpu.memory_space<smem>>
    %c2_6 = arith.constant 2 : index
    %c0_7 = arith.constant 0 : index
    %c0_8 = arith.constant 0 : index
    %18 = vector.load %arg3[%c2_6, %c0_7, %c0_8] : memref<9x2x676xf32, #tpu.memory_space<vmem>>, vector<1x2x676xf32>
    %19 = vector.shape_cast %18 : vector<1x2x676xf32> to vector<2x676xf32>
    %20 = vector.broadcast %17 : f32 to vector<2x676xf32>
    %21 = arith.mulf %20, %19 : vector<2x676xf32>
    %22 = arith.addf %15, %21 : vector<2x676xf32>
    %23 = arith.index_cast %2 : i32 to index
    %c3 = arith.constant 3 : index
    %24 = memref.load %arg1[%23, %c3] : memref<32x9xf32, #tpu.memory_space<smem>>
    %c3_9 = arith.constant 3 : index
    %c0_10 = arith.constant 0 : index
    %c0_11 = arith.constant 0 : index
    %25 = vector.load %arg3[%c3_9, %c0_10, %c0_11] : memref<9x2x676xf32, #tpu.memory_space<vmem>>, vector<1x2x676xf32>
    %26 = vector.shape_cast %25 : vector<1x2x676xf32> to vector<2x676xf32>
    %27 = vector.broadcast %24 : f32 to vector<2x676xf32>
    %28 = arith.mulf %27, %26 : vector<2x676xf32>
    %29 = arith.addf %22, %28 : vector<2x676xf32>
    %30 = arith.index_cast %2 : i32 to index
    %c4 = arith.constant 4 : index
    %31 = memref.load %arg1[%30, %c4] : memref<32x9xf32, #tpu.memory_space<smem>>
    %c4_12 = arith.constant 4 : index
    %c0_13 = arith.constant 0 : index
    %c0_14 = arith.constant 0 : index
    %32 = vector.load %arg3[%c4_12, %c0_13, %c0_14] : memref<9x2x676xf32, #tpu.memory_space<vmem>>, vector<1x2x676xf32>
    %33 = vector.shape_cast %32 : vector<1x2x676xf32> to vector<2x676xf32>
    %34 = vector.broadcast %31 : f32 to vector<2x676xf32>
    %35 = arith.mulf %34, %33 : vector<2x676xf32>
    %36 = arith.addf %29, %35 : vector<2x676xf32>
    %37 = arith.index_cast %2 : i32 to index
    %c5 = arith.constant 5 : index
    %38 = memref.load %arg1[%37, %c5] : memref<32x9xf32, #tpu.memory_space<smem>>
    %c5_15 = arith.constant 5 : index
    %c0_16 = arith.constant 0 : index
    %c0_17 = arith.constant 0 : index
    %39 = vector.load %arg3[%c5_15, %c0_16, %c0_17] : memref<9x2x676xf32, #tpu.memory_space<vmem>>, vector<1x2x676xf32>
    %40 = vector.shape_cast %39 : vector<1x2x676xf32> to vector<2x676xf32>
    %41 = vector.broadcast %38 : f32 to vector<2x676xf32>
    %42 = arith.mulf %41, %40 : vector<2x676xf32>
    %43 = arith.addf %36, %42 : vector<2x676xf32>
    %44 = arith.index_cast %2 : i32 to index
    %c6 = arith.constant 6 : index
    %45 = memref.load %arg1[%44, %c6] : memref<32x9xf32, #tpu.memory_space<smem>>
    %c6_18 = arith.constant 6 : index
    %c0_19 = arith.constant 0 : index
    %c0_20 = arith.constant 0 : index
    %46 = vector.load %arg3[%c6_18, %c0_19, %c0_20] : memref<9x2x676xf32, #tpu.memory_space<vmem>>, vector<1x2x676xf32>
    %47 = vector.shape_cast %46 : vector<1x2x676xf32> to vector<2x676xf32>
    %48 = vector.broadcast %45 : f32 to vector<2x676xf32>
    %49 = arith.mulf %48, %47 : vector<2x676xf32>
    %50 = arith.addf %43, %49 : vector<2x676xf32>
    %51 = arith.index_cast %2 : i32 to index
    %c7 = arith.constant 7 : index
    %52 = memref.load %arg1[%51, %c7] : memref<32x9xf32, #tpu.memory_space<smem>>
    %c7_21 = arith.constant 7 : index
    %c0_22 = arith.constant 0 : index
    %c0_23 = arith.constant 0 : index
    %53 = vector.load %arg3[%c7_21, %c0_22, %c0_23] : memref<9x2x676xf32, #tpu.memory_space<vmem>>, vector<1x2x676xf32>
    %54 = vector.shape_cast %53 : vector<1x2x676xf32> to vector<2x676xf32>
    %55 = vector.broadcast %52 : f32 to vector<2x676xf32>
    %56 = arith.mulf %55, %54 : vector<2x676xf32>
    %57 = arith.addf %50, %56 : vector<2x676xf32>
    %58 = arith.index_cast %2 : i32 to index
    %c8 = arith.constant 8 : index
    %59 = memref.load %arg1[%58, %c8] : memref<32x9xf32, #tpu.memory_space<smem>>
    %c8_24 = arith.constant 8 : index
    %c0_25 = arith.constant 0 : index
    %c0_26 = arith.constant 0 : index
    %60 = vector.load %arg3[%c8_24, %c0_25, %c0_26] : memref<9x2x676xf32, #tpu.memory_space<vmem>>, vector<1x2x676xf32>
    %61 = vector.shape_cast %60 : vector<1x2x676xf32> to vector<2x676xf32>
    %62 = vector.broadcast %59 : f32 to vector<2x676xf32>
    %63 = arith.mulf %62, %61 : vector<2x676xf32>
    %64 = arith.addf %57, %63 : vector<2x676xf32>
    %65 = arith.index_cast %2 : i32 to index
    %66 = memref.load %arg2[%65] : memref<32xf32, #tpu.memory_space<smem>>
    %67 = vector.broadcast %66 : f32 to vector<2x676xf32>
    %68 = arith.addf %64, %67 : vector<2x676xf32>
    %cst_27 = arith.constant 0.000000e+00 : f32
    %69 = vector.broadcast %cst_27 : f32 to vector<2x676xf32>
    %70 = arith.maximumf %68, %69 : vector<2x676xf32>
    %71 = arith.truncf %70 : vector<2x676xf32> to vector<2x676xbf16>
    %c0_28 = arith.constant 0 : index
    %c0_29 = arith.constant 0 : index
    %c0_30 = arith.constant 0 : index
    %72 = vector.load %arg4[%c0_28, %c0_29, %c0_30] : memref<16x676x128xbf16, #tpu.memory_space<vmem>>, vector<1x676x128xbf16>
    %73 = vector.shape_cast %72 : vector<1x676x128xbf16> to vector<676x128xbf16>
    %cst_31 = arith.constant dense<0.000000e+00> : vector<2x128xf32>
    %74 = tpu.matmul %71, %73, %cst_31 {dimension_numbers = #tpu.dot_dimension_numbers<[1], [0], [0], [1], [0, 0, 1, 1], [], []>} : vector<2x676xbf16>, vector<676x128xbf16>, vector<2x128xf32> -> vector<2x128xf32>
    %75 = arith.addf %1, %74 : vector<2x128xf32>
    %c1_i32 = arith.constant 1 : i32
    %76 = arith.addi %0, %c1_i32 : i32
    %77 = arith.index_cast %76 : i32 to index
    %c0_32 = arith.constant 0 : index
    %78 = memref.load %arg1[%77, %c0_32] : memref<32x9xf32, #tpu.memory_space<smem>>
    %c0_33 = arith.constant 0 : index
    %c0_34 = arith.constant 0 : index
    %c0_35 = arith.constant 0 : index
    %79 = vector.load %arg3[%c0_33, %c0_34, %c0_35] : memref<9x2x676xf32, #tpu.memory_space<vmem>>, vector<1x2x676xf32>
    %80 = vector.shape_cast %79 : vector<1x2x676xf32> to vector<2x676xf32>
    %81 = vector.broadcast %78 : f32 to vector<2x676xf32>
    %82 = arith.mulf %81, %80 : vector<2x676xf32>
    %83 = arith.index_cast %76 : i32 to index
    %c1_36 = arith.constant 1 : index
    %84 = memref.load %arg1[%83, %c1_36] : memref<32x9xf32, #tpu.memory_space<smem>>
    %c1_37 = arith.constant 1 : index
    %c0_38 = arith.constant 0 : index
    %c0_39 = arith.constant 0 : index
    %85 = vector.load %arg3[%c1_37, %c0_38, %c0_39] : memref<9x2x676xf32, #tpu.memory_space<vmem>>, vector<1x2x676xf32>
    %86 = vector.shape_cast %85 : vector<1x2x676xf32> to vector<2x676xf32>
    %87 = vector.broadcast %84 : f32 to vector<2x676xf32>
    %88 = arith.mulf %87, %86 : vector<2x676xf32>
    %89 = arith.addf %82, %88 : vector<2x676xf32>
    %90 = arith.index_cast %76 : i32 to index
    %c2_40 = arith.constant 2 : index
    %91 = memref.load %arg1[%90, %c2_40] : memref<32x9xf32, #tpu.memory_space<smem>>
    %c2_41 = arith.constant 2 : index
    %c0_42 = arith.constant 0 : index
    %c0_43 = arith.constant 0 : index
    %92 = vector.load %arg3[%c2_41, %c0_42, %c0_43] : memref<9x2x676xf32, #tpu.memory_space<vmem>>, vector<1x2x676xf32>
    %93 = vector.shape_cast %92 : vector<1x2x676xf32> to vector<2x676xf32>
    %94 = vector.broadcast %91 : f32 to vector<2x676xf32>
    %95 = arith.mulf %94, %93 : vector<2x676xf32>
    %96 = arith.addf %89, %95 : vector<2x676xf32>
    %97 = arith.index_cast %76 : i32 to index
    %c3_44 = arith.constant 3 : index
    %98 = memref.load %arg1[%97, %c3_44] : memref<32x9xf32, #tpu.memory_space<smem>>
    %c3_45 = arith.constant 3 : index
    %c0_46 = arith.constant 0 : index
    %c0_47 = arith.constant 0 : index
    %99 = vector.load %arg3[%c3_45, %c0_46, %c0_47] : memref<9x2x676xf32, #tpu.memory_space<vmem>>, vector<1x2x676xf32>
    %100 = vector.shape_cast %99 : vector<1x2x676xf32> to vector<2x676xf32>
    %101 = vector.broadcast %98 : f32 to vector<2x676xf32>
    %102 = arith.mulf %101, %100 : vector<2x676xf32>
    %103 = arith.addf %96, %102 : vector<2x676xf32>
    %104 = arith.index_cast %76 : i32 to index
    %c4_48 = arith.constant 4 : index
    %105 = memref.load %arg1[%104, %c4_48] : memref<32x9xf32, #tpu.memory_space<smem>>
    %c4_49 = arith.constant 4 : index
    %c0_50 = arith.constant 0 : index
    %c0_51 = arith.constant 0 : index
    %106 = vector.load %arg3[%c4_49, %c0_50, %c0_51] : memref<9x2x676xf32, #tpu.memory_space<vmem>>, vector<1x2x676xf32>
    %107 = vector.shape_cast %106 : vector<1x2x676xf32> to vector<2x676xf32>
    %108 = vector.broadcast %105 : f32 to vector<2x676xf32>
    %109 = arith.mulf %108, %107 : vector<2x676xf32>
    %110 = arith.addf %103, %109 : vector<2x676xf32>
    %111 = arith.index_cast %76 : i32 to index
    %c5_52 = arith.constant 5 : index
    %112 = memref.load %arg1[%111, %c5_52] : memref<32x9xf32, #tpu.memory_space<smem>>
    %c5_53 = arith.constant 5 : index
    %c0_54 = arith.constant 0 : index
    %c0_55 = arith.constant 0 : index
    %113 = vector.load %arg3[%c5_53, %c0_54, %c0_55] : memref<9x2x676xf32, #tpu.memory_space<vmem>>, vector<1x2x676xf32>
    %114 = vector.shape_cast %113 : vector<1x2x676xf32> to vector<2x676xf32>
    %115 = vector.broadcast %112 : f32 to vector<2x676xf32>
    %116 = arith.mulf %115, %114 : vector<2x676xf32>
    %117 = arith.addf %110, %116 : vector<2x676xf32>
    %118 = arith.index_cast %76 : i32 to index
    %c6_56 = arith.constant 6 : index
    %119 = memref.load %arg1[%118, %c6_56] : memref<32x9xf32, #tpu.memory_space<smem>>
    %c6_57 = arith.constant 6 : index
    %c0_58 = arith.constant 0 : index
    %c0_59 = arith.constant 0 : index
    %120 = vector.load %arg3[%c6_57, %c0_58, %c0_59] : memref<9x2x676xf32, #tpu.memory_space<vmem>>, vector<1x2x676xf32>
    %121 = vector.shape_cast %120 : vector<1x2x676xf32> to vector<2x676xf32>
    %122 = vector.broadcast %119 : f32 to vector<2x676xf32>
    %123 = arith.mulf %122, %121 : vector<2x676xf32>
    %124 = arith.addf %117, %123 : vector<2x676xf32>
    %125 = arith.index_cast %76 : i32 to index
    %c7_60 = arith.constant 7 : index
    %126 = memref.load %arg1[%125, %c7_60] : memref<32x9xf32, #tpu.memory_space<smem>>
    %c7_61 = arith.constant 7 : index
    %c0_62 = arith.constant 0 : index
    %c0_63 = arith.constant 0 : index
    %127 = vector.load %arg3[%c7_61, %c0_62, %c0_63] : memref<9x2x676xf32, #tpu.memory_space<vmem>>, vector<1x2x676xf32>
    %128 = vector.shape_cast %127 : vector<1x2x676xf32> to vector<2x676xf32>
    %129 = vector.broadcast %126 : f32 to vector<2x676xf32>
    %130 = arith.mulf %129, %128 : vector<2x676xf32>
    %131 = arith.addf %124, %130 : vector<2x676xf32>
    %132 = arith.index_cast %76 : i32 to index
    %c8_64 = arith.constant 8 : index
    %133 = memref.load %arg1[%132, %c8_64] : memref<32x9xf32, #tpu.memory_space<smem>>
    %c8_65 = arith.constant 8 : index
    %c0_66 = arith.constant 0 : index
    %c0_67 = arith.constant 0 : index
    %134 = vector.load %arg3[%c8_65, %c0_66, %c0_67] : memref<9x2x676xf32, #tpu.memory_space<vmem>>, vector<1x2x676xf32>
    %135 = vector.shape_cast %134 : vector<1x2x676xf32> to vector<2x676xf32>
    %136 = vector.broadcast %133 : f32 to vector<2x676xf32>
    %137 = arith.mulf %136, %135 : vector<2x676xf32>
    %138 = arith.addf %131, %137 : vector<2x676xf32>
    %139 = arith.index_cast %76 : i32 to index
    %140 = memref.load %arg2[%139] : memref<32xf32, #tpu.memory_space<smem>>
    %141 = vector.broadcast %140 : f32 to vector<2x676xf32>
    %142 = arith.addf %138, %141 : vector<2x676xf32>
    %cst_68 = arith.constant 0.000000e+00 : f32
    %143 = vector.broadcast %cst_68 : f32 to vector<2x676xf32>
    %144 = arith.maximumf %142, %143 : vector<2x676xf32>
    %145 = arith.truncf %144 : vector<2x676xf32> to vector<2x676xbf16>
    %c1_69 = arith.constant 1 : index
    %c0_70 = arith.constant 0 : index
    %c0_71 = arith.constant 0 : index
    %146 = vector.load %arg4[%c1_69, %c0_70, %c0_71] : memref<16x676x128xbf16, #tpu.memory_space<vmem>>, vector<1x676x128xbf16>
    %147 = vector.shape_cast %146 : vector<1x676x128xbf16> to vector<676x128xbf16>
    %cst_72 = arith.constant dense<0.000000e+00> : vector<2x128xf32>
    %148 = tpu.matmul %145, %147, %cst_72 {dimension_numbers = #tpu.dot_dimension_numbers<[1], [0], [0], [1], [0, 0, 1, 1], [], []>} : vector<2x676xbf16>, vector<676x128xbf16>, vector<2x128xf32> -> vector<2x128xf32>
    %149 = arith.addf %75, %148 : vector<2x128xf32>
    %c2_i32 = arith.constant 2 : i32
    %150 = arith.addi %0, %c2_i32 : i32
    %151 = arith.index_cast %150 : i32 to index
    %c0_73 = arith.constant 0 : index
    %152 = memref.load %arg1[%151, %c0_73] : memref<32x9xf32, #tpu.memory_space<smem>>
    %c0_74 = arith.constant 0 : index
    %c0_75 = arith.constant 0 : index
    %c0_76 = arith.constant 0 : index
    %153 = vector.load %arg3[%c0_74, %c0_75, %c0_76] : memref<9x2x676xf32, #tpu.memory_space<vmem>>, vector<1x2x676xf32>
    %154 = vector.shape_cast %153 : vector<1x2x676xf32> to vector<2x676xf32>
    %155 = vector.broadcast %152 : f32 to vector<2x676xf32>
    %156 = arith.mulf %155, %154 : vector<2x676xf32>
    %157 = arith.index_cast %150 : i32 to index
    %c1_77 = arith.constant 1 : index
    %158 = memref.load %arg1[%157, %c1_77] : memref<32x9xf32, #tpu.memory_space<smem>>
    %c1_78 = arith.constant 1 : index
    %c0_79 = arith.constant 0 : index
    %c0_80 = arith.constant 0 : index
    %159 = vector.load %arg3[%c1_78, %c0_79, %c0_80] : memref<9x2x676xf32, #tpu.memory_space<vmem>>, vector<1x2x676xf32>
    %160 = vector.shape_cast %159 : vector<1x2x676xf32> to vector<2x676xf32>
    %161 = vector.broadcast %158 : f32 to vector<2x676xf32>
    %162 = arith.mulf %161, %160 : vector<2x676xf32>
    %163 = arith.addf %156, %162 : vector<2x676xf32>
    %164 = arith.index_cast %150 : i32 to index
    %c2_81 = arith.constant 2 : index
    %165 = memref.load %arg1[%164, %c2_81] : memref<32x9xf32, #tpu.memory_space<smem>>
    %c2_82 = arith.constant 2 : index
    %c0_83 = arith.constant 0 : index
    %c0_84 = arith.constant 0 : index
    %166 = vector.load %arg3[%c2_82, %c0_83, %c0_84] : memref<9x2x676xf32, #tpu.memory_space<vmem>>, vector<1x2x676xf32>
    %167 = vector.shape_cast %166 : vector<1x2x676xf32> to vector<2x676xf32>
    %168 = vector.broadcast %165 : f32 to vector<2x676xf32>
    %169 = arith.mulf %168, %167 : vector<2x676xf32>
    %170 = arith.addf %163, %169 : vector<2x676xf32>
    %171 = arith.index_cast %150 : i32 to index
    %c3_85 = arith.constant 3 : index
    %172 = memref.load %arg1[%171, %c3_85] : memref<32x9xf32, #tpu.memory_space<smem>>
    %c3_86 = arith.constant 3 : index
    %c0_87 = arith.constant 0 : index
    %c0_88 = arith.constant 0 : index
    %173 = vector.load %arg3[%c3_86, %c0_87, %c0_88] : memref<9x2x676xf32, #tpu.memory_space<vmem>>, vector<1x2x676xf32>
    %174 = vector.shape_cast %173 : vector<1x2x676xf32> to vector<2x676xf32>
    %175 = vector.broadcast %172 : f32 to vector<2x676xf32>
    %176 = arith.mulf %175, %174 : vector<2x676xf32>
    %177 = arith.addf %170, %176 : vector<2x676xf32>
    %178 = arith.index_cast %150 : i32 to index
    %c4_89 = arith.constant 4 : index
    %179 = memref.load %arg1[%178, %c4_89] : memref<32x9xf32, #tpu.memory_space<smem>>
    %c4_90 = arith.constant 4 : index
    %c0_91 = arith.constant 0 : index
    %c0_92 = arith.constant 0 : index
    %180 = vector.load %arg3[%c4_90, %c0_91, %c0_92] : memref<9x2x676xf32, #tpu.memory_space<vmem>>, vector<1x2x676xf32>
    %181 = vector.shape_cast %180 : vector<1x2x676xf32> to vector<2x676xf32>
    %182 = vector.broadcast %179 : f32 to vector<2x676xf32>
    %183 = arith.mulf %182, %181 : vector<2x676xf32>
    %184 = arith.addf %177, %183 : vector<2x676xf32>
    %185 = arith.index_cast %150 : i32 to index
    %c5_93 = arith.constant 5 : index
    %186 = memref.load %arg1[%185, %c5_93] : memref<32x9xf32, #tpu.memory_space<smem>>
    %c5_94 = arith.constant 5 : index
    %c0_95 = arith.constant 0 : index
    %c0_96 = arith.constant 0 : index
    %187 = vector.load %arg3[%c5_94, %c0_95, %c0_96] : memref<9x2x676xf32, #tpu.memory_space<vmem>>, vector<1x2x676xf32>
    %188 = vector.shape_cast %187 : vector<1x2x676xf32> to vector<2x676xf32>
    %189 = vector.broadcast %186 : f32 to vector<2x676xf32>
    %190 = arith.mulf %189, %188 : vector<2x676xf32>
    %191 = arith.addf %184, %190 : vector<2x676xf32>
    %192 = arith.index_cast %150 : i32 to index
    %c6_97 = arith.constant 6 : index
    %193 = memref.load %arg1[%192, %c6_97] : memref<32x9xf32, #tpu.memory_space<smem>>
    %c6_98 = arith.constant 6 : index
    %c0_99 = arith.constant 0 : index
    %c0_100 = arith.constant 0 : index
    %194 = vector.load %arg3[%c6_98, %c0_99, %c0_100] : memref<9x2x676xf32, #tpu.memory_space<vmem>>, vector<1x2x676xf32>
    %195 = vector.shape_cast %194 : vector<1x2x676xf32> to vector<2x676xf32>
    %196 = vector.broadcast %193 : f32 to vector<2x676xf32>
    %197 = arith.mulf %196, %195 : vector<2x676xf32>
    %198 = arith.addf %191, %197 : vector<2x676xf32>
    %199 = arith.index_cast %150 : i32 to index
    %c7_101 = arith.constant 7 : index
    %200 = memref.load %arg1[%199, %c7_101] : memref<32x9xf32, #tpu.memory_space<smem>>
    %c7_102 = arith.constant 7 : index
    %c0_103 = arith.constant 0 : index
    %c0_104 = arith.constant 0 : index
    %201 = vector.load %arg3[%c7_102, %c0_103, %c0_104] : memref<9x2x676xf32, #tpu.memory_space<vmem>>, vector<1x2x676xf32>
    %202 = vector.shape_cast %201 : vector<1x2x676xf32> to vector<2x676xf32>
    %203 = vector.broadcast %200 : f32 to vector<2x676xf32>
    %204 = arith.mulf %203, %202 : vector<2x676xf32>
    %205 = arith.addf %198, %204 : vector<2x676xf32>
    %206 = arith.index_cast %150 : i32 to index
    %c8_105 = arith.constant 8 : index
    %207 = memref.load %arg1[%206, %c8_105] : memref<32x9xf32, #tpu.memory_space<smem>>
    %c8_106 = arith.constant 8 : index
    %c0_107 = arith.constant 0 : index
    %c0_108 = arith.constant 0 : index
    %208 = vector.load %arg3[%c8_106, %c0_107, %c0_108] : memref<9x2x676xf32, #tpu.memory_space<vmem>>, vector<1x2x676xf32>
    %209 = vector.shape_cast %208 : vector<1x2x676xf32> to vector<2x676xf32>
    %210 = vector.broadcast %207 : f32 to vector<2x676xf32>
    %211 = arith.mulf %210, %209 : vector<2x676xf32>
    %212 = arith.addf %205, %211 : vector<2x676xf32>
    %213 = arith.index_cast %150 : i32 to index
    %214 = memref.load %arg2[%213] : memref<32xf32, #tpu.memory_space<smem>>
    %215 = vector.broadcast %214 : f32 to vector<2x676xf32>
    %216 = arith.addf %212, %215 : vector<2x676xf32>
    %cst_109 = arith.constant 0.000000e+00 : f32
    %217 = vector.broadcast %cst_109 : f32 to vector<2x676xf32>
    %218 = arith.maximumf %216, %217 : vector<2x676xf32>
    %219 = arith.truncf %218 : vector<2x676xf32> to vector<2x676xbf16>
    %c2_110 = arith.constant 2 : index
    %c0_111 = arith.constant 0 : index
    %c0_112 = arith.constant 0 : index
    %220 = vector.load %arg4[%c2_110, %c0_111, %c0_112] : memref<16x676x128xbf16, #tpu.memory_space<vmem>>, vector<1x676x128xbf16>
    %221 = vector.shape_cast %220 : vector<1x676x128xbf16> to vector<676x128xbf16>
    %cst_113 = arith.constant dense<0.000000e+00> : vector<2x128xf32>
    %222 = tpu.matmul %219, %221, %cst_113 {dimension_numbers = #tpu.dot_dimension_numbers<[1], [0], [0], [1], [0, 0, 1, 1], [], []>} : vector<2x676xbf16>, vector<676x128xbf16>, vector<2x128xf32> -> vector<2x128xf32>
    %223 = arith.addf %149, %222 : vector<2x128xf32>
    %c3_i32 = arith.constant 3 : i32
    %224 = arith.addi %0, %c3_i32 : i32
    %225 = arith.index_cast %224 : i32 to index
    %c0_114 = arith.constant 0 : index
    %226 = memref.load %arg1[%225, %c0_114] : memref<32x9xf32, #tpu.memory_space<smem>>
    %c0_115 = arith.constant 0 : index
    %c0_116 = arith.constant 0 : index
    %c0_117 = arith.constant 0 : index
    %227 = vector.load %arg3[%c0_115, %c0_116, %c0_117] : memref<9x2x676xf32, #tpu.memory_space<vmem>>, vector<1x2x676xf32>
    %228 = vector.shape_cast %227 : vector<1x2x676xf32> to vector<2x676xf32>
    %229 = vector.broadcast %226 : f32 to vector<2x676xf32>
    %230 = arith.mulf %229, %228 : vector<2x676xf32>
    %231 = arith.index_cast %224 : i32 to index
    %c1_118 = arith.constant 1 : index
    %232 = memref.load %arg1[%231, %c1_118] : memref<32x9xf32, #tpu.memory_space<smem>>
    %c1_119 = arith.constant 1 : index
    %c0_120 = arith.constant 0 : index
    %c0_121 = arith.constant 0 : index
    %233 = vector.load %arg3[%c1_119, %c0_120, %c0_121] : memref<9x2x676xf32, #tpu.memory_space<vmem>>, vector<1x2x676xf32>
    %234 = vector.shape_cast %233 : vector<1x2x676xf32> to vector<2x676xf32>
    %235 = vector.broadcast %232 : f32 to vector<2x676xf32>
    %236 = arith.mulf %235, %234 : vector<2x676xf32>
    %237 = arith.addf %230, %236 : vector<2x676xf32>
    %238 = arith.index_cast %224 : i32 to index
    %c2_122 = arith.constant 2 : index
    %239 = memref.load %arg1[%238, %c2_122] : memref<32x9xf32, #tpu.memory_space<smem>>
    %c2_123 = arith.constant 2 : index
    %c0_124 = arith.constant 0 : index
    %c0_125 = arith.constant 0 : index
    %240 = vector.load %arg3[%c2_123, %c0_124, %c0_125] : memref<9x2x676xf32, #tpu.memory_space<vmem>>, vector<1x2x676xf32>
    %241 = vector.shape_cast %240 : vector<1x2x676xf32> to vector<2x676xf32>
    %242 = vector.broadcast %239 : f32 to vector<2x676xf32>
    %243 = arith.mulf %242, %241 : vector<2x676xf32>
    %244 = arith.addf %237, %243 : vector<2x676xf32>
    %245 = arith.index_cast %224 : i32 to index
    %c3_126 = arith.constant 3 : index
    %246 = memref.load %arg1[%245, %c3_126] : memref<32x9xf32, #tpu.memory_space<smem>>
    %c3_127 = arith.constant 3 : index
    %c0_128 = arith.constant 0 : index
    %c0_129 = arith.constant 0 : index
    %247 = vector.load %arg3[%c3_127, %c0_128, %c0_129] : memref<9x2x676xf32, #tpu.memory_space<vmem>>, vector<1x2x676xf32>
    %248 = vector.shape_cast %247 : vector<1x2x676xf32> to vector<2x676xf32>
    %249 = vector.broadcast %246 : f32 to vector<2x676xf32>
    %250 = arith.mulf %249, %248 : vector<2x676xf32>
    %251 = arith.addf %244, %250 : vector<2x676xf32>
    %252 = arith.index_cast %224 : i32 to index
    %c4_130 = arith.constant 4 : index
    %253 = memref.load %arg1[%252, %c4_130] : memref<32x9xf32, #tpu.memory_space<smem>>
    %c4_131 = arith.constant 4 : index
    %c0_132 = arith.constant 0 : index
    %c0_133 = arith.constant 0 : index
    %254 = vector.load %arg3[%c4_131, %c0_132, %c0_133] : memref<9x2x676xf32, #tpu.memory_space<vmem>>, vector<1x2x676xf32>
    %255 = vector.shape_cast %254 : vector<1x2x676xf32> to vector<2x676xf32>
    %256 = vector.broadcast %253 : f32 to vector<2x676xf32>
    %257 = arith.mulf %256, %255 : vector<2x676xf32>
    %258 = arith.addf %251, %257 : vector<2x676xf32>
    %259 = arith.index_cast %224 : i32 to index
    %c5_134 = arith.constant 5 : index
    %260 = memref.load %arg1[%259, %c5_134] : memref<32x9xf32, #tpu.memory_space<smem>>
    %c5_135 = arith.constant 5 : index
    %c0_136 = arith.constant 0 : index
    %c0_137 = arith.constant 0 : index
    %261 = vector.load %arg3[%c5_135, %c0_136, %c0_137] : memref<9x2x676xf32, #tpu.memory_space<vmem>>, vector<1x2x676xf32>
    %262 = vector.shape_cast %261 : vector<1x2x676xf32> to vector<2x676xf32>
    %263 = vector.broadcast %260 : f32 to vector<2x676xf32>
    %264 = arith.mulf %263, %262 : vector<2x676xf32>
    %265 = arith.addf %258, %264 : vector<2x676xf32>
    %266 = arith.index_cast %224 : i32 to index
    %c6_138 = arith.constant 6 : index
    %267 = memref.load %arg1[%266, %c6_138] : memref<32x9xf32, #tpu.memory_space<smem>>
    %c6_139 = arith.constant 6 : index
    %c0_140 = arith.constant 0 : index
    %c0_141 = arith.constant 0 : index
    %268 = vector.load %arg3[%c6_139, %c0_140, %c0_141] : memref<9x2x676xf32, #tpu.memory_space<vmem>>, vector<1x2x676xf32>
    %269 = vector.shape_cast %268 : vector<1x2x676xf32> to vector<2x676xf32>
    %270 = vector.broadcast %267 : f32 to vector<2x676xf32>
    %271 = arith.mulf %270, %269 : vector<2x676xf32>
    %272 = arith.addf %265, %271 : vector<2x676xf32>
    %273 = arith.index_cast %224 : i32 to index
    %c7_142 = arith.constant 7 : index
    %274 = memref.load %arg1[%273, %c7_142] : memref<32x9xf32, #tpu.memory_space<smem>>
    %c7_143 = arith.constant 7 : index
    %c0_144 = arith.constant 0 : index
    %c0_145 = arith.constant 0 : index
    %275 = vector.load %arg3[%c7_143, %c0_144, %c0_145] : memref<9x2x676xf32, #tpu.memory_space<vmem>>, vector<1x2x676xf32>
    %276 = vector.shape_cast %275 : vector<1x2x676xf32> to vector<2x676xf32>
    %277 = vector.broadcast %274 : f32 to vector<2x676xf32>
    %278 = arith.mulf %277, %276 : vector<2x676xf32>
    %279 = arith.addf %272, %278 : vector<2x676xf32>
    %280 = arith.index_cast %224 : i32 to index
    %c8_146 = arith.constant 8 : index
    %281 = memref.load %arg1[%280, %c8_146] : memref<32x9xf32, #tpu.memory_space<smem>>
    %c8_147 = arith.constant 8 : index
    %c0_148 = arith.constant 0 : index
    %c0_149 = arith.constant 0 : index
    %282 = vector.load %arg3[%c8_147, %c0_148, %c0_149] : memref<9x2x676xf32, #tpu.memory_space<vmem>>, vector<1x2x676xf32>
    %283 = vector.shape_cast %282 : vector<1x2x676xf32> to vector<2x676xf32>
    %284 = vector.broadcast %281 : f32 to vector<2x676xf32>
    %285 = arith.mulf %284, %283 : vector<2x676xf32>
    %286 = arith.addf %279, %285 : vector<2x676xf32>
    %287 = arith.index_cast %224 : i32 to index
    %288 = memref.load %arg2[%287] : memref<32xf32, #tpu.memory_space<smem>>
    %289 = vector.broadcast %288 : f32 to vector<2x676xf32>
    %290 = arith.addf %286, %289 : vector<2x676xf32>
    %cst_150 = arith.constant 0.000000e+00 : f32
    %291 = vector.broadcast %cst_150 : f32 to vector<2x676xf32>
    %292 = arith.maximumf %290, %291 : vector<2x676xf32>
    %293 = arith.truncf %292 : vector<2x676xf32> to vector<2x676xbf16>
    %c3_151 = arith.constant 3 : index
    %c0_152 = arith.constant 0 : index
    %c0_153 = arith.constant 0 : index
    %294 = vector.load %arg4[%c3_151, %c0_152, %c0_153] : memref<16x676x128xbf16, #tpu.memory_space<vmem>>, vector<1x676x128xbf16>
    %295 = vector.shape_cast %294 : vector<1x676x128xbf16> to vector<676x128xbf16>
    %cst_154 = arith.constant dense<0.000000e+00> : vector<2x128xf32>
    %296 = tpu.matmul %293, %295, %cst_154 {dimension_numbers = #tpu.dot_dimension_numbers<[1], [0], [0], [1], [0, 0, 1, 1], [], []>} : vector<2x676xbf16>, vector<676x128xbf16>, vector<2x128xf32> -> vector<2x128xf32>
    %297 = arith.addf %223, %296 : vector<2x128xf32>
    %c4_i32 = arith.constant 4 : i32
    %298 = arith.addi %0, %c4_i32 : i32
    %299 = arith.index_cast %298 : i32 to index
    %c0_155 = arith.constant 0 : index
    %300 = memref.load %arg1[%299, %c0_155] : memref<32x9xf32, #tpu.memory_space<smem>>
    %c0_156 = arith.constant 0 : index
    %c0_157 = arith.constant 0 : index
    %c0_158 = arith.constant 0 : index
    %301 = vector.load %arg3[%c0_156, %c0_157, %c0_158] : memref<9x2x676xf32, #tpu.memory_space<vmem>>, vector<1x2x676xf32>
    %302 = vector.shape_cast %301 : vector<1x2x676xf32> to vector<2x676xf32>
    %303 = vector.broadcast %300 : f32 to vector<2x676xf32>
    %304 = arith.mulf %303, %302 : vector<2x676xf32>
    %305 = arith.index_cast %298 : i32 to index
    %c1_159 = arith.constant 1 : index
    %306 = memref.load %arg1[%305, %c1_159] : memref<32x9xf32, #tpu.memory_space<smem>>
    %c1_160 = arith.constant 1 : index
    %c0_161 = arith.constant 0 : index
    %c0_162 = arith.constant 0 : index
    %307 = vector.load %arg3[%c1_160, %c0_161, %c0_162] : memref<9x2x676xf32, #tpu.memory_space<vmem>>, vector<1x2x676xf32>
    %308 = vector.shape_cast %307 : vector<1x2x676xf32> to vector<2x676xf32>
    %309 = vector.broadcast %306 : f32 to vector<2x676xf32>
    %310 = arith.mulf %309, %308 : vector<2x676xf32>
    %311 = arith.addf %304, %310 : vector<2x676xf32>
    %312 = arith.index_cast %298 : i32 to index
    %c2_163 = arith.constant 2 : index
    %313 = memref.load %arg1[%312, %c2_163] : memref<32x9xf32, #tpu.memory_space<smem>>
    %c2_164 = arith.constant 2 : index
    %c0_165 = arith.constant 0 : index
    %c0_166 = arith.constant 0 : index
    %314 = vector.load %arg3[%c2_164, %c0_165, %c0_166] : memref<9x2x676xf32, #tpu.memory_space<vmem>>, vector<1x2x676xf32>
    %315 = vector.shape_cast %314 : vector<1x2x676xf32> to vector<2x676xf32>
    %316 = vector.broadcast %313 : f32 to vector<2x676xf32>
    %317 = arith.mulf %316, %315 : vector<2x676xf32>
    %318 = arith.addf %311, %317 : vector<2x676xf32>
    %319 = arith.index_cast %298 : i32 to index
    %c3_167 = arith.constant 3 : index
    %320 = memref.load %arg1[%319, %c3_167] : memref<32x9xf32, #tpu.memory_space<smem>>
    %c3_168 = arith.constant 3 : index
    %c0_169 = arith.constant 0 : index
    %c0_170 = arith.constant 0 : index
    %321 = vector.load %arg3[%c3_168, %c0_169, %c0_170] : memref<9x2x676xf32, #tpu.memory_space<vmem>>, vector<1x2x676xf32>
    %322 = vector.shape_cast %321 : vector<1x2x676xf32> to vector<2x676xf32>
    %323 = vector.broadcast %320 : f32 to vector<2x676xf32>
    %324 = arith.mulf %323, %322 : vector<2x676xf32>
    %325 = arith.addf %318, %324 : vector<2x676xf32>
    %326 = arith.index_cast %298 : i32 to index
    %c4_171 = arith.constant 4 : index
    %327 = memref.load %arg1[%326, %c4_171] : memref<32x9xf32, #tpu.memory_space<smem>>
    %c4_172 = arith.constant 4 : index
    %c0_173 = arith.constant 0 : index
    %c0_174 = arith.constant 0 : index
    %328 = vector.load %arg3[%c4_172, %c0_173, %c0_174] : memref<9x2x676xf32, #tpu.memory_space<vmem>>, vector<1x2x676xf32>
    %329 = vector.shape_cast %328 : vector<1x2x676xf32> to vector<2x676xf32>
    %330 = vector.broadcast %327 : f32 to vector<2x676xf32>
    %331 = arith.mulf %330, %329 : vector<2x676xf32>
    %332 = arith.addf %325, %331 : vector<2x676xf32>
    %333 = arith.index_cast %298 : i32 to index
    %c5_175 = arith.constant 5 : index
    %334 = memref.load %arg1[%333, %c5_175] : memref<32x9xf32, #tpu.memory_space<smem>>
    %c5_176 = arith.constant 5 : index
    %c0_177 = arith.constant 0 : index
    %c0_178 = arith.constant 0 : index
    %335 = vector.load %arg3[%c5_176, %c0_177, %c0_178] : memref<9x2x676xf32, #tpu.memory_space<vmem>>, vector<1x2x676xf32>
    %336 = vector.shape_cast %335 : vector<1x2x676xf32> to vector<2x676xf32>
    %337 = vector.broadcast %334 : f32 to vector<2x676xf32>
    %338 = arith.mulf %337, %336 : vector<2x676xf32>
    %339 = arith.addf %332, %338 : vector<2x676xf32>
    %340 = arith.index_cast %298 : i32 to index
    %c6_179 = arith.constant 6 : index
    %341 = memref.load %arg1[%340, %c6_179] : memref<32x9xf32, #tpu.memory_space<smem>>
    %c6_180 = arith.constant 6 : index
    %c0_181 = arith.constant 0 : index
    %c0_182 = arith.constant 0 : index
    %342 = vector.load %arg3[%c6_180, %c0_181, %c0_182] : memref<9x2x676xf32, #tpu.memory_space<vmem>>, vector<1x2x676xf32>
    %343 = vector.shape_cast %342 : vector<1x2x676xf32> to vector<2x676xf32>
    %344 = vector.broadcast %341 : f32 to vector<2x676xf32>
    %345 = arith.mulf %344, %343 : vector<2x676xf32>
    %346 = arith.addf %339, %345 : vector<2x676xf32>
    %347 = arith.index_cast %298 : i32 to index
    %c7_183 = arith.constant 7 : index
    %348 = memref.load %arg1[%347, %c7_183] : memref<32x9xf32, #tpu.memory_space<smem>>
    %c7_184 = arith.constant 7 : index
    %c0_185 = arith.constant 0 : index
    %c0_186 = arith.constant 0 : index
    %349 = vector.load %arg3[%c7_184, %c0_185, %c0_186] : memref<9x2x676xf32, #tpu.memory_space<vmem>>, vector<1x2x676xf32>
    %350 = vector.shape_cast %349 : vector<1x2x676xf32> to vector<2x676xf32>
    %351 = vector.broadcast %348 : f32 to vector<2x676xf32>
    %352 = arith.mulf %351, %350 : vector<2x676xf32>
    %353 = arith.addf %346, %352 : vector<2x676xf32>
    %354 = arith.index_cast %298 : i32 to index
    %c8_187 = arith.constant 8 : index
    %355 = memref.load %arg1[%354, %c8_187] : memref<32x9xf32, #tpu.memory_space<smem>>
    %c8_188 = arith.constant 8 : index
    %c0_189 = arith.constant 0 : index
    %c0_190 = arith.constant 0 : index
    %356 = vector.load %arg3[%c8_188, %c0_189, %c0_190] : memref<9x2x676xf32, #tpu.memory_space<vmem>>, vector<1x2x676xf32>
    %357 = vector.shape_cast %356 : vector<1x2x676xf32> to vector<2x676xf32>
    %358 = vector.broadcast %355 : f32 to vector<2x676xf32>
    %359 = arith.mulf %358, %357 : vector<2x676xf32>
    %360 = arith.addf %353, %359 : vector<2x676xf32>
    %361 = arith.index_cast %298 : i32 to index
    %362 = memref.load %arg2[%361] : memref<32xf32, #tpu.memory_space<smem>>
    %363 = vector.broadcast %362 : f32 to vector<2x676xf32>
    %364 = arith.addf %360, %363 : vector<2x676xf32>
    %cst_191 = arith.constant 0.000000e+00 : f32
    %365 = vector.broadcast %cst_191 : f32 to vector<2x676xf32>
    %366 = arith.maximumf %364, %365 : vector<2x676xf32>
    %367 = arith.truncf %366 : vector<2x676xf32> to vector<2x676xbf16>
    %c4_192 = arith.constant 4 : index
    %c0_193 = arith.constant 0 : index
    %c0_194 = arith.constant 0 : index
    %368 = vector.load %arg4[%c4_192, %c0_193, %c0_194] : memref<16x676x128xbf16, #tpu.memory_space<vmem>>, vector<1x676x128xbf16>
    %369 = vector.shape_cast %368 : vector<1x676x128xbf16> to vector<676x128xbf16>
    %cst_195 = arith.constant dense<0.000000e+00> : vector<2x128xf32>
    %370 = tpu.matmul %367, %369, %cst_195 {dimension_numbers = #tpu.dot_dimension_numbers<[1], [0], [0], [1], [0, 0, 1, 1], [], []>} : vector<2x676xbf16>, vector<676x128xbf16>, vector<2x128xf32> -> vector<2x128xf32>
    %371 = arith.addf %297, %370 : vector<2x128xf32>
    %c5_i32 = arith.constant 5 : i32
    %372 = arith.addi %0, %c5_i32 : i32
    %373 = arith.index_cast %372 : i32 to index
    %c0_196 = arith.constant 0 : index
    %374 = memref.load %arg1[%373, %c0_196] : memref<32x9xf32, #tpu.memory_space<smem>>
    %c0_197 = arith.constant 0 : index
    %c0_198 = arith.constant 0 : index
    %c0_199 = arith.constant 0 : index
    %375 = vector.load %arg3[%c0_197, %c0_198, %c0_199] : memref<9x2x676xf32, #tpu.memory_space<vmem>>, vector<1x2x676xf32>
    %376 = vector.shape_cast %375 : vector<1x2x676xf32> to vector<2x676xf32>
    %377 = vector.broadcast %374 : f32 to vector<2x676xf32>
    %378 = arith.mulf %377, %376 : vector<2x676xf32>
    %379 = arith.index_cast %372 : i32 to index
    %c1_200 = arith.constant 1 : index
    %380 = memref.load %arg1[%379, %c1_200] : memref<32x9xf32, #tpu.memory_space<smem>>
    %c1_201 = arith.constant 1 : index
    %c0_202 = arith.constant 0 : index
    %c0_203 = arith.constant 0 : index
    %381 = vector.load %arg3[%c1_201, %c0_202, %c0_203] : memref<9x2x676xf32, #tpu.memory_space<vmem>>, vector<1x2x676xf32>
    %382 = vector.shape_cast %381 : vector<1x2x676xf32> to vector<2x676xf32>
    %383 = vector.broadcast %380 : f32 to vector<2x676xf32>
    %384 = arith.mulf %383, %382 : vector<2x676xf32>
    %385 = arith.addf %378, %384 : vector<2x676xf32>
    %386 = arith.index_cast %372 : i32 to index
    %c2_204 = arith.constant 2 : index
    %387 = memref.load %arg1[%386, %c2_204] : memref<32x9xf32, #tpu.memory_space<smem>>
    %c2_205 = arith.constant 2 : index
    %c0_206 = arith.constant 0 : index
    %c0_207 = arith.constant 0 : index
    %388 = vector.load %arg3[%c2_205, %c0_206, %c0_207] : memref<9x2x676xf32, #tpu.memory_space<vmem>>, vector<1x2x676xf32>
    %389 = vector.shape_cast %388 : vector<1x2x676xf32> to vector<2x676xf32>
    %390 = vector.broadcast %387 : f32 to vector<2x676xf32>
    %391 = arith.mulf %390, %389 : vector<2x676xf32>
    %392 = arith.addf %385, %391 : vector<2x676xf32>
    %393 = arith.index_cast %372 : i32 to index
    %c3_208 = arith.constant 3 : index
    %394 = memref.load %arg1[%393, %c3_208] : memref<32x9xf32, #tpu.memory_space<smem>>
    %c3_209 = arith.constant 3 : index
    %c0_210 = arith.constant 0 : index
    %c0_211 = arith.constant 0 : index
    %395 = vector.load %arg3[%c3_209, %c0_210, %c0_211] : memref<9x2x676xf32, #tpu.memory_space<vmem>>, vector<1x2x676xf32>
    %396 = vector.shape_cast %395 : vector<1x2x676xf32> to vector<2x676xf32>
    %397 = vector.broadcast %394 : f32 to vector<2x676xf32>
    %398 = arith.mulf %397, %396 : vector<2x676xf32>
    %399 = arith.addf %392, %398 : vector<2x676xf32>
    %400 = arith.index_cast %372 : i32 to index
    %c4_212 = arith.constant 4 : index
    %401 = memref.load %arg1[%400, %c4_212] : memref<32x9xf32, #tpu.memory_space<smem>>
    %c4_213 = arith.constant 4 : index
    %c0_214 = arith.constant 0 : index
    %c0_215 = arith.constant 0 : index
    %402 = vector.load %arg3[%c4_213, %c0_214, %c0_215] : memref<9x2x676xf32, #tpu.memory_space<vmem>>, vector<1x2x676xf32>
    %403 = vector.shape_cast %402 : vector<1x2x676xf32> to vector<2x676xf32>
    %404 = vector.broadcast %401 : f32 to vector<2x676xf32>
    %405 = arith.mulf %404, %403 : vector<2x676xf32>
    %406 = arith.addf %399, %405 : vector<2x676xf32>
    %407 = arith.index_cast %372 : i32 to index
    %c5_216 = arith.constant 5 : index
    %408 = memref.load %arg1[%407, %c5_216] : memref<32x9xf32, #tpu.memory_space<smem>>
    %c5_217 = arith.constant 5 : index
    %c0_218 = arith.constant 0 : index
    %c0_219 = arith.constant 0 : index
    %409 = vector.load %arg3[%c5_217, %c0_218, %c0_219] : memref<9x2x676xf32, #tpu.memory_space<vmem>>, vector<1x2x676xf32>
    %410 = vector.shape_cast %409 : vector<1x2x676xf32> to vector<2x676xf32>
    %411 = vector.broadcast %408 : f32 to vector<2x676xf32>
    %412 = arith.mulf %411, %410 : vector<2x676xf32>
    %413 = arith.addf %406, %412 : vector<2x676xf32>
    %414 = arith.index_cast %372 : i32 to index
    %c6_220 = arith.constant 6 : index
    %415 = memref.load %arg1[%414, %c6_220] : memref<32x9xf32, #tpu.memory_space<smem>>
    %c6_221 = arith.constant 6 : index
    %c0_222 = arith.constant 0 : index
    %c0_223 = arith.constant 0 : index
    %416 = vector.load %arg3[%c6_221, %c0_222, %c0_223] : memref<9x2x676xf32, #tpu.memory_space<vmem>>, vector<1x2x676xf32>
    %417 = vector.shape_cast %416 : vector<1x2x676xf32> to vector<2x676xf32>
    %418 = vector.broadcast %415 : f32 to vector<2x676xf32>
    %419 = arith.mulf %418, %417 : vector<2x676xf32>
    %420 = arith.addf %413, %419 : vector<2x676xf32>
    %421 = arith.index_cast %372 : i32 to index
    %c7_224 = arith.constant 7 : index
    %422 = memref.load %arg1[%421, %c7_224] : memref<32x9xf32, #tpu.memory_space<smem>>
    %c7_225 = arith.constant 7 : index
    %c0_226 = arith.constant 0 : index
    %c0_227 = arith.constant 0 : index
    %423 = vector.load %arg3[%c7_225, %c0_226, %c0_227] : memref<9x2x676xf32, #tpu.memory_space<vmem>>, vector<1x2x676xf32>
    %424 = vector.shape_cast %423 : vector<1x2x676xf32> to vector<2x676xf32>
    %425 = vector.broadcast %422 : f32 to vector<2x676xf32>
    %426 = arith.mulf %425, %424 : vector<2x676xf32>
    %427 = arith.addf %420, %426 : vector<2x676xf32>
    %428 = arith.index_cast %372 : i32 to index
    %c8_228 = arith.constant 8 : index
    %429 = memref.load %arg1[%428, %c8_228] : memref<32x9xf32, #tpu.memory_space<smem>>
    %c8_229 = arith.constant 8 : index
    %c0_230 = arith.constant 0 : index
    %c0_231 = arith.constant 0 : index
    %430 = vector.load %arg3[%c8_229, %c0_230, %c0_231] : memref<9x2x676xf32, #tpu.memory_space<vmem>>, vector<1x2x676xf32>
    %431 = vector.shape_cast %430 : vector<1x2x676xf32> to vector<2x676xf32>
    %432 = vector.broadcast %429 : f32 to vector<2x676xf32>
    %433 = arith.mulf %432, %431 : vector<2x676xf32>
    %434 = arith.addf %427, %433 : vector<2x676xf32>
    %435 = arith.index_cast %372 : i32 to index
    %436 = memref.load %arg2[%435] : memref<32xf32, #tpu.memory_space<smem>>
    %437 = vector.broadcast %436 : f32 to vector<2x676xf32>
    %438 = arith.addf %434, %437 : vector<2x676xf32>
    %cst_232 = arith.constant 0.000000e+00 : f32
    %439 = vector.broadcast %cst_232 : f32 to vector<2x676xf32>
    %440 = arith.maximumf %438, %439 : vector<2x676xf32>
    %441 = arith.truncf %440 : vector<2x676xf32> to vector<2x676xbf16>
    %c5_233 = arith.constant 5 : index
    %c0_234 = arith.constant 0 : index
    %c0_235 = arith.constant 0 : index
    %442 = vector.load %arg4[%c5_233, %c0_234, %c0_235] : memref<16x676x128xbf16, #tpu.memory_space<vmem>>, vector<1x676x128xbf16>
    %443 = vector.shape_cast %442 : vector<1x676x128xbf16> to vector<676x128xbf16>
    %cst_236 = arith.constant dense<0.000000e+00> : vector<2x128xf32>
    %444 = tpu.matmul %441, %443, %cst_236 {dimension_numbers = #tpu.dot_dimension_numbers<[1], [0], [0], [1], [0, 0, 1, 1], [], []>} : vector<2x676xbf16>, vector<676x128xbf16>, vector<2x128xf32> -> vector<2x128xf32>
    %445 = arith.addf %371, %444 : vector<2x128xf32>
    %c6_i32 = arith.constant 6 : i32
    %446 = arith.addi %0, %c6_i32 : i32
    %447 = arith.index_cast %446 : i32 to index
    %c0_237 = arith.constant 0 : index
    %448 = memref.load %arg1[%447, %c0_237] : memref<32x9xf32, #tpu.memory_space<smem>>
    %c0_238 = arith.constant 0 : index
    %c0_239 = arith.constant 0 : index
    %c0_240 = arith.constant 0 : index
    %449 = vector.load %arg3[%c0_238, %c0_239, %c0_240] : memref<9x2x676xf32, #tpu.memory_space<vmem>>, vector<1x2x676xf32>
    %450 = vector.shape_cast %449 : vector<1x2x676xf32> to vector<2x676xf32>
    %451 = vector.broadcast %448 : f32 to vector<2x676xf32>
    %452 = arith.mulf %451, %450 : vector<2x676xf32>
    %453 = arith.index_cast %446 : i32 to index
    %c1_241 = arith.constant 1 : index
    %454 = memref.load %arg1[%453, %c1_241] : memref<32x9xf32, #tpu.memory_space<smem>>
    %c1_242 = arith.constant 1 : index
    %c0_243 = arith.constant 0 : index
    %c0_244 = arith.constant 0 : index
    %455 = vector.load %arg3[%c1_242, %c0_243, %c0_244] : memref<9x2x676xf32, #tpu.memory_space<vmem>>, vector<1x2x676xf32>
    %456 = vector.shape_cast %455 : vector<1x2x676xf32> to vector<2x676xf32>
    %457 = vector.broadcast %454 : f32 to vector<2x676xf32>
    %458 = arith.mulf %457, %456 : vector<2x676xf32>
    %459 = arith.addf %452, %458 : vector<2x676xf32>
    %460 = arith.index_cast %446 : i32 to index
    %c2_245 = arith.constant 2 : index
    %461 = memref.load %arg1[%460, %c2_245] : memref<32x9xf32, #tpu.memory_space<smem>>
    %c2_246 = arith.constant 2 : index
    %c0_247 = arith.constant 0 : index
    %c0_248 = arith.constant 0 : index
    %462 = vector.load %arg3[%c2_246, %c0_247, %c0_248] : memref<9x2x676xf32, #tpu.memory_space<vmem>>, vector<1x2x676xf32>
    %463 = vector.shape_cast %462 : vector<1x2x676xf32> to vector<2x676xf32>
    %464 = vector.broadcast %461 : f32 to vector<2x676xf32>
    %465 = arith.mulf %464, %463 : vector<2x676xf32>
    %466 = arith.addf %459, %465 : vector<2x676xf32>
    %467 = arith.index_cast %446 : i32 to index
    %c3_249 = arith.constant 3 : index
    %468 = memref.load %arg1[%467, %c3_249] : memref<32x9xf32, #tpu.memory_space<smem>>
    %c3_250 = arith.constant 3 : index
    %c0_251 = arith.constant 0 : index
    %c0_252 = arith.constant 0 : index
    %469 = vector.load %arg3[%c3_250, %c0_251, %c0_252] : memref<9x2x676xf32, #tpu.memory_space<vmem>>, vector<1x2x676xf32>
    %470 = vector.shape_cast %469 : vector<1x2x676xf32> to vector<2x676xf32>
    %471 = vector.broadcast %468 : f32 to vector<2x676xf32>
    %472 = arith.mulf %471, %470 : vector<2x676xf32>
    %473 = arith.addf %466, %472 : vector<2x676xf32>
    %474 = arith.index_cast %446 : i32 to index
    %c4_253 = arith.constant 4 : index
    %475 = memref.load %arg1[%474, %c4_253] : memref<32x9xf32, #tpu.memory_space<smem>>
    %c4_254 = arith.constant 4 : index
    %c0_255 = arith.constant 0 : index
    %c0_256 = arith.constant 0 : index
    %476 = vector.load %arg3[%c4_254, %c0_255, %c0_256] : memref<9x2x676xf32, #tpu.memory_space<vmem>>, vector<1x2x676xf32>
    %477 = vector.shape_cast %476 : vector<1x2x676xf32> to vector<2x676xf32>
    %478 = vector.broadcast %475 : f32 to vector<2x676xf32>
    %479 = arith.mulf %478, %477 : vector<2x676xf32>
    %480 = arith.addf %473, %479 : vector<2x676xf32>
    %481 = arith.index_cast %446 : i32 to index
    %c5_257 = arith.constant 5 : index
    %482 = memref.load %arg1[%481, %c5_257] : memref<32x9xf32, #tpu.memory_space<smem>>
    %c5_258 = arith.constant 5 : index
    %c0_259 = arith.constant 0 : index
    %c0_260 = arith.constant 0 : index
    %483 = vector.load %arg3[%c5_258, %c0_259, %c0_260] : memref<9x2x676xf32, #tpu.memory_space<vmem>>, vector<1x2x676xf32>
    %484 = vector.shape_cast %483 : vector<1x2x676xf32> to vector<2x676xf32>
    %485 = vector.broadcast %482 : f32 to vector<2x676xf32>
    %486 = arith.mulf %485, %484 : vector<2x676xf32>
    %487 = arith.addf %480, %486 : vector<2x676xf32>
    %488 = arith.index_cast %446 : i32 to index
    %c6_261 = arith.constant 6 : index
    %489 = memref.load %arg1[%488, %c6_261] : memref<32x9xf32, #tpu.memory_space<smem>>
    %c6_262 = arith.constant 6 : index
    %c0_263 = arith.constant 0 : index
    %c0_264 = arith.constant 0 : index
    %490 = vector.load %arg3[%c6_262, %c0_263, %c0_264] : memref<9x2x676xf32, #tpu.memory_space<vmem>>, vector<1x2x676xf32>
    %491 = vector.shape_cast %490 : vector<1x2x676xf32> to vector<2x676xf32>
    %492 = vector.broadcast %489 : f32 to vector<2x676xf32>
    %493 = arith.mulf %492, %491 : vector<2x676xf32>
    %494 = arith.addf %487, %493 : vector<2x676xf32>
    %495 = arith.index_cast %446 : i32 to index
    %c7_265 = arith.constant 7 : index
    %496 = memref.load %arg1[%495, %c7_265] : memref<32x9xf32, #tpu.memory_space<smem>>
    %c7_266 = arith.constant 7 : index
    %c0_267 = arith.constant 0 : index
    %c0_268 = arith.constant 0 : index
    %497 = vector.load %arg3[%c7_266, %c0_267, %c0_268] : memref<9x2x676xf32, #tpu.memory_space<vmem>>, vector<1x2x676xf32>
    %498 = vector.shape_cast %497 : vector<1x2x676xf32> to vector<2x676xf32>
    %499 = vector.broadcast %496 : f32 to vector<2x676xf32>
    %500 = arith.mulf %499, %498 : vector<2x676xf32>
    %501 = arith.addf %494, %500 : vector<2x676xf32>
    %502 = arith.index_cast %446 : i32 to index
    %c8_269 = arith.constant 8 : index
    %503 = memref.load %arg1[%502, %c8_269] : memref<32x9xf32, #tpu.memory_space<smem>>
    %c8_270 = arith.constant 8 : index
    %c0_271 = arith.constant 0 : index
    %c0_272 = arith.constant 0 : index
    %504 = vector.load %arg3[%c8_270, %c0_271, %c0_272] : memref<9x2x676xf32, #tpu.memory_space<vmem>>, vector<1x2x676xf32>
    %505 = vector.shape_cast %504 : vector<1x2x676xf32> to vector<2x676xf32>
    %506 = vector.broadcast %503 : f32 to vector<2x676xf32>
    %507 = arith.mulf %506, %505 : vector<2x676xf32>
    %508 = arith.addf %501, %507 : vector<2x676xf32>
    %509 = arith.index_cast %446 : i32 to index
    %510 = memref.load %arg2[%509] : memref<32xf32, #tpu.memory_space<smem>>
    %511 = vector.broadcast %510 : f32 to vector<2x676xf32>
    %512 = arith.addf %508, %511 : vector<2x676xf32>
    %cst_273 = arith.constant 0.000000e+00 : f32
    %513 = vector.broadcast %cst_273 : f32 to vector<2x676xf32>
    %514 = arith.maximumf %512, %513 : vector<2x676xf32>
    %515 = arith.truncf %514 : vector<2x676xf32> to vector<2x676xbf16>
    %c6_274 = arith.constant 6 : index
    %c0_275 = arith.constant 0 : index
    %c0_276 = arith.constant 0 : index
    %516 = vector.load %arg4[%c6_274, %c0_275, %c0_276] : memref<16x676x128xbf16, #tpu.memory_space<vmem>>, vector<1x676x128xbf16>
    %517 = vector.shape_cast %516 : vector<1x676x128xbf16> to vector<676x128xbf16>
    %cst_277 = arith.constant dense<0.000000e+00> : vector<2x128xf32>
    %518 = tpu.matmul %515, %517, %cst_277 {dimension_numbers = #tpu.dot_dimension_numbers<[1], [0], [0], [1], [0, 0, 1, 1], [], []>} : vector<2x676xbf16>, vector<676x128xbf16>, vector<2x128xf32> -> vector<2x128xf32>
    %519 = arith.addf %445, %518 : vector<2x128xf32>
    %c7_i32 = arith.constant 7 : i32
    %520 = arith.addi %0, %c7_i32 : i32
    %521 = arith.index_cast %520 : i32 to index
    %c0_278 = arith.constant 0 : index
    %522 = memref.load %arg1[%521, %c0_278] : memref<32x9xf32, #tpu.memory_space<smem>>
    %c0_279 = arith.constant 0 : index
    %c0_280 = arith.constant 0 : index
    %c0_281 = arith.constant 0 : index
    %523 = vector.load %arg3[%c0_279, %c0_280, %c0_281] : memref<9x2x676xf32, #tpu.memory_space<vmem>>, vector<1x2x676xf32>
    %524 = vector.shape_cast %523 : vector<1x2x676xf32> to vector<2x676xf32>
    %525 = vector.broadcast %522 : f32 to vector<2x676xf32>
    %526 = arith.mulf %525, %524 : vector<2x676xf32>
    %527 = arith.index_cast %520 : i32 to index
    %c1_282 = arith.constant 1 : index
    %528 = memref.load %arg1[%527, %c1_282] : memref<32x9xf32, #tpu.memory_space<smem>>
    %c1_283 = arith.constant 1 : index
    %c0_284 = arith.constant 0 : index
    %c0_285 = arith.constant 0 : index
    %529 = vector.load %arg3[%c1_283, %c0_284, %c0_285] : memref<9x2x676xf32, #tpu.memory_space<vmem>>, vector<1x2x676xf32>
    %530 = vector.shape_cast %529 : vector<1x2x676xf32> to vector<2x676xf32>
    %531 = vector.broadcast %528 : f32 to vector<2x676xf32>
    %532 = arith.mulf %531, %530 : vector<2x676xf32>
    %533 = arith.addf %526, %532 : vector<2x676xf32>
    %534 = arith.index_cast %520 : i32 to index
    %c2_286 = arith.constant 2 : index
    %535 = memref.load %arg1[%534, %c2_286] : memref<32x9xf32, #tpu.memory_space<smem>>
    %c2_287 = arith.constant 2 : index
    %c0_288 = arith.constant 0 : index
    %c0_289 = arith.constant 0 : index
    %536 = vector.load %arg3[%c2_287, %c0_288, %c0_289] : memref<9x2x676xf32, #tpu.memory_space<vmem>>, vector<1x2x676xf32>
    %537 = vector.shape_cast %536 : vector<1x2x676xf32> to vector<2x676xf32>
    %538 = vector.broadcast %535 : f32 to vector<2x676xf32>
    %539 = arith.mulf %538, %537 : vector<2x676xf32>
    %540 = arith.addf %533, %539 : vector<2x676xf32>
    %541 = arith.index_cast %520 : i32 to index
    %c3_290 = arith.constant 3 : index
    %542 = memref.load %arg1[%541, %c3_290] : memref<32x9xf32, #tpu.memory_space<smem>>
    %c3_291 = arith.constant 3 : index
    %c0_292 = arith.constant 0 : index
    %c0_293 = arith.constant 0 : index
    %543 = vector.load %arg3[%c3_291, %c0_292, %c0_293] : memref<9x2x676xf32, #tpu.memory_space<vmem>>, vector<1x2x676xf32>
    %544 = vector.shape_cast %543 : vector<1x2x676xf32> to vector<2x676xf32>
    %545 = vector.broadcast %542 : f32 to vector<2x676xf32>
    %546 = arith.mulf %545, %544 : vector<2x676xf32>
    %547 = arith.addf %540, %546 : vector<2x676xf32>
    %548 = arith.index_cast %520 : i32 to index
    %c4_294 = arith.constant 4 : index
    %549 = memref.load %arg1[%548, %c4_294] : memref<32x9xf32, #tpu.memory_space<smem>>
    %c4_295 = arith.constant 4 : index
    %c0_296 = arith.constant 0 : index
    %c0_297 = arith.constant 0 : index
    %550 = vector.load %arg3[%c4_295, %c0_296, %c0_297] : memref<9x2x676xf32, #tpu.memory_space<vmem>>, vector<1x2x676xf32>
    %551 = vector.shape_cast %550 : vector<1x2x676xf32> to vector<2x676xf32>
    %552 = vector.broadcast %549 : f32 to vector<2x676xf32>
    %553 = arith.mulf %552, %551 : vector<2x676xf32>
    %554 = arith.addf %547, %553 : vector<2x676xf32>
    %555 = arith.index_cast %520 : i32 to index
    %c5_298 = arith.constant 5 : index
    %556 = memref.load %arg1[%555, %c5_298] : memref<32x9xf32, #tpu.memory_space<smem>>
    %c5_299 = arith.constant 5 : index
    %c0_300 = arith.constant 0 : index
    %c0_301 = arith.constant 0 : index
    %557 = vector.load %arg3[%c5_299, %c0_300, %c0_301] : memref<9x2x676xf32, #tpu.memory_space<vmem>>, vector<1x2x676xf32>
    %558 = vector.shape_cast %557 : vector<1x2x676xf32> to vector<2x676xf32>
    %559 = vector.broadcast %556 : f32 to vector<2x676xf32>
    %560 = arith.mulf %559, %558 : vector<2x676xf32>
    %561 = arith.addf %554, %560 : vector<2x676xf32>
    %562 = arith.index_cast %520 : i32 to index
    %c6_302 = arith.constant 6 : index
    %563 = memref.load %arg1[%562, %c6_302] : memref<32x9xf32, #tpu.memory_space<smem>>
    %c6_303 = arith.constant 6 : index
    %c0_304 = arith.constant 0 : index
    %c0_305 = arith.constant 0 : index
    %564 = vector.load %arg3[%c6_303, %c0_304, %c0_305] : memref<9x2x676xf32, #tpu.memory_space<vmem>>, vector<1x2x676xf32>
    %565 = vector.shape_cast %564 : vector<1x2x676xf32> to vector<2x676xf32>
    %566 = vector.broadcast %563 : f32 to vector<2x676xf32>
    %567 = arith.mulf %566, %565 : vector<2x676xf32>
    %568 = arith.addf %561, %567 : vector<2x676xf32>
    %569 = arith.index_cast %520 : i32 to index
    %c7_306 = arith.constant 7 : index
    %570 = memref.load %arg1[%569, %c7_306] : memref<32x9xf32, #tpu.memory_space<smem>>
    %c7_307 = arith.constant 7 : index
    %c0_308 = arith.constant 0 : index
    %c0_309 = arith.constant 0 : index
    %571 = vector.load %arg3[%c7_307, %c0_308, %c0_309] : memref<9x2x676xf32, #tpu.memory_space<vmem>>, vector<1x2x676xf32>
    %572 = vector.shape_cast %571 : vector<1x2x676xf32> to vector<2x676xf32>
    %573 = vector.broadcast %570 : f32 to vector<2x676xf32>
    %574 = arith.mulf %573, %572 : vector<2x676xf32>
    %575 = arith.addf %568, %574 : vector<2x676xf32>
    %576 = arith.index_cast %520 : i32 to index
    %c8_310 = arith.constant 8 : index
    %577 = memref.load %arg1[%576, %c8_310] : memref<32x9xf32, #tpu.memory_space<smem>>
    %c8_311 = arith.constant 8 : index
    %c0_312 = arith.constant 0 : index
    %c0_313 = arith.constant 0 : index
    %578 = vector.load %arg3[%c8_311, %c0_312, %c0_313] : memref<9x2x676xf32, #tpu.memory_space<vmem>>, vector<1x2x676xf32>
    %579 = vector.shape_cast %578 : vector<1x2x676xf32> to vector<2x676xf32>
    %580 = vector.broadcast %577 : f32 to vector<2x676xf32>
    %581 = arith.mulf %580, %579 : vector<2x676xf32>
    %582 = arith.addf %575, %581 : vector<2x676xf32>
    %583 = arith.index_cast %520 : i32 to index
    %584 = memref.load %arg2[%583] : memref<32xf32, #tpu.memory_space<smem>>
    %585 = vector.broadcast %584 : f32 to vector<2x676xf32>
    %586 = arith.addf %582, %585 : vector<2x676xf32>
    %cst_314 = arith.constant 0.000000e+00 : f32
    %587 = vector.broadcast %cst_314 : f32 to vector<2x676xf32>
    %588 = arith.maximumf %586, %587 : vector<2x676xf32>
    %589 = arith.truncf %588 : vector<2x676xf32> to vector<2x676xbf16>
    %c7_315 = arith.constant 7 : index
    %c0_316 = arith.constant 0 : index
    %c0_317 = arith.constant 0 : index
    %590 = vector.load %arg4[%c7_315, %c0_316, %c0_317] : memref<16x676x128xbf16, #tpu.memory_space<vmem>>, vector<1x676x128xbf16>
    %591 = vector.shape_cast %590 : vector<1x676x128xbf16> to vector<676x128xbf16>
    %cst_318 = arith.constant dense<0.000000e+00> : vector<2x128xf32>
    %592 = tpu.matmul %589, %591, %cst_318 {dimension_numbers = #tpu.dot_dimension_numbers<[1], [0], [0], [1], [0, 0, 1, 1], [], []>} : vector<2x676xbf16>, vector<676x128xbf16>, vector<2x128xf32> -> vector<2x128xf32>
    %593 = arith.addf %519, %592 : vector<2x128xf32>
    %c8_i32 = arith.constant 8 : i32
    %594 = arith.addi %0, %c8_i32 : i32
    %595 = arith.index_cast %594 : i32 to index
    %c0_319 = arith.constant 0 : index
    %596 = memref.load %arg1[%595, %c0_319] : memref<32x9xf32, #tpu.memory_space<smem>>
    %c0_320 = arith.constant 0 : index
    %c0_321 = arith.constant 0 : index
    %c0_322 = arith.constant 0 : index
    %597 = vector.load %arg3[%c0_320, %c0_321, %c0_322] : memref<9x2x676xf32, #tpu.memory_space<vmem>>, vector<1x2x676xf32>
    %598 = vector.shape_cast %597 : vector<1x2x676xf32> to vector<2x676xf32>
    %599 = vector.broadcast %596 : f32 to vector<2x676xf32>
    %600 = arith.mulf %599, %598 : vector<2x676xf32>
    %601 = arith.index_cast %594 : i32 to index
    %c1_323 = arith.constant 1 : index
    %602 = memref.load %arg1[%601, %c1_323] : memref<32x9xf32, #tpu.memory_space<smem>>
    %c1_324 = arith.constant 1 : index
    %c0_325 = arith.constant 0 : index
    %c0_326 = arith.constant 0 : index
    %603 = vector.load %arg3[%c1_324, %c0_325, %c0_326] : memref<9x2x676xf32, #tpu.memory_space<vmem>>, vector<1x2x676xf32>
    %604 = vector.shape_cast %603 : vector<1x2x676xf32> to vector<2x676xf32>
    %605 = vector.broadcast %602 : f32 to vector<2x676xf32>
    %606 = arith.mulf %605, %604 : vector<2x676xf32>
    %607 = arith.addf %600, %606 : vector<2x676xf32>
    %608 = arith.index_cast %594 : i32 to index
    %c2_327 = arith.constant 2 : index
    %609 = memref.load %arg1[%608, %c2_327] : memref<32x9xf32, #tpu.memory_space<smem>>
    %c2_328 = arith.constant 2 : index
    %c0_329 = arith.constant 0 : index
    %c0_330 = arith.constant 0 : index
    %610 = vector.load %arg3[%c2_328, %c0_329, %c0_330] : memref<9x2x676xf32, #tpu.memory_space<vmem>>, vector<1x2x676xf32>
    %611 = vector.shape_cast %610 : vector<1x2x676xf32> to vector<2x676xf32>
    %612 = vector.broadcast %609 : f32 to vector<2x676xf32>
    %613 = arith.mulf %612, %611 : vector<2x676xf32>
    %614 = arith.addf %607, %613 : vector<2x676xf32>
    %615 = arith.index_cast %594 : i32 to index
    %c3_331 = arith.constant 3 : index
    %616 = memref.load %arg1[%615, %c3_331] : memref<32x9xf32, #tpu.memory_space<smem>>
    %c3_332 = arith.constant 3 : index
    %c0_333 = arith.constant 0 : index
    %c0_334 = arith.constant 0 : index
    %617 = vector.load %arg3[%c3_332, %c0_333, %c0_334] : memref<9x2x676xf32, #tpu.memory_space<vmem>>, vector<1x2x676xf32>
    %618 = vector.shape_cast %617 : vector<1x2x676xf32> to vector<2x676xf32>
    %619 = vector.broadcast %616 : f32 to vector<2x676xf32>
    %620 = arith.mulf %619, %618 : vector<2x676xf32>
    %621 = arith.addf %614, %620 : vector<2x676xf32>
    %622 = arith.index_cast %594 : i32 to index
    %c4_335 = arith.constant 4 : index
    %623 = memref.load %arg1[%622, %c4_335] : memref<32x9xf32, #tpu.memory_space<smem>>
    %c4_336 = arith.constant 4 : index
    %c0_337 = arith.constant 0 : index
    %c0_338 = arith.constant 0 : index
    %624 = vector.load %arg3[%c4_336, %c0_337, %c0_338] : memref<9x2x676xf32, #tpu.memory_space<vmem>>, vector<1x2x676xf32>
    %625 = vector.shape_cast %624 : vector<1x2x676xf32> to vector<2x676xf32>
    %626 = vector.broadcast %623 : f32 to vector<2x676xf32>
    %627 = arith.mulf %626, %625 : vector<2x676xf32>
    %628 = arith.addf %621, %627 : vector<2x676xf32>
    %629 = arith.index_cast %594 : i32 to index
    %c5_339 = arith.constant 5 : index
    %630 = memref.load %arg1[%629, %c5_339] : memref<32x9xf32, #tpu.memory_space<smem>>
    %c5_340 = arith.constant 5 : index
    %c0_341 = arith.constant 0 : index
    %c0_342 = arith.constant 0 : index
    %631 = vector.load %arg3[%c5_340, %c0_341, %c0_342] : memref<9x2x676xf32, #tpu.memory_space<vmem>>, vector<1x2x676xf32>
    %632 = vector.shape_cast %631 : vector<1x2x676xf32> to vector<2x676xf32>
    %633 = vector.broadcast %630 : f32 to vector<2x676xf32>
    %634 = arith.mulf %633, %632 : vector<2x676xf32>
    %635 = arith.addf %628, %634 : vector<2x676xf32>
    %636 = arith.index_cast %594 : i32 to index
    %c6_343 = arith.constant 6 : index
    %637 = memref.load %arg1[%636, %c6_343] : memref<32x9xf32, #tpu.memory_space<smem>>
    %c6_344 = arith.constant 6 : index
    %c0_345 = arith.constant 0 : index
    %c0_346 = arith.constant 0 : index
    %638 = vector.load %arg3[%c6_344, %c0_345, %c0_346] : memref<9x2x676xf32, #tpu.memory_space<vmem>>, vector<1x2x676xf32>
    %639 = vector.shape_cast %638 : vector<1x2x676xf32> to vector<2x676xf32>
    %640 = vector.broadcast %637 : f32 to vector<2x676xf32>
    %641 = arith.mulf %640, %639 : vector<2x676xf32>
    %642 = arith.addf %635, %641 : vector<2x676xf32>
    %643 = arith.index_cast %594 : i32 to index
    %c7_347 = arith.constant 7 : index
    %644 = memref.load %arg1[%643, %c7_347] : memref<32x9xf32, #tpu.memory_space<smem>>
    %c7_348 = arith.constant 7 : index
    %c0_349 = arith.constant 0 : index
    %c0_350 = arith.constant 0 : index
    %645 = vector.load %arg3[%c7_348, %c0_349, %c0_350] : memref<9x2x676xf32, #tpu.memory_space<vmem>>, vector<1x2x676xf32>
    %646 = vector.shape_cast %645 : vector<1x2x676xf32> to vector<2x676xf32>
    %647 = vector.broadcast %644 : f32 to vector<2x676xf32>
    %648 = arith.mulf %647, %646 : vector<2x676xf32>
    %649 = arith.addf %642, %648 : vector<2x676xf32>
    %650 = arith.index_cast %594 : i32 to index
    %c8_351 = arith.constant 8 : index
    %651 = memref.load %arg1[%650, %c8_351] : memref<32x9xf32, #tpu.memory_space<smem>>
    %c8_352 = arith.constant 8 : index
    %c0_353 = arith.constant 0 : index
    %c0_354 = arith.constant 0 : index
    %652 = vector.load %arg3[%c8_352, %c0_353, %c0_354] : memref<9x2x676xf32, #tpu.memory_space<vmem>>, vector<1x2x676xf32>
    %653 = vector.shape_cast %652 : vector<1x2x676xf32> to vector<2x676xf32>
    %654 = vector.broadcast %651 : f32 to vector<2x676xf32>
    %655 = arith.mulf %654, %653 : vector<2x676xf32>
    %656 = arith.addf %649, %655 : vector<2x676xf32>
    %657 = arith.index_cast %594 : i32 to index
    %658 = memref.load %arg2[%657] : memref<32xf32, #tpu.memory_space<smem>>
    %659 = vector.broadcast %658 : f32 to vector<2x676xf32>
    %660 = arith.addf %656, %659 : vector<2x676xf32>
    %cst_355 = arith.constant 0.000000e+00 : f32
    %661 = vector.broadcast %cst_355 : f32 to vector<2x676xf32>
    %662 = arith.maximumf %660, %661 : vector<2x676xf32>
    %663 = arith.truncf %662 : vector<2x676xf32> to vector<2x676xbf16>
    %c8_356 = arith.constant 8 : index
    %c0_357 = arith.constant 0 : index
    %c0_358 = arith.constant 0 : index
    %664 = vector.load %arg4[%c8_356, %c0_357, %c0_358] : memref<16x676x128xbf16, #tpu.memory_space<vmem>>, vector<1x676x128xbf16>
    %665 = vector.shape_cast %664 : vector<1x676x128xbf16> to vector<676x128xbf16>
    %cst_359 = arith.constant dense<0.000000e+00> : vector<2x128xf32>
    %666 = tpu.matmul %663, %665, %cst_359 {dimension_numbers = #tpu.dot_dimension_numbers<[1], [0], [0], [1], [0, 0, 1, 1], [], []>} : vector<2x676xbf16>, vector<676x128xbf16>, vector<2x128xf32> -> vector<2x128xf32>
    %667 = arith.addf %593, %666 : vector<2x128xf32>
    %c9_i32 = arith.constant 9 : i32
    %668 = arith.addi %0, %c9_i32 : i32
    %669 = arith.index_cast %668 : i32 to index
    %c0_360 = arith.constant 0 : index
    %670 = memref.load %arg1[%669, %c0_360] : memref<32x9xf32, #tpu.memory_space<smem>>
    %c0_361 = arith.constant 0 : index
    %c0_362 = arith.constant 0 : index
    %c0_363 = arith.constant 0 : index
    %671 = vector.load %arg3[%c0_361, %c0_362, %c0_363] : memref<9x2x676xf32, #tpu.memory_space<vmem>>, vector<1x2x676xf32>
    %672 = vector.shape_cast %671 : vector<1x2x676xf32> to vector<2x676xf32>
    %673 = vector.broadcast %670 : f32 to vector<2x676xf32>
    %674 = arith.mulf %673, %672 : vector<2x676xf32>
    %675 = arith.index_cast %668 : i32 to index
    %c1_364 = arith.constant 1 : index
    %676 = memref.load %arg1[%675, %c1_364] : memref<32x9xf32, #tpu.memory_space<smem>>
    %c1_365 = arith.constant 1 : index
    %c0_366 = arith.constant 0 : index
    %c0_367 = arith.constant 0 : index
    %677 = vector.load %arg3[%c1_365, %c0_366, %c0_367] : memref<9x2x676xf32, #tpu.memory_space<vmem>>, vector<1x2x676xf32>
    %678 = vector.shape_cast %677 : vector<1x2x676xf32> to vector<2x676xf32>
    %679 = vector.broadcast %676 : f32 to vector<2x676xf32>
    %680 = arith.mulf %679, %678 : vector<2x676xf32>
    %681 = arith.addf %674, %680 : vector<2x676xf32>
    %682 = arith.index_cast %668 : i32 to index
    %c2_368 = arith.constant 2 : index
    %683 = memref.load %arg1[%682, %c2_368] : memref<32x9xf32, #tpu.memory_space<smem>>
    %c2_369 = arith.constant 2 : index
    %c0_370 = arith.constant 0 : index
    %c0_371 = arith.constant 0 : index
    %684 = vector.load %arg3[%c2_369, %c0_370, %c0_371] : memref<9x2x676xf32, #tpu.memory_space<vmem>>, vector<1x2x676xf32>
    %685 = vector.shape_cast %684 : vector<1x2x676xf32> to vector<2x676xf32>
    %686 = vector.broadcast %683 : f32 to vector<2x676xf32>
    %687 = arith.mulf %686, %685 : vector<2x676xf32>
    %688 = arith.addf %681, %687 : vector<2x676xf32>
    %689 = arith.index_cast %668 : i32 to index
    %c3_372 = arith.constant 3 : index
    %690 = memref.load %arg1[%689, %c3_372] : memref<32x9xf32, #tpu.memory_space<smem>>
    %c3_373 = arith.constant 3 : index
    %c0_374 = arith.constant 0 : index
    %c0_375 = arith.constant 0 : index
    %691 = vector.load %arg3[%c3_373, %c0_374, %c0_375] : memref<9x2x676xf32, #tpu.memory_space<vmem>>, vector<1x2x676xf32>
    %692 = vector.shape_cast %691 : vector<1x2x676xf32> to vector<2x676xf32>
    %693 = vector.broadcast %690 : f32 to vector<2x676xf32>
    %694 = arith.mulf %693, %692 : vector<2x676xf32>
    %695 = arith.addf %688, %694 : vector<2x676xf32>
    %696 = arith.index_cast %668 : i32 to index
    %c4_376 = arith.constant 4 : index
    %697 = memref.load %arg1[%696, %c4_376] : memref<32x9xf32, #tpu.memory_space<smem>>
    %c4_377 = arith.constant 4 : index
    %c0_378 = arith.constant 0 : index
    %c0_379 = arith.constant 0 : index
    %698 = vector.load %arg3[%c4_377, %c0_378, %c0_379] : memref<9x2x676xf32, #tpu.memory_space<vmem>>, vector<1x2x676xf32>
    %699 = vector.shape_cast %698 : vector<1x2x676xf32> to vector<2x676xf32>
    %700 = vector.broadcast %697 : f32 to vector<2x676xf32>
    %701 = arith.mulf %700, %699 : vector<2x676xf32>
    %702 = arith.addf %695, %701 : vector<2x676xf32>
    %703 = arith.index_cast %668 : i32 to index
    %c5_380 = arith.constant 5 : index
    %704 = memref.load %arg1[%703, %c5_380] : memref<32x9xf32, #tpu.memory_space<smem>>
    %c5_381 = arith.constant 5 : index
    %c0_382 = arith.constant 0 : index
    %c0_383 = arith.constant 0 : index
    %705 = vector.load %arg3[%c5_381, %c0_382, %c0_383] : memref<9x2x676xf32, #tpu.memory_space<vmem>>, vector<1x2x676xf32>
    %706 = vector.shape_cast %705 : vector<1x2x676xf32> to vector<2x676xf32>
    %707 = vector.broadcast %704 : f32 to vector<2x676xf32>
    %708 = arith.mulf %707, %706 : vector<2x676xf32>
    %709 = arith.addf %702, %708 : vector<2x676xf32>
    %710 = arith.index_cast %668 : i32 to index
    %c6_384 = arith.constant 6 : index
    %711 = memref.load %arg1[%710, %c6_384] : memref<32x9xf32, #tpu.memory_space<smem>>
    %c6_385 = arith.constant 6 : index
    %c0_386 = arith.constant 0 : index
    %c0_387 = arith.constant 0 : index
    %712 = vector.load %arg3[%c6_385, %c0_386, %c0_387] : memref<9x2x676xf32, #tpu.memory_space<vmem>>, vector<1x2x676xf32>
    %713 = vector.shape_cast %712 : vector<1x2x676xf32> to vector<2x676xf32>
    %714 = vector.broadcast %711 : f32 to vector<2x676xf32>
    %715 = arith.mulf %714, %713 : vector<2x676xf32>
    %716 = arith.addf %709, %715 : vector<2x676xf32>
    %717 = arith.index_cast %668 : i32 to index
    %c7_388 = arith.constant 7 : index
    %718 = memref.load %arg1[%717, %c7_388] : memref<32x9xf32, #tpu.memory_space<smem>>
    %c7_389 = arith.constant 7 : index
    %c0_390 = arith.constant 0 : index
    %c0_391 = arith.constant 0 : index
    %719 = vector.load %arg3[%c7_389, %c0_390, %c0_391] : memref<9x2x676xf32, #tpu.memory_space<vmem>>, vector<1x2x676xf32>
    %720 = vector.shape_cast %719 : vector<1x2x676xf32> to vector<2x676xf32>
    %721 = vector.broadcast %718 : f32 to vector<2x676xf32>
    %722 = arith.mulf %721, %720 : vector<2x676xf32>
    %723 = arith.addf %716, %722 : vector<2x676xf32>
    %724 = arith.index_cast %668 : i32 to index
    %c8_392 = arith.constant 8 : index
    %725 = memref.load %arg1[%724, %c8_392] : memref<32x9xf32, #tpu.memory_space<smem>>
    %c8_393 = arith.constant 8 : index
    %c0_394 = arith.constant 0 : index
    %c0_395 = arith.constant 0 : index
    %726 = vector.load %arg3[%c8_393, %c0_394, %c0_395] : memref<9x2x676xf32, #tpu.memory_space<vmem>>, vector<1x2x676xf32>
    %727 = vector.shape_cast %726 : vector<1x2x676xf32> to vector<2x676xf32>
    %728 = vector.broadcast %725 : f32 to vector<2x676xf32>
    %729 = arith.mulf %728, %727 : vector<2x676xf32>
    %730 = arith.addf %723, %729 : vector<2x676xf32>
    %731 = arith.index_cast %668 : i32 to index
    %732 = memref.load %arg2[%731] : memref<32xf32, #tpu.memory_space<smem>>
    %733 = vector.broadcast %732 : f32 to vector<2x676xf32>
    %734 = arith.addf %730, %733 : vector<2x676xf32>
    %cst_396 = arith.constant 0.000000e+00 : f32
    %735 = vector.broadcast %cst_396 : f32 to vector<2x676xf32>
    %736 = arith.maximumf %734, %735 : vector<2x676xf32>
    %737 = arith.truncf %736 : vector<2x676xf32> to vector<2x676xbf16>
    %c9 = arith.constant 9 : index
    %c0_397 = arith.constant 0 : index
    %c0_398 = arith.constant 0 : index
    %738 = vector.load %arg4[%c9, %c0_397, %c0_398] : memref<16x676x128xbf16, #tpu.memory_space<vmem>>, vector<1x676x128xbf16>
    %739 = vector.shape_cast %738 : vector<1x676x128xbf16> to vector<676x128xbf16>
    %cst_399 = arith.constant dense<0.000000e+00> : vector<2x128xf32>
    %740 = tpu.matmul %737, %739, %cst_399 {dimension_numbers = #tpu.dot_dimension_numbers<[1], [0], [0], [1], [0, 0, 1, 1], [], []>} : vector<2x676xbf16>, vector<676x128xbf16>, vector<2x128xf32> -> vector<2x128xf32>
    %741 = arith.addf %667, %740 : vector<2x128xf32>
    %c10_i32 = arith.constant 10 : i32
    %742 = arith.addi %0, %c10_i32 : i32
    %743 = arith.index_cast %742 : i32 to index
    %c0_400 = arith.constant 0 : index
    %744 = memref.load %arg1[%743, %c0_400] : memref<32x9xf32, #tpu.memory_space<smem>>
    %c0_401 = arith.constant 0 : index
    %c0_402 = arith.constant 0 : index
    %c0_403 = arith.constant 0 : index
    %745 = vector.load %arg3[%c0_401, %c0_402, %c0_403] : memref<9x2x676xf32, #tpu.memory_space<vmem>>, vector<1x2x676xf32>
    %746 = vector.shape_cast %745 : vector<1x2x676xf32> to vector<2x676xf32>
    %747 = vector.broadcast %744 : f32 to vector<2x676xf32>
    %748 = arith.mulf %747, %746 : vector<2x676xf32>
    %749 = arith.index_cast %742 : i32 to index
    %c1_404 = arith.constant 1 : index
    %750 = memref.load %arg1[%749, %c1_404] : memref<32x9xf32, #tpu.memory_space<smem>>
    %c1_405 = arith.constant 1 : index
    %c0_406 = arith.constant 0 : index
    %c0_407 = arith.constant 0 : index
    %751 = vector.load %arg3[%c1_405, %c0_406, %c0_407] : memref<9x2x676xf32, #tpu.memory_space<vmem>>, vector<1x2x676xf32>
    %752 = vector.shape_cast %751 : vector<1x2x676xf32> to vector<2x676xf32>
    %753 = vector.broadcast %750 : f32 to vector<2x676xf32>
    %754 = arith.mulf %753, %752 : vector<2x676xf32>
    %755 = arith.addf %748, %754 : vector<2x676xf32>
    %756 = arith.index_cast %742 : i32 to index
    %c2_408 = arith.constant 2 : index
    %757 = memref.load %arg1[%756, %c2_408] : memref<32x9xf32, #tpu.memory_space<smem>>
    %c2_409 = arith.constant 2 : index
    %c0_410 = arith.constant 0 : index
    %c0_411 = arith.constant 0 : index
    %758 = vector.load %arg3[%c2_409, %c0_410, %c0_411] : memref<9x2x676xf32, #tpu.memory_space<vmem>>, vector<1x2x676xf32>
    %759 = vector.shape_cast %758 : vector<1x2x676xf32> to vector<2x676xf32>
    %760 = vector.broadcast %757 : f32 to vector<2x676xf32>
    %761 = arith.mulf %760, %759 : vector<2x676xf32>
    %762 = arith.addf %755, %761 : vector<2x676xf32>
    %763 = arith.index_cast %742 : i32 to index
    %c3_412 = arith.constant 3 : index
    %764 = memref.load %arg1[%763, %c3_412] : memref<32x9xf32, #tpu.memory_space<smem>>
    %c3_413 = arith.constant 3 : index
    %c0_414 = arith.constant 0 : index
    %c0_415 = arith.constant 0 : index
    %765 = vector.load %arg3[%c3_413, %c0_414, %c0_415] : memref<9x2x676xf32, #tpu.memory_space<vmem>>, vector<1x2x676xf32>
    %766 = vector.shape_cast %765 : vector<1x2x676xf32> to vector<2x676xf32>
    %767 = vector.broadcast %764 : f32 to vector<2x676xf32>
    %768 = arith.mulf %767, %766 : vector<2x676xf32>
    %769 = arith.addf %762, %768 : vector<2x676xf32>
    %770 = arith.index_cast %742 : i32 to index
    %c4_416 = arith.constant 4 : index
    %771 = memref.load %arg1[%770, %c4_416] : memref<32x9xf32, #tpu.memory_space<smem>>
    %c4_417 = arith.constant 4 : index
    %c0_418 = arith.constant 0 : index
    %c0_419 = arith.constant 0 : index
    %772 = vector.load %arg3[%c4_417, %c0_418, %c0_419] : memref<9x2x676xf32, #tpu.memory_space<vmem>>, vector<1x2x676xf32>
    %773 = vector.shape_cast %772 : vector<1x2x676xf32> to vector<2x676xf32>
    %774 = vector.broadcast %771 : f32 to vector<2x676xf32>
    %775 = arith.mulf %774, %773 : vector<2x676xf32>
    %776 = arith.addf %769, %775 : vector<2x676xf32>
    %777 = arith.index_cast %742 : i32 to index
    %c5_420 = arith.constant 5 : index
    %778 = memref.load %arg1[%777, %c5_420] : memref<32x9xf32, #tpu.memory_space<smem>>
    %c5_421 = arith.constant 5 : index
    %c0_422 = arith.constant 0 : index
    %c0_423 = arith.constant 0 : index
    %779 = vector.load %arg3[%c5_421, %c0_422, %c0_423] : memref<9x2x676xf32, #tpu.memory_space<vmem>>, vector<1x2x676xf32>
    %780 = vector.shape_cast %779 : vector<1x2x676xf32> to vector<2x676xf32>
    %781 = vector.broadcast %778 : f32 to vector<2x676xf32>
    %782 = arith.mulf %781, %780 : vector<2x676xf32>
    %783 = arith.addf %776, %782 : vector<2x676xf32>
    %784 = arith.index_cast %742 : i32 to index
    %c6_424 = arith.constant 6 : index
    %785 = memref.load %arg1[%784, %c6_424] : memref<32x9xf32, #tpu.memory_space<smem>>
    %c6_425 = arith.constant 6 : index
    %c0_426 = arith.constant 0 : index
    %c0_427 = arith.constant 0 : index
    %786 = vector.load %arg3[%c6_425, %c0_426, %c0_427] : memref<9x2x676xf32, #tpu.memory_space<vmem>>, vector<1x2x676xf32>
    %787 = vector.shape_cast %786 : vector<1x2x676xf32> to vector<2x676xf32>
    %788 = vector.broadcast %785 : f32 to vector<2x676xf32>
    %789 = arith.mulf %788, %787 : vector<2x676xf32>
    %790 = arith.addf %783, %789 : vector<2x676xf32>
    %791 = arith.index_cast %742 : i32 to index
    %c7_428 = arith.constant 7 : index
    %792 = memref.load %arg1[%791, %c7_428] : memref<32x9xf32, #tpu.memory_space<smem>>
    %c7_429 = arith.constant 7 : index
    %c0_430 = arith.constant 0 : index
    %c0_431 = arith.constant 0 : index
    %793 = vector.load %arg3[%c7_429, %c0_430, %c0_431] : memref<9x2x676xf32, #tpu.memory_space<vmem>>, vector<1x2x676xf32>
    %794 = vector.shape_cast %793 : vector<1x2x676xf32> to vector<2x676xf32>
    %795 = vector.broadcast %792 : f32 to vector<2x676xf32>
    %796 = arith.mulf %795, %794 : vector<2x676xf32>
    %797 = arith.addf %790, %796 : vector<2x676xf32>
    %798 = arith.index_cast %742 : i32 to index
    %c8_432 = arith.constant 8 : index
    %799 = memref.load %arg1[%798, %c8_432] : memref<32x9xf32, #tpu.memory_space<smem>>
    %c8_433 = arith.constant 8 : index
    %c0_434 = arith.constant 0 : index
    %c0_435 = arith.constant 0 : index
    %800 = vector.load %arg3[%c8_433, %c0_434, %c0_435] : memref<9x2x676xf32, #tpu.memory_space<vmem>>, vector<1x2x676xf32>
    %801 = vector.shape_cast %800 : vector<1x2x676xf32> to vector<2x676xf32>
    %802 = vector.broadcast %799 : f32 to vector<2x676xf32>
    %803 = arith.mulf %802, %801 : vector<2x676xf32>
    %804 = arith.addf %797, %803 : vector<2x676xf32>
    %805 = arith.index_cast %742 : i32 to index
    %806 = memref.load %arg2[%805] : memref<32xf32, #tpu.memory_space<smem>>
    %807 = vector.broadcast %806 : f32 to vector<2x676xf32>
    %808 = arith.addf %804, %807 : vector<2x676xf32>
    %cst_436 = arith.constant 0.000000e+00 : f32
    %809 = vector.broadcast %cst_436 : f32 to vector<2x676xf32>
    %810 = arith.maximumf %808, %809 : vector<2x676xf32>
    %811 = arith.truncf %810 : vector<2x676xf32> to vector<2x676xbf16>
    %c10 = arith.constant 10 : index
    %c0_437 = arith.constant 0 : index
    %c0_438 = arith.constant 0 : index
    %812 = vector.load %arg4[%c10, %c0_437, %c0_438] : memref<16x676x128xbf16, #tpu.memory_space<vmem>>, vector<1x676x128xbf16>
    %813 = vector.shape_cast %812 : vector<1x676x128xbf16> to vector<676x128xbf16>
    %cst_439 = arith.constant dense<0.000000e+00> : vector<2x128xf32>
    %814 = tpu.matmul %811, %813, %cst_439 {dimension_numbers = #tpu.dot_dimension_numbers<[1], [0], [0], [1], [0, 0, 1, 1], [], []>} : vector<2x676xbf16>, vector<676x128xbf16>, vector<2x128xf32> -> vector<2x128xf32>
    %815 = arith.addf %741, %814 : vector<2x128xf32>
    %c11_i32 = arith.constant 11 : i32
    %816 = arith.addi %0, %c11_i32 : i32
    %817 = arith.index_cast %816 : i32 to index
    %c0_440 = arith.constant 0 : index
    %818 = memref.load %arg1[%817, %c0_440] : memref<32x9xf32, #tpu.memory_space<smem>>
    %c0_441 = arith.constant 0 : index
    %c0_442 = arith.constant 0 : index
    %c0_443 = arith.constant 0 : index
    %819 = vector.load %arg3[%c0_441, %c0_442, %c0_443] : memref<9x2x676xf32, #tpu.memory_space<vmem>>, vector<1x2x676xf32>
    %820 = vector.shape_cast %819 : vector<1x2x676xf32> to vector<2x676xf32>
    %821 = vector.broadcast %818 : f32 to vector<2x676xf32>
    %822 = arith.mulf %821, %820 : vector<2x676xf32>
    %823 = arith.index_cast %816 : i32 to index
    %c1_444 = arith.constant 1 : index
    %824 = memref.load %arg1[%823, %c1_444] : memref<32x9xf32, #tpu.memory_space<smem>>
    %c1_445 = arith.constant 1 : index
    %c0_446 = arith.constant 0 : index
    %c0_447 = arith.constant 0 : index
    %825 = vector.load %arg3[%c1_445, %c0_446, %c0_447] : memref<9x2x676xf32, #tpu.memory_space<vmem>>, vector<1x2x676xf32>
    %826 = vector.shape_cast %825 : vector<1x2x676xf32> to vector<2x676xf32>
    %827 = vector.broadcast %824 : f32 to vector<2x676xf32>
    %828 = arith.mulf %827, %826 : vector<2x676xf32>
    %829 = arith.addf %822, %828 : vector<2x676xf32>
    %830 = arith.index_cast %816 : i32 to index
    %c2_448 = arith.constant 2 : index
    %831 = memref.load %arg1[%830, %c2_448] : memref<32x9xf32, #tpu.memory_space<smem>>
    %c2_449 = arith.constant 2 : index
    %c0_450 = arith.constant 0 : index
    %c0_451 = arith.constant 0 : index
    %832 = vector.load %arg3[%c2_449, %c0_450, %c0_451] : memref<9x2x676xf32, #tpu.memory_space<vmem>>, vector<1x2x676xf32>
    %833 = vector.shape_cast %832 : vector<1x2x676xf32> to vector<2x676xf32>
    %834 = vector.broadcast %831 : f32 to vector<2x676xf32>
    %835 = arith.mulf %834, %833 : vector<2x676xf32>
    %836 = arith.addf %829, %835 : vector<2x676xf32>
    %837 = arith.index_cast %816 : i32 to index
    %c3_452 = arith.constant 3 : index
    %838 = memref.load %arg1[%837, %c3_452] : memref<32x9xf32, #tpu.memory_space<smem>>
    %c3_453 = arith.constant 3 : index
    %c0_454 = arith.constant 0 : index
    %c0_455 = arith.constant 0 : index
    %839 = vector.load %arg3[%c3_453, %c0_454, %c0_455] : memref<9x2x676xf32, #tpu.memory_space<vmem>>, vector<1x2x676xf32>
    %840 = vector.shape_cast %839 : vector<1x2x676xf32> to vector<2x676xf32>
    %841 = vector.broadcast %838 : f32 to vector<2x676xf32>
    %842 = arith.mulf %841, %840 : vector<2x676xf32>
    %843 = arith.addf %836, %842 : vector<2x676xf32>
    %844 = arith.index_cast %816 : i32 to index
    %c4_456 = arith.constant 4 : index
    %845 = memref.load %arg1[%844, %c4_456] : memref<32x9xf32, #tpu.memory_space<smem>>
    %c4_457 = arith.constant 4 : index
    %c0_458 = arith.constant 0 : index
    %c0_459 = arith.constant 0 : index
    %846 = vector.load %arg3[%c4_457, %c0_458, %c0_459] : memref<9x2x676xf32, #tpu.memory_space<vmem>>, vector<1x2x676xf32>
    %847 = vector.shape_cast %846 : vector<1x2x676xf32> to vector<2x676xf32>
    %848 = vector.broadcast %845 : f32 to vector<2x676xf32>
    %849 = arith.mulf %848, %847 : vector<2x676xf32>
    %850 = arith.addf %843, %849 : vector<2x676xf32>
    %851 = arith.index_cast %816 : i32 to index
    %c5_460 = arith.constant 5 : index
    %852 = memref.load %arg1[%851, %c5_460] : memref<32x9xf32, #tpu.memory_space<smem>>
    %c5_461 = arith.constant 5 : index
    %c0_462 = arith.constant 0 : index
    %c0_463 = arith.constant 0 : index
    %853 = vector.load %arg3[%c5_461, %c0_462, %c0_463] : memref<9x2x676xf32, #tpu.memory_space<vmem>>, vector<1x2x676xf32>
    %854 = vector.shape_cast %853 : vector<1x2x676xf32> to vector<2x676xf32>
    %855 = vector.broadcast %852 : f32 to vector<2x676xf32>
    %856 = arith.mulf %855, %854 : vector<2x676xf32>
    %857 = arith.addf %850, %856 : vector<2x676xf32>
    %858 = arith.index_cast %816 : i32 to index
    %c6_464 = arith.constant 6 : index
    %859 = memref.load %arg1[%858, %c6_464] : memref<32x9xf32, #tpu.memory_space<smem>>
    %c6_465 = arith.constant 6 : index
    %c0_466 = arith.constant 0 : index
    %c0_467 = arith.constant 0 : index
    %860 = vector.load %arg3[%c6_465, %c0_466, %c0_467] : memref<9x2x676xf32, #tpu.memory_space<vmem>>, vector<1x2x676xf32>
    %861 = vector.shape_cast %860 : vector<1x2x676xf32> to vector<2x676xf32>
    %862 = vector.broadcast %859 : f32 to vector<2x676xf32>
    %863 = arith.mulf %862, %861 : vector<2x676xf32>
    %864 = arith.addf %857, %863 : vector<2x676xf32>
    %865 = arith.index_cast %816 : i32 to index
    %c7_468 = arith.constant 7 : index
    %866 = memref.load %arg1[%865, %c7_468] : memref<32x9xf32, #tpu.memory_space<smem>>
    %c7_469 = arith.constant 7 : index
    %c0_470 = arith.constant 0 : index
    %c0_471 = arith.constant 0 : index
    %867 = vector.load %arg3[%c7_469, %c0_470, %c0_471] : memref<9x2x676xf32, #tpu.memory_space<vmem>>, vector<1x2x676xf32>
    %868 = vector.shape_cast %867 : vector<1x2x676xf32> to vector<2x676xf32>
    %869 = vector.broadcast %866 : f32 to vector<2x676xf32>
    %870 = arith.mulf %869, %868 : vector<2x676xf32>
    %871 = arith.addf %864, %870 : vector<2x676xf32>
    %872 = arith.index_cast %816 : i32 to index
    %c8_472 = arith.constant 8 : index
    %873 = memref.load %arg1[%872, %c8_472] : memref<32x9xf32, #tpu.memory_space<smem>>
    %c8_473 = arith.constant 8 : index
    %c0_474 = arith.constant 0 : index
    %c0_475 = arith.constant 0 : index
    %874 = vector.load %arg3[%c8_473, %c0_474, %c0_475] : memref<9x2x676xf32, #tpu.memory_space<vmem>>, vector<1x2x676xf32>
    %875 = vector.shape_cast %874 : vector<1x2x676xf32> to vector<2x676xf32>
    %876 = vector.broadcast %873 : f32 to vector<2x676xf32>
    %877 = arith.mulf %876, %875 : vector<2x676xf32>
    %878 = arith.addf %871, %877 : vector<2x676xf32>
    %879 = arith.index_cast %816 : i32 to index
    %880 = memref.load %arg2[%879] : memref<32xf32, #tpu.memory_space<smem>>
    %881 = vector.broadcast %880 : f32 to vector<2x676xf32>
    %882 = arith.addf %878, %881 : vector<2x676xf32>
    %cst_476 = arith.constant 0.000000e+00 : f32
    %883 = vector.broadcast %cst_476 : f32 to vector<2x676xf32>
    %884 = arith.maximumf %882, %883 : vector<2x676xf32>
    %885 = arith.truncf %884 : vector<2x676xf32> to vector<2x676xbf16>
    %c11 = arith.constant 11 : index
    %c0_477 = arith.constant 0 : index
    %c0_478 = arith.constant 0 : index
    %886 = vector.load %arg4[%c11, %c0_477, %c0_478] : memref<16x676x128xbf16, #tpu.memory_space<vmem>>, vector<1x676x128xbf16>
    %887 = vector.shape_cast %886 : vector<1x676x128xbf16> to vector<676x128xbf16>
    %cst_479 = arith.constant dense<0.000000e+00> : vector<2x128xf32>
    %888 = tpu.matmul %885, %887, %cst_479 {dimension_numbers = #tpu.dot_dimension_numbers<[1], [0], [0], [1], [0, 0, 1, 1], [], []>} : vector<2x676xbf16>, vector<676x128xbf16>, vector<2x128xf32> -> vector<2x128xf32>
    %889 = arith.addf %815, %888 : vector<2x128xf32>
    %c12_i32 = arith.constant 12 : i32
    %890 = arith.addi %0, %c12_i32 : i32
    %891 = arith.index_cast %890 : i32 to index
    %c0_480 = arith.constant 0 : index
    %892 = memref.load %arg1[%891, %c0_480] : memref<32x9xf32, #tpu.memory_space<smem>>
    %c0_481 = arith.constant 0 : index
    %c0_482 = arith.constant 0 : index
    %c0_483 = arith.constant 0 : index
    %893 = vector.load %arg3[%c0_481, %c0_482, %c0_483] : memref<9x2x676xf32, #tpu.memory_space<vmem>>, vector<1x2x676xf32>
    %894 = vector.shape_cast %893 : vector<1x2x676xf32> to vector<2x676xf32>
    %895 = vector.broadcast %892 : f32 to vector<2x676xf32>
    %896 = arith.mulf %895, %894 : vector<2x676xf32>
    %897 = arith.index_cast %890 : i32 to index
    %c1_484 = arith.constant 1 : index
    %898 = memref.load %arg1[%897, %c1_484] : memref<32x9xf32, #tpu.memory_space<smem>>
    %c1_485 = arith.constant 1 : index
    %c0_486 = arith.constant 0 : index
    %c0_487 = arith.constant 0 : index
    %899 = vector.load %arg3[%c1_485, %c0_486, %c0_487] : memref<9x2x676xf32, #tpu.memory_space<vmem>>, vector<1x2x676xf32>
    %900 = vector.shape_cast %899 : vector<1x2x676xf32> to vector<2x676xf32>
    %901 = vector.broadcast %898 : f32 to vector<2x676xf32>
    %902 = arith.mulf %901, %900 : vector<2x676xf32>
    %903 = arith.addf %896, %902 : vector<2x676xf32>
    %904 = arith.index_cast %890 : i32 to index
    %c2_488 = arith.constant 2 : index
    %905 = memref.load %arg1[%904, %c2_488] : memref<32x9xf32, #tpu.memory_space<smem>>
    %c2_489 = arith.constant 2 : index
    %c0_490 = arith.constant 0 : index
    %c0_491 = arith.constant 0 : index
    %906 = vector.load %arg3[%c2_489, %c0_490, %c0_491] : memref<9x2x676xf32, #tpu.memory_space<vmem>>, vector<1x2x676xf32>
    %907 = vector.shape_cast %906 : vector<1x2x676xf32> to vector<2x676xf32>
    %908 = vector.broadcast %905 : f32 to vector<2x676xf32>
    %909 = arith.mulf %908, %907 : vector<2x676xf32>
    %910 = arith.addf %903, %909 : vector<2x676xf32>
    %911 = arith.index_cast %890 : i32 to index
    %c3_492 = arith.constant 3 : index
    %912 = memref.load %arg1[%911, %c3_492] : memref<32x9xf32, #tpu.memory_space<smem>>
    %c3_493 = arith.constant 3 : index
    %c0_494 = arith.constant 0 : index
    %c0_495 = arith.constant 0 : index
    %913 = vector.load %arg3[%c3_493, %c0_494, %c0_495] : memref<9x2x676xf32, #tpu.memory_space<vmem>>, vector<1x2x676xf32>
    %914 = vector.shape_cast %913 : vector<1x2x676xf32> to vector<2x676xf32>
    %915 = vector.broadcast %912 : f32 to vector<2x676xf32>
    %916 = arith.mulf %915, %914 : vector<2x676xf32>
    %917 = arith.addf %910, %916 : vector<2x676xf32>
    %918 = arith.index_cast %890 : i32 to index
    %c4_496 = arith.constant 4 : index
    %919 = memref.load %arg1[%918, %c4_496] : memref<32x9xf32, #tpu.memory_space<smem>>
    %c4_497 = arith.constant 4 : index
    %c0_498 = arith.constant 0 : index
    %c0_499 = arith.constant 0 : index
    %920 = vector.load %arg3[%c4_497, %c0_498, %c0_499] : memref<9x2x676xf32, #tpu.memory_space<vmem>>, vector<1x2x676xf32>
    %921 = vector.shape_cast %920 : vector<1x2x676xf32> to vector<2x676xf32>
    %922 = vector.broadcast %919 : f32 to vector<2x676xf32>
    %923 = arith.mulf %922, %921 : vector<2x676xf32>
    %924 = arith.addf %917, %923 : vector<2x676xf32>
    %925 = arith.index_cast %890 : i32 to index
    %c5_500 = arith.constant 5 : index
    %926 = memref.load %arg1[%925, %c5_500] : memref<32x9xf32, #tpu.memory_space<smem>>
    %c5_501 = arith.constant 5 : index
    %c0_502 = arith.constant 0 : index
    %c0_503 = arith.constant 0 : index
    %927 = vector.load %arg3[%c5_501, %c0_502, %c0_503] : memref<9x2x676xf32, #tpu.memory_space<vmem>>, vector<1x2x676xf32>
    %928 = vector.shape_cast %927 : vector<1x2x676xf32> to vector<2x676xf32>
    %929 = vector.broadcast %926 : f32 to vector<2x676xf32>
    %930 = arith.mulf %929, %928 : vector<2x676xf32>
    %931 = arith.addf %924, %930 : vector<2x676xf32>
    %932 = arith.index_cast %890 : i32 to index
    %c6_504 = arith.constant 6 : index
    %933 = memref.load %arg1[%932, %c6_504] : memref<32x9xf32, #tpu.memory_space<smem>>
    %c6_505 = arith.constant 6 : index
    %c0_506 = arith.constant 0 : index
    %c0_507 = arith.constant 0 : index
    %934 = vector.load %arg3[%c6_505, %c0_506, %c0_507] : memref<9x2x676xf32, #tpu.memory_space<vmem>>, vector<1x2x676xf32>
    %935 = vector.shape_cast %934 : vector<1x2x676xf32> to vector<2x676xf32>
    %936 = vector.broadcast %933 : f32 to vector<2x676xf32>
    %937 = arith.mulf %936, %935 : vector<2x676xf32>
    %938 = arith.addf %931, %937 : vector<2x676xf32>
    %939 = arith.index_cast %890 : i32 to index
    %c7_508 = arith.constant 7 : index
    %940 = memref.load %arg1[%939, %c7_508] : memref<32x9xf32, #tpu.memory_space<smem>>
    %c7_509 = arith.constant 7 : index
    %c0_510 = arith.constant 0 : index
    %c0_511 = arith.constant 0 : index
    %941 = vector.load %arg3[%c7_509, %c0_510, %c0_511] : memref<9x2x676xf32, #tpu.memory_space<vmem>>, vector<1x2x676xf32>
    %942 = vector.shape_cast %941 : vector<1x2x676xf32> to vector<2x676xf32>
    %943 = vector.broadcast %940 : f32 to vector<2x676xf32>
    %944 = arith.mulf %943, %942 : vector<2x676xf32>
    %945 = arith.addf %938, %944 : vector<2x676xf32>
    %946 = arith.index_cast %890 : i32 to index
    %c8_512 = arith.constant 8 : index
    %947 = memref.load %arg1[%946, %c8_512] : memref<32x9xf32, #tpu.memory_space<smem>>
    %c8_513 = arith.constant 8 : index
    %c0_514 = arith.constant 0 : index
    %c0_515 = arith.constant 0 : index
    %948 = vector.load %arg3[%c8_513, %c0_514, %c0_515] : memref<9x2x676xf32, #tpu.memory_space<vmem>>, vector<1x2x676xf32>
    %949 = vector.shape_cast %948 : vector<1x2x676xf32> to vector<2x676xf32>
    %950 = vector.broadcast %947 : f32 to vector<2x676xf32>
    %951 = arith.mulf %950, %949 : vector<2x676xf32>
    %952 = arith.addf %945, %951 : vector<2x676xf32>
    %953 = arith.index_cast %890 : i32 to index
    %954 = memref.load %arg2[%953] : memref<32xf32, #tpu.memory_space<smem>>
    %955 = vector.broadcast %954 : f32 to vector<2x676xf32>
    %956 = arith.addf %952, %955 : vector<2x676xf32>
    %cst_516 = arith.constant 0.000000e+00 : f32
    %957 = vector.broadcast %cst_516 : f32 to vector<2x676xf32>
    %958 = arith.maximumf %956, %957 : vector<2x676xf32>
    %959 = arith.truncf %958 : vector<2x676xf32> to vector<2x676xbf16>
    %c12 = arith.constant 12 : index
    %c0_517 = arith.constant 0 : index
    %c0_518 = arith.constant 0 : index
    %960 = vector.load %arg4[%c12, %c0_517, %c0_518] : memref<16x676x128xbf16, #tpu.memory_space<vmem>>, vector<1x676x128xbf16>
    %961 = vector.shape_cast %960 : vector<1x676x128xbf16> to vector<676x128xbf16>
    %cst_519 = arith.constant dense<0.000000e+00> : vector<2x128xf32>
    %962 = tpu.matmul %959, %961, %cst_519 {dimension_numbers = #tpu.dot_dimension_numbers<[1], [0], [0], [1], [0, 0, 1, 1], [], []>} : vector<2x676xbf16>, vector<676x128xbf16>, vector<2x128xf32> -> vector<2x128xf32>
    %963 = arith.addf %889, %962 : vector<2x128xf32>
    %c13_i32 = arith.constant 13 : i32
    %964 = arith.addi %0, %c13_i32 : i32
    %965 = arith.index_cast %964 : i32 to index
    %c0_520 = arith.constant 0 : index
    %966 = memref.load %arg1[%965, %c0_520] : memref<32x9xf32, #tpu.memory_space<smem>>
    %c0_521 = arith.constant 0 : index
    %c0_522 = arith.constant 0 : index
    %c0_523 = arith.constant 0 : index
    %967 = vector.load %arg3[%c0_521, %c0_522, %c0_523] : memref<9x2x676xf32, #tpu.memory_space<vmem>>, vector<1x2x676xf32>
    %968 = vector.shape_cast %967 : vector<1x2x676xf32> to vector<2x676xf32>
    %969 = vector.broadcast %966 : f32 to vector<2x676xf32>
    %970 = arith.mulf %969, %968 : vector<2x676xf32>
    %971 = arith.index_cast %964 : i32 to index
    %c1_524 = arith.constant 1 : index
    %972 = memref.load %arg1[%971, %c1_524] : memref<32x9xf32, #tpu.memory_space<smem>>
    %c1_525 = arith.constant 1 : index
    %c0_526 = arith.constant 0 : index
    %c0_527 = arith.constant 0 : index
    %973 = vector.load %arg3[%c1_525, %c0_526, %c0_527] : memref<9x2x676xf32, #tpu.memory_space<vmem>>, vector<1x2x676xf32>
    %974 = vector.shape_cast %973 : vector<1x2x676xf32> to vector<2x676xf32>
    %975 = vector.broadcast %972 : f32 to vector<2x676xf32>
    %976 = arith.mulf %975, %974 : vector<2x676xf32>
    %977 = arith.addf %970, %976 : vector<2x676xf32>
    %978 = arith.index_cast %964 : i32 to index
    %c2_528 = arith.constant 2 : index
    %979 = memref.load %arg1[%978, %c2_528] : memref<32x9xf32, #tpu.memory_space<smem>>
    %c2_529 = arith.constant 2 : index
    %c0_530 = arith.constant 0 : index
    %c0_531 = arith.constant 0 : index
    %980 = vector.load %arg3[%c2_529, %c0_530, %c0_531] : memref<9x2x676xf32, #tpu.memory_space<vmem>>, vector<1x2x676xf32>
    %981 = vector.shape_cast %980 : vector<1x2x676xf32> to vector<2x676xf32>
    %982 = vector.broadcast %979 : f32 to vector<2x676xf32>
    %983 = arith.mulf %982, %981 : vector<2x676xf32>
    %984 = arith.addf %977, %983 : vector<2x676xf32>
    %985 = arith.index_cast %964 : i32 to index
    %c3_532 = arith.constant 3 : index
    %986 = memref.load %arg1[%985, %c3_532] : memref<32x9xf32, #tpu.memory_space<smem>>
    %c3_533 = arith.constant 3 : index
    %c0_534 = arith.constant 0 : index
    %c0_535 = arith.constant 0 : index
    %987 = vector.load %arg3[%c3_533, %c0_534, %c0_535] : memref<9x2x676xf32, #tpu.memory_space<vmem>>, vector<1x2x676xf32>
    %988 = vector.shape_cast %987 : vector<1x2x676xf32> to vector<2x676xf32>
    %989 = vector.broadcast %986 : f32 to vector<2x676xf32>
    %990 = arith.mulf %989, %988 : vector<2x676xf32>
    %991 = arith.addf %984, %990 : vector<2x676xf32>
    %992 = arith.index_cast %964 : i32 to index
    %c4_536 = arith.constant 4 : index
    %993 = memref.load %arg1[%992, %c4_536] : memref<32x9xf32, #tpu.memory_space<smem>>
    %c4_537 = arith.constant 4 : index
    %c0_538 = arith.constant 0 : index
    %c0_539 = arith.constant 0 : index
    %994 = vector.load %arg3[%c4_537, %c0_538, %c0_539] : memref<9x2x676xf32, #tpu.memory_space<vmem>>, vector<1x2x676xf32>
    %995 = vector.shape_cast %994 : vector<1x2x676xf32> to vector<2x676xf32>
    %996 = vector.broadcast %993 : f32 to vector<2x676xf32>
    %997 = arith.mulf %996, %995 : vector<2x676xf32>
    %998 = arith.addf %991, %997 : vector<2x676xf32>
    %999 = arith.index_cast %964 : i32 to index
    %c5_540 = arith.constant 5 : index
    %1000 = memref.load %arg1[%999, %c5_540] : memref<32x9xf32, #tpu.memory_space<smem>>
    %c5_541 = arith.constant 5 : index
    %c0_542 = arith.constant 0 : index
    %c0_543 = arith.constant 0 : index
    %1001 = vector.load %arg3[%c5_541, %c0_542, %c0_543] : memref<9x2x676xf32, #tpu.memory_space<vmem>>, vector<1x2x676xf32>
    %1002 = vector.shape_cast %1001 : vector<1x2x676xf32> to vector<2x676xf32>
    %1003 = vector.broadcast %1000 : f32 to vector<2x676xf32>
    %1004 = arith.mulf %1003, %1002 : vector<2x676xf32>
    %1005 = arith.addf %998, %1004 : vector<2x676xf32>
    %1006 = arith.index_cast %964 : i32 to index
    %c6_544 = arith.constant 6 : index
    %1007 = memref.load %arg1[%1006, %c6_544] : memref<32x9xf32, #tpu.memory_space<smem>>
    %c6_545 = arith.constant 6 : index
    %c0_546 = arith.constant 0 : index
    %c0_547 = arith.constant 0 : index
    %1008 = vector.load %arg3[%c6_545, %c0_546, %c0_547] : memref<9x2x676xf32, #tpu.memory_space<vmem>>, vector<1x2x676xf32>
    %1009 = vector.shape_cast %1008 : vector<1x2x676xf32> to vector<2x676xf32>
    %1010 = vector.broadcast %1007 : f32 to vector<2x676xf32>
    %1011 = arith.mulf %1010, %1009 : vector<2x676xf32>
    %1012 = arith.addf %1005, %1011 : vector<2x676xf32>
    %1013 = arith.index_cast %964 : i32 to index
    %c7_548 = arith.constant 7 : index
    %1014 = memref.load %arg1[%1013, %c7_548] : memref<32x9xf32, #tpu.memory_space<smem>>
    %c7_549 = arith.constant 7 : index
    %c0_550 = arith.constant 0 : index
    %c0_551 = arith.constant 0 : index
    %1015 = vector.load %arg3[%c7_549, %c0_550, %c0_551] : memref<9x2x676xf32, #tpu.memory_space<vmem>>, vector<1x2x676xf32>
    %1016 = vector.shape_cast %1015 : vector<1x2x676xf32> to vector<2x676xf32>
    %1017 = vector.broadcast %1014 : f32 to vector<2x676xf32>
    %1018 = arith.mulf %1017, %1016 : vector<2x676xf32>
    %1019 = arith.addf %1012, %1018 : vector<2x676xf32>
    %1020 = arith.index_cast %964 : i32 to index
    %c8_552 = arith.constant 8 : index
    %1021 = memref.load %arg1[%1020, %c8_552] : memref<32x9xf32, #tpu.memory_space<smem>>
    %c8_553 = arith.constant 8 : index
    %c0_554 = arith.constant 0 : index
    %c0_555 = arith.constant 0 : index
    %1022 = vector.load %arg3[%c8_553, %c0_554, %c0_555] : memref<9x2x676xf32, #tpu.memory_space<vmem>>, vector<1x2x676xf32>
    %1023 = vector.shape_cast %1022 : vector<1x2x676xf32> to vector<2x676xf32>
    %1024 = vector.broadcast %1021 : f32 to vector<2x676xf32>
    %1025 = arith.mulf %1024, %1023 : vector<2x676xf32>
    %1026 = arith.addf %1019, %1025 : vector<2x676xf32>
    %1027 = arith.index_cast %964 : i32 to index
    %1028 = memref.load %arg2[%1027] : memref<32xf32, #tpu.memory_space<smem>>
    %1029 = vector.broadcast %1028 : f32 to vector<2x676xf32>
    %1030 = arith.addf %1026, %1029 : vector<2x676xf32>
    %cst_556 = arith.constant 0.000000e+00 : f32
    %1031 = vector.broadcast %cst_556 : f32 to vector<2x676xf32>
    %1032 = arith.maximumf %1030, %1031 : vector<2x676xf32>
    %1033 = arith.truncf %1032 : vector<2x676xf32> to vector<2x676xbf16>
    %c13 = arith.constant 13 : index
    %c0_557 = arith.constant 0 : index
    %c0_558 = arith.constant 0 : index
    %1034 = vector.load %arg4[%c13, %c0_557, %c0_558] : memref<16x676x128xbf16, #tpu.memory_space<vmem>>, vector<1x676x128xbf16>
    %1035 = vector.shape_cast %1034 : vector<1x676x128xbf16> to vector<676x128xbf16>
    %cst_559 = arith.constant dense<0.000000e+00> : vector<2x128xf32>
    %1036 = tpu.matmul %1033, %1035, %cst_559 {dimension_numbers = #tpu.dot_dimension_numbers<[1], [0], [0], [1], [0, 0, 1, 1], [], []>} : vector<2x676xbf16>, vector<676x128xbf16>, vector<2x128xf32> -> vector<2x128xf32>
    %1037 = arith.addf %963, %1036 : vector<2x128xf32>
    %c14_i32 = arith.constant 14 : i32
    %1038 = arith.addi %0, %c14_i32 : i32
    %1039 = arith.index_cast %1038 : i32 to index
    %c0_560 = arith.constant 0 : index
    %1040 = memref.load %arg1[%1039, %c0_560] : memref<32x9xf32, #tpu.memory_space<smem>>
    %c0_561 = arith.constant 0 : index
    %c0_562 = arith.constant 0 : index
    %c0_563 = arith.constant 0 : index
    %1041 = vector.load %arg3[%c0_561, %c0_562, %c0_563] : memref<9x2x676xf32, #tpu.memory_space<vmem>>, vector<1x2x676xf32>
    %1042 = vector.shape_cast %1041 : vector<1x2x676xf32> to vector<2x676xf32>
    %1043 = vector.broadcast %1040 : f32 to vector<2x676xf32>
    %1044 = arith.mulf %1043, %1042 : vector<2x676xf32>
    %1045 = arith.index_cast %1038 : i32 to index
    %c1_564 = arith.constant 1 : index
    %1046 = memref.load %arg1[%1045, %c1_564] : memref<32x9xf32, #tpu.memory_space<smem>>
    %c1_565 = arith.constant 1 : index
    %c0_566 = arith.constant 0 : index
    %c0_567 = arith.constant 0 : index
    %1047 = vector.load %arg3[%c1_565, %c0_566, %c0_567] : memref<9x2x676xf32, #tpu.memory_space<vmem>>, vector<1x2x676xf32>
    %1048 = vector.shape_cast %1047 : vector<1x2x676xf32> to vector<2x676xf32>
    %1049 = vector.broadcast %1046 : f32 to vector<2x676xf32>
    %1050 = arith.mulf %1049, %1048 : vector<2x676xf32>
    %1051 = arith.addf %1044, %1050 : vector<2x676xf32>
    %1052 = arith.index_cast %1038 : i32 to index
    %c2_568 = arith.constant 2 : index
    %1053 = memref.load %arg1[%1052, %c2_568] : memref<32x9xf32, #tpu.memory_space<smem>>
    %c2_569 = arith.constant 2 : index
    %c0_570 = arith.constant 0 : index
    %c0_571 = arith.constant 0 : index
    %1054 = vector.load %arg3[%c2_569, %c0_570, %c0_571] : memref<9x2x676xf32, #tpu.memory_space<vmem>>, vector<1x2x676xf32>
    %1055 = vector.shape_cast %1054 : vector<1x2x676xf32> to vector<2x676xf32>
    %1056 = vector.broadcast %1053 : f32 to vector<2x676xf32>
    %1057 = arith.mulf %1056, %1055 : vector<2x676xf32>
    %1058 = arith.addf %1051, %1057 : vector<2x676xf32>
    %1059 = arith.index_cast %1038 : i32 to index
    %c3_572 = arith.constant 3 : index
    %1060 = memref.load %arg1[%1059, %c3_572] : memref<32x9xf32, #tpu.memory_space<smem>>
    %c3_573 = arith.constant 3 : index
    %c0_574 = arith.constant 0 : index
    %c0_575 = arith.constant 0 : index
    %1061 = vector.load %arg3[%c3_573, %c0_574, %c0_575] : memref<9x2x676xf32, #tpu.memory_space<vmem>>, vector<1x2x676xf32>
    %1062 = vector.shape_cast %1061 : vector<1x2x676xf32> to vector<2x676xf32>
    %1063 = vector.broadcast %1060 : f32 to vector<2x676xf32>
    %1064 = arith.mulf %1063, %1062 : vector<2x676xf32>
    %1065 = arith.addf %1058, %1064 : vector<2x676xf32>
    %1066 = arith.index_cast %1038 : i32 to index
    %c4_576 = arith.constant 4 : index
    %1067 = memref.load %arg1[%1066, %c4_576] : memref<32x9xf32, #tpu.memory_space<smem>>
    %c4_577 = arith.constant 4 : index
    %c0_578 = arith.constant 0 : index
    %c0_579 = arith.constant 0 : index
    %1068 = vector.load %arg3[%c4_577, %c0_578, %c0_579] : memref<9x2x676xf32, #tpu.memory_space<vmem>>, vector<1x2x676xf32>
    %1069 = vector.shape_cast %1068 : vector<1x2x676xf32> to vector<2x676xf32>
    %1070 = vector.broadcast %1067 : f32 to vector<2x676xf32>
    %1071 = arith.mulf %1070, %1069 : vector<2x676xf32>
    %1072 = arith.addf %1065, %1071 : vector<2x676xf32>
    %1073 = arith.index_cast %1038 : i32 to index
    %c5_580 = arith.constant 5 : index
    %1074 = memref.load %arg1[%1073, %c5_580] : memref<32x9xf32, #tpu.memory_space<smem>>
    %c5_581 = arith.constant 5 : index
    %c0_582 = arith.constant 0 : index
    %c0_583 = arith.constant 0 : index
    %1075 = vector.load %arg3[%c5_581, %c0_582, %c0_583] : memref<9x2x676xf32, #tpu.memory_space<vmem>>, vector<1x2x676xf32>
    %1076 = vector.shape_cast %1075 : vector<1x2x676xf32> to vector<2x676xf32>
    %1077 = vector.broadcast %1074 : f32 to vector<2x676xf32>
    %1078 = arith.mulf %1077, %1076 : vector<2x676xf32>
    %1079 = arith.addf %1072, %1078 : vector<2x676xf32>
    %1080 = arith.index_cast %1038 : i32 to index
    %c6_584 = arith.constant 6 : index
    %1081 = memref.load %arg1[%1080, %c6_584] : memref<32x9xf32, #tpu.memory_space<smem>>
    %c6_585 = arith.constant 6 : index
    %c0_586 = arith.constant 0 : index
    %c0_587 = arith.constant 0 : index
    %1082 = vector.load %arg3[%c6_585, %c0_586, %c0_587] : memref<9x2x676xf32, #tpu.memory_space<vmem>>, vector<1x2x676xf32>
    %1083 = vector.shape_cast %1082 : vector<1x2x676xf32> to vector<2x676xf32>
    %1084 = vector.broadcast %1081 : f32 to vector<2x676xf32>
    %1085 = arith.mulf %1084, %1083 : vector<2x676xf32>
    %1086 = arith.addf %1079, %1085 : vector<2x676xf32>
    %1087 = arith.index_cast %1038 : i32 to index
    %c7_588 = arith.constant 7 : index
    %1088 = memref.load %arg1[%1087, %c7_588] : memref<32x9xf32, #tpu.memory_space<smem>>
    %c7_589 = arith.constant 7 : index
    %c0_590 = arith.constant 0 : index
    %c0_591 = arith.constant 0 : index
    %1089 = vector.load %arg3[%c7_589, %c0_590, %c0_591] : memref<9x2x676xf32, #tpu.memory_space<vmem>>, vector<1x2x676xf32>
    %1090 = vector.shape_cast %1089 : vector<1x2x676xf32> to vector<2x676xf32>
    %1091 = vector.broadcast %1088 : f32 to vector<2x676xf32>
    %1092 = arith.mulf %1091, %1090 : vector<2x676xf32>
    %1093 = arith.addf %1086, %1092 : vector<2x676xf32>
    %1094 = arith.index_cast %1038 : i32 to index
    %c8_592 = arith.constant 8 : index
    %1095 = memref.load %arg1[%1094, %c8_592] : memref<32x9xf32, #tpu.memory_space<smem>>
    %c8_593 = arith.constant 8 : index
    %c0_594 = arith.constant 0 : index
    %c0_595 = arith.constant 0 : index
    %1096 = vector.load %arg3[%c8_593, %c0_594, %c0_595] : memref<9x2x676xf32, #tpu.memory_space<vmem>>, vector<1x2x676xf32>
    %1097 = vector.shape_cast %1096 : vector<1x2x676xf32> to vector<2x676xf32>
    %1098 = vector.broadcast %1095 : f32 to vector<2x676xf32>
    %1099 = arith.mulf %1098, %1097 : vector<2x676xf32>
    %1100 = arith.addf %1093, %1099 : vector<2x676xf32>
    %1101 = arith.index_cast %1038 : i32 to index
    %1102 = memref.load %arg2[%1101] : memref<32xf32, #tpu.memory_space<smem>>
    %1103 = vector.broadcast %1102 : f32 to vector<2x676xf32>
    %1104 = arith.addf %1100, %1103 : vector<2x676xf32>
    %cst_596 = arith.constant 0.000000e+00 : f32
    %1105 = vector.broadcast %cst_596 : f32 to vector<2x676xf32>
    %1106 = arith.maximumf %1104, %1105 : vector<2x676xf32>
    %1107 = arith.truncf %1106 : vector<2x676xf32> to vector<2x676xbf16>
    %c14 = arith.constant 14 : index
    %c0_597 = arith.constant 0 : index
    %c0_598 = arith.constant 0 : index
    %1108 = vector.load %arg4[%c14, %c0_597, %c0_598] : memref<16x676x128xbf16, #tpu.memory_space<vmem>>, vector<1x676x128xbf16>
    %1109 = vector.shape_cast %1108 : vector<1x676x128xbf16> to vector<676x128xbf16>
    %cst_599 = arith.constant dense<0.000000e+00> : vector<2x128xf32>
    %1110 = tpu.matmul %1107, %1109, %cst_599 {dimension_numbers = #tpu.dot_dimension_numbers<[1], [0], [0], [1], [0, 0, 1, 1], [], []>} : vector<2x676xbf16>, vector<676x128xbf16>, vector<2x128xf32> -> vector<2x128xf32>
    %1111 = arith.addf %1037, %1110 : vector<2x128xf32>
    %c15_i32 = arith.constant 15 : i32
    %1112 = arith.addi %0, %c15_i32 : i32
    %1113 = arith.index_cast %1112 : i32 to index
    %c0_600 = arith.constant 0 : index
    %1114 = memref.load %arg1[%1113, %c0_600] : memref<32x9xf32, #tpu.memory_space<smem>>
    %c0_601 = arith.constant 0 : index
    %c0_602 = arith.constant 0 : index
    %c0_603 = arith.constant 0 : index
    %1115 = vector.load %arg3[%c0_601, %c0_602, %c0_603] : memref<9x2x676xf32, #tpu.memory_space<vmem>>, vector<1x2x676xf32>
    %1116 = vector.shape_cast %1115 : vector<1x2x676xf32> to vector<2x676xf32>
    %1117 = vector.broadcast %1114 : f32 to vector<2x676xf32>
    %1118 = arith.mulf %1117, %1116 : vector<2x676xf32>
    %1119 = arith.index_cast %1112 : i32 to index
    %c1_604 = arith.constant 1 : index
    %1120 = memref.load %arg1[%1119, %c1_604] : memref<32x9xf32, #tpu.memory_space<smem>>
    %c1_605 = arith.constant 1 : index
    %c0_606 = arith.constant 0 : index
    %c0_607 = arith.constant 0 : index
    %1121 = vector.load %arg3[%c1_605, %c0_606, %c0_607] : memref<9x2x676xf32, #tpu.memory_space<vmem>>, vector<1x2x676xf32>
    %1122 = vector.shape_cast %1121 : vector<1x2x676xf32> to vector<2x676xf32>
    %1123 = vector.broadcast %1120 : f32 to vector<2x676xf32>
    %1124 = arith.mulf %1123, %1122 : vector<2x676xf32>
    %1125 = arith.addf %1118, %1124 : vector<2x676xf32>
    %1126 = arith.index_cast %1112 : i32 to index
    %c2_608 = arith.constant 2 : index
    %1127 = memref.load %arg1[%1126, %c2_608] : memref<32x9xf32, #tpu.memory_space<smem>>
    %c2_609 = arith.constant 2 : index
    %c0_610 = arith.constant 0 : index
    %c0_611 = arith.constant 0 : index
    %1128 = vector.load %arg3[%c2_609, %c0_610, %c0_611] : memref<9x2x676xf32, #tpu.memory_space<vmem>>, vector<1x2x676xf32>
    %1129 = vector.shape_cast %1128 : vector<1x2x676xf32> to vector<2x676xf32>
    %1130 = vector.broadcast %1127 : f32 to vector<2x676xf32>
    %1131 = arith.mulf %1130, %1129 : vector<2x676xf32>
    %1132 = arith.addf %1125, %1131 : vector<2x676xf32>
    %1133 = arith.index_cast %1112 : i32 to index
    %c3_612 = arith.constant 3 : index
    %1134 = memref.load %arg1[%1133, %c3_612] : memref<32x9xf32, #tpu.memory_space<smem>>
    %c3_613 = arith.constant 3 : index
    %c0_614 = arith.constant 0 : index
    %c0_615 = arith.constant 0 : index
    %1135 = vector.load %arg3[%c3_613, %c0_614, %c0_615] : memref<9x2x676xf32, #tpu.memory_space<vmem>>, vector<1x2x676xf32>
    %1136 = vector.shape_cast %1135 : vector<1x2x676xf32> to vector<2x676xf32>
    %1137 = vector.broadcast %1134 : f32 to vector<2x676xf32>
    %1138 = arith.mulf %1137, %1136 : vector<2x676xf32>
    %1139 = arith.addf %1132, %1138 : vector<2x676xf32>
    %1140 = arith.index_cast %1112 : i32 to index
    %c4_616 = arith.constant 4 : index
    %1141 = memref.load %arg1[%1140, %c4_616] : memref<32x9xf32, #tpu.memory_space<smem>>
    %c4_617 = arith.constant 4 : index
    %c0_618 = arith.constant 0 : index
    %c0_619 = arith.constant 0 : index
    %1142 = vector.load %arg3[%c4_617, %c0_618, %c0_619] : memref<9x2x676xf32, #tpu.memory_space<vmem>>, vector<1x2x676xf32>
    %1143 = vector.shape_cast %1142 : vector<1x2x676xf32> to vector<2x676xf32>
    %1144 = vector.broadcast %1141 : f32 to vector<2x676xf32>
    %1145 = arith.mulf %1144, %1143 : vector<2x676xf32>
    %1146 = arith.addf %1139, %1145 : vector<2x676xf32>
    %1147 = arith.index_cast %1112 : i32 to index
    %c5_620 = arith.constant 5 : index
    %1148 = memref.load %arg1[%1147, %c5_620] : memref<32x9xf32, #tpu.memory_space<smem>>
    %c5_621 = arith.constant 5 : index
    %c0_622 = arith.constant 0 : index
    %c0_623 = arith.constant 0 : index
    %1149 = vector.load %arg3[%c5_621, %c0_622, %c0_623] : memref<9x2x676xf32, #tpu.memory_space<vmem>>, vector<1x2x676xf32>
    %1150 = vector.shape_cast %1149 : vector<1x2x676xf32> to vector<2x676xf32>
    %1151 = vector.broadcast %1148 : f32 to vector<2x676xf32>
    %1152 = arith.mulf %1151, %1150 : vector<2x676xf32>
    %1153 = arith.addf %1146, %1152 : vector<2x676xf32>
    %1154 = arith.index_cast %1112 : i32 to index
    %c6_624 = arith.constant 6 : index
    %1155 = memref.load %arg1[%1154, %c6_624] : memref<32x9xf32, #tpu.memory_space<smem>>
    %c6_625 = arith.constant 6 : index
    %c0_626 = arith.constant 0 : index
    %c0_627 = arith.constant 0 : index
    %1156 = vector.load %arg3[%c6_625, %c0_626, %c0_627] : memref<9x2x676xf32, #tpu.memory_space<vmem>>, vector<1x2x676xf32>
    %1157 = vector.shape_cast %1156 : vector<1x2x676xf32> to vector<2x676xf32>
    %1158 = vector.broadcast %1155 : f32 to vector<2x676xf32>
    %1159 = arith.mulf %1158, %1157 : vector<2x676xf32>
    %1160 = arith.addf %1153, %1159 : vector<2x676xf32>
    %1161 = arith.index_cast %1112 : i32 to index
    %c7_628 = arith.constant 7 : index
    %1162 = memref.load %arg1[%1161, %c7_628] : memref<32x9xf32, #tpu.memory_space<smem>>
    %c7_629 = arith.constant 7 : index
    %c0_630 = arith.constant 0 : index
    %c0_631 = arith.constant 0 : index
    %1163 = vector.load %arg3[%c7_629, %c0_630, %c0_631] : memref<9x2x676xf32, #tpu.memory_space<vmem>>, vector<1x2x676xf32>
    %1164 = vector.shape_cast %1163 : vector<1x2x676xf32> to vector<2x676xf32>
    %1165 = vector.broadcast %1162 : f32 to vector<2x676xf32>
    %1166 = arith.mulf %1165, %1164 : vector<2x676xf32>
    %1167 = arith.addf %1160, %1166 : vector<2x676xf32>
    %1168 = arith.index_cast %1112 : i32 to index
    %c8_632 = arith.constant 8 : index
    %1169 = memref.load %arg1[%1168, %c8_632] : memref<32x9xf32, #tpu.memory_space<smem>>
    %c8_633 = arith.constant 8 : index
    %c0_634 = arith.constant 0 : index
    %c0_635 = arith.constant 0 : index
    %1170 = vector.load %arg3[%c8_633, %c0_634, %c0_635] : memref<9x2x676xf32, #tpu.memory_space<vmem>>, vector<1x2x676xf32>
    %1171 = vector.shape_cast %1170 : vector<1x2x676xf32> to vector<2x676xf32>
    %1172 = vector.broadcast %1169 : f32 to vector<2x676xf32>
    %1173 = arith.mulf %1172, %1171 : vector<2x676xf32>
    %1174 = arith.addf %1167, %1173 : vector<2x676xf32>
    %1175 = arith.index_cast %1112 : i32 to index
    %1176 = memref.load %arg2[%1175] : memref<32xf32, #tpu.memory_space<smem>>
    %1177 = vector.broadcast %1176 : f32 to vector<2x676xf32>
    %1178 = arith.addf %1174, %1177 : vector<2x676xf32>
    %cst_636 = arith.constant 0.000000e+00 : f32
    %1179 = vector.broadcast %cst_636 : f32 to vector<2x676xf32>
    %1180 = arith.maximumf %1178, %1179 : vector<2x676xf32>
    %1181 = arith.truncf %1180 : vector<2x676xf32> to vector<2x676xbf16>
    %c15 = arith.constant 15 : index
    %c0_637 = arith.constant 0 : index
    %c0_638 = arith.constant 0 : index
    %1182 = vector.load %arg4[%c15, %c0_637, %c0_638] : memref<16x676x128xbf16, #tpu.memory_space<vmem>>, vector<1x676x128xbf16>
    %1183 = vector.shape_cast %1182 : vector<1x676x128xbf16> to vector<676x128xbf16>
    %cst_639 = arith.constant dense<0.000000e+00> : vector<2x128xf32>
    %1184 = tpu.matmul %1181, %1183, %cst_639 {dimension_numbers = #tpu.dot_dimension_numbers<[1], [0], [0], [1], [0, 0, 1, 1], [], []>} : vector<2x676xbf16>, vector<676x128xbf16>, vector<2x128xf32> -> vector<2x128xf32>
    %1185 = arith.addf %1111, %1184 : vector<2x128xf32>
    %c0_i32_640 = arith.constant 0 : i32
    %1186 = arith.cmpi eq, %arg0, %c0_i32_640 : i32
    %1187 = arith.extui %1186 : i1 to i32
    %1188 = arith.sitofp %1187 : i32 to f32
    %c0_641 = arith.constant 0 : index
    %c0_642 = arith.constant 0 : index
    %1189 = vector.load %arg5[%c0_641, %c0_642] : memref<1x128xf32, #tpu.memory_space<vmem>>, vector<1x128xf32>
    %1190 = vector.broadcast %1188 : f32 to vector<1x128xf32>
    %1191 = arith.mulf %1190, %1189 : vector<1x128xf32>
    %1192 = vector.broadcast %1191 : vector<1x128xf32> to vector<2x128xf32>
    %1193 = arith.addf %1185, %1192 : vector<2x128xf32>
    %c0_643 = arith.constant 0 : index
    %c0_644 = arith.constant 0 : index
    %1194 = vector.load %arg6[%c0_643, %c0_644] : memref<128x10xf32, #tpu.memory_space<vmem>>, vector<128x10xf32>
    %cst_645 = arith.constant dense<0.000000e+00> : vector<2x10xf32>
    %1195 = tpu.matmul %1193, %1194, %cst_645 {dimension_numbers = #tpu.dot_dimension_numbers<[1], [0], [0], [1], [0, 0, 1, 1], [], []>} : vector<2x128xf32>, vector<128x10xf32>, vector<2x10xf32> -> vector<2x10xf32>
    %c0_646 = arith.constant 0 : index
    %c0_647 = arith.constant 0 : index
    %1196 = vector.load %arg7[%c0_646, %c0_647] : memref<1x10xf32, #tpu.memory_space<vmem>>, vector<1x10xf32>
    %1197 = vector.broadcast %1188 : f32 to vector<1x10xf32>
    %1198 = arith.mulf %1197, %1196 : vector<1x10xf32>
    %1199 = vector.broadcast %1198 : vector<1x10xf32> to vector<2x10xf32>
    %1200 = arith.addf %1195, %1199 : vector<2x10xf32>
    %c0_648 = arith.constant 0 : index
    %c0_649 = arith.constant 0 : index
    %c0_650 = arith.constant 0 : index
    %1201 = vector.load %arg8[%c0_648, %c0_649, %c0_650] : memref<1x2x10xf32, #tpu.memory_space<vmem>>, vector<1x2x10xf32>
    %1202 = vector.shape_cast %1201 : vector<1x2x10xf32> to vector<2x10xf32>
    %1203 = vector.shape_cast %1200 : vector<2x10xf32> to vector<1x2x10xf32>
    tpu.vector_store %arg8[%c0_648, %c0_649, %c0_650], %1203 {strides = array<i32>} : memref<1x2x10xf32, #tpu.memory_space<vmem>>, vector<1x2x10xf32>,
    return
  }
  func.func @transform_0(%arg0: i32) -> (i32, i32) {
    %c0_i32 = arith.constant 0 : i32
    %c0_i32_0 = arith.constant 0 : i32
    %c0_i32_1 = arith.constant 0 : i32
    return %c0_i32, %c0_i32_0 : i32, i32
  }
  func.func @transform_1(%arg0: i32) -> i32 {
    %c0_i32 = arith.constant 0 : i32
    %c0_i32_0 = arith.constant 0 : i32
    return %c0_i32 : i32
  }
  func.func @transform_2(%arg0: i32) -> (i32, i32, i32) {
    %c0_i32 = arith.constant 0 : i32
    %c0_i32_0 = arith.constant 0 : i32
    %c0_i32_1 = arith.constant 0 : i32
    %c0_i32_2 = arith.constant 0 : i32
    return %c0_i32, %c0_i32_0, %c0_i32_1 : i32, i32, i32
  }
  func.func @transform_3(%arg0: i32) -> (i32, i32, i32) {
    %c0_i32 = arith.constant 0 : i32
    %c0_i32_0 = arith.constant 0 : i32
    %c0_i32_1 = arith.constant 0 : i32
    return %arg0, %c0_i32, %c0_i32_0 : i32, i32, i32
  }
  func.func @transform_4(%arg0: i32) -> (i32, i32) {
    %c0_i32 = arith.constant 0 : i32
    %c0_i32_0 = arith.constant 0 : i32
    %c0_i32_1 = arith.constant 0 : i32
    return %c0_i32, %c0_i32_0 : i32, i32
  }
  func.func @transform_5(%arg0: i32) -> (i32, i32) {
    %c0_i32 = arith.constant 0 : i32
    %c0_i32_0 = arith.constant 0 : i32
    %c0_i32_1 = arith.constant 0 : i32
    return %c0_i32, %c0_i32_0 : i32, i32
  }
  func.func @transform_6(%arg0: i32) -> (i32, i32) {
    %c0_i32 = arith.constant 0 : i32
    %c0_i32_0 = arith.constant 0 : i32
    %c0_i32_1 = arith.constant 0 : i32
    return %c0_i32, %c0_i32_0 : i32, i32
  }
  func.func @transform_7(%arg0: i32) -> (i32, i32, i32) {
    %c0_i32 = arith.constant 0 : i32
    %c0_i32_0 = arith.constant 0 : i32
    %c0_i32_1 = arith.constant 0 : i32
    return %arg0, %c0_i32, %c0_i32_0 : i32, i32, i32
  }
}

</mosaic_0001>

<llo_original>
// kernel: mnist_forward.1
$region0: #{mnist_forward.1}
  #allocation0 [shape = 'u32[]', space=smem, size = 0x4, offset = 0x4, fixed_abs, tag = 'smem constant byte address 0x4 - core index']
  #allocation1 [shape = 'u32[72,128]{1,0:T(1,128)}', space=vmem, size = 0x9000, scoped, tag = 'internal scratch']
  %s0 = inlined_call_operand.vmem [shape: f32[32,9], index: 0, kind: input, shape index: {}]
  %s1 = inlined_call_operand.vmem [shape: f32[32], index: 1, kind: input, shape index: {}]
  %s2 = inlined_call_operand.vmem [shape: f32[9,2,676], index: 2, kind: input, shape index: {}]
  %s3 = inlined_call_operand.vmem [shape: bf16[32,676,128], index: 3, kind: input, shape index: {}]
  %s4 = inlined_call_operand.vmem [shape: f32[1,128], index: 4, kind: input, shape index: {}]
  %s5 = inlined_call_operand.vmem [shape: f32[128,10], index: 5, kind: input, shape index: {}]
  %s6 = inlined_call_operand.vmem [shape: f32[1,10], index: 6, kind: input, shape index: {}]
  %s7 = inlined_call_operand.vmem [shape: f32[2,2,10], index: 7, kind: output, shape index: {}]
  %s8 = sld [smem:[#allocation0]]
  $region69: #{mnist_forward.1} parent=0
    _
  %s10 = ssub.s32 1, %s8
  %s11 = scalar_select 0, %s10, %s8
  $region1: #{mnist_forward.1} parent=0
    #allocation2 [shape = 'u8[16384]{0}', space=smem, size = 0x4000, scoped, tag = 'input window, operand 0, single buffered']
    #allocation3 [shape = 's32[2]{0}', space=sflag, size = 0x8, scoped, tag = 'scoped memory for mnist_forward.1']
    #allocation4 [shape = 'u8[512]{0}', space=smem, size = 0x200, scoped, tag = 'input window, operand 1, single buffered']
    #allocation5 [shape = 's32[1]{0}', space=sflag, size = 0x4, scoped, tag = 'scoped memory for mnist_forward.1']
    %12 = vsyncpa [#allocation3], 0
    %13 = vsyncpa [#allocation5], 0
    loop: start=0, step=1, limit=4
    $region2: #{mnist_forward.1} parent=1 // loop_pre_header
      _
    $region3: #{mnist_forward.1} parent=1 // loop_header
      %s15 = sphi 0, %s19
      %p16 = scmp.ge.s32.totalorder %s15, 4
      %s23 = sphi 0, %s23
      %s25 = sphi 0, %s23
      %s26 = sphi 0, %s25
      %s40 = sphi 0, %s26
      %s44 = sphi 0, %s44
      %s46 = sphi 0, %s44
      %s47 = sphi 0, %s46
      %s61 = sphi 0, %s47
      %s65 = sphi 0, %s65
      %s67 = sphi 0, %s65
      %s68 = sphi 0, %s67
      %s82 = sphi 0, %s68
      %s88 = sphi 0, %s90
      %s91 = sphi 0, %s88
      %s92 = sphi 0, %s91
      %s108 = sphi 0, %s92
      %s112 = sphi 0, %s112
      %s114 = sphi 0, %s112
      %s115 = sphi 0, %s114
      %s129 = sphi 0, %s115
      %s133 = sphi 0, %s133
      %s135 = sphi 0, %s133
      %s136 = sphi 0, %s135
      %s150 = sphi 0, %s136
      %s154 = sphi 0, %s154
      %s156 = sphi 0, %s154
      %s157 = sphi 0, %s156
      %s171 = sphi 0, %s157
      %s177 = sphi 0, %s179
      %s180 = sphi 0, %s177
      %s181 = sphi 0, %s180
      %s197 = sphi 0, %s181
    $region4: #{mnist_forward.1} parent=1 // loop_header_branch
      %18 = sbr.rel (%p16) target = $region8
    $region5: #{mnist_forward.1} parent=1 // loop_body
      %s20 = ssub.s32 %s15, 1
      %s21 = ssub.s32 %s15, 2
      %s22 = sadd.s32 %s15, 1
      %s24 = sadd.s32 %s23, 1
      %p27 = scmp.eq.s32.totalorder %s15, 1
      %p28 = scmp.ne.s32.totalorder %s23, %s25
      %p29 = scmp.eq.s32.totalorder %s15, 0
      %p30 = por %p28, %p29
      %p31 = scmp.ne.s32.totalorder %s23, %s25
      %p32 = scmp.eq.s32.totalorder %s20, 1
      %p33 = por %p31, %p32
      %p34 = scmp.ne.s32.totalorder %s25, %s26
      %p35 = scmp.eq.s32.totalorder %s20, 0
      %p36 = por %p34, %p35
      %p37 = scmp.ne.s32.totalorder %s25, %s26
      %p38 = scmp.eq.s32.totalorder %s21, 1
      %p39 = por %p37, %p38
      %p41 = scmp.ne.s32.totalorder %s26, %s40
      %p42 = scmp.eq.s32.totalorder %s21, 0
      %p43 = por %p41, %p42
      %s45 = sadd.s32 %s44, 1
      %p48 = scmp.eq.s32.totalorder %s15, 1
      %p49 = scmp.ne.s32.totalorder %s44, %s46
      %p50 = scmp.eq.s32.totalorder %s15, 0
      %p51 = por %p49, %p50
      %p52 = scmp.ne.s32.totalorder %s44, %s46
      %p53 = scmp.eq.s32.totalorder %s20, 1
      %p54 = por %p52, %p53
      %p55 = scmp.ne.s32.totalorder %s46, %s47
      %p56 = scmp.eq.s32.totalorder %s20, 0
      %p57 = por %p55, %p56
      %p58 = scmp.ne.s32.totalorder %s46, %s47
      %p59 = scmp.eq.s32.totalorder %s21, 1
      %p60 = por %p58, %p59
      %p62 = scmp.ne.s32.totalorder %s47, %s61
      %p63 = scmp.eq.s32.totalorder %s21, 0
      %p64 = por %p62, %p63
      %s66 = sadd.s32 %s65, 1
      %p69 = scmp.eq.s32.totalorder %s15, 1
      %p70 = scmp.ne.s32.totalorder %s65, %s67
      %p71 = scmp.eq.s32.totalorder %s15, 0
      %p72 = por %p70, %p71
      %p73 = scmp.ne.s32.totalorder %s65, %s67
      %p74 = scmp.eq.s32.totalorder %s20, 1
      %p75 = por %p73, %p74
      %p76 = scmp.ne.s32.totalorder %s67, %s68
      %p77 = scmp.eq.s32.totalorder %s20, 0
      %p78 = por %p76, %p77
      %p79 = scmp.ne.s32.totalorder %s67, %s68
      %p80 = scmp.eq.s32.totalorder %s21, 1
      %p81 = por %p79, %p80
      %p83 = scmp.ne.s32.totalorder %s68, %s82
      %p84 = scmp.eq.s32.totalorder %s21, 0
      %p85 = por %p83, %p84
      %s86 = ssub.s32 %s15, %s22
      %p87 = scmp.eq.s32.totalorder %s86, 0
      %s89 = sadd.s32 %s88, 1
      %s90 = scalar_select %p87, %s88, %s89
      %p93 = pneg %p87
      %p94 = scmp.eq.s32.totalorder %s15, 1
      %p95 = por %p93, %p94
      %p96 = scmp.ne.s32.totalorder %s88, %s91
      %p97 = scmp.eq.s32.totalorder %s15, 0
      %p98 = por %p96, %p97
      %p99 = scmp.ne.s32.totalorder %s88, %s91
      %p100 = scmp.eq.s32.totalorder %s20, 1
      %p101 = por %p99, %p100
      %p102 = scmp.ne.s32.totalorder %s91, %s92
      %p103 = scmp.eq.s32.totalorder %s20, 0
      %p104 = por %p102, %p103
      %p105 = scmp.ne.s32.totalorder %s91, %s92
      %p106 = scmp.eq.s32.totalorder %s21, 1
      %p107 = por %p105, %p106
      %p109 = scmp.ne.s32.totalorder %s92, %s108
      %p110 = scmp.eq.s32.totalorder %s21, 0
      %p111 = por %p109, %p110
      %s113 = sadd.s32 %s112, 1
      %p116 = scmp.eq.s32.totalorder %s15, 1
      %p117 = scmp.ne.s32.totalorder %s112, %s114
      %p118 = scmp.eq.s32.totalorder %s15, 0
      %p119 = por %p117, %p118
      %p120 = scmp.ne.s32.totalorder %s112, %s114
      %p121 = scmp.eq.s32.totalorder %s20, 1
      %p122 = por %p120, %p121
      %p123 = scmp.ne.s32.totalorder %s114, %s115
      %p124 = scmp.eq.s32.totalorder %s20, 0
      %p125 = por %p123, %p124
      %p126 = scmp.ne.s32.totalorder %s114, %s115
      %p127 = scmp.eq.s32.totalorder %s21, 1
      %p128 = por %p126, %p127
      %p130 = scmp.ne.s32.totalorder %s115, %s129
      %p131 = scmp.eq.s32.totalorder %s21, 0
      %p132 = por %p130, %p131
      %s134 = sadd.s32 %s133, 1
      %p137 = scmp.eq.s32.totalorder %s15, 1
      %p138 = scmp.ne.s32.totalorder %s133, %s135
      %p139 = scmp.eq.s32.totalorder %s15, 0
      %p140 = por %p138, %p139
      %p141 = scmp.ne.s32.totalorder %s133, %s135
      %p142 = scmp.eq.s32.totalorder %s20, 1
      %p143 = por %p141, %p142
      %p144 = scmp.ne.s32.totalorder %s135, %s136
      %p145 = scmp.eq.s32.totalorder %s20, 0
      %p146 = por %p144, %p145
      %p147 = scmp.ne.s32.totalorder %s135, %s136
      %p148 = scmp.eq.s32.totalorder %s21, 1
      %p149 = por %p147, %p148
      %p151 = scmp.ne.s32.totalorder %s136, %s150
      %p152 = scmp.eq.s32.totalorder %s21, 0
      %p153 = por %p151, %p152
      %s155 = sadd.s32 %s154, 1
      %p158 = scmp.eq.s32.totalorder %s15, 1
      %p159 = scmp.ne.s32.totalorder %s154, %s156
      %p160 = scmp.eq.s32.totalorder %s15, 0
      %p161 = por %p159, %p160
      %p162 = scmp.ne.s32.totalorder %s154, %s156
      %p163 = scmp.eq.s32.totalorder %s20, 1
      %p164 = por %p162, %p163
      %p165 = scmp.ne.s32.totalorder %s156, %s157
      %p166 = scmp.eq.s32.totalorder %s20, 0
      %p167 = por %p165, %p166
      %p168 = scmp.ne.s32.totalorder %s156, %s157
      %p169 = scmp.eq.s32.totalorder %s21, 1
      %p170 = por %p168, %p169
      %p172 = scmp.ne.s32.totalorder %s157, %s171
      %p173 = scmp.eq.s32.totalorder %s21, 0
      %p174 = por %p172, %p173
      %s175 = ssub.s32 %s15, %s22
      %p176 = scmp.eq.s32.totalorder %s175, 0
      %s178 = sadd.s32 %s177, 1
      %s179 = scalar_select %p176, %s177, %s178
      %p182 = pneg %p176
      %p183 = scmp.eq.s32.totalorder %s15, 1
      %p184 = por %p182, %p183
      %p185 = scmp.ne.s32.totalorder %s177, %s180
      %p186 = scmp.eq.s32.totalorder %s15, 0
      %p187 = por %p185, %p186
      %p188 = scmp.ne.s32.totalorder %s177, %s180
      %p189 = scmp.eq.s32.totalorder %s20, 1
      %p190 = por %p188, %p189
      %p191 = scmp.ne.s32.totalorder %s180, %s181
      %p192 = scmp.eq.s32.totalorder %s20, 0
      %p193 = por %p191, %p192
      %p194 = scmp.ne.s32.totalorder %s180, %s181
      %p195 = scmp.eq.s32.totalorder %s21, 1
      %p196 = por %p194, %p195
      %p198 = scmp.ne.s32.totalorder %s181, %s197
      %p199 = scmp.eq.s32.totalorder %s21, 0
      %p200 = por %p198, %p199
      %p201 = scmp.le.s32.totalorder 1, %s15
      %p202 = scmp.lt.s32.totalorder %s15, 3
      %p203 = pnand %p201, %p202
      %p204 = pneg %p203
      // Predicated region
      $region9: #{mnist_forward.1} parent=5 // pred_check
        _
      $region10: #{mnist_forward.1} parent=5 // pred_check_branch
        %206 = sbr.rel (%p203) target = $region12
      $region11: #{mnist_forward.1} parent=5 // pred_region
        %s207 = ssub.s32 %s15, 1
        // Predicated region
        $region13: #{mnist_forward.1} parent=11 // pred_check
          %p208 = pneg %p36
        $region14: #{mnist_forward.1} parent=11 // pred_check_branch
          %210 = sbr.rel (%p208) target = $region16
        $region15: #{mnist_forward.1} parent=11 // pred_region
          %212 = vsyncadd [#allocation3], 0
          %s213 = sshll.u32 %s0, 4
          %s214 = int_to_ptr.vmem [resolvable:$true] %s213
          %219 = dma.vmem_to_smem %s214, 512, [#allocation2], [#allocation3], 128, 128, 8
        $region16: #{mnist_forward.1} parent=11 // pred_fallthru
          _
        // Predicated region
        $region17: #{mnist_forward.1} parent=11 // pred_check
          %p220 = pneg %p57
        $region18: #{mnist_forward.1} parent=11 // pred_check_branch
          %222 = sbr.rel (%p220) target = $region20
        $region19: #{mnist_forward.1} parent=11 // pred_region
          %224 = vsyncadd [#allocation5], 0
          %s226 = sshll.u32 %s1, 4
          %s227 = int_to_ptr.vmem [resolvable:$true] %s226
          %229 = dma.vmem_to_smem %s227, 16, [#allocation4], [#allocation5]
        $region20: #{mnist_forward.1} parent=11 // pred_fallthru
          _
        // Predicated region
        $region21: #{mnist_forward.1} parent=11 // pred_check
          %p230 = pneg %p78
        $region22: #{mnist_forward.1} parent=11 // pred_check_branch
          %232 = sbr.rel (%p230) target = $region24
        $region23: #{mnist_forward.1} parent=11 // pred_region
          _
        $region24: #{mnist_forward.1} parent=11 // pred_fallthru
          _
        // Predicated region
        $region25: #{mnist_forward.1} parent=11 // pred_check
          %p233 = pneg %p125
        $region26: #{mnist_forward.1} parent=11 // pred_check_branch
          %235 = sbr.rel (%p233) target = $region28
        $region27: #{mnist_forward.1} parent=11 // pred_region
          _
        $region28: #{mnist_forward.1} parent=11 // pred_fallthru
          _
        // Predicated region
        $region29: #{mnist_forward.1} parent=11 // pred_check
          %p236 = pneg %p146
        $region30: #{mnist_forward.1} parent=11 // pred_check_branch
          %238 = sbr.rel (%p236) target = $region32
        $region31: #{mnist_forward.1} parent=11 // pred_region
          _
        $region32: #{mnist_forward.1} parent=11 // pred_fallthru
          _
        // Predicated region
        $region33: #{mnist_forward.1} parent=11 // pred_check
          %p239 = pneg %p167
        $region34: #{mnist_forward.1} parent=11 // pred_check_branch
          %241 = sbr.rel (%p239) target = $region36
        $region35: #{mnist_forward.1} parent=11 // pred_region
          _
        $region36: #{mnist_forward.1} parent=11 // pred_fallthru
          _
      $region12: #{mnist_forward.1} parent=5 // pred_fallthru
        _
      %p242 = scmp.lt.s32.totalorder %s15, 2
      // Predicated region
      $region37: #{mnist_forward.1} parent=5 // pred_check
        %p243 = pneg %p242
      $region38: #{mnist_forward.1} parent=5 // pred_check_branch
        %245 = sbr.rel (%p243) target = $region40
      $region39: #{mnist_forward.1} parent=5 // pred_region
        // Predicated region
        $region41: #{mnist_forward.1} parent=39 // pred_check
          %p246 = pneg %p98
        $region42: #{mnist_forward.1} parent=39 // pred_check_branch
          %248 = sbr.rel (%p246) target = $region44
        $region43: #{mnist_forward.1} parent=39 // pred_region
          %s249 = smul.u32 16, %s15
          %p250 = scmp.lt.s32.totalorder %s249, 31
          %s251 = scalar_select %p250, %s249, 31
          %s252 = smul.addr %s251, 85
          %s253 = smul.addr %s252, 4
          %s254 = scalar_lea.vmem %s3, %s253
          %s255 = smul.u32 16, %s15
        $region44: #{mnist_forward.1} parent=39 // pred_fallthru
          _
      $region40: #{mnist_forward.1} parent=5 // pred_fallthru
        _
      %p256 = scmp.le.s32.totalorder 1, %s15
      %p257 = scmp.lt.s32.totalorder %s15, 3
      %p258 = pnand %p256, %p257
      %p259 = pneg %p258
      // Predicated region
      $region45: #{mnist_forward.1} parent=5 // pred_check
        _
      $region46: #{mnist_forward.1} parent=5 // pred_check_branch
        %261 = sbr.rel (%p258) target = $region48
      $region47: #{mnist_forward.1} parent=5 // pred_region
        %s262 = ssub.s32 %s15, 1
        // Predicated region
        $region49: #{mnist_forward.1} parent=47 // pred_check
          %p263 = pneg %p36
        $region50: #{mnist_forward.1} parent=47 // pred_check_branch
          %265 = sbr.rel (%p263) target = $region52
        $region51: #{mnist_forward.1} parent=47 // pred_region
          %267 = dma.done [#allocation3], 512
        $region52: #{mnist_forward.1} parent=47 // pred_fallthru
          _
        // Predicated region
        $region53: #{mnist_forward.1} parent=47 // pred_check
          %p268 = pneg %p57
        $region54: #{mnist_forward.1} parent=47 // pred_check_branch
          %270 = sbr.rel (%p268) target = $region56
        $region55: #{mnist_forward.1} parent=47 // pred_region
          %272 = dma.done [#allocation5], 16
        $region56: #{mnist_forward.1} parent=47 // pred_fallthru
          _
        %273 = sfence
        %p274 = pneg %p36
        %p275 = pneg %p33
        %p276 = pneg %p57
        %p277 = pneg %p54
        %p278 = pneg %p78
        %p279 = pneg %p75
        %s280 = smul.u32 16, %s20
        %p281 = scmp.lt.s32.totalorder %s280, 31
        %s282 = scalar_select %p281, %s280, 31
        %s283 = smul.addr %s282, 85
        %s284 = smul.addr %s283, 4
        %s285 = scalar_lea.vmem %s3, %s284
        %p286 = pneg %p104
        %p287 = pneg %p101
        %p288 = pneg %p125
        %p289 = pneg %p122
        %p290 = pneg %p146
        %p291 = pneg %p143
        %p292 = pneg %p167
        %p293 = pneg %p164
        %p294 = pneg %p193
        %p295 = pneg %p190
        %p296 = scmp.lt.s32.totalorder %s20, 1
        %s297 = scalar_select %p296, %s20, 1
        %s298 = smul.addr %s297, 2
        %s299 = scalar_lea.vmem %s7, %s298
        %s300 = smul.u32 16, %s20
        %p301 = scmp.lt.s32.totalorder %s300, 31
        %s302 = scalar_select %p301, %s300, 31
        %s303 = smul.addr %s302, 85
        %s304 = smul.addr %s303, 4
        %s305 = scalar_lea.vmem %s3, %s304
        %s306 = smul.u32 16, %s20
        %p307 = scmp.lt.s32.totalorder %s20, 1
        %s308 = scalar_select %p307, %s20, 1
        %s309 = smul.addr %s308, 2
        %s310 = scalar_lea.vmem %s7, %s309
        %s312 = smul.u32 %s20, 16
        %s313 = smul.u32 %s312, 128
        %s314 = sld [smem:[#allocation2 + %s313]]
        %v315 = vld [vmem:[%s2] sm:$0xff]
        %v316 = vld [vmem:[%s2 + $0x8] sm:$0xf]
        %v317 = vstv %s314
        %v318 = vmul.f32 %v317, %v315
        %v319 = vmul.f32 %v317, %v316
        %s320 = sadd.s32 %s313, 1
        %s321 = sld [smem:[#allocation2 + %s320]]
        %s322 = scalar_lea.vmem %s2, 12
        %v323 = vld [vmem:[%s322] sm:$0xff]
        %v324 = vld [vmem:[%s322 + $0x8] sm:$0xf]
        %v325 = vstv %s321
        %v326 = vmul.f32 %v325, %v323
        %v327 = vmul.f32 %v325, %v324
        %v328 = vadd.f32 %v318, %v326
        %v329 = vadd.f32 %v319, %v327
        %s330 = sadd.s32 %s313, 2
        %s331 = sld [smem:[#allocation2 + %s330]]
        %s332 = scalar_lea.vmem %s2, 24
        %v333 = vld [vmem:[%s332] sm:$0xff]
        %v334 = vld [vmem:[%s332 + $0x8] sm:$0xf]
        %v335 = vstv %s331
        %v336 = vmul.f32 %v335, %v333
        %v337 = vmul.f32 %v335, %v334
        %v338 = vadd.f32 %v328, %v336
        %v339 = vadd.f32 %v329, %v337
        %s340 = sadd.s32 %s313, 3
        %s341 = sld [smem:[#allocation2 + %s340]]
        %s342 = scalar_lea.vmem %s2, 36
        %v343 = vld [vmem:[%s342] sm:$0xff]
        %v344 = vld [vmem:[%s342 + $0x8] sm:$0xf]
        %v345 = vstv %s341
        %v346 = vmul.f32 %v345, %v343
        %v347 = vmul.f32 %v345, %v344
        %v348 = vadd.f32 %v338, %v346
        %v349 = vadd.f32 %v339, %v347
        %s350 = sadd.s32 %s313, 4
        %s351 = sld [smem:[#allocation2 + %s350]]
        %s352 = scalar_lea.vmem %s2, 48
        %v353 = vld [vmem:[%s352] sm:$0xff]
        %v354 = vld [vmem:[%s352 + $0x8] sm:$0xf]
        %v355 = vstv %s351
        %v356 = vmul.f32 %v355, %v353
        %v357 = vmul.f32 %v355, %v354
        %v358 = vadd.f32 %v348, %v356
        %v359 = vadd.f32 %v349, %v357
        %s360 = sadd.s32 %s313, 5
        %s361 = sld [smem:[#allocation2 + %s360]]
        %s362 = scalar_lea.vmem %s2, 60
        %v363 = vld [vmem:[%s362] sm:$0xff]
        %v364 = vld [vmem:[%s362 + $0x8] sm:$0xf]
        %v365 = vstv %s361
        %v366 = vmul.f32 %v365, %v363
        %v367 = vmul.f32 %v365, %v364
        %v368 = vadd.f32 %v358, %v366
        %v369 = vadd.f32 %v359, %v367
        %s370 = sadd.s32 %s313, 6
        %s371 = sld [smem:[#allocation2 + %s370]]
        %s372 = scalar_lea.vmem %s2, 72
        %v373 = vld [vmem:[%s372] sm:$0xff]
        %v374 = vld [vmem:[%s372 + $0x8] sm:$0xf]
        %v375 = vstv %s371
        %v376 = vmul.f32 %v375, %v373
        %v377 = vmul.f32 %v375, %v374
        %v378 = vadd.f32 %v368, %v376
        %v379 = vadd.f32 %v369, %v377
        %s380 = sadd.s32 %s313, 7
        %s381 = sld [smem:[#allocation2 + %s380]]
        %s382 = scalar_lea.vmem %s2, 84
        %v383 = vld [vmem:[%s382] sm:$0xff]
        %v384 = vld [vmem:[%s382 + $0x8] sm:$0xf]
        %v385 = vstv %s381
        %v386 = vmul.f32 %v385, %v383
        %v387 = vmul.f32 %v385, %v384
        %v388 = vadd.f32 %v378, %v386
        %v389 = vadd.f32 %v379, %v387
        %s390 = sadd.s32 %s313, 8
        %s391 = sld [smem:[#allocation2 + %s390]]
        %s392 = scalar_lea.vmem %s2, 96
        %v393 = vld [vmem:[%s392] sm:$0xff]
        %v394 = vld [vmem:[%s392 + $0x8] sm:$0xf]
        %v395 = vstv %s391
        %v396 = vmul.f32 %v395, %v393
        %v397 = vmul.f32 %v395, %v394
        %v398 = vadd.f32 %v388, %v396
        %v399 = vadd.f32 %v389, %v397
        %s400 = sld [smem:[#allocation4 + %s312]]
        %v401 = vstv %s400
        %v402 = vadd.f32 %v398, %v401
        %v403 = vadd.f32 %v399, %v401
        %v404 = vmax.f32 %v402, 0.0
        %v405 = vmax.f32 %v403, 0.0
        %408 = vst [vmem:[#allocation1] ss:$4 sm:$0xff] %v404
        %s409 = scalar_lea.vmem [#allocation1], 32
        %410 = vst [vmem:[%s409] ss:$4 sm:$0xff] %v405
        %v411 = vld.sshfl [vmem:[#allocation1] sm:$0xff pattern:$0x73625140]
        %v412 = vld.sshfl [vmem:[#allocation1 + $0x8] sm:$0xff pattern:$0x73625140]
        %v413 = vld.sshfl [vmem:[#allocation1 + $0x10] sm:$0xff pattern:$0x73625140]
        %v414 = vld.sshfl [vmem:[#allocation1 + $0x18] sm:$0xff pattern:$0x73625140]
        %v415 = vld.sshfl [vmem:[#allocation1 + $0x20] sm:$0xff pattern:$0x73625140]
        %v416 = vld.sshfl [vmem:[#allocation1 + $0x28] sm:$0xff pattern:$0x73625140]
        %v423 = vpack.c.bf16 %v411, %v411
        %v424 = vpack.c.bf16 %v412, %v412
        %v425 = vpack.c.bf16 %v413, %v413
        %v426 = vpack.c.bf16 %v414, %v414
        %v427 = vpack.c.bf16 %v415, %v415
        %v428 = vpack.c.bf16 %v416, %v416
        %v429 = vld [vmem:[%s305] sm:$0xf]
        %v430 = vld [vmem:[%s305 + $0x4] sm:$0xf]
        %v431 = vld [vmem:[%s305 + $0x8] sm:$0xf]
        %v432 = vld [vmem:[%s305 + $0xc] sm:$0xf]
        %v433 = vld [vmem:[%s305 + $0x10] sm:$0xf]
        %v434 = vld [vmem:[%s305 + $0x14] sm:$0xf]
        %v435 = vld [vmem:[%s305 + $0x18] sm:$0xf]
        %v436 = vld [vmem:[%s305 + $0x1c] sm:$0xf]
        %v437 = vld [vmem:[%s305 + $0x20] sm:$0xf]
        %v438 = vld [vmem:[%s305 + $0x24] sm:$0xf]
        %v439 = vld [vmem:[%s305 + $0x28] sm:$0xf]
        %v440 = vld [vmem:[%s305 + $0x2c] sm:$0xf]
        %v441 = vld [vmem:[%s305 + $0x30] sm:$0xf]
        %v442 = vld [vmem:[%s305 + $0x34] sm:$0xf]
        %v443 = vld [vmem:[%s305 + $0x38] sm:$0xf]
        %v444 = vld [vmem:[%s305 + $0x3c] sm:$0xf]
        %v445 = vld [vmem:[%s305 + $0x40] sm:$0xf]
        %v446 = vld [vmem:[%s305 + $0x44] sm:$0xf]
        %v447 = vld [vmem:[%s305 + $0x48] sm:$0xf]
        %v448 = vld [vmem:[%s305 + $0x4c] sm:$0xf]
        %v449 = vld [vmem:[%s305 + $0x50] sm:$0xf]
        %v450 = vld [vmem:[%s305 + $0x54] sm:$0xf]
        %v451 = vld [vmem:[%s305 + $0x58] sm:$0xf]
        %v452 = vld [vmem:[%s305 + $0x5c] sm:$0xf]
        %v453 = vld [vmem:[%s305 + $0x60] sm:$0xf]
        %v454 = vld [vmem:[%s305 + $0x64] sm:$0xf]
        %v455 = vld [vmem:[%s305 + $0x68] sm:$0xf]
        %v456 = vld [vmem:[%s305 + $0x6c] sm:$0xf]
        %v457 = vld [vmem:[%s305 + $0x70] sm:$0xf]
        %v458 = vld [vmem:[%s305 + $0x74] sm:$0xf]
        %v459 = vld [vmem:[%s305 + $0x78] sm:$0xf]
        %v460 = vld [vmem:[%s305 + $0x7c] sm:$0xf]
        %v461 = vld [vmem:[%s305 + $0x80] sm:$0xf]
        %v462 = vld [vmem:[%s305 + $0x84] sm:$0xf]
        %v463 = vld [vmem:[%s305 + $0x88] sm:$0xf]
        %v464 = vld [vmem:[%s305 + $0x8c] sm:$0xf]
        %v465 = vld [vmem:[%s305 + $0x90] sm:$0xf]
        %v466 = vld [vmem:[%s305 + $0x94] sm:$0xf]
        %v467 = vld [vmem:[%s305 + $0x98] sm:$0xf]
        %v468 = vld [vmem:[%s305 + $0x9c] sm:$0xf]
        %v469 = vld [vmem:[%s305 + $0xa0] sm:$0xf]
        %v470 = vld [vmem:[%s305 + $0xa4] sm:$0xf]
        %v471 = vld [vmem:[%s305 + $0xa8] sm:$0xf]
        %v472 = vld [vmem:[%s305 + $0xac] sm:$0xf]
        %v473 = vld [vmem:[%s305 + $0xb0] sm:$0xf]
        %v474 = vld [vmem:[%s305 + $0xb4] sm:$0xf]
        %v475 = vld [vmem:[%s305 + $0xb8] sm:$0xf]
        %v476 = vld [vmem:[%s305 + $0xbc] sm:$0xf]
        %v477 = vld [vmem:[%s305 + $0xc0] sm:$0xf]
        %v478 = vld [vmem:[%s305 + $0xc4] sm:$0xf]
        %v479 = vld [vmem:[%s305 + $0xc8] sm:$0xf]
        %v480 = vld [vmem:[%s305 + $0xcc] sm:$0xf]
        %v481 = vld [vmem:[%s305 + $0xd0] sm:$0xf]
        %v482 = vld [vmem:[%s305 + $0xd4] sm:$0xf]
        %v483 = vld [vmem:[%s305 + $0xd8] sm:$0xf]
        %v484 = vld [vmem:[%s305 + $0xdc] sm:$0xf]
        %v485 = vld [vmem:[%s305 + $0xe0] sm:$0xf]
        %v486 = vld [vmem:[%s305 + $0xe4] sm:$0xf]
        %v487 = vld [vmem:[%s305 + $0xe8] sm:$0xf]
        %v488 = vld [vmem:[%s305 + $0xec] sm:$0xf]
        %v489 = vld [vmem:[%s305 + $0xf0] sm:$0xf]
        %v490 = vld [vmem:[%s305 + $0xf4] sm:$0xf]
        %v491 = vld [vmem:[%s305 + $0xf8] sm:$0xf]
        %v492 = vld [vmem:[%s305 + $0xfc] sm:$0xf]
        %v493 = vld [vmem:[%s305 + $0x100] sm:$0xf]
        %v494 = vld [vmem:[%s305 + $0x104] sm:$0xf]
        %v495 = vld [vmem:[%s305 + $0x108] sm:$0xf]
        %v496 = vld [vmem:[%s305 + $0x10c] sm:$0xf]
        %v497 = vld [vmem:[%s305 + $0x110] sm:$0xf]
        %v498 = vld [vmem:[%s305 + $0x114] sm:$0xf]
        %v499 = vld [vmem:[%s305 + $0x118] sm:$0xf]
        %v500 = vld [vmem:[%s305 + $0x11c] sm:$0xf]
        %v501 = vld [vmem:[%s305 + $0x120] sm:$0xf]
        %v502 = vld [vmem:[%s305 + $0x124] sm:$0xf]
        %v503 = vld [vmem:[%s305 + $0x128] sm:$0xf]
        %v504 = vld [vmem:[%s305 + $0x12c] sm:$0xf]
        %v505 = vld [vmem:[%s305 + $0x130] sm:$0xf]
        %v506 = vld [vmem:[%s305 + $0x134] sm:$0xf]
        %v507 = vld [vmem:[%s305 + $0x138] sm:$0xf]
        %v508 = vld [vmem:[%s305 + $0x13c] sm:$0xf]
        %v509 = vld [vmem:[%s305 + $0x140] sm:$0xf]
        %v510 = vld [vmem:[%s305 + $0x144] sm:$0xf]
        %v511 = vld [vmem:[%s305 + $0x148] sm:$0xf]
        %v512 = vld [vmem:[%s305 + $0x14c] sm:$0xf]
        %v513 = vld [vmem:[%s305 + $0x150] sm:$0x3]
        %s514 = sadd.s32 %s312, 1
        %s515 = smul.u32 %s514, 128
        %s516 = sld [smem:[#allocation2 + %s515]]
        %v517 = vstv %s516
        %v518 = vmul.f32 %v517, %v315
        %v519 = vmul.f32 %v517, %v316
        %s520 = sadd.s32 %s515, 1
        %s521 = sld [smem:[#allocation2 + %s520]]
        %v522 = vstv %s521
        %v523 = vmul.f32 %v522, %v323
        %v524 = vmul.f32 %v522, %v324
        %v525 = vadd.f32 %v518, %v523
        %v526 = vadd.f32 %v519, %v524
        %s527 = sadd.s32 %s515, 2
        %s528 = sld [smem:[#allocation2 + %s527]]
        %v529 = vstv %s528
        %v530 = vmul.f32 %v529, %v333
        %v531 = vmul.f32 %v529, %v334
        %v532 = vadd.f32 %v525, %v530
        %v533 = vadd.f32 %v526, %v531
        %s534 = sadd.s32 %s515, 3
        %s535 = sld [smem:[#allocation2 + %s534]]
        %v536 = vstv %s535
        %v537 = vmul.f32 %v536, %v343
        %v538 = vmul.f32 %v536, %v344
        %v539 = vadd.f32 %v532, %v537
        %v540 = vadd.f32 %v533, %v538
        %s541 = sadd.s32 %s515, 4
        %s542 = sld [smem:[#allocation2 + %s541]]
        %v543 = vstv %s542
        %v544 = vmul.f32 %v543, %v353
        %v545 = vmul.f32 %v543, %v354
        %v546 = vadd.f32 %v539, %v544
        %v547 = vadd.f32 %v540, %v545
        %s548 = sadd.s32 %s515, 5
        %s549 = sld [smem:[#allocation2 + %s548]]
        %v550 = vstv %s549
        %v551 = vmul.f32 %v550, %v363
        %v552 = vmul.f32 %v550, %v364
        %v553 = vadd.f32 %v546, %v551
        %v554 = vadd.f32 %v547, %v552
        %s555 = sadd.s32 %s515, 6
        %s556 = sld [smem:[#allocation2 + %s555]]
        %v557 = vstv %s556
        %v558 = vmul.f32 %v557, %v373
        %v559 = vmul.f32 %v557, %v374
        %v560 = vadd.f32 %v553, %v558
        %v561 = vadd.f32 %v554, %v559
        %s562 = sadd.s32 %s515, 7
        %s563 = sld [smem:[#allocation2 + %s562]]
        %v564 = vstv %s563
        %v565 = vmul.f32 %v564, %v383
        %v566 = vmul.f32 %v564, %v384
        %v567 = vadd.f32 %v560, %v565
        %v568 = vadd.f32 %v561, %v566
        %s569 = sadd.s32 %s515, 8
        %s570 = sld [smem:[#allocation2 + %s569]]
        %v571 = vstv %s570
        %v572 = vmul.f32 %v571, %v393
        %v573 = vmul.f32 %v571, %v394
        %v574 = vadd.f32 %v567, %v572
        %v575 = vadd.f32 %v568, %v573
        %s576 = sld [smem:[#allocation4 + %s514]]
        %v577 = vstv %s576
        %v578 = vadd.f32 %v574, %v577
        %v579 = vadd.f32 %v575, %v577
        %v580 = vmax.f32 %v578, 0.0
        %v581 = vmax.f32 %v579, 0.0
        %584 = vst [vmem:[#allocation1] ss:$4 sm:$0xff] %v580
        %s585 = scalar_lea.vmem [#allocation1], 32
        %586 = vst [vmem:[%s585] ss:$4 sm:$0xff] %v581
        %v587 = vld.sshfl [vmem:[#allocation1] sm:$0xff pattern:$0x73625140]
        %v588 = vld.sshfl [vmem:[#allocation1 + $0x8] sm:$0xff pattern:$0x73625140]
        %v589 = vld.sshfl [vmem:[#allocation1 + $0x10] sm:$0xff pattern:$0x73625140]
        %v590 = vld.sshfl [vmem:[#allocation1 + $0x18] sm:$0xff pattern:$0x73625140]
        %v591 = vld.sshfl [vmem:[#allocation1 + $0x20] sm:$0xff pattern:$0x73625140]
        %v592 = vld.sshfl [vmem:[#allocation1 + $0x28] sm:$0xff pattern:$0x73625140]
        %v599 = vpack.c.bf16 %v587, %v587
        %v600 = vpack.c.bf16 %v588, %v588
        %v601 = vpack.c.bf16 %v589, %v589
        %v602 = vpack.c.bf16 %v590, %v590
        %v603 = vpack.c.bf16 %v591, %v591
        %v604 = vpack.c.bf16 %v592, %v592
        %s605 = scalar_lea.vmem %s305, 340
        %v606 = vld [vmem:[%s605] sm:$0xf]
        %v607 = vld [vmem:[%s605 + $0x4] sm:$0xf]
        %v608 = vld [vmem:[%s605 + $0x8] sm:$0xf]
        %v609 = vld [vmem:[%s605 + $0xc] sm:$0xf]
        %v610 = vld [vmem:[%s605 + $0x10] sm:$0xf]
        %v611 = vld [vmem:[%s605 + $0x14] sm:$0xf]
        %v612 = vld [vmem:[%s605 + $0x18] sm:$0xf]
        %v613 = vld [vmem:[%s605 + $0x1c] sm:$0xf]
        %v614 = vld [vmem:[%s605 + $0x20] sm:$0xf]
        %v615 = vld [vmem:[%s605 + $0x24] sm:$0xf]
        %v616 = vld [vmem:[%s605 + $0x28] sm:$0xf]
        %v617 = vld [vmem:[%s605 + $0x2c] sm:$0xf]
        %v618 = vld [vmem:[%s605 + $0x30] sm:$0xf]
        %v619 = vld [vmem:[%s605 + $0x34] sm:$0xf]
        %v620 = vld [vmem:[%s605 + $0x38] sm:$0xf]
        %v621 = vld [vmem:[%s605 + $0x3c] sm:$0xf]
        %v622 = vld [vmem:[%s605 + $0x40] sm:$0xf]
        %v623 = vld [vmem:[%s605 + $0x44] sm:$0xf]
        %v624 = vld [vmem:[%s605 + $0x48] sm:$0xf]
        %v625 = vld [vmem:[%s605 + $0x4c] sm:$0xf]
        %v626 = vld [vmem:[%s605 + $0x50] sm:$0xf]
        %v627 = vld [vmem:[%s605 + $0x54] sm:$0xf]
        %v628 = vld [vmem:[%s605 + $0x58] sm:$0xf]
        %v629 = vld [vmem:[%s605 + $0x5c] sm:$0xf]
        %v630 = vld [vmem:[%s605 + $0x60] sm:$0xf]
        %v631 = vld [vmem:[%s605 + $0x64] sm:$0xf]
        %v632 = vld [vmem:[%s605 + $0x68] sm:$0xf]
        %v633 = vld [vmem:[%s605 + $0x6c] sm:$0xf]
        %v634 = vld [vmem:[%s605 + $0x70] sm:$0xf]
        %v635 = vld [vmem:[%s605 + $0x74] sm:$0xf]
        %v636 = vld [vmem:[%s605 + $0x78] sm:$0xf]
        %v637 = vld [vmem:[%s605 + $0x7c] sm:$0xf]
        %v638 = vld [vmem:[%s605 + $0x80] sm:$0xf]
        %v639 = vld [vmem:[%s605 + $0x84] sm:$0xf]
        %v640 = vld [vmem:[%s605 + $0x88] sm:$0xf]
        %v641 = vld [vmem:[%s605 + $0x8c] sm:$0xf]
        %v642 = vld [vmem:[%s605 + $0x90] sm:$0xf]
        %v643 = vld [vmem:[%s605 + $0x94] sm:$0xf]
        %v644 = vld [vmem:[%s605 + $0x98] sm:$0xf]
        %v645 = vld [vmem:[%s605 + $0x9c] sm:$0xf]
        %v646 = vld [vmem:[%s605 + $0xa0] sm:$0xf]
        %v647 = vld [vmem:[%s605 + $0xa4] sm:$0xf]
        %v648 = vld [vmem:[%s605 + $0xa8] sm:$0xf]
        %v649 = vld [vmem:[%s605 + $0xac] sm:$0xf]
        %v650 = vld [vmem:[%s605 + $0xb0] sm:$0xf]
        %v651 = vld [vmem:[%s605 + $0xb4] sm:$0xf]
        %v652 = vld [vmem:[%s605 + $0xb8] sm:$0xf]
        %v653 = vld [vmem:[%s605 + $0xbc] sm:$0xf]
        %v654 = vld [vmem:[%s605 + $0xc0] sm:$0xf]
        %v655 = vld [vmem:[%s605 + $0xc4] sm:$0xf]
        %v656 = vld [vmem:[%s605 + $0xc8] sm:$0xf]
        %v657 = vld [vmem:[%s605 + $0xcc] sm:$0xf]
        %v658 = vld [vmem:[%s605 + $0xd0] sm:$0xf]
        %v659 = vld [vmem:[%s605 + $0xd4] sm:$0xf]
        %v660 = vld [vmem:[%s605 + $0xd8] sm:$0xf]
        %v661 = vld [vmem:[%s605 + $0xdc] sm:$0xf]
        %v662 = vld [vmem:[%s605 + $0xe0] sm:$0xf]
        %v663 = vld [vmem:[%s605 + $0xe4] sm:$0xf]
        %v664 = vld [vmem:[%s605 + $0xe8] sm:$0xf]
        %v665 = vld [vmem:[%s605 + $0xec] sm:$0xf]
        %v666 = vld [vmem:[%s605 + $0xf0] sm:$0xf]
        %v667 = vld [vmem:[%s605 + $0xf4] sm:$0xf]
        %v668 = vld [vmem:[%s605 + $0xf8] sm:$0xf]
        %v669 = vld [vmem:[%s605 + $0xfc] sm:$0xf]
        %v670 = vld [vmem:[%s605 + $0x100] sm:$0xf]
        %v671 = vld [vmem:[%s605 + $0x104] sm:$0xf]
        %v672 = vld [vmem:[%s605 + $0x108] sm:$0xf]
        %v673 = vld [vmem:[%s605 + $0x10c] sm:$0xf]
        %v674 = vld [vmem:[%s605 + $0x110] sm:$0xf]
        %v675 = vld [vmem:[%s605 + $0x114] sm:$0xf]
        %v676 = vld [vmem:[%s605 + $0x118] sm:$0xf]
        %v677 = vld [vmem:[%s605 + $0x11c] sm:$0xf]
        %v678 = vld [vmem:[%s605 + $0x120] sm:$0xf]
        %v679 = vld [vmem:[%s605 + $0x124] sm:$0xf]
        %v680 = vld [vmem:[%s605 + $0x128] sm:$0xf]
        %v681 = vld [vmem:[%s605 + $0x12c] sm:$0xf]
        %v682 = vld [vmem:[%s605 + $0x130] sm:$0xf]
        %v683 = vld [vmem:[%s605 + $0x134] sm:$0xf]
        %v684 = vld [vmem:[%s605 + $0x138] sm:$0xf]
        %v685 = vld [vmem:[%s605 + $0x13c] sm:$0xf]
        %v686 = vld [vmem:[%s605 + $0x140] sm:$0xf]
        %v687 = vld [vmem:[%s605 + $0x144] sm:$0xf]
        %v688 = vld [vmem:[%s605 + $0x148] sm:$0xf]
        %v689 = vld [vmem:[%s605 + $0x14c] sm:$0xf]
        %v690 = vld [vmem:[%s605 + $0x150] sm:$0x3]
        %v776 = vunpack.c.l.b16 %v606
        %v777 = vunpack.c.l.b16 %v607
        %v778 = vunpack.c.l.b16 %v608
        %v779 = vunpack.c.l.b16 %v609
        %v780 = vunpack.c.l.b16 %v610
        %v781 = vunpack.c.l.b16 %v611
        %v782 = vunpack.c.l.b16 %v612
        %v783 = vunpack.c.l.b16 %v613
        %v784 = vunpack.c.l.b16 %v614
        %v785 = vunpack.c.l.b16 %v615
        %v786 = vunpack.c.l.b16 %v616
        %v787 = vunpack.c.l.b16 %v617
        %v788 = vunpack.c.l.b16 %v618
        %v789 = vunpack.c.l.b16 %v619
        %v790 = vunpack.c.l.b16 %v620
        %v791 = vunpack.c.l.b16 %v621
        %v792 = vunpack.c.l.b16 %v622
        %v793 = vunpack.c.l.b16 %v623
        %v794 = vunpack.c.l.b16 %v624
        %v795 = vunpack.c.l.b16 %v625
        %v796 = vunpack.c.l.b16 %v626
        %v797 = vunpack.c.l.b16 %v627
        %v798 = vunpack.c.l.b16 %v628
        %v799 = vunpack.c.l.b16 %v629
        %v800 = vunpack.c.l.b16 %v630
        %v801 = vunpack.c.l.b16 %v631
        %v802 = vunpack.c.l.b16 %v632
        %v803 = vunpack.c.l.b16 %v633
        %v804 = vunpack.c.l.b16 %v634
        %v805 = vunpack.c.l.b16 %v635
        %v806 = vunpack.c.l.b16 %v636
        %v807 = vunpack.c.l.b16 %v637
        %v808 = vunpack.c.l.b16 %v638
        %v809 = vunpack.c.l.b16 %v639
        %v810 = vunpack.c.l.b16 %v640
        %v811 = vunpack.c.l.b16 %v641
        %v812 = vunpack.c.l.b16 %v642
        %v813 = vunpack.c.l.b16 %v643
        %v814 = vunpack.c.l.b16 %v644
        %v815 = vunpack.c.l.b16 %v645
        %v816 = vunpack.c.l.b16 %v646
        %v817 = vunpack.c.l.b16 %v647
        %v818 = vunpack.c.l.b16 %v648
        %v819 = vunpack.c.l.b16 %v649
        %v820 = vunpack.c.l.b16 %v650
        %v821 = vunpack.c.l.b16 %v651
        %v822 = vunpack.c.l.b16 %v652
        %v823 = vunpack.c.l.b16 %v653
        %v824 = vunpack.c.l.b16 %v654
        %v825 = vunpack.c.l.b16 %v655
        %v826 = vunpack.c.l.b16 %v656
        %v827 = vunpack.c.l.b16 %v657
        %v828 = vunpack.c.l.b16 %v658
        %v829 = vunpack.c.l.b16 %v659
        %v830 = vunpack.c.l.b16 %v660
        %v831 = vunpack.c.l.b16 %v661
        %v832 = vunpack.c.l.b16 %v662
        %v833 = vunpack.c.l.b16 %v663
        %v834 = vunpack.c.l.b16 %v664
        %v835 = vunpack.c.l.b16 %v665
        %v836 = vunpack.c.l.b16 %v666
        %v837 = vunpack.c.l.b16 %v667
        %v838 = vunpack.c.l.b16 %v668
        %v839 = vunpack.c.l.b16 %v669
        %v840 = vunpack.c.l.b16 %v670
        %v841 = vunpack.c.l.b16 %v671
        %v842 = vunpack.c.l.b16 %v672
        %v843 = vunpack.c.l.b16 %v673
        %v844 = vunpack.c.l.b16 %v674
        %v845 = vunpack.c.l.b16 %v675
        %v846 = vunpack.c.l.b16 %v676
        %v847 = vunpack.c.l.b16 %v677
        %v848 = vunpack.c.l.b16 %v678
        %v849 = vunpack.c.l.b16 %v679
        %v850 = vunpack.c.l.b16 %v680
        %v851 = vunpack.c.l.b16 %v681
        %v852 = vunpack.c.l.b16 %v682
        %v853 = vunpack.c.l.b16 %v683
        %v854 = vunpack.c.l.b16 %v684
        %v855 = vunpack.c.l.b16 %v685
        %v856 = vunpack.c.l.b16 %v686
        %v857 = vunpack.c.l.b16 %v687
        %v858 = vunpack.c.l.b16 %v688
        %v859 = vunpack.c.l.b16 %v689
        %v860 = vunpack.c.l.b16 %v690
        %v861 = vpack.c.b16 %v777, %v776
        %v862 = vpack.c.b16 %v779, %v778
        %v863 = vpack.c.b16 %v781, %v780
        %v864 = vpack.c.b16 %v783, %v782
        %v865 = vpack.c.b16 %v785, %v784
        %v866 = vpack.c.b16 %v787, %v786
        %v867 = vpack.c.b16 %v789, %v788
        %v868 = vpack.c.b16 %v791, %v790
        %v869 = vpack.c.b16 %v793, %v792
        %v870 = vpack.c.b16 %v795, %v794
        %v871 = vpack.c.b16 %v797, %v796
        %v872 = vpack.c.b16 %v799, %v798
        %v873 = vpack.c.b16 %v801, %v800
        %v874 = vpack.c.b16 %v803, %v802
        %v875 = vpack.c.b16 %v805, %v804
        %v876 = vpack.c.b16 %v807, %v806
        %v877 = vpack.c.b16 %v809, %v808
        %v878 = vpack.c.b16 %v811, %v810
        %v879 = vpack.c.b16 %v813, %v812
        %v880 = vpack.c.b16 %v815, %v814
        %v881 = vpack.c.b16 %v817, %v816
        %v882 = vpack.c.b16 %v819, %v818
        %v883 = vpack.c.b16 %v821, %v820
        %v884 = vpack.c.b16 %v823, %v822
        %v885 = vpack.c.b16 %v825, %v824
        %v886 = vpack.c.b16 %v827, %v826
        %v887 = vpack.c.b16 %v829, %v828
        %v888 = vpack.c.b16 %v831, %v830
        %v889 = vpack.c.b16 %v833, %v832
        %v890 = vpack.c.b16 %v835, %v834
        %v891 = vpack.c.b16 %v837, %v836
        %v892 = vpack.c.b16 %v839, %v838
        %v893 = vpack.c.b16 %v841, %v840
        %v894 = vpack.c.b16 %v843, %v842
        %v895 = vpack.c.b16 %v845, %v844
        %v896 = vpack.c.b16 %v847, %v846
        %v897 = vpack.c.b16 %v849, %v848
        %v898 = vpack.c.b16 %v851, %v850
        %v899 = vpack.c.b16 %v853, %v852
        %v900 = vpack.c.b16 %v855, %v854
        %v901 = vpack.c.b16 %v857, %v856
        %v902 = vpack.c.b16 %v859, %v858
        %v903 = vpack.c.b16 %v860, %v860
        %vm946 = vcmask 293888
        %v948 = vsel %vm946, %v604, 0
        %vm950 = vcmask 1041408
        %v952 = vsel %vm950, %v903, 0
        %954 = vmatpush.bf16.msra.mxu0 %v868
        %955 = vmatpush.bf16.msra.mxu0 %v867
        %956 = vmatpush.bf16.msra.mxu0 %v866
        %957 = vmatpush.bf16.msra.mxu0 %v865
        %958 = vmatpush.bf16.msra.mxu0 %v864
        %959 = vmatpush.bf16.msra.mxu0 %v863
        %960 = vmatpush.bf16.msra.mxu0 %v862
        %961 = vmatpush.bf16.msra.mxu0 %v861
        %962 = vmatmul.bf16.gmra.mxu0 %v599
        %v963 = vpop.f32.mrf.mxu0
        %v964 = vadd.f32 0.0, %v963
        %v965 = vpop.f32.mrf.mxu0
        %966 = vdwg.mxu0
        %967 = vmatpush.bf16.msra.mxu0 %v876
        %968 = vmatpush.bf16.msra.mxu0 %v875
        %969 = vmatpush.bf16.msra.mxu0 %v874
        %970 = vmatpush.bf16.msra.mxu0 %v873
        %971 = vmatpush.bf16.msra.mxu0 %v872
        %972 = vmatpush.bf16.msra.mxu0 %v871
        %973 = vmatpush.bf16.msra.mxu0 %v870
        %974 = vmatpush.bf16.msra.mxu0 %v869
        %975 = vmatmul.bf16.gmra.mxu0 %v600
        %v976 = vpop.f32.mrf.mxu0
        %v977 = vadd.f32 %v964, %v976
        %v978 = vpop.f32.mrf.mxu0
        %979 = vdwg.mxu0
        %980 = vmatpush.bf16.msra.mxu0 %v884
        %981 = vmatpush.bf16.msra.mxu0 %v883
        %982 = vmatpush.bf16.msra.mxu0 %v882
        %983 = vmatpush.bf16.msra.mxu0 %v881
        %984 = vmatpush.bf16.msra.mxu0 %v880
        %985 = vmatpush.bf16.msra.mxu0 %v879
        %986 = vmatpush.bf16.msra.mxu0 %v878
        %987 = vmatpush.bf16.msra.mxu0 %v877
        %988 = vmatmul.bf16.gmra.mxu0 %v601
        %v989 = vpop.f32.mrf.mxu0
        %v990 = vadd.f32 %v977, %v989
        %v991 = vpop.f32.mrf.mxu0
        %992 = vdwg.mxu0
        %993 = vmatpush.bf16.msra.mxu0 %v892
        %994 = vmatpush.bf16.msra.mxu0 %v891
        %995 = vmatpush.bf16.msra.mxu0 %v890
        %996 = vmatpush.bf16.msra.mxu0 %v889
        %997 = vmatpush.bf16.msra.mxu0 %v888
        %998 = vmatpush.bf16.msra.mxu0 %v887
        %999 = vmatpush.bf16.msra.mxu0 %v886
        %1000 = vmatpush.bf16.msra.mxu0 %v885
        %1001 = vmatmul.bf16.gmra.mxu0 %v602
        %v1002 = vpop.f32.mrf.mxu0
        %v1003 = vadd.f32 %v990, %v1002
        %v1004 = vpop.f32.mrf.mxu0
        %1005 = vdwg.mxu0
        %1006 = vmatpush.bf16.msra.mxu0 %v900
        %1007 = vmatpush.bf16.msra.mxu0 %v899
        %1008 = vmatpush.bf16.msra.mxu0 %v898
        %1009 = vmatpush.bf16.msra.mxu0 %v897
        %1010 = vmatpush.bf16.msra.mxu0 %v896
        %1011 = vmatpush.bf16.msra.mxu0 %v895
        %1012 = vmatpush.bf16.msra.mxu0 %v894
        %1013 = vmatpush.bf16.msra.mxu0 %v893
        %1014 = vmatmul.bf16.gmra.mxu0 %v603
        %v1015 = vpop.f32.mrf.mxu0
        %v1016 = vadd.f32 %v1003, %v1015
        %v1017 = vpop.f32.mrf.mxu0
        %1018 = vdwg.mxu0
        %1019 = vmatpush.bf16.msra.mxu0 0
        %1020 = vmatpush.bf16.msra.mxu0 0
        %1021 = vmatpush.bf16.msra.mxu0 0
        %1022 = vmatpush.bf16.msra.mxu0 0
        %1023 = vmatpush.bf16.msra.mxu0 0
        %1024 = vmatpush.bf16.msra.mxu0 %v952
        %1025 = vmatpush.bf16.msra.mxu0 %v902
        %1026 = vmatpush.bf16.msra.mxu0 %v901
        %1027 = vmatmul.bf16.gmra.mxu0 %v948
        %v1028 = vpop.f32.mrf.mxu0
        %v1029 = vadd.f32 %v1016, %v1028
        %v1030 = vpop.f32.mrf.mxu0
        %1031 = vdwg.mxu0
        %v1117 = vunpack.c.l.b16 %v429
        %v1118 = vunpack.c.l.b16 %v430
        %v1119 = vunpack.c.l.b16 %v431
        %v1120 = vunpack.c.l.b16 %v432
        %v1121 = vunpack.c.l.b16 %v433
        %v1122 = vunpack.c.l.b16 %v434
        %v1123 = vunpack.c.l.b16 %v435
        %v1124 = vunpack.c.l.b16 %v436
        %v1125 = vunpack.c.l.b16 %v437
        %v1126 = vunpack.c.l.b16 %v438
        %v1127 = vunpack.c.l.b16 %v439
        %v1128 = vunpack.c.l.b16 %v440
        %v1129 = vunpack.c.l.b16 %v441
        %v1130 = vunpack.c.l.b16 %v442
        %v1131 = vunpack.c.l.b16 %v443
        %v1132 = vunpack.c.l.b16 %v444
        %v1133 = vunpack.c.l.b16 %v445
        %v1134 = vunpack.c.l.b16 %v446
        %v1135 = vunpack.c.l.b16 %v447
        %v1136 = vunpack.c.l.b16 %v448
        %v1137 = vunpack.c.l.b16 %v449
        %v1138 = vunpack.c.l.b16 %v450
        %v1139 = vunpack.c.l.b16 %v451
        %v1140 = vunpack.c.l.b16 %v452
        %v1141 = vunpack.c.l.b16 %v453
        %v1142 = vunpack.c.l.b16 %v454
        %v1143 = vunpack.c.l.b16 %v455
        %v1144 = vunpack.c.l.b16 %v456
        %v1145 = vunpack.c.l.b16 %v457
        %v1146 = vunpack.c.l.b16 %v458
        %v1147 = vunpack.c.l.b16 %v459
        %v1148 = vunpack.c.l.b16 %v460
        %v1149 = vunpack.c.l.b16 %v461
        %v1150 = vunpack.c.l.b16 %v462
        %v1151 = vunpack.c.l.b16 %v463
        %v1152 = vunpack.c.l.b16 %v464
        %v1153 = vunpack.c.l.b16 %v465
        %v1154 = vunpack.c.l.b16 %v466
        %v1155 = vunpack.c.l.b16 %v467
        %v1156 = vunpack.c.l.b16 %v468
        %v1157 = vunpack.c.l.b16 %v469
        %v1158 = vunpack.c.l.b16 %v470
        %v1159 = vunpack.c.l.b16 %v471
        %v1160 = vunpack.c.l.b16 %v472
        %v1161 = vunpack.c.l.b16 %v473
        %v1162 = vunpack.c.l.b16 %v474
        %v1163 = vunpack.c.l.b16 %v475
        %v1164 = vunpack.c.l.b16 %v476
        %v1165 = vunpack.c.l.b16 %v477
        %v1166 = vunpack.c.l.b16 %v478
        %v1167 = vunpack.c.l.b16 %v479
        %v1168 = vunpack.c.l.b16 %v480
        %v1169 = vunpack.c.l.b16 %v481
        %v1170 = vunpack.c.l.b16 %v482
        %v1171 = vunpack.c.l.b16 %v483
        %v1172 = vunpack.c.l.b16 %v484
        %v1173 = vunpack.c.l.b16 %v485
        %v1174 = vunpack.c.l.b16 %v486
        %v1175 = vunpack.c.l.b16 %v487
        %v1176 = vunpack.c.l.b16 %v488
        %v1177 = vunpack.c.l.b16 %v489
        %v1178 = vunpack.c.l.b16 %v490
        %v1179 = vunpack.c.l.b16 %v491
        %v1180 = vunpack.c.l.b16 %v492
        %v1181 = vunpack.c.l.b16 %v493
        %v1182 = vunpack.c.l.b16 %v494
        %v1183 = vunpack.c.l.b16 %v495
        %v1184 = vunpack.c.l.b16 %v496
        %v1185 = vunpack.c.l.b16 %v497
        %v1186 = vunpack.c.l.b16 %v498
        %v1187 = vunpack.c.l.b16 %v499
        %v1188 = vunpack.c.l.b16 %v500
        %v1189 = vunpack.c.l.b16 %v501
        %v1190 = vunpack.c.l.b16 %v502
        %v1191 = vunpack.c.l.b16 %v503
        %v1192 = vunpack.c.l.b16 %v504
        %v1193 = vunpack.c.l.b16 %v505
        %v1194 = vunpack.c.l.b16 %v506
        %v1195 = vunpack.c.l.b16 %v507
        %v1196 = vunpack.c.l.b16 %v508
        %v1197 = vunpack.c.l.b16 %v509
        %v1198 = vunpack.c.l.b16 %v510
        %v1199 = vunpack.c.l.b16 %v511
        %v1200 = vunpack.c.l.b16 %v512
        %v1201 = vunpack.c.l.b16 %v513
        %v1202 = vpack.c.b16 %v1118, %v1117
        %v1203 = vpack.c.b16 %v1120, %v1119
        %v1204 = vpack.c.b16 %v1122, %v1121
        %v1205 = vpack.c.b16 %v1124, %v1123
        %v1206 = vpack.c.b16 %v1126, %v1125
        %v1207 = vpack.c.b16 %v1128, %v1127
        %v1208 = vpack.c.b16 %v1130, %v1129
        %v1209 = vpack.c.b16 %v1132, %v1131
        %v1210 = vpack.c.b16 %v1134, %v1133
        %v1211 = vpack.c.b16 %v1136, %v1135
        %v1212 = vpack.c.b16 %v1138, %v1137
        %v1213 = vpack.c.b16 %v1140, %v1139
        %v1214 = vpack.c.b16 %v1142, %v1141
        %v1215 = vpack.c.b16 %v1144, %v1143
        %v1216 = vpack.c.b16 %v1146, %v1145
        %v1217 = vpack.c.b16 %v1148, %v1147
        %v1218 = vpack.c.b16 %v1150, %v1149
        %v1219 = vpack.c.b16 %v1152, %v1151
        %v1220 = vpack.c.b16 %v1154, %v1153
        %v1221 = vpack.c.b16 %v1156, %v1155
        %v1222 = vpack.c.b16 %v1158, %v1157
        %v1223 = vpack.c.b16 %v1160, %v1159
        %v1224 = vpack.c.b16 %v1162, %v1161
        %v1225 = vpack.c.b16 %v1164, %v1163
        %v1226 = vpack.c.b16 %v1166, %v1165
        %v1227 = vpack.c.b16 %v1168, %v1167
        %v1228 = vpack.c.b16 %v1170, %v1169
        %v1229 = vpack.c.b16 %v1172, %v1171
        %v1230 = vpack.c.b16 %v1174, %v1173
        %v1231 = vpack.c.b16 %v1176, %v1175
        %v1232 = vpack.c.b16 %v1178, %v1177
        %v1233 = vpack.c.b16 %v1180, %v1179
        %v1234 = vpack.c.b16 %v1182, %v1181
        %v1235 = vpack.c.b16 %v1184, %v1183
        %v1236 = vpack.c.b16 %v1186, %v1185
        %v1237 = vpack.c.b16 %v1188, %v1187
        %v1238 = vpack.c.b16 %v1190, %v1189
        %v1239 = vpack.c.b16 %v1192, %v1191
        %v1240 = vpack.c.b16 %v1194, %v1193
        %v1241 = vpack.c.b16 %v1196, %v1195
        %v1242 = vpack.c.b16 %v1198, %v1197
        %v1243 = vpack.c.b16 %v1200, %v1199
        %v1244 = vpack.c.b16 %v1201, %v1201
        %v1288 = vsel %vm946, %v428, 0
        %v1291 = vsel %vm950, %v1244, 0
        %1293 = vmatpush.bf16.msra.mxu0 %v1209
        %1294 = vmatpush.bf16.msra.mxu0 %v1208
        %1295 = vmatpush.bf16.msra.mxu0 %v1207
        %1296 = vmatpush.bf16.msra.mxu0 %v1206
        %1297 = vmatpush.bf16.msra.mxu0 %v1205
        %1298 = vmatpush.bf16.msra.mxu0 %v1204
        %1299 = vmatpush.bf16.msra.mxu0 %v1203
        %1300 = vmatpush.bf16.msra.mxu0 %v1202
        %1301 = vmatmul.bf16.gmra.mxu0 %v423
        %v1302 = vpop.f32.mrf.mxu0
        %v1303 = vadd.f32 %v1029, %v1302
        %v1304 = vpop.f32.mrf.mxu0
        %1305 = vdwg.mxu0
        %1306 = vmatpush.bf16.msra.mxu0 %v1217
        %1307 = vmatpush.bf16.msra.mxu0 %v1216
        %1308 = vmatpush.bf16.msra.mxu0 %v1215
        %1309 = vmatpush.bf16.msra.mxu0 %v1214
        %1310 = vmatpush.bf16.msra.mxu0 %v1213
        %1311 = vmatpush.bf16.msra.mxu0 %v1212
        %1312 = vmatpush.bf16.msra.mxu0 %v1211
        %1313 = vmatpush.bf16.msra.mxu0 %v1210
        %1314 = vmatmul.bf16.gmra.mxu0 %v424
        %v1315 = vpop.f32.mrf.mxu0
        %v1316 = vadd.f32 %v1303, %v1315
        %v1317 = vpop.f32.mrf.mxu0
        %1318 = vdwg.mxu0
        %1319 = vmatpush.bf16.msra.mxu0 %v1225
        %1320 = vmatpush.bf16.msra.mxu0 %v1224
        %1321 = vmatpush.bf16.msra.mxu0 %v1223
        %1322 = vmatpush.bf16.msra.mxu0 %v1222
        %1323 = vmatpush.bf16.msra.mxu0 %v1221
        %1324 = vmatpush.bf16.msra.mxu0 %v1220
        %1325 = vmatpush.bf16.msra.mxu0 %v1219
        %1326 = vmatpush.bf16.msra.mxu0 %v1218
        %1327 = vmatmul.bf16.gmra.mxu0 %v425
        %v1328 = vpop.f32.mrf.mxu0
        %v1329 = vadd.f32 %v1316, %v1328
        %v1330 = vpop.f32.mrf.mxu0
        %1331 = vdwg.mxu0
        %1332 = vmatpush.bf16.msra.mxu0 %v1233
        %1333 = vmatpush.bf16.msra.mxu0 %v1232
        %1334 = vmatpush.bf16.msra.mxu0 %v1231
        %1335 = vmatpush.bf16.msra.mxu0 %v1230
        %1336 = vmatpush.bf16.msra.mxu0 %v1229
        %1337 = vmatpush.bf16.msra.mxu0 %v1228
        %1338 = vmatpush.bf16.msra.mxu0 %v1227
        %1339 = vmatpush.bf16.msra.mxu0 %v1226
        %1340 = vmatmul.bf16.gmra.mxu0 %v426
        %v1341 = vpop.f32.mrf.mxu0
        %v1342 = vadd.f32 %v1329, %v1341
        %v1343 = vpop.f32.mrf.mxu0
        %1344 = vdwg.mxu0
        %1345 = vmatpush.bf16.msra.mxu0 %v1241
        %1346 = vmatpush.bf16.msra.mxu0 %v1240
        %1347 = vmatpush.bf16.msra.mxu0 %v1239
        %1348 = vmatpush.bf16.msra.mxu0 %v1238
        %1349 = vmatpush.bf16.msra.mxu0 %v1237
        %1350 = vmatpush.bf16.msra.mxu0 %v1236
        %1351 = vmatpush.bf16.msra.mxu0 %v1235
        %1352 = vmatpush.bf16.msra.mxu0 %v1234
        %1353 = vmatmul.bf16.gmra.mxu0 %v427
        %v1354 = vpop.f32.mrf.mxu0
        %v1355 = vadd.f32 %v1342, %v1354
        %v1356 = vpop.f32.mrf.mxu0
        %1357 = vdwg.mxu0
        %1358 = vmatpush.bf16.msra.mxu0 0
        %1359 = vmatpush.bf16.msra.mxu0 0
        %1360 = vmatpush.bf16.msra.mxu0 0
        %1361 = vmatpush.bf16.msra.mxu0 0
        %1362 = vmatpush.bf16.msra.mxu0 0
        %1363 = vmatpush.bf16.msra.mxu0 %v1291
        %1364 = vmatpush.bf16.msra.mxu0 %v1243
        %1365 = vmatpush.bf16.msra.mxu0 %v1242
        %1366 = vmatmul.bf16.gmra.mxu0 %v1288
        %v1367 = vpop.f32.mrf.mxu0
        %v1368 = vadd.f32 %v1355, %v1367
        %v1369 = vpop.f32.mrf.mxu0
        %1370 = vdwg.mxu0
        %s1371 = sadd.s32 %s312, 2
        %s1372 = smul.u32 %s1371, 128
        %s1373 = sld [smem:[#allocation2 + %s1372]]
        %v1374 = vstv %s1373
        %v1375 = vmul.f32 %v1374, %v315
        %v1376 = vmul.f32 %v1374, %v316
        %s1377 = sadd.s32 %s1372, 1
        %s1378 = sld [smem:[#allocation2 + %s1377]]
        %v1379 = vstv %s1378
        %v1380 = vmul.f32 %v1379, %v323
        %v1381 = vmul.f32 %v1379, %v324
        %v1382 = vadd.f32 %v1375, %v1380
        %v1383 = vadd.f32 %v1376, %v1381
        %s1384 = sadd.s32 %s1372, 2
        %s1385 = sld [smem:[#allocation2 + %s1384]]
        %v1386 = vstv %s1385
        %v1387 = vmul.f32 %v1386, %v333
        %v1388 = vmul.f32 %v1386, %v334
        %v1389 = vadd.f32 %v1382, %v1387
        %v1390 = vadd.f32 %v1383, %v1388
        %s1391 = sadd.s32 %s1372, 3
        %s1392 = sld [smem:[#allocation2 + %s1391]]
        %v1393 = vstv %s1392
        %v1394 = vmul.f32 %v1393, %v343
        %v1395 = vmul.f32 %v1393, %v344
        %v1396 = vadd.f32 %v1389, %v1394
        %v1397 = vadd.f32 %v1390, %v1395
        %s1398 = sadd.s32 %s1372, 4
        %s1399 = sld [smem:[#allocation2 + %s1398]]
        %v1400 = vstv %s1399
        %v1401 = vmul.f32 %v1400, %v353
        %v1402 = vmul.f32 %v1400, %v354
        %v1403 = vadd.f32 %v1396, %v1401
        %v1404 = vadd.f32 %v1397, %v1402
        %s1405 = sadd.s32 %s1372, 5
        %s1406 = sld [smem:[#allocation2 + %s1405]]
        %v1407 = vstv %s1406
        %v1408 = vmul.f32 %v1407, %v363
        %v1409 = vmul.f32 %v1407, %v364
        %v1410 = vadd.f32 %v1403, %v1408
        %v1411 = vadd.f32 %v1404, %v1409
        %s1412 = sadd.s32 %s1372, 6
        %s1413 = sld [smem:[#allocation2 + %s1412]]
        %v1414 = vstv %s1413
        %v1415 = vmul.f32 %v1414, %v373
        %v1416 = vmul.f32 %v1414, %v374
        %v1417 = vadd.f32 %v1410, %v1415
        %v1418 = vadd.f32 %v1411, %v1416
        %s1419 = sadd.s32 %s1372, 7
        %s1420 = sld [smem:[#allocation2 + %s1419]]
        %v1421 = vstv %s1420
        %v1422 = vmul.f32 %v1421, %v383
        %v1423 = vmul.f32 %v1421, %v384
        %v1424 = vadd.f32 %v1417, %v1422
        %v1425 = vadd.f32 %v1418, %v1423
        %s1426 = sadd.s32 %s1372, 8
        %s1427 = sld [smem:[#allocation2 + %s1426]]
        %v1428 = vstv %s1427
        %v1429 = vmul.f32 %v1428, %v393
        %v1430 = vmul.f32 %v1428, %v394
        %v1431 = vadd.f32 %v1424, %v1429
        %v1432 = vadd.f32 %v1425, %v1430
        %s1433 = sld [smem:[#allocation4 + %s1371]]
        %v1434 = vstv %s1433
        %v1435 = vadd.f32 %v1431, %v1434
        %v1436 = vadd.f32 %v1432, %v1434
        %v1437 = vmax.f32 %v1435, 0.0
        %v1438 = vmax.f32 %v1436, 0.0
        %1441 = vst [vmem:[#allocation1] ss:$4 sm:$0xff] %v1437
        %s1442 = scalar_lea.vmem [#allocation1], 32
        %1443 = vst [vmem:[%s1442] ss:$4 sm:$0xff] %v1438
        %v1444 = vld.sshfl [vmem:[#allocation1] sm:$0xff pattern:$0x73625140]
        %v1445 = vld.sshfl [vmem:[#allocation1 + $0x8] sm:$0xff pattern:$0x73625140]
        %v1446 = vld.sshfl [vmem:[#allocation1 + $0x10] sm:$0xff pattern:$0x73625140]
        %v1447 = vld.sshfl [vmem:[#allocation1 + $0x18] sm:$0xff pattern:$0x73625140]
        %v1448 = vld.sshfl [vmem:[#allocation1 + $0x20] sm:$0xff pattern:$0x73625140]
        %v1449 = vld.sshfl [vmem:[#allocation1 + $0x28] sm:$0xff pattern:$0x73625140]
        %v1456 = vpack.c.bf16 %v1444, %v1444
        %v1457 = vpack.c.bf16 %v1445, %v1445
        %v1458 = vpack.c.bf16 %v1446, %v1446
        %v1459 = vpack.c.bf16 %v1447, %v1447
        %v1460 = vpack.c.bf16 %v1448, %v1448
        %v1461 = vpack.c.bf16 %v1449, %v1449
        %s1462 = scalar_lea.vmem %s305, 680
        %v1463 = vld [vmem:[%s1462] sm:$0xf]
        %v1464 = vld [vmem:[%s1462 + $0x4] sm:$0xf]
        %v1465 = vld [vmem:[%s1462 + $0x8] sm:$0xf]
        %v1466 = vld [vmem:[%s1462 + $0xc] sm:$0xf]
        %v1467 = vld [vmem:[%s1462 + $0x10] sm:$0xf]
        %v1468 = vld [vmem:[%s1462 + $0x14] sm:$0xf]
        %v1469 = vld [vmem:[%s1462 + $0x18] sm:$0xf]
        %v1470 = vld [vmem:[%s1462 + $0x1c] sm:$0xf]
        %v1471 = vld [vmem:[%s1462 + $0x20] sm:$0xf]
        %v1472 = vld [vmem:[%s1462 + $0x24] sm:$0xf]
        %v1473 = vld [vmem:[%s1462 + $0x28] sm:$0xf]
        %v1474 = vld [vmem:[%s1462 + $0x2c] sm:$0xf]
        %v1475 = vld [vmem:[%s1462 + $0x30] sm:$0xf]
        %v1476 = vld [vmem:[%s1462 + $0x34] sm:$0xf]
        %v1477 = vld [vmem:[%s1462 + $0x38] sm:$0xf]
        %v1478 = vld [vmem:[%s1462 + $0x3c] sm:$0xf]
        %v1479 = vld [vmem:[%s1462 + $0x40] sm:$0xf]
        %v1480 = vld [vmem:[%s1462 + $0x44] sm:$0xf]
        %v1481 = vld [vmem:[%s1462 + $0x48] sm:$0xf]
        %v1482 = vld [vmem:[%s1462 + $0x4c] sm:$0xf]
        %v1483 = vld [vmem:[%s1462 + $0x50] sm:$0xf]
        %v1484 = vld [vmem:[%s1462 + $0x54] sm:$0xf]
        %v1485 = vld [vmem:[%s1462 + $0x58] sm:$0xf]
        %v1486 = vld [vmem:[%s1462 + $0x5c] sm:$0xf]
        %v1487 = vld [vmem:[%s1462 + $0x60] sm:$0xf]
        %v1488 = vld [vmem:[%s1462 + $0x64] sm:$0xf]
        %v1489 = vld [vmem:[%s1462 + $0x68] sm:$0xf]
        %v1490 = vld [vmem:[%s1462 + $0x6c] sm:$0xf]
        %v1491 = vld [vmem:[%s1462 + $0x70] sm:$0xf]
        %v1492 = vld [vmem:[%s1462 + $0x74] sm:$0xf]
        %v1493 = vld [vmem:[%s1462 + $0x78] sm:$0xf]
        %v1494 = vld [vmem:[%s1462 + $0x7c] sm:$0xf]
        %v1495 = vld [vmem:[%s1462 + $0x80] sm:$0xf]
        %v1496 = vld [vmem:[%s1462 + $0x84] sm:$0xf]
        %v1497 = vld [vmem:[%s1462 + $0x88] sm:$0xf]
        %v1498 = vld [vmem:[%s1462 + $0x8c] sm:$0xf]
        %v1499 = vld [vmem:[%s1462 + $0x90] sm:$0xf]
        %v1500 = vld [vmem:[%s1462 + $0x94] sm:$0xf]
        %v1501 = vld [vmem:[%s1462 + $0x98] sm:$0xf]
        %v1502 = vld [vmem:[%s1462 + $0x9c] sm:$0xf]
        %v1503 = vld [vmem:[%s1462 + $0xa0] sm:$0xf]
        %v1504 = vld [vmem:[%s1462 + $0xa4] sm:$0xf]
        %v1505 = vld [vmem:[%s1462 + $0xa8] sm:$0xf]
        %v1506 = vld [vmem:[%s1462 + $0xac] sm:$0xf]
        %v1507 = vld [vmem:[%s1462 + $0xb0] sm:$0xf]
        %v1508 = vld [vmem:[%s1462 + $0xb4] sm:$0xf]
        %v1509 = vld [vmem:[%s1462 + $0xb8] sm:$0xf]
        %v1510 = vld [vmem:[%s1462 + $0xbc] sm:$0xf]
        %v1511 = vld [vmem:[%s1462 + $0xc0] sm:$0xf]
        %v1512 = vld [vmem:[%s1462 + $0xc4] sm:$0xf]
        %v1513 = vld [vmem:[%s1462 + $0xc8] sm:$0xf]
        %v1514 = vld [vmem:[%s1462 + $0xcc] sm:$0xf]
        %v1515 = vld [vmem:[%s1462 + $0xd0] sm:$0xf]
        %v1516 = vld [vmem:[%s1462 + $0xd4] sm:$0xf]
        %v1517 = vld [vmem:[%s1462 + $0xd8] sm:$0xf]
        %v1518 = vld [vmem:[%s1462 + $0xdc] sm:$0xf]
        %v1519 = vld [vmem:[%s1462 + $0xe0] sm:$0xf]
        %v1520 = vld [vmem:[%s1462 + $0xe4] sm:$0xf]
        %v1521 = vld [vmem:[%s1462 + $0xe8] sm:$0xf]
        %v1522 = vld [vmem:[%s1462 + $0xec] sm:$0xf]
        %v1523 = vld [vmem:[%s1462 + $0xf0] sm:$0xf]
        %v1524 = vld [vmem:[%s1462 + $0xf4] sm:$0xf]
        %v1525 = vld [vmem:[%s1462 + $0xf8] sm:$0xf]
        %v1526 = vld [vmem:[%s1462 + $0xfc] sm:$0xf]
        %v1527 = vld [vmem:[%s1462 + $0x100] sm:$0xf]
        %v1528 = vld [vmem:[%s1462 + $0x104] sm:$0xf]
        %v1529 = vld [vmem:[%s1462 + $0x108] sm:$0xf]
        %v1530 = vld [vmem:[%s1462 + $0x10c] sm:$0xf]
        %v1531 = vld [vmem:[%s1462 + $0x110] sm:$0xf]
        %v1532 = vld [vmem:[%s1462 + $0x114] sm:$0xf]
        %v1533 = vld [vmem:[%s1462 + $0x118] sm:$0xf]
        %v1534 = vld [vmem:[%s1462 + $0x11c] sm:$0xf]
        %v1535 = vld [vmem:[%s1462 + $0x120] sm:$0xf]
        %v1536 = vld [vmem:[%s1462 + $0x124] sm:$0xf]
        %v1537 = vld [vmem:[%s1462 + $0x128] sm:$0xf]
        %v1538 = vld [vmem:[%s1462 + $0x12c] sm:$0xf]
        %v1539 = vld [vmem:[%s1462 + $0x130] sm:$0xf]
        %v1540 = vld [vmem:[%s1462 + $0x134] sm:$0xf]
        %v1541 = vld [vmem:[%s1462 + $0x138] sm:$0xf]
        %v1542 = vld [vmem:[%s1462 + $0x13c] sm:$0xf]
        %v1543 = vld [vmem:[%s1462 + $0x140] sm:$0xf]
        %v1544 = vld [vmem:[%s1462 + $0x144] sm:$0xf]
        %v1545 = vld [vmem:[%s1462 + $0x148] sm:$0xf]
        %v1546 = vld [vmem:[%s1462 + $0x14c] sm:$0xf]
        %v1547 = vld [vmem:[%s1462 + $0x150] sm:$0x3]
        %v1633 = vunpack.c.l.b16 %v1463
        %v1634 = vunpack.c.l.b16 %v1464
        %v1635 = vunpack.c.l.b16 %v1465
        %v1636 = vunpack.c.l.b16 %v1466
        %v1637 = vunpack.c.l.b16 %v1467
        %v1638 = vunpack.c.l.b16 %v1468
        %v1639 = vunpack.c.l.b16 %v1469
        %v1640 = vunpack.c.l.b16 %v1470
        %v1641 = vunpack.c.l.b16 %v1471
        %v1642 = vunpack.c.l.b16 %v1472
        %v1643 = vunpack.c.l.b16 %v1473
        %v1644 = vunpack.c.l.b16 %v1474
        %v1645 = vunpack.c.l.b16 %v1475
        %v1646 = vunpack.c.l.b16 %v1476
        %v1647 = vunpack.c.l.b16 %v1477
        %v1648 = vunpack.c.l.b16 %v1478
        %v1649 = vunpack.c.l.b16 %v1479
        %v1650 = vunpack.c.l.b16 %v1480
        %v1651 = vunpack.c.l.b16 %v1481
        %v1652 = vunpack.c.l.b16 %v1482
        %v1653 = vunpack.c.l.b16 %v1483
        %v1654 = vunpack.c.l.b16 %v1484
        %v1655 = vunpack.c.l.b16 %v1485
        %v1656 = vunpack.c.l.b16 %v1486
        %v1657 = vunpack.c.l.b16 %v1487
        %v1658 = vunpack.c.l.b16 %v1488
        %v1659 = vunpack.c.l.b16 %v1489
        %v1660 = vunpack.c.l.b16 %v1490
        %v1661 = vunpack.c.l.b16 %v1491
        %v1662 = vunpack.c.l.b16 %v1492
        %v1663 = vunpack.c.l.b16 %v1493
        %v1664 = vunpack.c.l.b16 %v1494
        %v1665 = vunpack.c.l.b16 %v1495
        %v1666 = vunpack.c.l.b16 %v1496
        %v1667 = vunpack.c.l.b16 %v1497
        %v1668 = vunpack.c.l.b16 %v1498
        %v1669 = vunpack.c.l.b16 %v1499
        %v1670 = vunpack.c.l.b16 %v1500
        %v1671 = vunpack.c.l.b16 %v1501
        %v1672 = vunpack.c.l.b16 %v1502
        %v1673 = vunpack.c.l.b16 %v1503
        %v1674 = vunpack.c.l.b16 %v1504
        %v1675 = vunpack.c.l.b16 %v1505
        %v1676 = vunpack.c.l.b16 %v1506
        %v1677 = vunpack.c.l.b16 %v1507
        %v1678 = vunpack.c.l.b16 %v1508
        %v1679 = vunpack.c.l.b16 %v1509
        %v1680 = vunpack.c.l.b16 %v1510
        %v1681 = vunpack.c.l.b16 %v1511
        %v1682 = vunpack.c.l.b16 %v1512
        %v1683 = vunpack.c.l.b16 %v1513
        %v1684 = vunpack.c.l.b16 %v1514
        %v1685 = vunpack.c.l.b16 %v1515
        %v1686 = vunpack.c.l.b16 %v1516
        %v1687 = vunpack.c.l.b16 %v1517
        %v1688 = vunpack.c.l.b16 %v1518
        %v1689 = vunpack.c.l.b16 %v1519
        %v1690 = vunpack.c.l.b16 %v1520
        %v1691 = vunpack.c.l.b16 %v1521
        %v1692 = vunpack.c.l.b16 %v1522
        %v1693 = vunpack.c.l.b16 %v1523
        %v1694 = vunpack.c.l.b16 %v1524
        %v1695 = vunpack.c.l.b16 %v1525
        %v1696 = vunpack.c.l.b16 %v1526
        %v1697 = vunpack.c.l.b16 %v1527
        %v1698 = vunpack.c.l.b16 %v1528
        %v1699 = vunpack.c.l.b16 %v1529
        %v1700 = vunpack.c.l.b16 %v1530
        %v1701 = vunpack.c.l.b16 %v1531
        %v1702 = vunpack.c.l.b16 %v1532
        %v1703 = vunpack.c.l.b16 %v1533
        %v1704 = vunpack.c.l.b16 %v1534
        %v1705 = vunpack.c.l.b16 %v1535
        %v1706 = vunpack.c.l.b16 %v1536
        %v1707 = vunpack.c.l.b16 %v1537
        %v1708 = vunpack.c.l.b16 %v1538
        %v1709 = vunpack.c.l.b16 %v1539
        %v1710 = vunpack.c.l.b16 %v1540
        %v1711 = vunpack.c.l.b16 %v1541
        %v1712 = vunpack.c.l.b16 %v1542
        %v1713 = vunpack.c.l.b16 %v1543
        %v1714 = vunpack.c.l.b16 %v1544
        %v1715 = vunpack.c.l.b16 %v1545
        %v1716 = vunpack.c.l.b16 %v1546
        %v1717 = vunpack.c.l.b16 %v1547
        %v1718 = vpack.c.b16 %v1634, %v1633
        %v1719 = vpack.c.b16 %v1636, %v1635
        %v1720 = vpack.c.b16 %v1638, %v1637
        %v1721 = vpack.c.b16 %v1640, %v1639
        %v1722 = vpack.c.b16 %v1642, %v1641
        %v1723 = vpack.c.b16 %v1644, %v1643
        %v1724 = vpack.c.b16 %v1646, %v1645
        %v1725 = vpack.c.b16 %v1648, %v1647
        %v1726 = vpack.c.b16 %v1650, %v1649
        %v1727 = vpack.c.b16 %v1652, %v1651
        %v1728 = vpack.c.b16 %v1654, %v1653
        %v1729 = vpack.c.b16 %v1656, %v1655
        %v1730 = vpack.c.b16 %v1658, %v1657
        %v1731 = vpack.c.b16 %v1660, %v1659
        %v1732 = vpack.c.b16 %v1662, %v1661
        %v1733 = vpack.c.b16 %v1664, %v1663
        %v1734 = vpack.c.b16 %v1666, %v1665
        %v1735 = vpack.c.b16 %v1668, %v1667
        %v1736 = vpack.c.b16 %v1670, %v1669
        %v1737 = vpack.c.b16 %v1672, %v1671
        %v1738 = vpack.c.b16 %v1674, %v1673
        %v1739 = vpack.c.b16 %v1676, %v1675
        %v1740 = vpack.c.b16 %v1678, %v1677
        %v1741 = vpack.c.b16 %v1680, %v1679
        %v1742 = vpack.c.b16 %v1682, %v1681
        %v1743 = vpack.c.b16 %v1684, %v1683
        %v1744 = vpack.c.b16 %v1686, %v1685
        %v1745 = vpack.c.b16 %v1688, %v1687
        %v1746 = vpack.c.b16 %v1690, %v1689
        %v1747 = vpack.c.b16 %v1692, %v1691
        %v1748 = vpack.c.b16 %v1694, %v1693
        %v1749 = vpack.c.b16 %v1696, %v1695
        %v1750 = vpack.c.b16 %v1698, %v1697
        %v1751 = vpack.c.b16 %v1700, %v1699
        %v1752 = vpack.c.b16 %v1702, %v1701
        %v1753 = vpack.c.b16 %v1704, %v1703
        %v1754 = vpack.c.b16 %v1706, %v1705
        %v1755 = vpack.c.b16 %v1708, %v1707
        %v1756 = vpack.c.b16 %v1710, %v1709
        %v1757 = vpack.c.b16 %v1712, %v1711
        %v1758 = vpack.c.b16 %v1714, %v1713
        %v1759 = vpack.c.b16 %v1716, %v1715
        %v1760 = vpack.c.b16 %v1717, %v1717
        %v1804 = vsel %vm946, %v1461, 0
        %v1807 = vsel %vm950, %v1760, 0
        %1809 = vmatpush.bf16.msra.mxu0 %v1725
        %1810 = vmatpush.bf16.msra.mxu0 %v1724
        %1811 = vmatpush.bf16.msra.mxu0 %v1723
        %1812 = vmatpush.bf16.msra.mxu0 %v1722
        %1813 = vmatpush.bf16.msra.mxu0 %v1721
        %1814 = vmatpush.bf16.msra.mxu0 %v1720
        %1815 = vmatpush.bf16.msra.mxu0 %v1719
        %1816 = vmatpush.bf16.msra.mxu0 %v1718
        %1817 = vmatmul.bf16.gmra.mxu0 %v1456
        %v1818 = vpop.f32.mrf.mxu0
        %v1819 = vadd.f32 0.0, %v1818
        %v1820 = vpop.f32.mrf.mxu0
        %1821 = vdwg.mxu0
        %1822 = vmatpush.bf16.msra.mxu0 %v1733
        %1823 = vmatpush.bf16.msra.mxu0 %v1732
        %1824 = vmatpush.bf16.msra.mxu0 %v1731
        %1825 = vmatpush.bf16.msra.mxu0 %v1730
        %1826 = vmatpush.bf16.msra.mxu0 %v1729
        %1827 = vmatpush.bf16.msra.mxu0 %v1728
        %1828 = vmatpush.bf16.msra.mxu0 %v1727
        %1829 = vmatpush.bf16.msra.mxu0 %v1726
        %1830 = vmatmul.bf16.gmra.mxu0 %v1457
        %v1831 = vpop.f32.mrf.mxu0
        %v1832 = vadd.f32 %v1819, %v1831
        %v1833 = vpop.f32.mrf.mxu0
        %1834 = vdwg.mxu0
        %1835 = vmatpush.bf16.msra.mxu0 %v1741
        %1836 = vmatpush.bf16.msra.mxu0 %v1740
        %1837 = vmatpush.bf16.msra.mxu0 %v1739
        %1838 = vmatpush.bf16.msra.mxu0 %v1738
        %1839 = vmatpush.bf16.msra.mxu0 %v1737
        %1840 = vmatpush.bf16.msra.mxu0 %v1736
        %1841 = vmatpush.bf16.msra.mxu0 %v1735
        %1842 = vmatpush.bf16.msra.mxu0 %v1734
        %1843 = vmatmul.bf16.gmra.mxu0 %v1458
        %v1844 = vpop.f32.mrf.mxu0
        %v1845 = vadd.f32 %v1832, %v1844
        %v1846 = vpop.f32.mrf.mxu0
        %1847 = vdwg.mxu0
        %1848 = vmatpush.bf16.msra.mxu0 %v1749
        %1849 = vmatpush.bf16.msra.mxu0 %v1748
        %1850 = vmatpush.bf16.msra.mxu0 %v1747
        %1851 = vmatpush.bf16.msra.mxu0 %v1746
        %1852 = vmatpush.bf16.msra.mxu0 %v1745
        %1853 = vmatpush.bf16.msra.mxu0 %v1744
        %1854 = vmatpush.bf16.msra.mxu0 %v1743
        %1855 = vmatpush.bf16.msra.mxu0 %v1742
        %1856 = vmatmul.bf16.gmra.mxu0 %v1459
        %v1857 = vpop.f32.mrf.mxu0
        %v1858 = vadd.f32 %v1845, %v1857
        %v1859 = vpop.f32.mrf.mxu0
        %1860 = vdwg.mxu0
        %1861 = vmatpush.bf16.msra.mxu0 %v1757
        %1862 = vmatpush.bf16.msra.mxu0 %v1756
        %1863 = vmatpush.bf16.msra.mxu0 %v1755
        %1864 = vmatpush.bf16.msra.mxu0 %v1754
        %1865 = vmatpush.bf16.msra.mxu0 %v1753
        %1866 = vmatpush.bf16.msra.mxu0 %v1752
        %1867 = vmatpush.bf16.msra.mxu0 %v1751
        %1868 = vmatpush.bf16.msra.mxu0 %v1750
        %1869 = vmatmul.bf16.gmra.mxu0 %v1460
        %v1870 = vpop.f32.mrf.mxu0
        %v1871 = vadd.f32 %v1858, %v1870
        %v1872 = vpop.f32.mrf.mxu0
        %1873 = vdwg.mxu0
        %1874 = vmatpush.bf16.msra.mxu0 0
        %1875 = vmatpush.bf16.msra.mxu0 0
        %1876 = vmatpush.bf16.msra.mxu0 0
        %1877 = vmatpush.bf16.msra.mxu0 0
        %1878 = vmatpush.bf16.msra.mxu0 0
        %1879 = vmatpush.bf16.msra.mxu0 %v1807
        %1880 = vmatpush.bf16.msra.mxu0 %v1759
        %1881 = vmatpush.bf16.msra.mxu0 %v1758
        %1882 = vmatmul.bf16.gmra.mxu0 %v1804
        %v1883 = vpop.f32.mrf.mxu0
        %v1884 = vadd.f32 %v1871, %v1883
        %v1885 = vpop.f32.mrf.mxu0
        %1886 = vdwg.mxu0
        %v1887 = vadd.f32 %v1368, %v1884
        %s1888 = sadd.s32 %s312, 3
        %s1889 = smul.u32 %s1888, 128
        %s1890 = sld [smem:[#allocation2 + %s1889]]
        %v1891 = vstv %s1890
        %v1892 = vmul.f32 %v1891, %v315
        %v1893 = vmul.f32 %v1891, %v316
        %s1894 = sadd.s32 %s1889, 1
        %s1895 = sld [smem:[#allocation2 + %s1894]]
        %v1896 = vstv %s1895
        %v1897 = vmul.f32 %v1896, %v323
        %v1898 = vmul.f32 %v1896, %v324
        %v1899 = vadd.f32 %v1892, %v1897
        %v1900 = vadd.f32 %v1893, %v1898
        %s1901 = sadd.s32 %s1889, 2
        %s1902 = sld [smem:[#allocation2 + %s1901]]
        %v1903 = vstv %s1902
        %v1904 = vmul.f32 %v1903, %v333
        %v1905 = vmul.f32 %v1903, %v334
        %v1906 = vadd.f32 %v1899, %v1904
        %v1907 = vadd.f32 %v1900, %v1905
        %s1908 = sadd.s32 %s1889, 3
        %s1909 = sld [smem:[#allocation2 + %s1908]]
        %v1910 = vstv %s1909
        %v1911 = vmul.f32 %v1910, %v343
        %v1912 = vmul.f32 %v1910, %v344
        %v1913 = vadd.f32 %v1906, %v1911
        %v1914 = vadd.f32 %v1907, %v1912
        %s1915 = sadd.s32 %s1889, 4
        %s1916 = sld [smem:[#allocation2 + %s1915]]
        %v1917 = vstv %s1916
        %v1918 = vmul.f32 %v1917, %v353
        %v1919 = vmul.f32 %v1917, %v354
        %v1920 = vadd.f32 %v1913, %v1918
        %v1921 = vadd.f32 %v1914, %v1919
        %s1922 = sadd.s32 %s1889, 5
        %s1923 = sld [smem:[#allocation2 + %s1922]]
        %v1924 = vstv %s1923
        %v1925 = vmul.f32 %v1924, %v363
        %v1926 = vmul.f32 %v1924, %v364
        %v1927 = vadd.f32 %v1920, %v1925
        %v1928 = vadd.f32 %v1921, %v1926
        %s1929 = sadd.s32 %s1889, 6
        %s1930 = sld [smem:[#allocation2 + %s1929]]
        %v1931 = vstv %s1930
        %v1932 = vmul.f32 %v1931, %v373
        %v1933 = vmul.f32 %v1931, %v374
        %v1934 = vadd.f32 %v1927, %v1932
        %v1935 = vadd.f32 %v1928, %v1933
        %s1936 = sadd.s32 %s1889, 7
        %s1937 = sld [smem:[#allocation2 + %s1936]]
        %v1938 = vstv %s1937
        %v1939 = vmul.f32 %v1938, %v383
        %v1940 = vmul.f32 %v1938, %v384
        %v1941 = vadd.f32 %v1934, %v1939
        %v1942 = vadd.f32 %v1935, %v1940
        %s1943 = sadd.s32 %s1889, 8
        %s1944 = sld [smem:[#allocation2 + %s1943]]
        %v1945 = vstv %s1944
        %v1946 = vmul.f32 %v1945, %v393
        %v1947 = vmul.f32 %v1945, %v394
        %v1948 = vadd.f32 %v1941, %v1946
        %v1949 = vadd.f32 %v1942, %v1947
        %s1950 = sld [smem:[#allocation4 + %s1888]]
        %v1951 = vstv %s1950
        %v1952 = vadd.f32 %v1948, %v1951
        %v1953 = vadd.f32 %v1949, %v1951
        %v1954 = vmax.f32 %v1952, 0.0
        %v1955 = vmax.f32 %v1953, 0.0
        %1958 = vst [vmem:[#allocation1] ss:$4 sm:$0xff] %v1954
        %s1959 = scalar_lea.vmem [#allocation1], 32
        %1960 = vst [vmem:[%s1959] ss:$4 sm:$0xff] %v1955
        %v1961 = vld.sshfl [vmem:[#allocation1] sm:$0xff pattern:$0x73625140]
        %v1962 = vld.sshfl [vmem:[#allocation1 + $0x8] sm:$0xff pattern:$0x73625140]
        %v1963 = vld.sshfl [vmem:[#allocation1 + $0x10] sm:$0xff pattern:$0x73625140]
        %v1964 = vld.sshfl [vmem:[#allocation1 + $0x18] sm:$0xff pattern:$0x73625140]
        %v1965 = vld.sshfl [vmem:[#allocation1 + $0x20] sm:$0xff pattern:$0x73625140]
        %v1966 = vld.sshfl [vmem:[#allocation1 + $0x28] sm:$0xff pattern:$0x73625140]
        %v1973 = vpack.c.bf16 %v1961, %v1961
        %v1974 = vpack.c.bf16 %v1962, %v1962
        %v1975 = vpack.c.bf16 %v1963, %v1963
        %v1976 = vpack.c.bf16 %v1964, %v1964
        %v1977 = vpack.c.bf16 %v1965, %v1965
        %v1978 = vpack.c.bf16 %v1966, %v1966
        %s1979 = scalar_lea.vmem %s305, 1020
        %v1980 = vld [vmem:[%s1979] sm:$0xf]
        %v1981 = vld [vmem:[%s1979 + $0x4] sm:$0xf]
        %v1982 = vld [vmem:[%s1979 + $0x8] sm:$0xf]
        %v1983 = vld [vmem:[%s1979 + $0xc] sm:$0xf]
        %v1984 = vld [vmem:[%s1979 + $0x10] sm:$0xf]
        %v1985 = vld [vmem:[%s1979 + $0x14] sm:$0xf]
        %v1986 = vld [vmem:[%s1979 + $0x18] sm:$0xf]
        %v1987 = vld [vmem:[%s1979 + $0x1c] sm:$0xf]
        %v1988 = vld [vmem:[%s1979 + $0x20] sm:$0xf]
        %v1989 = vld [vmem:[%s1979 + $0x24] sm:$0xf]
        %v1990 = vld [vmem:[%s1979 + $0x28] sm:$0xf]
        %v1991 = vld [vmem:[%s1979 + $0x2c] sm:$0xf]
        %v1992 = vld [vmem:[%s1979 + $0x30] sm:$0xf]
        %v1993 = vld [vmem:[%s1979 + $0x34] sm:$0xf]
        %v1994 = vld [vmem:[%s1979 + $0x38] sm:$0xf]
        %v1995 = vld [vmem:[%s1979 + $0x3c] sm:$0xf]
        %v1996 = vld [vmem:[%s1979 + $0x40] sm:$0xf]
        %v1997 = vld [vmem:[%s1979 + $0x44] sm:$0xf]
        %v1998 = vld [vmem:[%s1979 + $0x48] sm:$0xf]
        %v1999 = vld [vmem:[%s1979 + $0x4c] sm:$0xf]
        %v2000 = vld [vmem:[%s1979 + $0x50] sm:$0xf]
        %v2001 = vld [vmem:[%s1979 + $0x54] sm:$0xf]
        %v2002 = vld [vmem:[%s1979 + $0x58] sm:$0xf]
        %v2003 = vld [vmem:[%s1979 + $0x5c] sm:$0xf]
        %v2004 = vld [vmem:[%s1979 + $0x60] sm:$0xf]
        %v2005 = vld [vmem:[%s1979 + $0x64] sm:$0xf]
        %v2006 = vld [vmem:[%s1979 + $0x68] sm:$0xf]
        %v2007 = vld [vmem:[%s1979 + $0x6c] sm:$0xf]
        %v2008 = vld [vmem:[%s1979 + $0x70] sm:$0xf]
        %v2009 = vld [vmem:[%s1979 + $0x74] sm:$0xf]
        %v2010 = vld [vmem:[%s1979 + $0x78] sm:$0xf]
        %v2011 = vld [vmem:[%s1979 + $0x7c] sm:$0xf]
        %v2012 = vld [vmem:[%s1979 + $0x80] sm:$0xf]
        %v2013 = vld [vmem:[%s1979 + $0x84] sm:$0xf]
        %v2014 = vld [vmem:[%s1979 + $0x88] sm:$0xf]
        %v2015 = vld [vmem:[%s1979 + $0x8c] sm:$0xf]
        %v2016 = vld [vmem:[%s1979 + $0x90] sm:$0xf]
        %v2017 = vld [vmem:[%s1979 + $0x94] sm:$0xf]
        %v2018 = vld [vmem:[%s1979 + $0x98] sm:$0xf]
        %v2019 = vld [vmem:[%s1979 + $0x9c] sm:$0xf]
        %v2020 = vld [vmem:[%s1979 + $0xa0] sm:$0xf]
        %v2021 = vld [vmem:[%s1979 + $0xa4] sm:$0xf]
        %v2022 = vld [vmem:[%s1979 + $0xa8] sm:$0xf]
        %v2023 = vld [vmem:[%s1979 + $0xac] sm:$0xf]
        %v2024 = vld [vmem:[%s1979 + $0xb0] sm:$0xf]
        %v2025 = vld [vmem:[%s1979 + $0xb4] sm:$0xf]
        %v2026 = vld [vmem:[%s1979 + $0xb8] sm:$0xf]
        %v2027 = vld [vmem:[%s1979 + $0xbc] sm:$0xf]
        %v2028 = vld [vmem:[%s1979 + $0xc0] sm:$0xf]
        %v2029 = vld [vmem:[%s1979 + $0xc4] sm:$0xf]
        %v2030 = vld [vmem:[%s1979 + $0xc8] sm:$0xf]
        %v2031 = vld [vmem:[%s1979 + $0xcc] sm:$0xf]
        %v2032 = vld [vmem:[%s1979 + $0xd0] sm:$0xf]
        %v2033 = vld [vmem:[%s1979 + $0xd4] sm:$0xf]
        %v2034 = vld [vmem:[%s1979 + $0xd8] sm:$0xf]
        %v2035 = vld [vmem:[%s1979 + $0xdc] sm:$0xf]
        %v2036 = vld [vmem:[%s1979 + $0xe0] sm:$0xf]
        %v2037 = vld [vmem:[%s1979 + $0xe4] sm:$0xf]
        %v2038 = vld [vmem:[%s1979 + $0xe8] sm:$0xf]
        %v2039 = vld [vmem:[%s1979 + $0xec] sm:$0xf]
        %v2040 = vld [vmem:[%s1979 + $0xf0] sm:$0xf]
        %v2041 = vld [vmem:[%s1979 + $0xf4] sm:$0xf]
        %v2042 = vld [vmem:[%s1979 + $0xf8] sm:$0xf]
        %v2043 = vld [vmem:[%s1979 + $0xfc] sm:$0xf]
        %v2044 = vld [vmem:[%s1979 + $0x100] sm:$0xf]
        %v2045 = vld [vmem:[%s1979 + $0x104] sm:$0xf]
        %v2046 = vld [vmem:[%s1979 + $0x108] sm:$0xf]
        %v2047 = vld [vmem:[%s1979 + $0x10c] sm:$0xf]
        %v2048 = vld [vmem:[%s1979 + $0x110] sm:$0xf]
        %v2049 = vld [vmem:[%s1979 + $0x114] sm:$0xf]
        %v2050 = vld [vmem:[%s1979 + $0x118] sm:$0xf]
        %v2051 = vld [vmem:[%s1979 + $0x11c] sm:$0xf]
        %v2052 = vld [vmem:[%s1979 + $0x120] sm:$0xf]
        %v2053 = vld [vmem:[%s1979 + $0x124] sm:$0xf]
        %v2054 = vld [vmem:[%s1979 + $0x128] sm:$0xf]
        %v2055 = vld [vmem:[%s1979 + $0x12c] sm:$0xf]
        %v2056 = vld [vmem:[%s1979 + $0x130] sm:$0xf]
        %v2057 = vld [vmem:[%s1979 + $0x134] sm:$0xf]
        %v2058 = vld [vmem:[%s1979 + $0x138] sm:$0xf]
        %v2059 = vld [vmem:[%s1979 + $0x13c] sm:$0xf]
        %v2060 = vld [vmem:[%s1979 + $0x140] sm:$0xf]
        %v2061 = vld [vmem:[%s1979 + $0x144] sm:$0xf]
        %v2062 = vld [vmem:[%s1979 + $0x148] sm:$0xf]
        %v2063 = vld [vmem:[%s1979 + $0x14c] sm:$0xf]
        %v2064 = vld [vmem:[%s1979 + $0x150] sm:$0x3]
        %v2150 = vunpack.c.l.b16 %v1980
        %v2151 = vunpack.c.l.b16 %v1981
        %v2152 = vunpack.c.l.b16 %v1982
        %v2153 = vunpack.c.l.b16 %v1983
        %v2154 = vunpack.c.l.b16 %v1984
        %v2155 = vunpack.c.l.b16 %v1985
        %v2156 = vunpack.c.l.b16 %v1986
        %v2157 = vunpack.c.l.b16 %v1987
        %v2158 = vunpack.c.l.b16 %v1988
        %v2159 = vunpack.c.l.b16 %v1989
        %v2160 = vunpack.c.l.b16 %v1990
        %v2161 = vunpack.c.l.b16 %v1991
        %v2162 = vunpack.c.l.b16 %v1992
        %v2163 = vunpack.c.l.b16 %v1993
        %v2164 = vunpack.c.l.b16 %v1994
        %v2165 = vunpack.c.l.b16 %v1995
        %v2166 = vunpack.c.l.b16 %v1996
        %v2167 = vunpack.c.l.b16 %v1997
        %v2168 = vunpack.c.l.b16 %v1998
        %v2169 = vunpack.c.l.b16 %v1999
        %v2170 = vunpack.c.l.b16 %v2000
        %v2171 = vunpack.c.l.b16 %v2001
        %v2172 = vunpack.c.l.b16 %v2002
        %v2173 = vunpack.c.l.b16 %v2003
        %v2174 = vunpack.c.l.b16 %v2004
        %v2175 = vunpack.c.l.b16 %v2005
        %v2176 = vunpack.c.l.b16 %v2006
        %v2177 = vunpack.c.l.b16 %v2007
        %v2178 = vunpack.c.l.b16 %v2008
        %v2179 = vunpack.c.l.b16 %v2009
        %v2180 = vunpack.c.l.b16 %v2010
        %v2181 = vunpack.c.l.b16 %v2011
        %v2182 = vunpack.c.l.b16 %v2012
        %v2183 = vunpack.c.l.b16 %v2013
        %v2184 = vunpack.c.l.b16 %v2014
        %v2185 = vunpack.c.l.b16 %v2015
        %v2186 = vunpack.c.l.b16 %v2016
        %v2187 = vunpack.c.l.b16 %v2017
        %v2188 = vunpack.c.l.b16 %v2018
        %v2189 = vunpack.c.l.b16 %v2019
        %v2190 = vunpack.c.l.b16 %v2020
        %v2191 = vunpack.c.l.b16 %v2021
        %v2192 = vunpack.c.l.b16 %v2022
        %v2193 = vunpack.c.l.b16 %v2023
        %v2194 = vunpack.c.l.b16 %v2024
        %v2195 = vunpack.c.l.b16 %v2025
        %v2196 = vunpack.c.l.b16 %v2026
        %v2197 = vunpack.c.l.b16 %v2027
        %v2198 = vunpack.c.l.b16 %v2028
        %v2199 = vunpack.c.l.b16 %v2029
        %v2200 = vunpack.c.l.b16 %v2030
        %v2201 = vunpack.c.l.b16 %v2031
        %v2202 = vunpack.c.l.b16 %v2032
        %v2203 = vunpack.c.l.b16 %v2033
        %v2204 = vunpack.c.l.b16 %v2034
        %v2205 = vunpack.c.l.b16 %v2035
        %v2206 = vunpack.c.l.b16 %v2036
        %v2207 = vunpack.c.l.b16 %v2037
        %v2208 = vunpack.c.l.b16 %v2038
        %v2209 = vunpack.c.l.b16 %v2039
        %v2210 = vunpack.c.l.b16 %v2040
        %v2211 = vunpack.c.l.b16 %v2041
        %v2212 = vunpack.c.l.b16 %v2042
        %v2213 = vunpack.c.l.b16 %v2043
        %v2214 = vunpack.c.l.b16 %v2044
        %v2215 = vunpack.c.l.b16 %v2045
        %v2216 = vunpack.c.l.b16 %v2046
        %v2217 = vunpack.c.l.b16 %v2047
        %v2218 = vunpack.c.l.b16 %v2048
        %v2219 = vunpack.c.l.b16 %v2049
        %v2220 = vunpack.c.l.b16 %v2050
        %v2221 = vunpack.c.l.b16 %v2051
        %v2222 = vunpack.c.l.b16 %v2052
        %v2223 = vunpack.c.l.b16 %v2053
        %v2224 = vunpack.c.l.b16 %v2054
        %v2225 = vunpack.c.l.b16 %v2055
        %v2226 = vunpack.c.l.b16 %v2056
        %v2227 = vunpack.c.l.b16 %v2057
        %v2228 = vunpack.c.l.b16 %v2058
        %v2229 = vunpack.c.l.b16 %v2059
        %v2230 = vunpack.c.l.b16 %v2060
        %v2231 = vunpack.c.l.b16 %v2061
        %v2232 = vunpack.c.l.b16 %v2062
        %v2233 = vunpack.c.l.b16 %v2063
        %v2234 = vunpack.c.l.b16 %v2064
        %v2235 = vpack.c.b16 %v2151, %v2150
        %v2236 = vpack.c.b16 %v2153, %v2152
        %v2237 = vpack.c.b16 %v2155, %v2154
        %v2238 = vpack.c.b16 %v2157, %v2156
        %v2239 = vpack.c.b16 %v2159, %v2158
        %v2240 = vpack.c.b16 %v2161, %v2160
        %v2241 = vpack.c.b16 %v2163, %v2162
        %v2242 = vpack.c.b16 %v2165, %v2164
        %v2243 = vpack.c.b16 %v2167, %v2166
        %v2244 = vpack.c.b16 %v2169, %v2168
        %v2245 = vpack.c.b16 %v2171, %v2170
        %v2246 = vpack.c.b16 %v2173, %v2172
        %v2247 = vpack.c.b16 %v2175, %v2174
        %v2248 = vpack.c.b16 %v2177, %v2176
        %v2249 = vpack.c.b16 %v2179, %v2178
        %v2250 = vpack.c.b16 %v2181, %v2180
        %v2251 = vpack.c.b16 %v2183, %v2182
        %v2252 = vpack.c.b16 %v2185, %v2184
        %v2253 = vpack.c.b16 %v2187, %v2186
        %v2254 = vpack.c.b16 %v2189, %v2188
        %v2255 = vpack.c.b16 %v2191, %v2190
        %v2256 = vpack.c.b16 %v2193, %v2192
        %v2257 = vpack.c.b16 %v2195, %v2194
        %v2258 = vpack.c.b16 %v2197, %v2196
        %v2259 = vpack.c.b16 %v2199, %v2198
        %v2260 = vpack.c.b16 %v2201, %v2200
        %v2261 = vpack.c.b16 %v2203, %v2202
        %v2262 = vpack.c.b16 %v2205, %v2204
        %v2263 = vpack.c.b16 %v2207, %v2206
        %v2264 = vpack.c.b16 %v2209, %v2208
        %v2265 = vpack.c.b16 %v2211, %v2210
        %v2266 = vpack.c.b16 %v2213, %v2212
        %v2267 = vpack.c.b16 %v2215, %v2214
        %v2268 = vpack.c.b16 %v2217, %v2216
        %v2269 = vpack.c.b16 %v2219, %v2218
        %v2270 = vpack.c.b16 %v2221, %v2220
        %v2271 = vpack.c.b16 %v2223, %v2222
        %v2272 = vpack.c.b16 %v2225, %v2224
        %v2273 = vpack.c.b16 %v2227, %v2226
        %v2274 = vpack.c.b16 %v2229, %v2228
        %v2275 = vpack.c.b16 %v2231, %v2230
        %v2276 = vpack.c.b16 %v2233, %v2232
        %v2277 = vpack.c.b16 %v2234, %v2234
        %v2321 = vsel %vm946, %v1978, 0
        %v2324 = vsel %vm950, %v2277, 0
        %2326 = vmatpush.bf16.msra.mxu0 %v2242
        %2327 = vmatpush.bf16.msra.mxu0 %v2241
        %2328 = vmatpush.bf16.msra.mxu0 %v2240
        %2329 = vmatpush.bf16.msra.mxu0 %v2239
        %2330 = vmatpush.bf16.msra.mxu0 %v2238
        %2331 = vmatpush.bf16.msra.mxu0 %v2237
        %2332 = vmatpush.bf16.msra.mxu0 %v2236
        %2333 = vmatpush.bf16.msra.mxu0 %v2235
        %2334 = vmatmul.bf16.gmra.mxu0 %v1973
        %v2335 = vpop.f32.mrf.mxu0
        %v2336 = vadd.f32 0.0, %v2335
        %v2337 = vpop.f32.mrf.mxu0
        %2338 = vdwg.mxu0
        %2339 = vmatpush.bf16.msra.mxu0 %v2250
        %2340 = vmatpush.bf16.msra.mxu0 %v2249
        %2341 = vmatpush.bf16.msra.mxu0 %v2248
        %2342 = vmatpush.bf16.msra.mxu0 %v2247
        %2343 = vmatpush.bf16.msra.mxu0 %v2246
        %2344 = vmatpush.bf16.msra.mxu0 %v2245
        %2345 = vmatpush.bf16.msra.mxu0 %v2244
        %2346 = vmatpush.bf16.msra.mxu0 %v2243
        %2347 = vmatmul.bf16.gmra.mxu0 %v1974
        %v2348 = vpop.f32.mrf.mxu0
        %v2349 = vadd.f32 %v2336, %v2348
        %v2350 = vpop.f32.mrf.mxu0
        %2351 = vdwg.mxu0
        %2352 = vmatpush.bf16.msra.mxu0 %v2258
        %2353 = vmatpush.bf16.msra.mxu0 %v2257
        %2354 = vmatpush.bf16.msra.mxu0 %v2256
        %2355 = vmatpush.bf16.msra.mxu0 %v2255
        %2356 = vmatpush.bf16.msra.mxu0 %v2254
        %2357 = vmatpush.bf16.msra.mxu0 %v2253
        %2358 = vmatpush.bf16.msra.mxu0 %v2252
        %2359 = vmatpush.bf16.msra.mxu0 %v2251
        %2360 = vmatmul.bf16.gmra.mxu0 %v1975
        %v2361 = vpop.f32.mrf.mxu0
        %v2362 = vadd.f32 %v2349, %v2361
        %v2363 = vpop.f32.mrf.mxu0
        %2364 = vdwg.mxu0
        %2365 = vmatpush.bf16.msra.mxu0 %v2266
        %2366 = vmatpush.bf16.msra.mxu0 %v2265
        %2367 = vmatpush.bf16.msra.mxu0 %v2264
        %2368 = vmatpush.bf16.msra.mxu0 %v2263
        %2369 = vmatpush.bf16.msra.mxu0 %v2262
        %2370 = vmatpush.bf16.msra.mxu0 %v2261
        %2371 = vmatpush.bf16.msra.mxu0 %v2260
        %2372 = vmatpush.bf16.msra.mxu0 %v2259
        %2373 = vmatmul.bf16.gmra.mxu0 %v1976
        %v2374 = vpop.f32.mrf.mxu0
        %v2375 = vadd.f32 %v2362, %v2374
        %v2376 = vpop.f32.mrf.mxu0
        %2377 = vdwg.mxu0
        %2378 = vmatpush.bf16.msra.mxu0 %v2274
        %2379 = vmatpush.bf16.msra.mxu0 %v2273
        %2380 = vmatpush.bf16.msra.mxu0 %v2272
        %2381 = vmatpush.bf16.msra.mxu0 %v2271
        %2382 = vmatpush.bf16.msra.mxu0 %v2270
        %2383 = vmatpush.bf16.msra.mxu0 %v2269
        %2384 = vmatpush.bf16.msra.mxu0 %v2268
        %2385 = vmatpush.bf16.msra.mxu0 %v2267
        %2386 = vmatmul.bf16.gmra.mxu0 %v1977
        %v2387 = vpop.f32.mrf.mxu0
        %v2388 = vadd.f32 %v2375, %v2387
        %v2389 = vpop.f32.mrf.mxu0
        %2390 = vdwg.mxu0
        %2391 = vmatpush.bf16.msra.mxu0 0
        %2392 = vmatpush.bf16.msra.mxu0 0
        %2393 = vmatpush.bf16.msra.mxu0 0
        %2394 = vmatpush.bf16.msra.mxu0 0
        %2395 = vmatpush.bf16.msra.mxu0 0
        %2396 = vmatpush.bf16.msra.mxu0 %v2324
        %2397 = vmatpush.bf16.msra.mxu0 %v2276
        %2398 = vmatpush.bf16.msra.mxu0 %v2275
        %2399 = vmatmul.bf16.gmra.mxu0 %v2321
        %v2400 = vpop.f32.mrf.mxu0
        %v2401 = vadd.f32 %v2388, %v2400
        %v2402 = vpop.f32.mrf.mxu0
        %2403 = vdwg.mxu0
        %v2404 = vadd.f32 %v1887, %v2401
        %s2405 = sadd.s32 %s312, 4
        %s2406 = smul.u32 %s2405, 128
        %s2407 = sld [smem:[#allocation2 + %s2406]]
        %v2408 = vstv %s2407
        %v2409 = vmul.f32 %v2408, %v315
        %v2410 = vmul.f32 %v2408, %v316
        %s2411 = sadd.s32 %s2406, 1
        %s2412 = sld [smem:[#allocation2 + %s2411]]
        %v2413 = vstv %s2412
        %v2414 = vmul.f32 %v2413, %v323
        %v2415 = vmul.f32 %v2413, %v324
        %v2416 = vadd.f32 %v2409, %v2414
        %v2417 = vadd.f32 %v2410, %v2415
        %s2418 = sadd.s32 %s2406, 2
        %s2419 = sld [smem:[#allocation2 + %s2418]]
        %v2420 = vstv %s2419
        %v2421 = vmul.f32 %v2420, %v333
        %v2422 = vmul.f32 %v2420, %v334
        %v2423 = vadd.f32 %v2416, %v2421
        %v2424 = vadd.f32 %v2417, %v2422
        %s2425 = sadd.s32 %s2406, 3
        %s2426 = sld [smem:[#allocation2 + %s2425]]
        %v2427 = vstv %s2426
        %v2428 = vmul.f32 %v2427, %v343
        %v2429 = vmul.f32 %v2427, %v344
        %v2430 = vadd.f32 %v2423, %v2428
        %v2431 = vadd.f32 %v2424, %v2429
        %s2432 = sadd.s32 %s2406, 4
        %s2433 = sld [smem:[#allocation2 + %s2432]]
        %v2434 = vstv %s2433
        %v2435 = vmul.f32 %v2434, %v353
        %v2436 = vmul.f32 %v2434, %v354
        %v2437 = vadd.f32 %v2430, %v2435
        %v2438 = vadd.f32 %v2431, %v2436
        %s2439 = sadd.s32 %s2406, 5
        %s2440 = sld [smem:[#allocation2 + %s2439]]
        %v2441 = vstv %s2440
        %v2442 = vmul.f32 %v2441, %v363
        %v2443 = vmul.f32 %v2441, %v364
        %v2444 = vadd.f32 %v2437, %v2442
        %v2445 = vadd.f32 %v2438, %v2443
        %s2446 = sadd.s32 %s2406, 6
        %s2447 = sld [smem:[#allocation2 + %s2446]]
        %v2448 = vstv %s2447
        %v2449 = vmul.f32 %v2448, %v373
        %v2450 = vmul.f32 %v2448, %v374
        %v2451 = vadd.f32 %v2444, %v2449
        %v2452 = vadd.f32 %v2445, %v2450
        %s2453 = sadd.s32 %s2406, 7
        %s2454 = sld [smem:[#allocation2 + %s2453]]
        %v2455 = vstv %s2454
        %v2456 = vmul.f32 %v2455, %v383
        %v2457 = vmul.f32 %v2455, %v384
        %v2458 = vadd.f32 %v2451, %v2456
        %v2459 = vadd.f32 %v2452, %v2457
        %s2460 = sadd.s32 %s2406, 8
        %s2461 = sld [smem:[#allocation2 + %s2460]]
        %v2462 = vstv %s2461
        %v2463 = vmul.f32 %v2462, %v393
        %v2464 = vmul.f32 %v2462, %v394
        %v2465 = vadd.f32 %v2458, %v2463
        %v2466 = vadd.f32 %v2459, %v2464
        %s2467 = sld [smem:[#allocation4 + %s2405]]
        %v2468 = vstv %s2467
        %v2469 = vadd.f32 %v2465, %v2468
        %v2470 = vadd.f32 %v2466, %v2468
        %v2471 = vmax.f32 %v2469, 0.0
        %v2472 = vmax.f32 %v2470, 0.0
        %2475 = vst [vmem:[#allocation1] ss:$4 sm:$0xff] %v2471
        %s2476 = scalar_lea.vmem [#allocation1], 32
        %2477 = vst [vmem:[%s2476] ss:$4 sm:$0xff] %v2472
        %v2478 = vld.sshfl [vmem:[#allocation1] sm:$0xff pattern:$0x73625140]
        %v2479 = vld.sshfl [vmem:[#allocation1 + $0x8] sm:$0xff pattern:$0x73625140]
        %v2480 = vld.sshfl [vmem:[#allocation1 + $0x10] sm:$0xff pattern:$0x73625140]
        %v2481 = vld.sshfl [vmem:[#allocation1 + $0x18] sm:$0xff pattern:$0x73625140]
        %v2482 = vld.sshfl [vmem:[#allocation1 + $0x20] sm:$0xff pattern:$0x73625140]
        %v2483 = vld.sshfl [vmem:[#allocation1 + $0x28] sm:$0xff pattern:$0x73625140]
        %v2490 = vpack.c.bf16 %v2478, %v2478
        %v2491 = vpack.c.bf16 %v2479, %v2479
        %v2492 = vpack.c.bf16 %v2480, %v2480
        %v2493 = vpack.c.bf16 %v2481, %v2481
        %v2494 = vpack.c.bf16 %v2482, %v2482
        %v2495 = vpack.c.bf16 %v2483, %v2483
        %s2496 = scalar_lea.vmem %s305, 1360
        %v2497 = vld [vmem:[%s2496] sm:$0xf]
        %v2498 = vld [vmem:[%s2496 + $0x4] sm:$0xf]
        %v2499 = vld [vmem:[%s2496 + $0x8] sm:$0xf]
        %v2500 = vld [vmem:[%s2496 + $0xc] sm:$0xf]
        %v2501 = vld [vmem:[%s2496 + $0x10] sm:$0xf]
        %v2502 = vld [vmem:[%s2496 + $0x14] sm:$0xf]
        %v2503 = vld [vmem:[%s2496 + $0x18] sm:$0xf]
        %v2504 = vld [vmem:[%s2496 + $0x1c] sm:$0xf]
        %v2505 = vld [vmem:[%s2496 + $0x20] sm:$0xf]
        %v2506 = vld [vmem:[%s2496 + $0x24] sm:$0xf]
        %v2507 = vld [vmem:[%s2496 + $0x28] sm:$0xf]
        %v2508 = vld [vmem:[%s2496 + $0x2c] sm:$0xf]
        %v2509 = vld [vmem:[%s2496 + $0x30] sm:$0xf]
        %v2510 = vld [vmem:[%s2496 + $0x34] sm:$0xf]
        %v2511 = vld [vmem:[%s2496 + $0x38] sm:$0xf]
        %v2512 = vld [vmem:[%s2496 + $0x3c] sm:$0xf]
        %v2513 = vld [vmem:[%s2496 + $0x40] sm:$0xf]
        %v2514 = vld [vmem:[%s2496 + $0x44] sm:$0xf]
        %v2515 = vld [vmem:[%s2496 + $0x48] sm:$0xf]
        %v2516 = vld [vmem:[%s2496 + $0x4c] sm:$0xf]
        %v2517 = vld [vmem:[%s2496 + $0x50] sm:$0xf]
        %v2518 = vld [vmem:[%s2496 + $0x54] sm:$0xf]
        %v2519 = vld [vmem:[%s2496 + $0x58] sm:$0xf]
        %v2520 = vld [vmem:[%s2496 + $0x5c] sm:$0xf]
        %v2521 = vld [vmem:[%s2496 + $0x60] sm:$0xf]
        %v2522 = vld [vmem:[%s2496 + $0x64] sm:$0xf]
        %v2523 = vld [vmem:[%s2496 + $0x68] sm:$0xf]
        %v2524 = vld [vmem:[%s2496 + $0x6c] sm:$0xf]
        %v2525 = vld [vmem:[%s2496 + $0x70] sm:$0xf]
        %v2526 = vld [vmem:[%s2496 + $0x74] sm:$0xf]
        %v2527 = vld [vmem:[%s2496 + $0x78] sm:$0xf]
        %v2528 = vld [vmem:[%s2496 + $0x7c] sm:$0xf]
        %v2529 = vld [vmem:[%s2496 + $0x80] sm:$0xf]
        %v2530 = vld [vmem:[%s2496 + $0x84] sm:$0xf]
        %v2531 = vld [vmem:[%s2496 + $0x88] sm:$0xf]
        %v2532 = vld [vmem:[%s2496 + $0x8c] sm:$0xf]
        %v2533 = vld [vmem:[%s2496 + $0x90] sm:$0xf]
        %v2534 = vld [vmem:[%s2496 + $0x94] sm:$0xf]
        %v2535 = vld [vmem:[%s2496 + $0x98] sm:$0xf]
        %v2536 = vld [vmem:[%s2496 + $0x9c] sm:$0xf]
        %v2537 = vld [vmem:[%s2496 + $0xa0] sm:$0xf]
        %v2538 = vld [vmem:[%s2496 + $0xa4] sm:$0xf]
        %v2539 = vld [vmem:[%s2496 + $0xa8] sm:$0xf]
        %v2540 = vld [vmem:[%s2496 + $0xac] sm:$0xf]
        %v2541 = vld [vmem:[%s2496 + $0xb0] sm:$0xf]
        %v2542 = vld [vmem:[%s2496 + $0xb4] sm:$0xf]
        %v2543 = vld [vmem:[%s2496 + $0xb8] sm:$0xf]
        %v2544 = vld [vmem:[%s2496 + $0xbc] sm:$0xf]
        %v2545 = vld [vmem:[%s2496 + $0xc0] sm:$0xf]
        %v2546 = vld [vmem:[%s2496 + $0xc4] sm:$0xf]
        %v2547 = vld [vmem:[%s2496 + $0xc8] sm:$0xf]
        %v2548 = vld [vmem:[%s2496 + $0xcc] sm:$0xf]
        %v2549 = vld [vmem:[%s2496 + $0xd0] sm:$0xf]
        %v2550 = vld [vmem:[%s2496 + $0xd4] sm:$0xf]
        %v2551 = vld [vmem:[%s2496 + $0xd8] sm:$0xf]
        %v2552 = vld [vmem:[%s2496 + $0xdc] sm:$0xf]
        %v2553 = vld [vmem:[%s2496 + $0xe0] sm:$0xf]
        %v2554 = vld [vmem:[%s2496 + $0xe4] sm:$0xf]
        %v2555 = vld [vmem:[%s2496 + $0xe8] sm:$0xf]
        %v2556 = vld [vmem:[%s2496 + $0xec] sm:$0xf]
        %v2557 = vld [vmem:[%s2496 + $0xf0] sm:$0xf]
        %v2558 = vld [vmem:[%s2496 + $0xf4] sm:$0xf]
        %v2559 = vld [vmem:[%s2496 + $0xf8] sm:$0xf]
        %v2560 = vld [vmem:[%s2496 + $0xfc] sm:$0xf]
        %v2561 = vld [vmem:[%s2496 + $0x100] sm:$0xf]
        %v2562 = vld [vmem:[%s2496 + $0x104] sm:$0xf]
        %v2563 = vld [vmem:[%s2496 + $0x108] sm:$0xf]
        %v2564 = vld [vmem:[%s2496 + $0x10c] sm:$0xf]
        %v2565 = vld [vmem:[%s2496 + $0x110] sm:$0xf]
        %v2566 = vld [vmem:[%s2496 + $0x114] sm:$0xf]
        %v2567 = vld [vmem:[%s2496 + $0x118] sm:$0xf]
        %v2568 = vld [vmem:[%s2496 + $0x11c] sm:$0xf]
        %v2569 = vld [vmem:[%s2496 + $0x120] sm:$0xf]
        %v2570 = vld [vmem:[%s2496 + $0x124] sm:$0xf]
        %v2571 = vld [vmem:[%s2496 + $0x128] sm:$0xf]
        %v2572 = vld [vmem:[%s2496 + $0x12c] sm:$0xf]
        %v2573 = vld [vmem:[%s2496 + $0x130] sm:$0xf]
        %v2574 = vld [vmem:[%s2496 + $0x134] sm:$0xf]
        %v2575 = vld [vmem:[%s2496 + $0x138] sm:$0xf]
        %v2576 = vld [vmem:[%s2496 + $0x13c] sm:$0xf]
        %v2577 = vld [vmem:[%s2496 + $0x140] sm:$0xf]
        %v2578 = vld [vmem:[%s2496 + $0x144] sm:$0xf]
        %v2579 = vld [vmem:[%s2496 + $0x148] sm:$0xf]
        %v2580 = vld [vmem:[%s2496 + $0x14c] sm:$0xf]
        %v2581 = vld [vmem:[%s2496 + $0x150] sm:$0x3]
        %v2667 = vunpack.c.l.b16 %v2497
        %v2668 = vunpack.c.l.b16 %v2498
        %v2669 = vunpack.c.l.b16 %v2499
        %v2670 = vunpack.c.l.b16 %v2500
        %v2671 = vunpack.c.l.b16 %v2501
        %v2672 = vunpack.c.l.b16 %v2502
        %v2673 = vunpack.c.l.b16 %v2503
        %v2674 = vunpack.c.l.b16 %v2504
        %v2675 = vunpack.c.l.b16 %v2505
        %v2676 = vunpack.c.l.b16 %v2506
        %v2677 = vunpack.c.l.b16 %v2507
        %v2678 = vunpack.c.l.b16 %v2508
        %v2679 = vunpack.c.l.b16 %v2509
        %v2680 = vunpack.c.l.b16 %v2510
        %v2681 = vunpack.c.l.b16 %v2511
        %v2682 = vunpack.c.l.b16 %v2512
        %v2683 = vunpack.c.l.b16 %v2513
        %v2684 = vunpack.c.l.b16 %v2514
        %v2685 = vunpack.c.l.b16 %v2515
        %v2686 = vunpack.c.l.b16 %v2516
        %v2687 = vunpack.c.l.b16 %v2517
        %v2688 = vunpack.c.l.b16 %v2518
        %v2689 = vunpack.c.l.b16 %v2519
        %v2690 = vunpack.c.l.b16 %v2520
        %v2691 = vunpack.c.l.b16 %v2521
        %v2692 = vunpack.c.l.b16 %v2522
        %v2693 = vunpack.c.l.b16 %v2523
        %v2694 = vunpack.c.l.b16 %v2524
        %v2695 = vunpack.c.l.b16 %v2525
        %v2696 = vunpack.c.l.b16 %v2526
        %v2697 = vunpack.c.l.b16 %v2527
        %v2698 = vunpack.c.l.b16 %v2528
        %v2699 = vunpack.c.l.b16 %v2529
        %v2700 = vunpack.c.l.b16 %v2530
        %v2701 = vunpack.c.l.b16 %v2531
        %v2702 = vunpack.c.l.b16 %v2532
        %v2703 = vunpack.c.l.b16 %v2533
        %v2704 = vunpack.c.l.b16 %v2534
        %v2705 = vunpack.c.l.b16 %v2535
        %v2706 = vunpack.c.l.b16 %v2536
        %v2707 = vunpack.c.l.b16 %v2537
        %v2708 = vunpack.c.l.b16 %v2538
        %v2709 = vunpack.c.l.b16 %v2539
        %v2710 = vunpack.c.l.b16 %v2540
        %v2711 = vunpack.c.l.b16 %v2541
        %v2712 = vunpack.c.l.b16 %v2542
        %v2713 = vunpack.c.l.b16 %v2543
        %v2714 = vunpack.c.l.b16 %v2544
        %v2715 = vunpack.c.l.b16 %v2545
        %v2716 = vunpack.c.l.b16 %v2546
        %v2717 = vunpack.c.l.b16 %v2547
        %v2718 = vunpack.c.l.b16 %v2548
        %v2719 = vunpack.c.l.b16 %v2549
        %v2720 = vunpack.c.l.b16 %v2550
        %v2721 = vunpack.c.l.b16 %v2551
        %v2722 = vunpack.c.l.b16 %v2552
        %v2723 = vunpack.c.l.b16 %v2553
        %v2724 = vunpack.c.l.b16 %v2554
        %v2725 = vunpack.c.l.b16 %v2555
        %v2726 = vunpack.c.l.b16 %v2556
        %v2727 = vunpack.c.l.b16 %v2557
        %v2728 = vunpack.c.l.b16 %v2558
        %v2729 = vunpack.c.l.b16 %v2559
        %v2730 = vunpack.c.l.b16 %v2560
        %v2731 = vunpack.c.l.b16 %v2561
        %v2732 = vunpack.c.l.b16 %v2562
        %v2733 = vunpack.c.l.b16 %v2563
        %v2734 = vunpack.c.l.b16 %v2564
        %v2735 = vunpack.c.l.b16 %v2565
        %v2736 = vunpack.c.l.b16 %v2566
        %v2737 = vunpack.c.l.b16 %v2567
        %v2738 = vunpack.c.l.b16 %v2568
        %v2739 = vunpack.c.l.b16 %v2569
        %v2740 = vunpack.c.l.b16 %v2570
        %v2741 = vunpack.c.l.b16 %v2571
        %v2742 = vunpack.c.l.b16 %v2572
        %v2743 = vunpack.c.l.b16 %v2573
        %v2744 = vunpack.c.l.b16 %v2574
        %v2745 = vunpack.c.l.b16 %v2575
        %v2746 = vunpack.c.l.b16 %v2576
        %v2747 = vunpack.c.l.b16 %v2577
        %v2748 = vunpack.c.l.b16 %v2578
        %v2749 = vunpack.c.l.b16 %v2579
        %v2750 = vunpack.c.l.b16 %v2580
        %v2751 = vunpack.c.l.b16 %v2581
        %v2752 = vpack.c.b16 %v2668, %v2667
        %v2753 = vpack.c.b16 %v2670, %v2669
        %v2754 = vpack.c.b16 %v2672, %v2671
        %v2755 = vpack.c.b16 %v2674, %v2673
        %v2756 = vpack.c.b16 %v2676, %v2675
        %v2757 = vpack.c.b16 %v2678, %v2677
        %v2758 = vpack.c.b16 %v2680, %v2679
        %v2759 = vpack.c.b16 %v2682, %v2681
        %v2760 = vpack.c.b16 %v2684, %v2683
        %v2761 = vpack.c.b16 %v2686, %v2685
        %v2762 = vpack.c.b16 %v2688, %v2687
        %v2763 = vpack.c.b16 %v2690, %v2689
        %v2764 = vpack.c.b16 %v2692, %v2691
        %v2765 = vpack.c.b16 %v2694, %v2693
        %v2766 = vpack.c.b16 %v2696, %v2695
        %v2767 = vpack.c.b16 %v2698, %v2697
        %v2768 = vpack.c.b16 %v2700, %v2699
        %v2769 = vpack.c.b16 %v2702, %v2701
        %v2770 = vpack.c.b16 %v2704, %v2703
        %v2771 = vpack.c.b16 %v2706, %v2705
        %v2772 = vpack.c.b16 %v2708, %v2707
        %v2773 = vpack.c.b16 %v2710, %v2709
        %v2774 = vpack.c.b16 %v2712, %v2711
        %v2775 = vpack.c.b16 %v2714, %v2713
        %v2776 = vpack.c.b16 %v2716, %v2715
        %v2777 = vpack.c.b16 %v2718, %v2717
        %v2778 = vpack.c.b16 %v2720, %v2719
        %v2779 = vpack.c.b16 %v2722, %v2721
        %v2780 = vpack.c.b16 %v2724, %v2723
        %v2781 = vpack.c.b16 %v2726, %v2725
        %v2782 = vpack.c.b16 %v2728, %v2727
        %v2783 = vpack.c.b16 %v2730, %v2729
        %v2784 = vpack.c.b16 %v2732, %v2731
        %v2785 = vpack.c.b16 %v2734, %v2733
        %v2786 = vpack.c.b16 %v2736, %v2735
        %v2787 = vpack.c.b16 %v2738, %v2737
        %v2788 = vpack.c.b16 %v2740, %v2739
        %v2789 = vpack.c.b16 %v2742, %v2741
        %v2790 = vpack.c.b16 %v2744, %v2743
        %v2791 = vpack.c.b16 %v2746, %v2745
        %v2792 = vpack.c.b16 %v2748, %v2747
        %v2793 = vpack.c.b16 %v2750, %v2749
        %v2794 = vpack.c.b16 %v2751, %v2751
        %v2838 = vsel %vm946, %v2495, 0
        %v2841 = vsel %vm950, %v2794, 0
        %2843 = vmatpush.bf16.msra.mxu0 %v2759
        %2844 = vmatpush.bf16.msra.mxu0 %v2758
        %2845 = vmatpush.bf16.msra.mxu0 %v2757
        %2846 = vmatpush.bf16.msra.mxu0 %v2756
        %2847 = vmatpush.bf16.msra.mxu0 %v2755
        %2848 = vmatpush.bf16.msra.mxu0 %v2754
        %2849 = vmatpush.bf16.msra.mxu0 %v2753
        %2850 = vmatpush.bf16.msra.mxu0 %v2752
        %2851 = vmatmul.bf16.gmra.mxu0 %v2490
        %v2852 = vpop.f32.mrf.mxu0
        %v2853 = vadd.f32 0.0, %v2852
        %v2854 = vpop.f32.mrf.mxu0
        %2855 = vdwg.mxu0
        %2856 = vmatpush.bf16.msra.mxu0 %v2767
        %2857 = vmatpush.bf16.msra.mxu0 %v2766
        %2858 = vmatpush.bf16.msra.mxu0 %v2765
        %2859 = vmatpush.bf16.msra.mxu0 %v2764
        %2860 = vmatpush.bf16.msra.mxu0 %v2763
        %2861 = vmatpush.bf16.msra.mxu0 %v2762
        %2862 = vmatpush.bf16.msra.mxu0 %v2761
        %2863 = vmatpush.bf16.msra.mxu0 %v2760
        %2864 = vmatmul.bf16.gmra.mxu0 %v2491
        %v2865 = vpop.f32.mrf.mxu0
        %v2866 = vadd.f32 %v2853, %v2865
        %v2867 = vpop.f32.mrf.mxu0
        %2868 = vdwg.mxu0
        %2869 = vmatpush.bf16.msra.mxu0 %v2775
        %2870 = vmatpush.bf16.msra.mxu0 %v2774
        %2871 = vmatpush.bf16.msra.mxu0 %v2773
        %2872 = vmatpush.bf16.msra.mxu0 %v2772
        %2873 = vmatpush.bf16.msra.mxu0 %v2771
        %2874 = vmatpush.bf16.msra.mxu0 %v2770
        %2875 = vmatpush.bf16.msra.mxu0 %v2769
        %2876 = vmatpush.bf16.msra.mxu0 %v2768
        %2877 = vmatmul.bf16.gmra.mxu0 %v2492
        %v2878 = vpop.f32.mrf.mxu0
        %v2879 = vadd.f32 %v2866, %v2878
        %v2880 = vpop.f32.mrf.mxu0
        %2881 = vdwg.mxu0
        %2882 = vmatpush.bf16.msra.mxu0 %v2783
        %2883 = vmatpush.bf16.msra.mxu0 %v2782
        %2884 = vmatpush.bf16.msra.mxu0 %v2781
        %2885 = vmatpush.bf16.msra.mxu0 %v2780
        %2886 = vmatpush.bf16.msra.mxu0 %v2779
        %2887 = vmatpush.bf16.msra.mxu0 %v2778
        %2888 = vmatpush.bf16.msra.mxu0 %v2777
        %2889 = vmatpush.bf16.msra.mxu0 %v2776
        %2890 = vmatmul.bf16.gmra.mxu0 %v2493
        %v2891 = vpop.f32.mrf.mxu0
        %v2892 = vadd.f32 %v2879, %v2891
        %v2893 = vpop.f32.mrf.mxu0
        %2894 = vdwg.mxu0
        %2895 = vmatpush.bf16.msra.mxu0 %v2791
        %2896 = vmatpush.bf16.msra.mxu0 %v2790
        %2897 = vmatpush.bf16.msra.mxu0 %v2789
        %2898 = vmatpush.bf16.msra.mxu0 %v2788
        %2899 = vmatpush.bf16.msra.mxu0 %v2787
        %2900 = vmatpush.bf16.msra.mxu0 %v2786
        %2901 = vmatpush.bf16.msra.mxu0 %v2785
        %2902 = vmatpush.bf16.msra.mxu0 %v2784
        %2903 = vmatmul.bf16.gmra.mxu0 %v2494
        %v2904 = vpop.f32.mrf.mxu0
        %v2905 = vadd.f32 %v2892, %v2904
        %v2906 = vpop.f32.mrf.mxu0
        %2907 = vdwg.mxu0
        %2908 = vmatpush.bf16.msra.mxu0 0
        %2909 = vmatpush.bf16.msra.mxu0 0
        %2910 = vmatpush.bf16.msra.mxu0 0
        %2911 = vmatpush.bf16.msra.mxu0 0
        %2912 = vmatpush.bf16.msra.mxu0 0
        %2913 = vmatpush.bf16.msra.mxu0 %v2841
        %2914 = vmatpush.bf16.msra.mxu0 %v2793
        %2915 = vmatpush.bf16.msra.mxu0 %v2792
        %2916 = vmatmul.bf16.gmra.mxu0 %v2838
        %v2917 = vpop.f32.mrf.mxu0
        %v2918 = vadd.f32 %v2905, %v2917
        %v2919 = vpop.f32.mrf.mxu0
        %2920 = vdwg.mxu0
        %v2921 = vadd.f32 %v2404, %v2918
        %s2922 = sadd.s32 %s312, 5
        %s2923 = smul.u32 %s2922, 128
        %s2924 = sld [smem:[#allocation2 + %s2923]]
        %v2925 = vstv %s2924
        %v2926 = vmul.f32 %v2925, %v315
        %v2927 = vmul.f32 %v2925, %v316
        %s2928 = sadd.s32 %s2923, 1
        %s2929 = sld [smem:[#allocation2 + %s2928]]
        %v2930 = vstv %s2929
        %v2931 = vmul.f32 %v2930, %v323
        %v2932 = vmul.f32 %v2930, %v324
        %v2933 = vadd.f32 %v2926, %v2931
        %v2934 = vadd.f32 %v2927, %v2932
        %s2935 = sadd.s32 %s2923, 2
        %s2936 = sld [smem:[#allocation2 + %s2935]]
        %v2937 = vstv %s2936
        %v2938 = vmul.f32 %v2937, %v333
        %v2939 = vmul.f32 %v2937, %v334
        %v2940 = vadd.f32 %v2933, %v2938
        %v2941 = vadd.f32 %v2934, %v2939
        %s2942 = sadd.s32 %s2923, 3
        %s2943 = sld [smem:[#allocation2 + %s2942]]
        %v2944 = vstv %s2943
        %v2945 = vmul.f32 %v2944, %v343
        %v2946 = vmul.f32 %v2944, %v344
        %v2947 = vadd.f32 %v2940, %v2945
        %v2948 = vadd.f32 %v2941, %v2946
        %s2949 = sadd.s32 %s2923, 4
        %s2950 = sld [smem:[#allocation2 + %s2949]]
        %v2951 = vstv %s2950
        %v2952 = vmul.f32 %v2951, %v353
        %v2953 = vmul.f32 %v2951, %v354
        %v2954 = vadd.f32 %v2947, %v2952
        %v2955 = vadd.f32 %v2948, %v2953
        %s2956 = sadd.s32 %s2923, 5
        %s2957 = sld [smem:[#allocation2 + %s2956]]
        %v2958 = vstv %s2957
        %v2959 = vmul.f32 %v2958, %v363
        %v2960 = vmul.f32 %v2958, %v364
        %v2961 = vadd.f32 %v2954, %v2959
        %v2962 = vadd.f32 %v2955, %v2960
        %s2963 = sadd.s32 %s2923, 6
        %s2964 = sld [smem:[#allocation2 + %s2963]]
        %v2965 = vstv %s2964
        %v2966 = vmul.f32 %v2965, %v373
        %v2967 = vmul.f32 %v2965, %v374
        %v2968 = vadd.f32 %v2961, %v2966
        %v2969 = vadd.f32 %v2962, %v2967
        %s2970 = sadd.s32 %s2923, 7
        %s2971 = sld [smem:[#allocation2 + %s2970]]
        %v2972 = vstv %s2971
        %v2973 = vmul.f32 %v2972, %v383
        %v2974 = vmul.f32 %v2972, %v384
        %v2975 = vadd.f32 %v2968, %v2973
        %v2976 = vadd.f32 %v2969, %v2974
        %s2977 = sadd.s32 %s2923, 8
        %s2978 = sld [smem:[#allocation2 + %s2977]]
        %v2979 = vstv %s2978
        %v2980 = vmul.f32 %v2979, %v393
        %v2981 = vmul.f32 %v2979, %v394
        %v2982 = vadd.f32 %v2975, %v2980
        %v2983 = vadd.f32 %v2976, %v2981
        %s2984 = sld [smem:[#allocation4 + %s2922]]
        %v2985 = vstv %s2984
        %v2986 = vadd.f32 %v2982, %v2985
        %v2987 = vadd.f32 %v2983, %v2985
        %v2988 = vmax.f32 %v2986, 0.0
        %v2989 = vmax.f32 %v2987, 0.0
        %2992 = vst [vmem:[#allocation1] ss:$4 sm:$0xff] %v2988
        %s2993 = scalar_lea.vmem [#allocation1], 32
        %2994 = vst [vmem:[%s2993] ss:$4 sm:$0xff] %v2989
        %v2995 = vld.sshfl [vmem:[#allocation1] sm:$0xff pattern:$0x73625140]
        %v2996 = vld.sshfl [vmem:[#allocation1 + $0x8] sm:$0xff pattern:$0x73625140]
        %v2997 = vld.sshfl [vmem:[#allocation1 + $0x10] sm:$0xff pattern:$0x73625140]
        %v2998 = vld.sshfl [vmem:[#allocation1 + $0x18] sm:$0xff pattern:$0x73625140]
        %v2999 = vld.sshfl [vmem:[#allocation1 + $0x20] sm:$0xff pattern:$0x73625140]
        %v3000 = vld.sshfl [vmem:[#allocation1 + $0x28] sm:$0xff pattern:$0x73625140]
        %v3007 = vpack.c.bf16 %v2995, %v2995
        %v3008 = vpack.c.bf16 %v2996, %v2996
        %v3009 = vpack.c.bf16 %v2997, %v2997
        %v3010 = vpack.c.bf16 %v2998, %v2998
        %v3011 = vpack.c.bf16 %v2999, %v2999
        %v3012 = vpack.c.bf16 %v3000, %v3000
        %s3013 = scalar_lea.vmem %s305, 1700
        %v3014 = vld [vmem:[%s3013] sm:$0xf]
        %v3015 = vld [vmem:[%s3013 + $0x4] sm:$0xf]
        %v3016 = vld [vmem:[%s3013 + $0x8] sm:$0xf]
        %v3017 = vld [vmem:[%s3013 + $0xc] sm:$0xf]
        %v3018 = vld [vmem:[%s3013 + $0x10] sm:$0xf]
        %v3019 = vld [vmem:[%s3013 + $0x14] sm:$0xf]
        %v3020 = vld [vmem:[%s3013 + $0x18] sm:$0xf]
        %v3021 = vld [vmem:[%s3013 + $0x1c] sm:$0xf]
        %v3022 = vld [vmem:[%s3013 + $0x20] sm:$0xf]
        %v3023 = vld [vmem:[%s3013 + $0x24] sm:$0xf]
        %v3024 = vld [vmem:[%s3013 + $0x28] sm:$0xf]
        %v3025 = vld [vmem:[%s3013 + $0x2c] sm:$0xf]
        %v3026 = vld [vmem:[%s3013 + $0x30] sm:$0xf]
        %v3027 = vld [vmem:[%s3013 + $0x34] sm:$0xf]
        %v3028 = vld [vmem:[%s3013 + $0x38] sm:$0xf]
        %v3029 = vld [vmem:[%s3013 + $0x3c] sm:$0xf]
        %v3030 = vld [vmem:[%s3013 + $0x40] sm:$0xf]
        %v3031 = vld [vmem:[%s3013 + $0x44] sm:$0xf]
        %v3032 = vld [vmem:[%s3013 + $0x48] sm:$0xf]
        %v3033 = vld [vmem:[%s3013 + $0x4c] sm:$0xf]
        %v3034 = vld [vmem:[%s3013 + $0x50] sm:$0xf]
        %v3035 = vld [vmem:[%s3013 + $0x54] sm:$0xf]
        %v3036 = vld [vmem:[%s3013 + $0x58] sm:$0xf]
        %v3037 = vld [vmem:[%s3013 + $0x5c] sm:$0xf]
        %v3038 = vld [vmem:[%s3013 + $0x60] sm:$0xf]
        %v3039 = vld [vmem:[%s3013 + $0x64] sm:$0xf]
        %v3040 = vld [vmem:[%s3013 + $0x68] sm:$0xf]
        %v3041 = vld [vmem:[%s3013 + $0x6c] sm:$0xf]
        %v3042 = vld [vmem:[%s3013 + $0x70] sm:$0xf]
        %v3043 = vld [vmem:[%s3013 + $0x74] sm:$0xf]
        %v3044 = vld [vmem:[%s3013 + $0x78] sm:$0xf]
        %v3045 = vld [vmem:[%s3013 + $0x7c] sm:$0xf]
        %v3046 = vld [vmem:[%s3013 + $0x80] sm:$0xf]
        %v3047 = vld [vmem:[%s3013 + $0x84] sm:$0xf]
        %v3048 = vld [vmem:[%s3013 + $0x88] sm:$0xf]
        %v3049 = vld [vmem:[%s3013 + $0x8c] sm:$0xf]
        %v3050 = vld [vmem:[%s3013 + $0x90] sm:$0xf]
        %v3051 = vld [vmem:[%s3013 + $0x94] sm:$0xf]
        %v3052 = vld [vmem:[%s3013 + $0x98] sm:$0xf]
        %v3053 = vld [vmem:[%s3013 + $0x9c] sm:$0xf]
        %v3054 = vld [vmem:[%s3013 + $0xa0] sm:$0xf]
        %v3055 = vld [vmem:[%s3013 + $0xa4] sm:$0xf]
        %v3056 = vld [vmem:[%s3013 + $0xa8] sm:$0xf]
        %v3057 = vld [vmem:[%s3013 + $0xac] sm:$0xf]
        %v3058 = vld [vmem:[%s3013 + $0xb0] sm:$0xf]
        %v3059 = vld [vmem:[%s3013 + $0xb4] sm:$0xf]
        %v3060 = vld [vmem:[%s3013 + $0xb8] sm:$0xf]
        %v3061 = vld [vmem:[%s3013 + $0xbc] sm:$0xf]
        %v3062 = vld [vmem:[%s3013 + $0xc0] sm:$0xf]
        %v3063 = vld [vmem:[%s3013 + $0xc4] sm:$0xf]
        %v3064 = vld [vmem:[%s3013 + $0xc8] sm:$0xf]
        %v3065 = vld [vmem:[%s3013 + $0xcc] sm:$0xf]
        %v3066 = vld [vmem:[%s3013 + $0xd0] sm:$0xf]
        %v3067 = vld [vmem:[%s3013 + $0xd4] sm:$0xf]
        %v3068 = vld [vmem:[%s3013 + $0xd8] sm:$0xf]
        %v3069 = vld [vmem:[%s3013 + $0xdc] sm:$0xf]
        %v3070 = vld [vmem:[%s3013 + $0xe0] sm:$0xf]
        %v3071 = vld [vmem:[%s3013 + $0xe4] sm:$0xf]
        %v3072 = vld [vmem:[%s3013 + $0xe8] sm:$0xf]
        %v3073 = vld [vmem:[%s3013 + $0xec] sm:$0xf]
        %v3074 = vld [vmem:[%s3013 + $0xf0] sm:$0xf]
        %v3075 = vld [vmem:[%s3013 + $0xf4] sm:$0xf]
        %v3076 = vld [vmem:[%s3013 + $0xf8] sm:$0xf]
        %v3077 = vld [vmem:[%s3013 + $0xfc] sm:$0xf]
        %v3078 = vld [vmem:[%s3013 + $0x100] sm:$0xf]
        %v3079 = vld [vmem:[%s3013 + $0x104] sm:$0xf]
        %v3080 = vld [vmem:[%s3013 + $0x108] sm:$0xf]
        %v3081 = vld [vmem:[%s3013 + $0x10c] sm:$0xf]
        %v3082 = vld [vmem:[%s3013 + $0x110] sm:$0xf]
        %v3083 = vld [vmem:[%s3013 + $0x114] sm:$0xf]
        %v3084 = vld [vmem:[%s3013 + $0x118] sm:$0xf]
        %v3085 = vld [vmem:[%s3013 + $0x11c] sm:$0xf]
        %v3086 = vld [vmem:[%s3013 + $0x120] sm:$0xf]
        %v3087 = vld [vmem:[%s3013 + $0x124] sm:$0xf]
        %v3088 = vld [vmem:[%s3013 + $0x128] sm:$0xf]
        %v3089 = vld [vmem:[%s3013 + $0x12c] sm:$0xf]
        %v3090 = vld [vmem:[%s3013 + $0x130] sm:$0xf]
        %v3091 = vld [vmem:[%s3013 + $0x134] sm:$0xf]
        %v3092 = vld [vmem:[%s3013 + $0x138] sm:$0xf]
        %v3093 = vld [vmem:[%s3013 + $0x13c] sm:$0xf]
        %v3094 = vld [vmem:[%s3013 + $0x140] sm:$0xf]
        %v3095 = vld [vmem:[%s3013 + $0x144] sm:$0xf]
        %v3096 = vld [vmem:[%s3013 + $0x148] sm:$0xf]
        %v3097 = vld [vmem:[%s3013 + $0x14c] sm:$0xf]
        %v3098 = vld [vmem:[%s3013 + $0x150] sm:$0x3]
        %v3184 = vunpack.c.l.b16 %v3014
        %v3185 = vunpack.c.l.b16 %v3015
        %v3186 = vunpack.c.l.b16 %v3016
        %v3187 = vunpack.c.l.b16 %v3017
        %v3188 = vunpack.c.l.b16 %v3018
        %v3189 = vunpack.c.l.b16 %v3019
        %v3190 = vunpack.c.l.b16 %v3020
        %v3191 = vunpack.c.l.b16 %v3021
        %v3192 = vunpack.c.l.b16 %v3022
        %v3193 = vunpack.c.l.b16 %v3023
        %v3194 = vunpack.c.l.b16 %v3024
        %v3195 = vunpack.c.l.b16 %v3025
        %v3196 = vunpack.c.l.b16 %v3026
        %v3197 = vunpack.c.l.b16 %v3027
        %v3198 = vunpack.c.l.b16 %v3028
        %v3199 = vunpack.c.l.b16 %v3029
        %v3200 = vunpack.c.l.b16 %v3030
        %v3201 = vunpack.c.l.b16 %v3031
        %v3202 = vunpack.c.l.b16 %v3032
        %v3203 = vunpack.c.l.b16 %v3033
        %v3204 = vunpack.c.l.b16 %v3034
        %v3205 = vunpack.c.l.b16 %v3035
        %v3206 = vunpack.c.l.b16 %v3036
        %v3207 = vunpack.c.l.b16 %v3037
        %v3208 = vunpack.c.l.b16 %v3038
        %v3209 = vunpack.c.l.b16 %v3039
        %v3210 = vunpack.c.l.b16 %v3040
        %v3211 = vunpack.c.l.b16 %v3041
        %v3212 = vunpack.c.l.b16 %v3042
        %v3213 = vunpack.c.l.b16 %v3043
        %v3214 = vunpack.c.l.b16 %v3044
        %v3215 = vunpack.c.l.b16 %v3045
        %v3216 = vunpack.c.l.b16 %v3046
        %v3217 = vunpack.c.l.b16 %v3047
        %v3218 = vunpack.c.l.b16 %v3048
        %v3219 = vunpack.c.l.b16 %v3049
        %v3220 = vunpack.c.l.b16 %v3050
        %v3221 = vunpack.c.l.b16 %v3051
        %v3222 = vunpack.c.l.b16 %v3052
        %v3223 = vunpack.c.l.b16 %v3053
        %v3224 = vunpack.c.l.b16 %v3054
        %v3225 = vunpack.c.l.b16 %v3055
        %v3226 = vunpack.c.l.b16 %v3056
        %v3227 = vunpack.c.l.b16 %v3057
        %v3228 = vunpack.c.l.b16 %v3058
        %v3229 = vunpack.c.l.b16 %v3059
        %v3230 = vunpack.c.l.b16 %v3060
        %v3231 = vunpack.c.l.b16 %v3061
        %v3232 = vunpack.c.l.b16 %v3062
        %v3233 = vunpack.c.l.b16 %v3063
        %v3234 = vunpack.c.l.b16 %v3064
        %v3235 = vunpack.c.l.b16 %v3065
        %v3236 = vunpack.c.l.b16 %v3066
        %v3237 = vunpack.c.l.b16 %v3067
        %v3238 = vunpack.c.l.b16 %v3068
        %v3239 = vunpack.c.l.b16 %v3069
        %v3240 = vunpack.c.l.b16 %v3070
        %v3241 = vunpack.c.l.b16 %v3071
        %v3242 = vunpack.c.l.b16 %v3072
        %v3243 = vunpack.c.l.b16 %v3073
        %v3244 = vunpack.c.l.b16 %v3074
        %v3245 = vunpack.c.l.b16 %v3075
        %v3246 = vunpack.c.l.b16 %v3076
        %v3247 = vunpack.c.l.b16 %v3077
        %v3248 = vunpack.c.l.b16 %v3078
        %v3249 = vunpack.c.l.b16 %v3079
        %v3250 = vunpack.c.l.b16 %v3080
        %v3251 = vunpack.c.l.b16 %v3081
        %v3252 = vunpack.c.l.b16 %v3082
        %v3253 = vunpack.c.l.b16 %v3083
        %v3254 = vunpack.c.l.b16 %v3084
        %v3255 = vunpack.c.l.b16 %v3085
        %v3256 = vunpack.c.l.b16 %v3086
        %v3257 = vunpack.c.l.b16 %v3087
        %v3258 = vunpack.c.l.b16 %v3088
        %v3259 = vunpack.c.l.b16 %v3089
        %v3260 = vunpack.c.l.b16 %v3090
        %v3261 = vunpack.c.l.b16 %v3091
        %v3262 = vunpack.c.l.b16 %v3092
        %v3263 = vunpack.c.l.b16 %v3093
        %v3264 = vunpack.c.l.b16 %v3094
        %v3265 = vunpack.c.l.b16 %v3095
        %v3266 = vunpack.c.l.b16 %v3096
        %v3267 = vunpack.c.l.b16 %v3097
        %v3268 = vunpack.c.l.b16 %v3098
        %v3269 = vpack.c.b16 %v3185, %v3184
        %v3270 = vpack.c.b16 %v3187, %v3186
        %v3271 = vpack.c.b16 %v3189, %v3188
        %v3272 = vpack.c.b16 %v3191, %v3190
        %v3273 = vpack.c.b16 %v3193, %v3192
        %v3274 = vpack.c.b16 %v3195, %v3194
        %v3275 = vpack.c.b16 %v3197, %v3196
        %v3276 = vpack.c.b16 %v3199, %v3198
        %v3277 = vpack.c.b16 %v3201, %v3200
        %v3278 = vpack.c.b16 %v3203, %v3202
        %v3279 = vpack.c.b16 %v3205, %v3204
        %v3280 = vpack.c.b16 %v3207, %v3206
        %v3281 = vpack.c.b16 %v3209, %v3208
        %v3282 = vpack.c.b16 %v3211, %v3210
        %v3283 = vpack.c.b16 %v3213, %v3212
        %v3284 = vpack.c.b16 %v3215, %v3214
        %v3285 = vpack.c.b16 %v3217, %v3216
        %v3286 = vpack.c.b16 %v3219, %v3218
        %v3287 = vpack.c.b16 %v3221, %v3220
        %v3288 = vpack.c.b16 %v3223, %v3222
        %v3289 = vpack.c.b16 %v3225, %v3224
        %v3290 = vpack.c.b16 %v3227, %v3226
        %v3291 = vpack.c.b16 %v3229, %v3228
        %v3292 = vpack.c.b16 %v3231, %v3230
        %v3293 = vpack.c.b16 %v3233, %v3232
        %v3294 = vpack.c.b16 %v3235, %v3234
        %v3295 = vpack.c.b16 %v3237, %v3236
        %v3296 = vpack.c.b16 %v3239, %v3238
        %v3297 = vpack.c.b16 %v3241, %v3240
        %v3298 = vpack.c.b16 %v3243, %v3242
        %v3299 = vpack.c.b16 %v3245, %v3244
        %v3300 = vpack.c.b16 %v3247, %v3246
        %v3301 = vpack.c.b16 %v3249, %v3248
        %v3302 = vpack.c.b16 %v3251, %v3250
        %v3303 = vpack.c.b16 %v3253, %v3252
        %v3304 = vpack.c.b16 %v3255, %v3254
        %v3305 = vpack.c.b16 %v3257, %v3256
        %v3306 = vpack.c.b16 %v3259, %v3258
        %v3307 = vpack.c.b16 %v3261, %v3260
        %v3308 = vpack.c.b16 %v3263, %v3262
        %v3309 = vpack.c.b16 %v3265, %v3264
        %v3310 = vpack.c.b16 %v3267, %v3266
        %v3311 = vpack.c.b16 %v3268, %v3268
        %v3355 = vsel %vm946, %v3012, 0
        %v3358 = vsel %vm950, %v3311, 0
        %3360 = vmatpush.bf16.msra.mxu0 %v3276
        %3361 = vmatpush.bf16.msra.mxu0 %v3275
        %3362 = vmatpush.bf16.msra.mxu0 %v3274
        %3363 = vmatpush.bf16.msra.mxu0 %v3273
        %3364 = vmatpush.bf16.msra.mxu0 %v3272
        %3365 = vmatpush.bf16.msra.mxu0 %v3271
        %3366 = vmatpush.bf16.msra.mxu0 %v3270
        %3367 = vmatpush.bf16.msra.mxu0 %v3269
        %3368 = vmatmul.bf16.gmra.mxu0 %v3007
        %v3369 = vpop.f32.mrf.mxu0
        %v3370 = vadd.f32 0.0, %v3369
        %v3371 = vpop.f32.mrf.mxu0
        %3372 = vdwg.mxu0
        %3373 = vmatpush.bf16.msra.mxu0 %v3284
        %3374 = vmatpush.bf16.msra.mxu0 %v3283
        %3375 = vmatpush.bf16.msra.mxu0 %v3282
        %3376 = vmatpush.bf16.msra.mxu0 %v3281
        %3377 = vmatpush.bf16.msra.mxu0 %v3280
        %3378 = vmatpush.bf16.msra.mxu0 %v3279
        %3379 = vmatpush.bf16.msra.mxu0 %v3278
        %3380 = vmatpush.bf16.msra.mxu0 %v3277
        %3381 = vmatmul.bf16.gmra.mxu0 %v3008
        %v3382 = vpop.f32.mrf.mxu0
        %v3383 = vadd.f32 %v3370, %v3382
        %v3384 = vpop.f32.mrf.mxu0
        %3385 = vdwg.mxu0
        %3386 = vmatpush.bf16.msra.mxu0 %v3292
        %3387 = vmatpush.bf16.msra.mxu0 %v3291
        %3388 = vmatpush.bf16.msra.mxu0 %v3290
        %3389 = vmatpush.bf16.msra.mxu0 %v3289
        %3390 = vmatpush.bf16.msra.mxu0 %v3288
        %3391 = vmatpush.bf16.msra.mxu0 %v3287
        %3392 = vmatpush.bf16.msra.mxu0 %v3286
        %3393 = vmatpush.bf16.msra.mxu0 %v3285
        %3394 = vmatmul.bf16.gmra.mxu0 %v3009
        %v3395 = vpop.f32.mrf.mxu0
        %v3396 = vadd.f32 %v3383, %v3395
        %v3397 = vpop.f32.mrf.mxu0
        %3398 = vdwg.mxu0
        %3399 = vmatpush.bf16.msra.mxu0 %v3300
        %3400 = vmatpush.bf16.msra.mxu0 %v3299
        %3401 = vmatpush.bf16.msra.mxu0 %v3298
        %3402 = vmatpush.bf16.msra.mxu0 %v3297
        %3403 = vmatpush.bf16.msra.mxu0 %v3296
        %3404 = vmatpush.bf16.msra.mxu0 %v3295
        %3405 = vmatpush.bf16.msra.mxu0 %v3294
        %3406 = vmatpush.bf16.msra.mxu0 %v3293
        %3407 = vmatmul.bf16.gmra.mxu0 %v3010
        %v3408 = vpop.f32.mrf.mxu0
        %v3409 = vadd.f32 %v3396, %v3408
        %v3410 = vpop.f32.mrf.mxu0
        %3411 = vdwg.mxu0
        %3412 = vmatpush.bf16.msra.mxu0 %v3308
        %3413 = vmatpush.bf16.msra.mxu0 %v3307
        %3414 = vmatpush.bf16.msra.mxu0 %v3306
        %3415 = vmatpush.bf16.msra.mxu0 %v3305
        %3416 = vmatpush.bf16.msra.mxu0 %v3304
        %3417 = vmatpush.bf16.msra.mxu0 %v3303
        %3418 = vmatpush.bf16.msra.mxu0 %v3302
        %3419 = vmatpush.bf16.msra.mxu0 %v3301
        %3420 = vmatmul.bf16.gmra.mxu0 %v3011
        %v3421 = vpop.f32.mrf.mxu0
        %v3422 = vadd.f32 %v3409, %v3421
        %v3423 = vpop.f32.mrf.mxu0
        %3424 = vdwg.mxu0
        %3425 = vmatpush.bf16.msra.mxu0 0
        %3426 = vmatpush.bf16.msra.mxu0 0
        %3427 = vmatpush.bf16.msra.mxu0 0
        %3428 = vmatpush.bf16.msra.mxu0 0
        %3429 = vmatpush.bf16.msra.mxu0 0
        %3430 = vmatpush.bf16.msra.mxu0 %v3358
        %3431 = vmatpush.bf16.msra.mxu0 %v3310
        %3432 = vmatpush.bf16.msra.mxu0 %v3309
        %3433 = vmatmul.bf16.gmra.mxu0 %v3355
        %v3434 = vpop.f32.mrf.mxu0
        %v3435 = vadd.f32 %v3422, %v3434
        %v3436 = vpop.f32.mrf.mxu0
        %3437 = vdwg.mxu0
        %v3438 = vadd.f32 %v2921, %v3435
        %s3439 = sadd.s32 %s312, 6
        %s3440 = smul.u32 %s3439, 128
        %s3441 = sld [smem:[#allocation2 + %s3440]]
        %v3442 = vstv %s3441
        %v3443 = vmul.f32 %v3442, %v315
        %v3444 = vmul.f32 %v3442, %v316
        %s3445 = sadd.s32 %s3440, 1
        %s3446 = sld [smem:[#allocation2 + %s3445]]
        %v3447 = vstv %s3446
        %v3448 = vmul.f32 %v3447, %v323
        %v3449 = vmul.f32 %v3447, %v324
        %v3450 = vadd.f32 %v3443, %v3448
        %v3451 = vadd.f32 %v3444, %v3449
        %s3452 = sadd.s32 %s3440, 2
        %s3453 = sld [smem:[#allocation2 + %s3452]]
        %v3454 = vstv %s3453
        %v3455 = vmul.f32 %v3454, %v333
        %v3456 = vmul.f32 %v3454, %v334
        %v3457 = vadd.f32 %v3450, %v3455
        %v3458 = vadd.f32 %v3451, %v3456
        %s3459 = sadd.s32 %s3440, 3
        %s3460 = sld [smem:[#allocation2 + %s3459]]
        %v3461 = vstv %s3460
        %v3462 = vmul.f32 %v3461, %v343
        %v3463 = vmul.f32 %v3461, %v344
        %v3464 = vadd.f32 %v3457, %v3462
        %v3465 = vadd.f32 %v3458, %v3463
        %s3466 = sadd.s32 %s3440, 4
        %s3467 = sld [smem:[#allocation2 + %s3466]]
        %v3468 = vstv %s3467
        %v3469 = vmul.f32 %v3468, %v353
        %v3470 = vmul.f32 %v3468, %v354
        %v3471 = vadd.f32 %v3464, %v3469
        %v3472 = vadd.f32 %v3465, %v3470
        %s3473 = sadd.s32 %s3440, 5
        %s3474 = sld [smem:[#allocation2 + %s3473]]
        %v3475 = vstv %s3474
        %v3476 = vmul.f32 %v3475, %v363
        %v3477 = vmul.f32 %v3475, %v364
        %v3478 = vadd.f32 %v3471, %v3476
        %v3479 = vadd.f32 %v3472, %v3477
        %s3480 = sadd.s32 %s3440, 6
        %s3481 = sld [smem:[#allocation2 + %s3480]]
        %v3482 = vstv %s3481
        %v3483 = vmul.f32 %v3482, %v373
        %v3484 = vmul.f32 %v3482, %v374
        %v3485 = vadd.f32 %v3478, %v3483
        %v3486 = vadd.f32 %v3479, %v3484
        %s3487 = sadd.s32 %s3440, 7
        %s3488 = sld [smem:[#allocation2 + %s3487]]
        %v3489 = vstv %s3488
        %v3490 = vmul.f32 %v3489, %v383
        %v3491 = vmul.f32 %v3489, %v384
        %v3492 = vadd.f32 %v3485, %v3490
        %v3493 = vadd.f32 %v3486, %v3491
        %s3494 = sadd.s32 %s3440, 8
        %s3495 = sld [smem:[#allocation2 + %s3494]]
        %v3496 = vstv %s3495
        %v3497 = vmul.f32 %v3496, %v393
        %v3498 = vmul.f32 %v3496, %v394
        %v3499 = vadd.f32 %v3492, %v3497
        %v3500 = vadd.f32 %v3493, %v3498
        %s3501 = sld [smem:[#allocation4 + %s3439]]
        %v3502 = vstv %s3501
        %v3503 = vadd.f32 %v3499, %v3502
        %v3504 = vadd.f32 %v3500, %v3502
        %v3505 = vmax.f32 %v3503, 0.0
        %v3506 = vmax.f32 %v3504, 0.0
        %3509 = vst [vmem:[#allocation1] ss:$4 sm:$0xff] %v3505
        %s3510 = scalar_lea.vmem [#allocation1], 32
        %3511 = vst [vmem:[%s3510] ss:$4 sm:$0xff] %v3506
        %v3512 = vld.sshfl [vmem:[#allocation1] sm:$0xff pattern:$0x73625140]
        %v3513 = vld.sshfl [vmem:[#allocation1 + $0x8] sm:$0xff pattern:$0x73625140]
        %v3514 = vld.sshfl [vmem:[#allocation1 + $0x10] sm:$0xff pattern:$0x73625140]
        %v3515 = vld.sshfl [vmem:[#allocation1 + $0x18] sm:$0xff pattern:$0x73625140]
        %v3516 = vld.sshfl [vmem:[#allocation1 + $0x20] sm:$0xff pattern:$0x73625140]
        %v3517 = vld.sshfl [vmem:[#allocation1 + $0x28] sm:$0xff pattern:$0x73625140]
        %v3524 = vpack.c.bf16 %v3512, %v3512
        %v3525 = vpack.c.bf16 %v3513, %v3513
        %v3526 = vpack.c.bf16 %v3514, %v3514
        %v3527 = vpack.c.bf16 %v3515, %v3515
        %v3528 = vpack.c.bf16 %v3516, %v3516
        %v3529 = vpack.c.bf16 %v3517, %v3517
        %s3530 = scalar_lea.vmem %s305, 2040
        %v3531 = vld [vmem:[%s3530] sm:$0xf]
        %v3532 = vld [vmem:[%s3530 + $0x4] sm:$0xf]
        %v3533 = vld [vmem:[%s3530 + $0x8] sm:$0xf]
        %v3534 = vld [vmem:[%s3530 + $0xc] sm:$0xf]
        %v3535 = vld [vmem:[%s3530 + $0x10] sm:$0xf]
        %v3536 = vld [vmem:[%s3530 + $0x14] sm:$0xf]
        %v3537 = vld [vmem:[%s3530 + $0x18] sm:$0xf]
        %v3538 = vld [vmem:[%s3530 + $0x1c] sm:$0xf]
        %v3539 = vld [vmem:[%s3530 + $0x20] sm:$0xf]
        %v3540 = vld [vmem:[%s3530 + $0x24] sm:$0xf]
        %v3541 = vld [vmem:[%s3530 + $0x28] sm:$0xf]
        %v3542 = vld [vmem:[%s3530 + $0x2c] sm:$0xf]
        %v3543 = vld [vmem:[%s3530 + $0x30] sm:$0xf]
        %v3544 = vld [vmem:[%s3530 + $0x34] sm:$0xf]
        %v3545 = vld [vmem:[%s3530 + $0x38] sm:$0xf]
        %v3546 = vld [vmem:[%s3530 + $0x3c] sm:$0xf]
        %v3547 = vld [vmem:[%s3530 + $0x40] sm:$0xf]
        %v3548 = vld [vmem:[%s3530 + $0x44] sm:$0xf]
        %v3549 = vld [vmem:[%s3530 + $0x48] sm:$0xf]
        %v3550 = vld [vmem:[%s3530 + $0x4c] sm:$0xf]
        %v3551 = vld [vmem:[%s3530 + $0x50] sm:$0xf]
        %v3552 = vld [vmem:[%s3530 + $0x54] sm:$0xf]
        %v3553 = vld [vmem:[%s3530 + $0x58] sm:$0xf]
        %v3554 = vld [vmem:[%s3530 + $0x5c] sm:$0xf]
        %v3555 = vld [vmem:[%s3530 + $0x60] sm:$0xf]
        %v3556 = vld [vmem:[%s3530 + $0x64] sm:$0xf]
        %v3557 = vld [vmem:[%s3530 + $0x68] sm:$0xf]
        %v3558 = vld [vmem:[%s3530 + $0x6c] sm:$0xf]
        %v3559 = vld [vmem:[%s3530 + $0x70] sm:$0xf]
        %v3560 = vld [vmem:[%s3530 + $0x74] sm:$0xf]
        %v3561 = vld [vmem:[%s3530 + $0x78] sm:$0xf]
        %v3562 = vld [vmem:[%s3530 + $0x7c] sm:$0xf]
        %v3563 = vld [vmem:[%s3530 + $0x80] sm:$0xf]
        %v3564 = vld [vmem:[%s3530 + $0x84] sm:$0xf]
        %v3565 = vld [vmem:[%s3530 + $0x88] sm:$0xf]
        %v3566 = vld [vmem:[%s3530 + $0x8c] sm:$0xf]
        %v3567 = vld [vmem:[%s3530 + $0x90] sm:$0xf]
        %v3568 = vld [vmem:[%s3530 + $0x94] sm:$0xf]
        %v3569 = vld [vmem:[%s3530 + $0x98] sm:$0xf]
        %v3570 = vld [vmem:[%s3530 + $0x9c] sm:$0xf]
        %v3571 = vld [vmem:[%s3530 + $0xa0] sm:$0xf]
        %v3572 = vld [vmem:[%s3530 + $0xa4] sm:$0xf]
        %v3573 = vld [vmem:[%s3530 + $0xa8] sm:$0xf]
        %v3574 = vld [vmem:[%s3530 + $0xac] sm:$0xf]
        %v3575 = vld [vmem:[%s3530 + $0xb0] sm:$0xf]
        %v3576 = vld [vmem:[%s3530 + $0xb4] sm:$0xf]
        %v3577 = vld [vmem:[%s3530 + $0xb8] sm:$0xf]
        %v3578 = vld [vmem:[%s3530 + $0xbc] sm:$0xf]
        %v3579 = vld [vmem:[%s3530 + $0xc0] sm:$0xf]
        %v3580 = vld [vmem:[%s3530 + $0xc4] sm:$0xf]
        %v3581 = vld [vmem:[%s3530 + $0xc8] sm:$0xf]
        %v3582 = vld [vmem:[%s3530 + $0xcc] sm:$0xf]
        %v3583 = vld [vmem:[%s3530 + $0xd0] sm:$0xf]
        %v3584 = vld [vmem:[%s3530 + $0xd4] sm:$0xf]
        %v3585 = vld [vmem:[%s3530 + $0xd8] sm:$0xf]
        %v3586 = vld [vmem:[%s3530 + $0xdc] sm:$0xf]
        %v3587 = vld [vmem:[%s3530 + $0xe0] sm:$0xf]
        %v3588 = vld [vmem:[%s3530 + $0xe4] sm:$0xf]
        %v3589 = vld [vmem:[%s3530 + $0xe8] sm:$0xf]
        %v3590 = vld [vmem:[%s3530 + $0xec] sm:$0xf]
        %v3591 = vld [vmem:[%s3530 + $0xf0] sm:$0xf]
        %v3592 = vld [vmem:[%s3530 + $0xf4] sm:$0xf]
        %v3593 = vld [vmem:[%s3530 + $0xf8] sm:$0xf]
        %v3594 = vld [vmem:[%s3530 + $0xfc] sm:$0xf]
        %v3595 = vld [vmem:[%s3530 + $0x100] sm:$0xf]
        %v3596 = vld [vmem:[%s3530 + $0x104] sm:$0xf]
        %v3597 = vld [vmem:[%s3530 + $0x108] sm:$0xf]
        %v3598 = vld [vmem:[%s3530 + $0x10c] sm:$0xf]
        %v3599 = vld [vmem:[%s3530 + $0x110] sm:$0xf]
        %v3600 = vld [vmem:[%s3530 + $0x114] sm:$0xf]
        %v3601 = vld [vmem:[%s3530 + $0x118] sm:$0xf]
        %v3602 = vld [vmem:[%s3530 + $0x11c] sm:$0xf]
        %v3603 = vld [vmem:[%s3530 + $0x120] sm:$0xf]
        %v3604 = vld [vmem:[%s3530 + $0x124] sm:$0xf]
        %v3605 = vld [vmem:[%s3530 + $0x128] sm:$0xf]
        %v3606 = vld [vmem:[%s3530 + $0x12c] sm:$0xf]
        %v3607 = vld [vmem:[%s3530 + $0x130] sm:$0xf]
        %v3608 = vld [vmem:[%s3530 + $0x134] sm:$0xf]
        %v3609 = vld [vmem:[%s3530 + $0x138] sm:$0xf]
        %v3610 = vld [vmem:[%s3530 + $0x13c] sm:$0xf]
        %v3611 = vld [vmem:[%s3530 + $0x140] sm:$0xf]
        %v3612 = vld [vmem:[%s3530 + $0x144] sm:$0xf]
        %v3613 = vld [vmem:[%s3530 + $0x148] sm:$0xf]
        %v3614 = vld [vmem:[%s3530 + $0x14c] sm:$0xf]
        %v3615 = vld [vmem:[%s3530 + $0x150] sm:$0x3]
        %v3701 = vunpack.c.l.b16 %v3531
        %v3702 = vunpack.c.l.b16 %v3532
        %v3703 = vunpack.c.l.b16 %v3533
        %v3704 = vunpack.c.l.b16 %v3534
        %v3705 = vunpack.c.l.b16 %v3535
        %v3706 = vunpack.c.l.b16 %v3536
        %v3707 = vunpack.c.l.b16 %v3537
        %v3708 = vunpack.c.l.b16 %v3538
        %v3709 = vunpack.c.l.b16 %v3539
        %v3710 = vunpack.c.l.b16 %v3540
        %v3711 = vunpack.c.l.b16 %v3541
        %v3712 = vunpack.c.l.b16 %v3542
        %v3713 = vunpack.c.l.b16 %v3543
        %v3714 = vunpack.c.l.b16 %v3544
        %v3715 = vunpack.c.l.b16 %v3545
        %v3716 = vunpack.c.l.b16 %v3546
        %v3717 = vunpack.c.l.b16 %v3547
        %v3718 = vunpack.c.l.b16 %v3548
        %v3719 = vunpack.c.l.b16 %v3549
        %v3720 = vunpack.c.l.b16 %v3550
        %v3721 = vunpack.c.l.b16 %v3551
        %v3722 = vunpack.c.l.b16 %v3552
        %v3723 = vunpack.c.l.b16 %v3553
        %v3724 = vunpack.c.l.b16 %v3554
        %v3725 = vunpack.c.l.b16 %v3555
        %v3726 = vunpack.c.l.b16 %v3556
        %v3727 = vunpack.c.l.b16 %v3557
        %v3728 = vunpack.c.l.b16 %v3558
        %v3729 = vunpack.c.l.b16 %v3559
        %v3730 = vunpack.c.l.b16 %v3560
        %v3731 = vunpack.c.l.b16 %v3561
        %v3732 = vunpack.c.l.b16 %v3562
        %v3733 = vunpack.c.l.b16 %v3563
        %v3734 = vunpack.c.l.b16 %v3564
        %v3735 = vunpack.c.l.b16 %v3565
        %v3736 = vunpack.c.l.b16 %v3566
        %v3737 = vunpack.c.l.b16 %v3567
        %v3738 = vunpack.c.l.b16 %v3568
        %v3739 = vunpack.c.l.b16 %v3569
        %v3740 = vunpack.c.l.b16 %v3570
        %v3741 = vunpack.c.l.b16 %v3571
        %v3742 = vunpack.c.l.b16 %v3572
        %v3743 = vunpack.c.l.b16 %v3573
        %v3744 = vunpack.c.l.b16 %v3574
        %v3745 = vunpack.c.l.b16 %v3575
        %v3746 = vunpack.c.l.b16 %v3576
        %v3747 = vunpack.c.l.b16 %v3577
        %v3748 = vunpack.c.l.b16 %v3578
        %v3749 = vunpack.c.l.b16 %v3579
        %v3750 = vunpack.c.l.b16 %v3580
        %v3751 = vunpack.c.l.b16 %v3581
        %v3752 = vunpack.c.l.b16 %v3582
        %v3753 = vunpack.c.l.b16 %v3583
        %v3754 = vunpack.c.l.b16 %v3584
        %v3755 = vunpack.c.l.b16 %v3585
        %v3756 = vunpack.c.l.b16 %v3586
        %v3757 = vunpack.c.l.b16 %v3587
        %v3758 = vunpack.c.l.b16 %v3588
        %v3759 = vunpack.c.l.b16 %v3589
        %v3760 = vunpack.c.l.b16 %v3590
        %v3761 = vunpack.c.l.b16 %v3591
        %v3762 = vunpack.c.l.b16 %v3592
        %v3763 = vunpack.c.l.b16 %v3593
        %v3764 = vunpack.c.l.b16 %v3594
        %v3765 = vunpack.c.l.b16 %v3595
        %v3766 = vunpack.c.l.b16 %v3596
        %v3767 = vunpack.c.l.b16 %v3597
        %v3768 = vunpack.c.l.b16 %v3598
        %v3769 = vunpack.c.l.b16 %v3599
        %v3770 = vunpack.c.l.b16 %v3600
        %v3771 = vunpack.c.l.b16 %v3601
        %v3772 = vunpack.c.l.b16 %v3602
        %v3773 = vunpack.c.l.b16 %v3603
        %v3774 = vunpack.c.l.b16 %v3604
        %v3775 = vunpack.c.l.b16 %v3605
        %v3776 = vunpack.c.l.b16 %v3606
        %v3777 = vunpack.c.l.b16 %v3607
        %v3778 = vunpack.c.l.b16 %v3608
        %v3779 = vunpack.c.l.b16 %v3609
        %v3780 = vunpack.c.l.b16 %v3610
        %v3781 = vunpack.c.l.b16 %v3611
        %v3782 = vunpack.c.l.b16 %v3612
        %v3783 = vunpack.c.l.b16 %v3613
        %v3784 = vunpack.c.l.b16 %v3614
        %v3785 = vunpack.c.l.b16 %v3615
        %v3786 = vpack.c.b16 %v3702, %v3701
        %v3787 = vpack.c.b16 %v3704, %v3703
        %v3788 = vpack.c.b16 %v3706, %v3705
        %v3789 = vpack.c.b16 %v3708, %v3707
        %v3790 = vpack.c.b16 %v3710, %v3709
        %v3791 = vpack.c.b16 %v3712, %v3711
        %v3792 = vpack.c.b16 %v3714, %v3713
        %v3793 = vpack.c.b16 %v3716, %v3715
        %v3794 = vpack.c.b16 %v3718, %v3717
        %v3795 = vpack.c.b16 %v3720, %v3719
        %v3796 = vpack.c.b16 %v3722, %v3721
        %v3797 = vpack.c.b16 %v3724, %v3723
        %v3798 = vpack.c.b16 %v3726, %v3725
        %v3799 = vpack.c.b16 %v3728, %v3727
        %v3800 = vpack.c.b16 %v3730, %v3729
        %v3801 = vpack.c.b16 %v3732, %v3731
        %v3802 = vpack.c.b16 %v3734, %v3733
        %v3803 = vpack.c.b16 %v3736, %v3735
        %v3804 = vpack.c.b16 %v3738, %v3737
        %v3805 = vpack.c.b16 %v3740, %v3739
        %v3806 = vpack.c.b16 %v3742, %v3741
        %v3807 = vpack.c.b16 %v3744, %v3743
        %v3808 = vpack.c.b16 %v3746, %v3745
        %v3809 = vpack.c.b16 %v3748, %v3747
        %v3810 = vpack.c.b16 %v3750, %v3749
        %v3811 = vpack.c.b16 %v3752, %v3751
        %v3812 = vpack.c.b16 %v3754, %v3753
        %v3813 = vpack.c.b16 %v3756, %v3755
        %v3814 = vpack.c.b16 %v3758, %v3757
        %v3815 = vpack.c.b16 %v3760, %v3759
        %v3816 = vpack.c.b16 %v3762, %v3761
        %v3817 = vpack.c.b16 %v3764, %v3763
        %v3818 = vpack.c.b16 %v3766, %v3765
        %v3819 = vpack.c.b16 %v3768, %v3767
        %v3820 = vpack.c.b16 %v3770, %v3769
        %v3821 = vpack.c.b16 %v3772, %v3771
        %v3822 = vpack.c.b16 %v3774, %v3773
        %v3823 = vpack.c.b16 %v3776, %v3775
        %v3824 = vpack.c.b16 %v3778, %v3777
        %v3825 = vpack.c.b16 %v3780, %v3779
        %v3826 = vpack.c.b16 %v3782, %v3781
        %v3827 = vpack.c.b16 %v3784, %v3783
        %v3828 = vpack.c.b16 %v3785, %v3785
        %v3872 = vsel %vm946, %v3529, 0
        %v3875 = vsel %vm950, %v3828, 0
        %3877 = vmatpush.bf16.msra.mxu0 %v3793
        %3878 = vmatpush.bf16.msra.mxu0 %v3792
        %3879 = vmatpush.bf16.msra.mxu0 %v3791
        %3880 = vmatpush.bf16.msra.mxu0 %v3790
        %3881 = vmatpush.bf16.msra.mxu0 %v3789
        %3882 = vmatpush.bf16.msra.mxu0 %v3788
        %3883 = vmatpush.bf16.msra.mxu0 %v3787
        %3884 = vmatpush.bf16.msra.mxu0 %v3786
        %3885 = vmatmul.bf16.gmra.mxu0 %v3524
        %v3886 = vpop.f32.mrf.mxu0
        %v3887 = vadd.f32 0.0, %v3886
        %v3888 = vpop.f32.mrf.mxu0
        %3889 = vdwg.mxu0
        %3890 = vmatpush.bf16.msra.mxu0 %v3801
        %3891 = vmatpush.bf16.msra.mxu0 %v3800
        %3892 = vmatpush.bf16.msra.mxu0 %v3799
        %3893 = vmatpush.bf16.msra.mxu0 %v3798
        %3894 = vmatpush.bf16.msra.mxu0 %v3797
        %3895 = vmatpush.bf16.msra.mxu0 %v3796
        %3896 = vmatpush.bf16.msra.mxu0 %v3795
        %3897 = vmatpush.bf16.msra.mxu0 %v3794
        %3898 = vmatmul.bf16.gmra.mxu0 %v3525
        %v3899 = vpop.f32.mrf.mxu0
        %v3900 = vadd.f32 %v3887, %v3899
        %v3901 = vpop.f32.mrf.mxu0
        %3902 = vdwg.mxu0
        %3903 = vmatpush.bf16.msra.mxu0 %v3809
        %3904 = vmatpush.bf16.msra.mxu0 %v3808
        %3905 = vmatpush.bf16.msra.mxu0 %v3807
        %3906 = vmatpush.bf16.msra.mxu0 %v3806
        %3907 = vmatpush.bf16.msra.mxu0 %v3805
        %3908 = vmatpush.bf16.msra.mxu0 %v3804
        %3909 = vmatpush.bf16.msra.mxu0 %v3803
        %3910 = vmatpush.bf16.msra.mxu0 %v3802
        %3911 = vmatmul.bf16.gmra.mxu0 %v3526
        %v3912 = vpop.f32.mrf.mxu0
        %v3913 = vadd.f32 %v3900, %v3912
        %v3914 = vpop.f32.mrf.mxu0
        %3915 = vdwg.mxu0
        %3916 = vmatpush.bf16.msra.mxu0 %v3817
        %3917 = vmatpush.bf16.msra.mxu0 %v3816
        %3918 = vmatpush.bf16.msra.mxu0 %v3815
        %3919 = vmatpush.bf16.msra.mxu0 %v3814
        %3920 = vmatpush.bf16.msra.mxu0 %v3813
        %3921 = vmatpush.bf16.msra.mxu0 %v3812
        %3922 = vmatpush.bf16.msra.mxu0 %v3811
        %3923 = vmatpush.bf16.msra.mxu0 %v3810
        %3924 = vmatmul.bf16.gmra.mxu0 %v3527
        %v3925 = vpop.f32.mrf.mxu0
        %v3926 = vadd.f32 %v3913, %v3925
        %v3927 = vpop.f32.mrf.mxu0
        %3928 = vdwg.mxu0
        %3929 = vmatpush.bf16.msra.mxu0 %v3825
        %3930 = vmatpush.bf16.msra.mxu0 %v3824
        %3931 = vmatpush.bf16.msra.mxu0 %v3823
        %3932 = vmatpush.bf16.msra.mxu0 %v3822
        %3933 = vmatpush.bf16.msra.mxu0 %v3821
        %3934 = vmatpush.bf16.msra.mxu0 %v3820
        %3935 = vmatpush.bf16.msra.mxu0 %v3819
        %3936 = vmatpush.bf16.msra.mxu0 %v3818
        %3937 = vmatmul.bf16.gmra.mxu0 %v3528
        %v3938 = vpop.f32.mrf.mxu0
        %v3939 = vadd.f32 %v3926, %v3938
        %v3940 = vpop.f32.mrf.mxu0
        %3941 = vdwg.mxu0
        %3942 = vmatpush.bf16.msra.mxu0 0
        %3943 = vmatpush.bf16.msra.mxu0 0
        %3944 = vmatpush.bf16.msra.mxu0 0
        %3945 = vmatpush.bf16.msra.mxu0 0
        %3946 = vmatpush.bf16.msra.mxu0 0
        %3947 = vmatpush.bf16.msra.mxu0 %v3875
        %3948 = vmatpush.bf16.msra.mxu0 %v3827
        %3949 = vmatpush.bf16.msra.mxu0 %v3826
        %3950 = vmatmul.bf16.gmra.mxu0 %v3872
        %v3951 = vpop.f32.mrf.mxu0
        %v3952 = vadd.f32 %v3939, %v3951
        %v3953 = vpop.f32.mrf.mxu0
        %3954 = vdwg.mxu0
        %v3955 = vadd.f32 %v3438, %v3952
        %s3956 = sadd.s32 %s312, 7
        %s3957 = smul.u32 %s3956, 128
        %s3958 = sld [smem:[#allocation2 + %s3957]]
        %v3959 = vstv %s3958
        %v3960 = vmul.f32 %v3959, %v315
        %v3961 = vmul.f32 %v3959, %v316
        %s3962 = sadd.s32 %s3957, 1
        %s3963 = sld [smem:[#allocation2 + %s3962]]
        %v3964 = vstv %s3963
        %v3965 = vmul.f32 %v3964, %v323
        %v3966 = vmul.f32 %v3964, %v324
        %v3967 = vadd.f32 %v3960, %v3965
        %v3968 = vadd.f32 %v3961, %v3966
        %s3969 = sadd.s32 %s3957, 2
        %s3970 = sld [smem:[#allocation2 + %s3969]]
        %v3971 = vstv %s3970
        %v3972 = vmul.f32 %v3971, %v333
        %v3973 = vmul.f32 %v3971, %v334
        %v3974 = vadd.f32 %v3967, %v3972
        %v3975 = vadd.f32 %v3968, %v3973
        %s3976 = sadd.s32 %s3957, 3
        %s3977 = sld [smem:[#allocation2 + %s3976]]
        %v3978 = vstv %s3977
        %v3979 = vmul.f32 %v3978, %v343
        %v3980 = vmul.f32 %v3978, %v344
        %v3981 = vadd.f32 %v3974, %v3979
        %v3982 = vadd.f32 %v3975, %v3980
        %s3983 = sadd.s32 %s3957, 4
        %s3984 = sld [smem:[#allocation2 + %s3983]]
        %v3985 = vstv %s3984
        %v3986 = vmul.f32 %v3985, %v353
        %v3987 = vmul.f32 %v3985, %v354
        %v3988 = vadd.f32 %v3981, %v3986
        %v3989 = vadd.f32 %v3982, %v3987
        %s3990 = sadd.s32 %s3957, 5
        %s3991 = sld [smem:[#allocation2 + %s3990]]
        %v3992 = vstv %s3991
        %v3993 = vmul.f32 %v3992, %v363
        %v3994 = vmul.f32 %v3992, %v364
        %v3995 = vadd.f32 %v3988, %v3993
        %v3996 = vadd.f32 %v3989, %v3994
        %s3997 = sadd.s32 %s3957, 6
        %s3998 = sld [smem:[#allocation2 + %s3997]]
        %v3999 = vstv %s3998
        %v4000 = vmul.f32 %v3999, %v373
        %v4001 = vmul.f32 %v3999, %v374
        %v4002 = vadd.f32 %v3995, %v4000
        %v4003 = vadd.f32 %v3996, %v4001
        %s4004 = sadd.s32 %s3957, 7
        %s4005 = sld [smem:[#allocation2 + %s4004]]
        %v4006 = vstv %s4005
        %v4007 = vmul.f32 %v4006, %v383
        %v4008 = vmul.f32 %v4006, %v384
        %v4009 = vadd.f32 %v4002, %v4007
        %v4010 = vadd.f32 %v4003, %v4008
        %s4011 = sadd.s32 %s3957, 8
        %s4012 = sld [smem:[#allocation2 + %s4011]]
        %v4013 = vstv %s4012
        %v4014 = vmul.f32 %v4013, %v393
        %v4015 = vmul.f32 %v4013, %v394
        %v4016 = vadd.f32 %v4009, %v4014
        %v4017 = vadd.f32 %v4010, %v4015
        %s4018 = sld [smem:[#allocation4 + %s3956]]
        %v4019 = vstv %s4018
        %v4020 = vadd.f32 %v4016, %v4019
        %v4021 = vadd.f32 %v4017, %v4019
        %v4022 = vmax.f32 %v4020, 0.0
        %v4023 = vmax.f32 %v4021, 0.0
        %4026 = vst [vmem:[#allocation1] ss:$4 sm:$0xff] %v4022
        %s4027 = scalar_lea.vmem [#allocation1], 32
        %4028 = vst [vmem:[%s4027] ss:$4 sm:$0xff] %v4023
        %v4029 = vld.sshfl [vmem:[#allocation1] sm:$0xff pattern:$0x73625140]
        %v4030 = vld.sshfl [vmem:[#allocation1 + $0x8] sm:$0xff pattern:$0x73625140]
        %v4031 = vld.sshfl [vmem:[#allocation1 + $0x10] sm:$0xff pattern:$0x73625140]
        %v4032 = vld.sshfl [vmem:[#allocation1 + $0x18] sm:$0xff pattern:$0x73625140]
        %v4033 = vld.sshfl [vmem:[#allocation1 + $0x20] sm:$0xff pattern:$0x73625140]
        %v4034 = vld.sshfl [vmem:[#allocation1 + $0x28] sm:$0xff pattern:$0x73625140]
        %v4041 = vpack.c.bf16 %v4029, %v4029
        %v4042 = vpack.c.bf16 %v4030, %v4030
        %v4043 = vpack.c.bf16 %v4031, %v4031
        %v4044 = vpack.c.bf16 %v4032, %v4032
        %v4045 = vpack.c.bf16 %v4033, %v4033
        %v4046 = vpack.c.bf16 %v4034, %v4034
        %s4047 = scalar_lea.vmem %s305, 2380
        %v4048 = vld [vmem:[%s4047] sm:$0xf]
        %v4049 = vld [vmem:[%s4047 + $0x4] sm:$0xf]
        %v4050 = vld [vmem:[%s4047 + $0x8] sm:$0xf]
        %v4051 = vld [vmem:[%s4047 + $0xc] sm:$0xf]
        %v4052 = vld [vmem:[%s4047 + $0x10] sm:$0xf]
        %v4053 = vld [vmem:[%s4047 + $0x14] sm:$0xf]
        %v4054 = vld [vmem:[%s4047 + $0x18] sm:$0xf]
        %v4055 = vld [vmem:[%s4047 + $0x1c] sm:$0xf]
        %v4056 = vld [vmem:[%s4047 + $0x20] sm:$0xf]
        %v4057 = vld [vmem:[%s4047 + $0x24] sm:$0xf]
        %v4058 = vld [vmem:[%s4047 + $0x28] sm:$0xf]
        %v4059 = vld [vmem:[%s4047 + $0x2c] sm:$0xf]
        %v4060 = vld [vmem:[%s4047 + $0x30] sm:$0xf]
        %v4061 = vld [vmem:[%s4047 + $0x34] sm:$0xf]
        %v4062 = vld [vmem:[%s4047 + $0x38] sm:$0xf]
        %v4063 = vld [vmem:[%s4047 + $0x3c] sm:$0xf]
        %v4064 = vld [vmem:[%s4047 + $0x40] sm:$0xf]
        %v4065 = vld [vmem:[%s4047 + $0x44] sm:$0xf]
        %v4066 = vld [vmem:[%s4047 + $0x48] sm:$0xf]
        %v4067 = vld [vmem:[%s4047 + $0x4c] sm:$0xf]
        %v4068 = vld [vmem:[%s4047 + $0x50] sm:$0xf]
        %v4069 = vld [vmem:[%s4047 + $0x54] sm:$0xf]
        %v4070 = vld [vmem:[%s4047 + $0x58] sm:$0xf]
        %v4071 = vld [vmem:[%s4047 + $0x5c] sm:$0xf]
        %v4072 = vld [vmem:[%s4047 + $0x60] sm:$0xf]
        %v4073 = vld [vmem:[%s4047 + $0x64] sm:$0xf]
        %v4074 = vld [vmem:[%s4047 + $0x68] sm:$0xf]
        %v4075 = vld [vmem:[%s4047 + $0x6c] sm:$0xf]
        %v4076 = vld [vmem:[%s4047 + $0x70] sm:$0xf]
        %v4077 = vld [vmem:[%s4047 + $0x74] sm:$0xf]
        %v4078 = vld [vmem:[%s4047 + $0x78] sm:$0xf]
        %v4079 = vld [vmem:[%s4047 + $0x7c] sm:$0xf]
        %v4080 = vld [vmem:[%s4047 + $0x80] sm:$0xf]
        %v4081 = vld [vmem:[%s4047 + $0x84] sm:$0xf]
        %v4082 = vld [vmem:[%s4047 + $0x88] sm:$0xf]
        %v4083 = vld [vmem:[%s4047 + $0x8c] sm:$0xf]
        %v4084 = vld [vmem:[%s4047 + $0x90] sm:$0xf]
        %v4085 = vld [vmem:[%s4047 + $0x94] sm:$0xf]
        %v4086 = vld [vmem:[%s4047 + $0x98] sm:$0xf]
        %v4087 = vld [vmem:[%s4047 + $0x9c] sm:$0xf]
        %v4088 = vld [vmem:[%s4047 + $0xa0] sm:$0xf]
        %v4089 = vld [vmem:[%s4047 + $0xa4] sm:$0xf]
        %v4090 = vld [vmem:[%s4047 + $0xa8] sm:$0xf]
        %v4091 = vld [vmem:[%s4047 + $0xac] sm:$0xf]
        %v4092 = vld [vmem:[%s4047 + $0xb0] sm:$0xf]
        %v4093 = vld [vmem:[%s4047 + $0xb4] sm:$0xf]
        %v4094 = vld [vmem:[%s4047 + $0xb8] sm:$0xf]
        %v4095 = vld [vmem:[%s4047 + $0xbc] sm:$0xf]
        %v4096 = vld [vmem:[%s4047 + $0xc0] sm:$0xf]
        %v4097 = vld [vmem:[%s4047 + $0xc4] sm:$0xf]
        %v4098 = vld [vmem:[%s4047 + $0xc8] sm:$0xf]
        %v4099 = vld [vmem:[%s4047 + $0xcc] sm:$0xf]
        %v4100 = vld [vmem:[%s4047 + $0xd0] sm:$0xf]
        %v4101 = vld [vmem:[%s4047 + $0xd4] sm:$0xf]
        %v4102 = vld [vmem:[%s4047 + $0xd8] sm:$0xf]
        %v4103 = vld [vmem:[%s4047 + $0xdc] sm:$0xf]
        %v4104 = vld [vmem:[%s4047 + $0xe0] sm:$0xf]
        %v4105 = vld [vmem:[%s4047 + $0xe4] sm:$0xf]
        %v4106 = vld [vmem:[%s4047 + $0xe8] sm:$0xf]
        %v4107 = vld [vmem:[%s4047 + $0xec] sm:$0xf]
        %v4108 = vld [vmem:[%s4047 + $0xf0] sm:$0xf]
        %v4109 = vld [vmem:[%s4047 + $0xf4] sm:$0xf]
        %v4110 = vld [vmem:[%s4047 + $0xf8] sm:$0xf]
        %v4111 = vld [vmem:[%s4047 + $0xfc] sm:$0xf]
        %v4112 = vld [vmem:[%s4047 + $0x100] sm:$0xf]
        %v4113 = vld [vmem:[%s4047 + $0x104] sm:$0xf]
        %v4114 = vld [vmem:[%s4047 + $0x108] sm:$0xf]
        %v4115 = vld [vmem:[%s4047 + $0x10c] sm:$0xf]
        %v4116 = vld [vmem:[%s4047 + $0x110] sm:$0xf]
        %v4117 = vld [vmem:[%s4047 + $0x114] sm:$0xf]
        %v4118 = vld [vmem:[%s4047 + $0x118] sm:$0xf]
        %v4119 = vld [vmem:[%s4047 + $0x11c] sm:$0xf]
        %v4120 = vld [vmem:[%s4047 + $0x120] sm:$0xf]
        %v4121 = vld [vmem:[%s4047 + $0x124] sm:$0xf]
        %v4122 = vld [vmem:[%s4047 + $0x128] sm:$0xf]
        %v4123 = vld [vmem:[%s4047 + $0x12c] sm:$0xf]
        %v4124 = vld [vmem:[%s4047 + $0x130] sm:$0xf]
        %v4125 = vld [vmem:[%s4047 + $0x134] sm:$0xf]
        %v4126 = vld [vmem:[%s4047 + $0x138] sm:$0xf]
        %v4127 = vld [vmem:[%s4047 + $0x13c] sm:$0xf]
        %v4128 = vld [vmem:[%s4047 + $0x140] sm:$0xf]
        %v4129 = vld [vmem:[%s4047 + $0x144] sm:$0xf]
        %v4130 = vld [vmem:[%s4047 + $0x148] sm:$0xf]
        %v4131 = vld [vmem:[%s4047 + $0x14c] sm:$0xf]
        %v4132 = vld [vmem:[%s4047 + $0x150] sm:$0x3]
        %v4218 = vunpack.c.l.b16 %v4048
        %v4219 = vunpack.c.l.b16 %v4049
        %v4220 = vunpack.c.l.b16 %v4050
        %v4221 = vunpack.c.l.b16 %v4051
        %v4222 = vunpack.c.l.b16 %v4052
        %v4223 = vunpack.c.l.b16 %v4053
        %v4224 = vunpack.c.l.b16 %v4054
        %v4225 = vunpack.c.l.b16 %v4055
        %v4226 = vunpack.c.l.b16 %v4056
        %v4227 = vunpack.c.l.b16 %v4057
        %v4228 = vunpack.c.l.b16 %v4058
        %v4229 = vunpack.c.l.b16 %v4059
        %v4230 = vunpack.c.l.b16 %v4060
        %v4231 = vunpack.c.l.b16 %v4061
        %v4232 = vunpack.c.l.b16 %v4062
        %v4233 = vunpack.c.l.b16 %v4063
        %v4234 = vunpack.c.l.b16 %v4064
        %v4235 = vunpack.c.l.b16 %v4065
        %v4236 = vunpack.c.l.b16 %v4066
        %v4237 = vunpack.c.l.b16 %v4067
        %v4238 = vunpack.c.l.b16 %v4068
        %v4239 = vunpack.c.l.b16 %v4069
        %v4240 = vunpack.c.l.b16 %v4070
        %v4241 = vunpack.c.l.b16 %v4071
        %v4242 = vunpack.c.l.b16 %v4072
        %v4243 = vunpack.c.l.b16 %v4073
        %v4244 = vunpack.c.l.b16 %v4074
        %v4245 = vunpack.c.l.b16 %v4075
        %v4246 = vunpack.c.l.b16 %v4076
        %v4247 = vunpack.c.l.b16 %v4077
        %v4248 = vunpack.c.l.b16 %v4078
        %v4249 = vunpack.c.l.b16 %v4079
        %v4250 = vunpack.c.l.b16 %v4080
        %v4251 = vunpack.c.l.b16 %v4081
        %v4252 = vunpack.c.l.b16 %v4082
        %v4253 = vunpack.c.l.b16 %v4083
        %v4254 = vunpack.c.l.b16 %v4084
        %v4255 = vunpack.c.l.b16 %v4085
        %v4256 = vunpack.c.l.b16 %v4086
        %v4257 = vunpack.c.l.b16 %v4087
        %v4258 = vunpack.c.l.b16 %v4088
        %v4259 = vunpack.c.l.b16 %v4089
        %v4260 = vunpack.c.l.b16 %v4090
        %v4261 = vunpack.c.l.b16 %v4091
        %v4262 = vunpack.c.l.b16 %v4092
        %v4263 = vunpack.c.l.b16 %v4093
        %v4264 = vunpack.c.l.b16 %v4094
        %v4265 = vunpack.c.l.b16 %v4095
        %v4266 = vunpack.c.l.b16 %v4096
        %v4267 = vunpack.c.l.b16 %v4097
        %v4268 = vunpack.c.l.b16 %v4098
        %v4269 = vunpack.c.l.b16 %v4099
        %v4270 = vunpack.c.l.b16 %v4100
        %v4271 = vunpack.c.l.b16 %v4101
        %v4272 = vunpack.c.l.b16 %v4102
        %v4273 = vunpack.c.l.b16 %v4103
        %v4274 = vunpack.c.l.b16 %v4104
        %v4275 = vunpack.c.l.b16 %v4105
        %v4276 = vunpack.c.l.b16 %v4106
        %v4277 = vunpack.c.l.b16 %v4107
        %v4278 = vunpack.c.l.b16 %v4108
        %v4279 = vunpack.c.l.b16 %v4109
        %v4280 = vunpack.c.l.b16 %v4110
        %v4281 = vunpack.c.l.b16 %v4111
        %v4282 = vunpack.c.l.b16 %v4112
        %v4283 = vunpack.c.l.b16 %v4113
        %v4284 = vunpack.c.l.b16 %v4114
        %v4285 = vunpack.c.l.b16 %v4115
        %v4286 = vunpack.c.l.b16 %v4116
        %v4287 = vunpack.c.l.b16 %v4117
        %v4288 = vunpack.c.l.b16 %v4118
        %v4289 = vunpack.c.l.b16 %v4119
        %v4290 = vunpack.c.l.b16 %v4120
        %v4291 = vunpack.c.l.b16 %v4121
        %v4292 = vunpack.c.l.b16 %v4122
        %v4293 = vunpack.c.l.b16 %v4123
        %v4294 = vunpack.c.l.b16 %v4124
        %v4295 = vunpack.c.l.b16 %v4125
        %v4296 = vunpack.c.l.b16 %v4126
        %v4297 = vunpack.c.l.b16 %v4127
        %v4298 = vunpack.c.l.b16 %v4128
        %v4299 = vunpack.c.l.b16 %v4129
        %v4300 = vunpack.c.l.b16 %v4130
        %v4301 = vunpack.c.l.b16 %v4131
        %v4302 = vunpack.c.l.b16 %v4132
        %v4303 = vpack.c.b16 %v4219, %v4218
        %v4304 = vpack.c.b16 %v4221, %v4220
        %v4305 = vpack.c.b16 %v4223, %v4222
        %v4306 = vpack.c.b16 %v4225, %v4224
        %v4307 = vpack.c.b16 %v4227, %v4226
        %v4308 = vpack.c.b16 %v4229, %v4228
        %v4309 = vpack.c.b16 %v4231, %v4230
        %v4310 = vpack.c.b16 %v4233, %v4232
        %v4311 = vpack.c.b16 %v4235, %v4234
        %v4312 = vpack.c.b16 %v4237, %v4236
        %v4313 = vpack.c.b16 %v4239, %v4238
        %v4314 = vpack.c.b16 %v4241, %v4240
        %v4315 = vpack.c.b16 %v4243, %v4242
        %v4316 = vpack.c.b16 %v4245, %v4244
        %v4317 = vpack.c.b16 %v4247, %v4246
        %v4318 = vpack.c.b16 %v4249, %v4248
        %v4319 = vpack.c.b16 %v4251, %v4250
        %v4320 = vpack.c.b16 %v4253, %v4252
        %v4321 = vpack.c.b16 %v4255, %v4254
        %v4322 = vpack.c.b16 %v4257, %v4256
        %v4323 = vpack.c.b16 %v4259, %v4258
        %v4324 = vpack.c.b16 %v4261, %v4260
        %v4325 = vpack.c.b16 %v4263, %v4262
        %v4326 = vpack.c.b16 %v4265, %v4264
        %v4327 = vpack.c.b16 %v4267, %v4266
        %v4328 = vpack.c.b16 %v4269, %v4268
        %v4329 = vpack.c.b16 %v4271, %v4270
        %v4330 = vpack.c.b16 %v4273, %v4272
        %v4331 = vpack.c.b16 %v4275, %v4274
        %v4332 = vpack.c.b16 %v4277, %v4276
        %v4333 = vpack.c.b16 %v4279, %v4278
        %v4334 = vpack.c.b16 %v4281, %v4280
        %v4335 = vpack.c.b16 %v4283, %v4282
        %v4336 = vpack.c.b16 %v4285, %v4284
        %v4337 = vpack.c.b16 %v4287, %v4286
        %v4338 = vpack.c.b16 %v4289, %v4288
        %v4339 = vpack.c.b16 %v4291, %v4290
        %v4340 = vpack.c.b16 %v4293, %v4292
        %v4341 = vpack.c.b16 %v4295, %v4294
        %v4342 = vpack.c.b16 %v4297, %v4296
        %v4343 = vpack.c.b16 %v4299, %v4298
        %v4344 = vpack.c.b16 %v4301, %v4300
        %v4345 = vpack.c.b16 %v4302, %v4302
        %v4389 = vsel %vm946, %v4046, 0
        %v4392 = vsel %vm950, %v4345, 0
        %4394 = vmatpush.bf16.msra.mxu0 %v4310
        %4395 = vmatpush.bf16.msra.mxu0 %v4309
        %4396 = vmatpush.bf16.msra.mxu0 %v4308
        %4397 = vmatpush.bf16.msra.mxu0 %v4307
        %4398 = vmatpush.bf16.msra.mxu0 %v4306
        %4399 = vmatpush.bf16.msra.mxu0 %v4305
        %4400 = vmatpush.bf16.msra.mxu0 %v4304
        %4401 = vmatpush.bf16.msra.mxu0 %v4303
        %4402 = vmatmul.bf16.gmra.mxu0 %v4041
        %v4403 = vpop.f32.mrf.mxu0
        %v4404 = vadd.f32 0.0, %v4403
        %v4405 = vpop.f32.mrf.mxu0
        %4406 = vdwg.mxu0
        %4407 = vmatpush.bf16.msra.mxu0 %v4318
        %4408 = vmatpush.bf16.msra.mxu0 %v4317
        %4409 = vmatpush.bf16.msra.mxu0 %v4316
        %4410 = vmatpush.bf16.msra.mxu0 %v4315
        %4411 = vmatpush.bf16.msra.mxu0 %v4314
        %4412 = vmatpush.bf16.msra.mxu0 %v4313
        %4413 = vmatpush.bf16.msra.mxu0 %v4312
        %4414 = vmatpush.bf16.msra.mxu0 %v4311
        %4415 = vmatmul.bf16.gmra.mxu0 %v4042
        %v4416 = vpop.f32.mrf.mxu0
        %v4417 = vadd.f32 %v4404, %v4416
        %v4418 = vpop.f32.mrf.mxu0
        %4419 = vdwg.mxu0
        %4420 = vmatpush.bf16.msra.mxu0 %v4326
        %4421 = vmatpush.bf16.msra.mxu0 %v4325
        %4422 = vmatpush.bf16.msra.mxu0 %v4324
        %4423 = vmatpush.bf16.msra.mxu0 %v4323
        %4424 = vmatpush.bf16.msra.mxu0 %v4322
        %4425 = vmatpush.bf16.msra.mxu0 %v4321
        %4426 = vmatpush.bf16.msra.mxu0 %v4320
        %4427 = vmatpush.bf16.msra.mxu0 %v4319
        %4428 = vmatmul.bf16.gmra.mxu0 %v4043
        %v4429 = vpop.f32.mrf.mxu0
        %v4430 = vadd.f32 %v4417, %v4429
        %v4431 = vpop.f32.mrf.mxu0
        %4432 = vdwg.mxu0
        %4433 = vmatpush.bf16.msra.mxu0 %v4334
        %4434 = vmatpush.bf16.msra.mxu0 %v4333
        %4435 = vmatpush.bf16.msra.mxu0 %v4332
        %4436 = vmatpush.bf16.msra.mxu0 %v4331
        %4437 = vmatpush.bf16.msra.mxu0 %v4330
        %4438 = vmatpush.bf16.msra.mxu0 %v4329
        %4439 = vmatpush.bf16.msra.mxu0 %v4328
        %4440 = vmatpush.bf16.msra.mxu0 %v4327
        %4441 = vmatmul.bf16.gmra.mxu0 %v4044
        %v4442 = vpop.f32.mrf.mxu0
        %v4443 = vadd.f32 %v4430, %v4442
        %v4444 = vpop.f32.mrf.mxu0
        %4445 = vdwg.mxu0
        %4446 = vmatpush.bf16.msra.mxu0 %v4342
        %4447 = vmatpush.bf16.msra.mxu0 %v4341
        %4448 = vmatpush.bf16.msra.mxu0 %v4340
        %4449 = vmatpush.bf16.msra.mxu0 %v4339
        %4450 = vmatpush.bf16.msra.mxu0 %v4338
        %4451 = vmatpush.bf16.msra.mxu0 %v4337
        %4452 = vmatpush.bf16.msra.mxu0 %v4336
        %4453 = vmatpush.bf16.msra.mxu0 %v4335
        %4454 = vmatmul.bf16.gmra.mxu0 %v4045
        %v4455 = vpop.f32.mrf.mxu0
        %v4456 = vadd.f32 %v4443, %v4455
        %v4457 = vpop.f32.mrf.mxu0
        %4458 = vdwg.mxu0
        %4459 = vmatpush.bf16.msra.mxu0 0
        %4460 = vmatpush.bf16.msra.mxu0 0
        %4461 = vmatpush.bf16.msra.mxu0 0
        %4462 = vmatpush.bf16.msra.mxu0 0
        %4463 = vmatpush.bf16.msra.mxu0 0
        %4464 = vmatpush.bf16.msra.mxu0 %v4392
        %4465 = vmatpush.bf16.msra.mxu0 %v4344
        %4466 = vmatpush.bf16.msra.mxu0 %v4343
        %4467 = vmatmul.bf16.gmra.mxu0 %v4389
        %v4468 = vpop.f32.mrf.mxu0
        %v4469 = vadd.f32 %v4456, %v4468
        %v4470 = vpop.f32.mrf.mxu0
        %4471 = vdwg.mxu0
        %v4472 = vadd.f32 %v3955, %v4469
        %s4473 = sadd.s32 %s312, 8
        %s4474 = smul.u32 %s4473, 128
        %s4475 = sld [smem:[#allocation2 + %s4474]]
        %v4476 = vstv %s4475
        %v4477 = vmul.f32 %v4476, %v315
        %v4478 = vmul.f32 %v4476, %v316
        %s4479 = sadd.s32 %s4474, 1
        %s4480 = sld [smem:[#allocation2 + %s4479]]
        %v4481 = vstv %s4480
        %v4482 = vmul.f32 %v4481, %v323
        %v4483 = vmul.f32 %v4481, %v324
        %v4484 = vadd.f32 %v4477, %v4482
        %v4485 = vadd.f32 %v4478, %v4483
        %s4486 = sadd.s32 %s4474, 2
        %s4487 = sld [smem:[#allocation2 + %s4486]]
        %v4488 = vstv %s4487
        %v4489 = vmul.f32 %v4488, %v333
        %v4490 = vmul.f32 %v4488, %v334
        %v4491 = vadd.f32 %v4484, %v4489
        %v4492 = vadd.f32 %v4485, %v4490
        %s4493 = sadd.s32 %s4474, 3
        %s4494 = sld [smem:[#allocation2 + %s4493]]
        %v4495 = vstv %s4494
        %v4496 = vmul.f32 %v4495, %v343
        %v4497 = vmul.f32 %v4495, %v344
        %v4498 = vadd.f32 %v4491, %v4496
        %v4499 = vadd.f32 %v4492, %v4497
        %s4500 = sadd.s32 %s4474, 4
        %s4501 = sld [smem:[#allocation2 + %s4500]]
        %v4502 = vstv %s4501
        %v4503 = vmul.f32 %v4502, %v353
        %v4504 = vmul.f32 %v4502, %v354
        %v4505 = vadd.f32 %v4498, %v4503
        %v4506 = vadd.f32 %v4499, %v4504
        %s4507 = sadd.s32 %s4474, 5
        %s4508 = sld [smem:[#allocation2 + %s4507]]
        %v4509 = vstv %s4508
        %v4510 = vmul.f32 %v4509, %v363
        %v4511 = vmul.f32 %v4509, %v364
        %v4512 = vadd.f32 %v4505, %v4510
        %v4513 = vadd.f32 %v4506, %v4511
        %s4514 = sadd.s32 %s4474, 6
        %s4515 = sld [smem:[#allocation2 + %s4514]]
        %v4516 = vstv %s4515
        %v4517 = vmul.f32 %v4516, %v373
        %v4518 = vmul.f32 %v4516, %v374
        %v4519 = vadd.f32 %v4512, %v4517
        %v4520 = vadd.f32 %v4513, %v4518
        %s4521 = sadd.s32 %s4474, 7
        %s4522 = sld [smem:[#allocation2 + %s4521]]
        %v4523 = vstv %s4522
        %v4524 = vmul.f32 %v4523, %v383
        %v4525 = vmul.f32 %v4523, %v384
        %v4526 = vadd.f32 %v4519, %v4524
        %v4527 = vadd.f32 %v4520, %v4525
        %s4528 = sadd.s32 %s4474, 8
        %s4529 = sld [smem:[#allocation2 + %s4528]]
        %v4530 = vstv %s4529
        %v4531 = vmul.f32 %v4530, %v393
        %v4532 = vmul.f32 %v4530, %v394
        %v4533 = vadd.f32 %v4526, %v4531
        %v4534 = vadd.f32 %v4527, %v4532
        %s4535 = sld [smem:[#allocation4 + %s4473]]
        %v4536 = vstv %s4535
        %v4537 = vadd.f32 %v4533, %v4536
        %v4538 = vadd.f32 %v4534, %v4536
        %v4539 = vmax.f32 %v4537, 0.0
        %v4540 = vmax.f32 %v4538, 0.0
        %4543 = vst [vmem:[#allocation1] ss:$4 sm:$0xff] %v4539
        %s4544 = scalar_lea.vmem [#allocation1], 32
        %4545 = vst [vmem:[%s4544] ss:$4 sm:$0xff] %v4540
        %v4546 = vld.sshfl [vmem:[#allocation1] sm:$0xff pattern:$0x73625140]
        %v4547 = vld.sshfl [vmem:[#allocation1 + $0x8] sm:$0xff pattern:$0x73625140]
        %v4548 = vld.sshfl [vmem:[#allocation1 + $0x10] sm:$0xff pattern:$0x73625140]
        %v4549 = vld.sshfl [vmem:[#allocation1 + $0x18] sm:$0xff pattern:$0x73625140]
        %v4550 = vld.sshfl [vmem:[#allocation1 + $0x20] sm:$0xff pattern:$0x73625140]
        %v4551 = vld.sshfl [vmem:[#allocation1 + $0x28] sm:$0xff pattern:$0x73625140]
        %v4558 = vpack.c.bf16 %v4546, %v4546
        %v4559 = vpack.c.bf16 %v4547, %v4547
        %v4560 = vpack.c.bf16 %v4548, %v4548
        %v4561 = vpack.c.bf16 %v4549, %v4549
        %v4562 = vpack.c.bf16 %v4550, %v4550
        %v4563 = vpack.c.bf16 %v4551, %v4551
        %s4564 = scalar_lea.vmem %s305, 2720
        %v4565 = vld [vmem:[%s4564] sm:$0xf]
        %v4566 = vld [vmem:[%s4564 + $0x4] sm:$0xf]
        %v4567 = vld [vmem:[%s4564 + $0x8] sm:$0xf]
        %v4568 = vld [vmem:[%s4564 + $0xc] sm:$0xf]
        %v4569 = vld [vmem:[%s4564 + $0x10] sm:$0xf]
        %v4570 = vld [vmem:[%s4564 + $0x14] sm:$0xf]
        %v4571 = vld [vmem:[%s4564 + $0x18] sm:$0xf]
        %v4572 = vld [vmem:[%s4564 + $0x1c] sm:$0xf]
        %v4573 = vld [vmem:[%s4564 + $0x20] sm:$0xf]
        %v4574 = vld [vmem:[%s4564 + $0x24] sm:$0xf]
        %v4575 = vld [vmem:[%s4564 + $0x28] sm:$0xf]
        %v4576 = vld [vmem:[%s4564 + $0x2c] sm:$0xf]
        %v4577 = vld [vmem:[%s4564 + $0x30] sm:$0xf]
        %v4578 = vld [vmem:[%s4564 + $0x34] sm:$0xf]
        %v4579 = vld [vmem:[%s4564 + $0x38] sm:$0xf]
        %v4580 = vld [vmem:[%s4564 + $0x3c] sm:$0xf]
        %v4581 = vld [vmem:[%s4564 + $0x40] sm:$0xf]
        %v4582 = vld [vmem:[%s4564 + $0x44] sm:$0xf]
        %v4583 = vld [vmem:[%s4564 + $0x48] sm:$0xf]
        %v4584 = vld [vmem:[%s4564 + $0x4c] sm:$0xf]
        %v4585 = vld [vmem:[%s4564 + $0x50] sm:$0xf]
        %v4586 = vld [vmem:[%s4564 + $0x54] sm:$0xf]
        %v4587 = vld [vmem:[%s4564 + $0x58] sm:$0xf]
        %v4588 = vld [vmem:[%s4564 + $0x5c] sm:$0xf]
        %v4589 = vld [vmem:[%s4564 + $0x60] sm:$0xf]
        %v4590 = vld [vmem:[%s4564 + $0x64] sm:$0xf]
        %v4591 = vld [vmem:[%s4564 + $0x68] sm:$0xf]
        %v4592 = vld [vmem:[%s4564 + $0x6c] sm:$0xf]
        %v4593 = vld [vmem:[%s4564 + $0x70] sm:$0xf]
        %v4594 = vld [vmem:[%s4564 + $0x74] sm:$0xf]
        %v4595 = vld [vmem:[%s4564 + $0x78] sm:$0xf]
        %v4596 = vld [vmem:[%s4564 + $0x7c] sm:$0xf]
        %v4597 = vld [vmem:[%s4564 + $0x80] sm:$0xf]
        %v4598 = vld [vmem:[%s4564 + $0x84] sm:$0xf]
        %v4599 = vld [vmem:[%s4564 + $0x88] sm:$0xf]
        %v4600 = vld [vmem:[%s4564 + $0x8c] sm:$0xf]
        %v4601 = vld [vmem:[%s4564 + $0x90] sm:$0xf]
        %v4602 = vld [vmem:[%s4564 + $0x94] sm:$0xf]
        %v4603 = vld [vmem:[%s4564 + $0x98] sm:$0xf]
        %v4604 = vld [vmem:[%s4564 + $0x9c] sm:$0xf]
        %v4605 = vld [vmem:[%s4564 + $0xa0] sm:$0xf]
        %v4606 = vld [vmem:[%s4564 + $0xa4] sm:$0xf]
        %v4607 = vld [vmem:[%s4564 + $0xa8] sm:$0xf]
        %v4608 = vld [vmem:[%s4564 + $0xac] sm:$0xf]
        %v4609 = vld [vmem:[%s4564 + $0xb0] sm:$0xf]
        %v4610 = vld [vmem:[%s4564 + $0xb4] sm:$0xf]
        %v4611 = vld [vmem:[%s4564 + $0xb8] sm:$0xf]
        %v4612 = vld [vmem:[%s4564 + $0xbc] sm:$0xf]
        %v4613 = vld [vmem:[%s4564 + $0xc0] sm:$0xf]
        %v4614 = vld [vmem:[%s4564 + $0xc4] sm:$0xf]
        %v4615 = vld [vmem:[%s4564 + $0xc8] sm:$0xf]
        %v4616 = vld [vmem:[%s4564 + $0xcc] sm:$0xf]
        %v4617 = vld [vmem:[%s4564 + $0xd0] sm:$0xf]
        %v4618 = vld [vmem:[%s4564 + $0xd4] sm:$0xf]
        %v4619 = vld [vmem:[%s4564 + $0xd8] sm:$0xf]
        %v4620 = vld [vmem:[%s4564 + $0xdc] sm:$0xf]
        %v4621 = vld [vmem:[%s4564 + $0xe0] sm:$0xf]
        %v4622 = vld [vmem:[%s4564 + $0xe4] sm:$0xf]
        %v4623 = vld [vmem:[%s4564 + $0xe8] sm:$0xf]
        %v4624 = vld [vmem:[%s4564 + $0xec] sm:$0xf]
        %v4625 = vld [vmem:[%s4564 + $0xf0] sm:$0xf]
        %v4626 = vld [vmem:[%s4564 + $0xf4] sm:$0xf]
        %v4627 = vld [vmem:[%s4564 + $0xf8] sm:$0xf]
        %v4628 = vld [vmem:[%s4564 + $0xfc] sm:$0xf]
        %v4629 = vld [vmem:[%s4564 + $0x100] sm:$0xf]
        %v4630 = vld [vmem:[%s4564 + $0x104] sm:$0xf]
        %v4631 = vld [vmem:[%s4564 + $0x108] sm:$0xf]
        %v4632 = vld [vmem:[%s4564 + $0x10c] sm:$0xf]
        %v4633 = vld [vmem:[%s4564 + $0x110] sm:$0xf]
        %v4634 = vld [vmem:[%s4564 + $0x114] sm:$0xf]
        %v4635 = vld [vmem:[%s4564 + $0x118] sm:$0xf]
        %v4636 = vld [vmem:[%s4564 + $0x11c] sm:$0xf]
        %v4637 = vld [vmem:[%s4564 + $0x120] sm:$0xf]
        %v4638 = vld [vmem:[%s4564 + $0x124] sm:$0xf]
        %v4639 = vld [vmem:[%s4564 + $0x128] sm:$0xf]
        %v4640 = vld [vmem:[%s4564 + $0x12c] sm:$0xf]
        %v4641 = vld [vmem:[%s4564 + $0x130] sm:$0xf]
        %v4642 = vld [vmem:[%s4564 + $0x134] sm:$0xf]
        %v4643 = vld [vmem:[%s4564 + $0x138] sm:$0xf]
        %v4644 = vld [vmem:[%s4564 + $0x13c] sm:$0xf]
        %v4645 = vld [vmem:[%s4564 + $0x140] sm:$0xf]
        %v4646 = vld [vmem:[%s4564 + $0x144] sm:$0xf]
        %v4647 = vld [vmem:[%s4564 + $0x148] sm:$0xf]
        %v4648 = vld [vmem:[%s4564 + $0x14c] sm:$0xf]
        %v4649 = vld [vmem:[%s4564 + $0x150] sm:$0x3]
        %v4735 = vunpack.c.l.b16 %v4565
        %v4736 = vunpack.c.l.b16 %v4566
        %v4737 = vunpack.c.l.b16 %v4567
        %v4738 = vunpack.c.l.b16 %v4568
        %v4739 = vunpack.c.l.b16 %v4569
        %v4740 = vunpack.c.l.b16 %v4570
        %v4741 = vunpack.c.l.b16 %v4571
        %v4742 = vunpack.c.l.b16 %v4572
        %v4743 = vunpack.c.l.b16 %v4573
        %v4744 = vunpack.c.l.b16 %v4574
        %v4745 = vunpack.c.l.b16 %v4575
        %v4746 = vunpack.c.l.b16 %v4576
        %v4747 = vunpack.c.l.b16 %v4577
        %v4748 = vunpack.c.l.b16 %v4578
        %v4749 = vunpack.c.l.b16 %v4579
        %v4750 = vunpack.c.l.b16 %v4580
        %v4751 = vunpack.c.l.b16 %v4581
        %v4752 = vunpack.c.l.b16 %v4582
        %v4753 = vunpack.c.l.b16 %v4583
        %v4754 = vunpack.c.l.b16 %v4584
        %v4755 = vunpack.c.l.b16 %v4585
        %v4756 = vunpack.c.l.b16 %v4586
        %v4757 = vunpack.c.l.b16 %v4587
        %v4758 = vunpack.c.l.b16 %v4588
        %v4759 = vunpack.c.l.b16 %v4589
        %v4760 = vunpack.c.l.b16 %v4590
        %v4761 = vunpack.c.l.b16 %v4591
        %v4762 = vunpack.c.l.b16 %v4592
        %v4763 = vunpack.c.l.b16 %v4593
        %v4764 = vunpack.c.l.b16 %v4594
        %v4765 = vunpack.c.l.b16 %v4595
        %v4766 = vunpack.c.l.b16 %v4596
        %v4767 = vunpack.c.l.b16 %v4597
        %v4768 = vunpack.c.l.b16 %v4598
        %v4769 = vunpack.c.l.b16 %v4599
        %v4770 = vunpack.c.l.b16 %v4600
        %v4771 = vunpack.c.l.b16 %v4601
        %v4772 = vunpack.c.l.b16 %v4602
        %v4773 = vunpack.c.l.b16 %v4603
        %v4774 = vunpack.c.l.b16 %v4604
        %v4775 = vunpack.c.l.b16 %v4605
        %v4776 = vunpack.c.l.b16 %v4606
        %v4777 = vunpack.c.l.b16 %v4607
        %v4778 = vunpack.c.l.b16 %v4608
        %v4779 = vunpack.c.l.b16 %v4609
        %v4780 = vunpack.c.l.b16 %v4610
        %v4781 = vunpack.c.l.b16 %v4611
        %v4782 = vunpack.c.l.b16 %v4612
        %v4783 = vunpack.c.l.b16 %v4613
        %v4784 = vunpack.c.l.b16 %v4614
        %v4785 = vunpack.c.l.b16 %v4615
        %v4786 = vunpack.c.l.b16 %v4616
        %v4787 = vunpack.c.l.b16 %v4617
        %v4788 = vunpack.c.l.b16 %v4618
        %v4789 = vunpack.c.l.b16 %v4619
        %v4790 = vunpack.c.l.b16 %v4620
        %v4791 = vunpack.c.l.b16 %v4621
        %v4792 = vunpack.c.l.b16 %v4622
        %v4793 = vunpack.c.l.b16 %v4623
        %v4794 = vunpack.c.l.b16 %v4624
        %v4795 = vunpack.c.l.b16 %v4625
        %v4796 = vunpack.c.l.b16 %v4626
        %v4797 = vunpack.c.l.b16 %v4627
        %v4798 = vunpack.c.l.b16 %v4628
        %v4799 = vunpack.c.l.b16 %v4629
        %v4800 = vunpack.c.l.b16 %v4630
        %v4801 = vunpack.c.l.b16 %v4631
        %v4802 = vunpack.c.l.b16 %v4632
        %v4803 = vunpack.c.l.b16 %v4633
        %v4804 = vunpack.c.l.b16 %v4634
        %v4805 = vunpack.c.l.b16 %v4635
        %v4806 = vunpack.c.l.b16 %v4636
        %v4807 = vunpack.c.l.b16 %v4637
        %v4808 = vunpack.c.l.b16 %v4638
        %v4809 = vunpack.c.l.b16 %v4639
        %v4810 = vunpack.c.l.b16 %v4640
        %v4811 = vunpack.c.l.b16 %v4641
        %v4812 = vunpack.c.l.b16 %v4642
        %v4813 = vunpack.c.l.b16 %v4643
        %v4814 = vunpack.c.l.b16 %v4644
        %v4815 = vunpack.c.l.b16 %v4645
        %v4816 = vunpack.c.l.b16 %v4646
        %v4817 = vunpack.c.l.b16 %v4647
        %v4818 = vunpack.c.l.b16 %v4648
        %v4819 = vunpack.c.l.b16 %v4649
        %v4820 = vpack.c.b16 %v4736, %v4735
        %v4821 = vpack.c.b16 %v4738, %v4737
        %v4822 = vpack.c.b16 %v4740, %v4739
        %v4823 = vpack.c.b16 %v4742, %v4741
        %v4824 = vpack.c.b16 %v4744, %v4743
        %v4825 = vpack.c.b16 %v4746, %v4745
        %v4826 = vpack.c.b16 %v4748, %v4747
        %v4827 = vpack.c.b16 %v4750, %v4749
        %v4828 = vpack.c.b16 %v4752, %v4751
        %v4829 = vpack.c.b16 %v4754, %v4753
        %v4830 = vpack.c.b16 %v4756, %v4755
        %v4831 = vpack.c.b16 %v4758, %v4757
        %v4832 = vpack.c.b16 %v4760, %v4759
        %v4833 = vpack.c.b16 %v4762, %v4761
        %v4834 = vpack.c.b16 %v4764, %v4763
        %v4835 = vpack.c.b16 %v4766, %v4765
        %v4836 = vpack.c.b16 %v4768, %v4767
        %v4837 = vpack.c.b16 %v4770, %v4769
        %v4838 = vpack.c.b16 %v4772, %v4771
        %v4839 = vpack.c.b16 %v4774, %v4773
        %v4840 = vpack.c.b16 %v4776, %v4775
        %v4841 = vpack.c.b16 %v4778, %v4777
        %v4842 = vpack.c.b16 %v4780, %v4779
        %v4843 = vpack.c.b16 %v4782, %v4781
        %v4844 = vpack.c.b16 %v4784, %v4783
        %v4845 = vpack.c.b16 %v4786, %v4785
        %v4846 = vpack.c.b16 %v4788, %v4787
        %v4847 = vpack.c.b16 %v4790, %v4789
        %v4848 = vpack.c.b16 %v4792, %v4791
        %v4849 = vpack.c.b16 %v4794, %v4793
        %v4850 = vpack.c.b16 %v4796, %v4795
        %v4851 = vpack.c.b16 %v4798, %v4797
        %v4852 = vpack.c.b16 %v4800, %v4799
        %v4853 = vpack.c.b16 %v4802, %v4801
        %v4854 = vpack.c.b16 %v4804, %v4803
        %v4855 = vpack.c.b16 %v4806, %v4805
        %v4856 = vpack.c.b16 %v4808, %v4807
        %v4857 = vpack.c.b16 %v4810, %v4809
        %v4858 = vpack.c.b16 %v4812, %v4811
        %v4859 = vpack.c.b16 %v4814, %v4813
        %v4860 = vpack.c.b16 %v4816, %v4815
        %v4861 = vpack.c.b16 %v4818, %v4817
        %v4862 = vpack.c.b16 %v4819, %v4819
        %v4906 = vsel %vm946, %v4563, 0
        %v4909 = vsel %vm950, %v4862, 0
        %4911 = vmatpush.bf16.msra.mxu0 %v4827
        %4912 = vmatpush.bf16.msra.mxu0 %v4826
        %4913 = vmatpush.bf16.msra.mxu0 %v4825
        %4914 = vmatpush.bf16.msra.mxu0 %v4824
        %4915 = vmatpush.bf16.msra.mxu0 %v4823
        %4916 = vmatpush.bf16.msra.mxu0 %v4822
        %4917 = vmatpush.bf16.msra.mxu0 %v4821
        %4918 = vmatpush.bf16.msra.mxu0 %v4820
        %4919 = vmatmul.bf16.gmra.mxu0 %v4558
        %v4920 = vpop.f32.mrf.mxu0
        %v4921 = vadd.f32 0.0, %v4920
        %v4922 = vpop.f32.mrf.mxu0
        %4923 = vdwg.mxu0
        %4924 = vmatpush.bf16.msra.mxu0 %v4835
        %4925 = vmatpush.bf16.msra.mxu0 %v4834
        %4926 = vmatpush.bf16.msra.mxu0 %v4833
        %4927 = vmatpush.bf16.msra.mxu0 %v4832
        %4928 = vmatpush.bf16.msra.mxu0 %v4831
        %4929 = vmatpush.bf16.msra.mxu0 %v4830
        %4930 = vmatpush.bf16.msra.mxu0 %v4829
        %4931 = vmatpush.bf16.msra.mxu0 %v4828
        %4932 = vmatmul.bf16.gmra.mxu0 %v4559
        %v4933 = vpop.f32.mrf.mxu0
        %v4934 = vadd.f32 %v4921, %v4933
        %v4935 = vpop.f32.mrf.mxu0
        %4936 = vdwg.mxu0
        %4937 = vmatpush.bf16.msra.mxu0 %v4843
        %4938 = vmatpush.bf16.msra.mxu0 %v4842
        %4939 = vmatpush.bf16.msra.mxu0 %v4841
        %4940 = vmatpush.bf16.msra.mxu0 %v4840
        %4941 = vmatpush.bf16.msra.mxu0 %v4839
        %4942 = vmatpush.bf16.msra.mxu0 %v4838
        %4943 = vmatpush.bf16.msra.mxu0 %v4837
        %4944 = vmatpush.bf16.msra.mxu0 %v4836
        %4945 = vmatmul.bf16.gmra.mxu0 %v4560
        %v4946 = vpop.f32.mrf.mxu0
        %v4947 = vadd.f32 %v4934, %v4946
        %v4948 = vpop.f32.mrf.mxu0
        %4949 = vdwg.mxu0
        %4950 = vmatpush.bf16.msra.mxu0 %v4851
        %4951 = vmatpush.bf16.msra.mxu0 %v4850
        %4952 = vmatpush.bf16.msra.mxu0 %v4849
        %4953 = vmatpush.bf16.msra.mxu0 %v4848
        %4954 = vmatpush.bf16.msra.mxu0 %v4847
        %4955 = vmatpush.bf16.msra.mxu0 %v4846
        %4956 = vmatpush.bf16.msra.mxu0 %v4845
        %4957 = vmatpush.bf16.msra.mxu0 %v4844
        %4958 = vmatmul.bf16.gmra.mxu0 %v4561
        %v4959 = vpop.f32.mrf.mxu0
        %v4960 = vadd.f32 %v4947, %v4959
        %v4961 = vpop.f32.mrf.mxu0
        %4962 = vdwg.mxu0
        %4963 = vmatpush.bf16.msra.mxu0 %v4859
        %4964 = vmatpush.bf16.msra.mxu0 %v4858
        %4965 = vmatpush.bf16.msra.mxu0 %v4857
        %4966 = vmatpush.bf16.msra.mxu0 %v4856
        %4967 = vmatpush.bf16.msra.mxu0 %v4855
        %4968 = vmatpush.bf16.msra.mxu0 %v4854
        %4969 = vmatpush.bf16.msra.mxu0 %v4853
        %4970 = vmatpush.bf16.msra.mxu0 %v4852
        %4971 = vmatmul.bf16.gmra.mxu0 %v4562
        %v4972 = vpop.f32.mrf.mxu0
        %v4973 = vadd.f32 %v4960, %v4972
        %v4974 = vpop.f32.mrf.mxu0
        %4975 = vdwg.mxu0
        %4976 = vmatpush.bf16.msra.mxu0 0
        %4977 = vmatpush.bf16.msra.mxu0 0
        %4978 = vmatpush.bf16.msra.mxu0 0
        %4979 = vmatpush.bf16.msra.mxu0 0
        %4980 = vmatpush.bf16.msra.mxu0 0
        %4981 = vmatpush.bf16.msra.mxu0 %v4909
        %4982 = vmatpush.bf16.msra.mxu0 %v4861
        %4983 = vmatpush.bf16.msra.mxu0 %v4860
        %4984 = vmatmul.bf16.gmra.mxu0 %v4906
        %v4985 = vpop.f32.mrf.mxu0
        %v4986 = vadd.f32 %v4973, %v4985
        %v4987 = vpop.f32.mrf.mxu0
        %4988 = vdwg.mxu0
        %v4989 = vadd.f32 %v4472, %v4986
        %s4990 = sadd.s32 %s312, 9
        %s4991 = smul.u32 %s4990, 128
        %s4992 = sld [smem:[#allocation2 + %s4991]]
        %v4993 = vstv %s4992
        %v4994 = vmul.f32 %v4993, %v315
        %v4995 = vmul.f32 %v4993, %v316
        %s4996 = sadd.s32 %s4991, 1
        %s4997 = sld [smem:[#allocation2 + %s4996]]
        %v4998 = vstv %s4997
        %v4999 = vmul.f32 %v4998, %v323
        %v5000 = vmul.f32 %v4998, %v324
        %v5001 = vadd.f32 %v4994, %v4999
        %v5002 = vadd.f32 %v4995, %v5000
        %s5003 = sadd.s32 %s4991, 2
        %s5004 = sld [smem:[#allocation2 + %s5003]]
        %v5005 = vstv %s5004
        %v5006 = vmul.f32 %v5005, %v333
        %v5007 = vmul.f32 %v5005, %v334
        %v5008 = vadd.f32 %v5001, %v5006
        %v5009 = vadd.f32 %v5002, %v5007
        %s5010 = sadd.s32 %s4991, 3
        %s5011 = sld [smem:[#allocation2 + %s5010]]
        %v5012 = vstv %s5011
        %v5013 = vmul.f32 %v5012, %v343
        %v5014 = vmul.f32 %v5012, %v344
        %v5015 = vadd.f32 %v5008, %v5013
        %v5016 = vadd.f32 %v5009, %v5014
        %s5017 = sadd.s32 %s4991, 4
        %s5018 = sld [smem:[#allocation2 + %s5017]]
        %v5019 = vstv %s5018
        %v5020 = vmul.f32 %v5019, %v353
        %v5021 = vmul.f32 %v5019, %v354
        %v5022 = vadd.f32 %v5015, %v5020
        %v5023 = vadd.f32 %v5016, %v5021
        %s5024 = sadd.s32 %s4991, 5
        %s5025 = sld [smem:[#allocation2 + %s5024]]
        %v5026 = vstv %s5025
        %v5027 = vmul.f32 %v5026, %v363
        %v5028 = vmul.f32 %v5026, %v364
        %v5029 = vadd.f32 %v5022, %v5027
        %v5030 = vadd.f32 %v5023, %v5028
        %s5031 = sadd.s32 %s4991, 6
        %s5032 = sld [smem:[#allocation2 + %s5031]]
        %v5033 = vstv %s5032
        %v5034 = vmul.f32 %v5033, %v373
        %v5035 = vmul.f32 %v5033, %v374
        %v5036 = vadd.f32 %v5029, %v5034
        %v5037 = vadd.f32 %v5030, %v5035
        %s5038 = sadd.s32 %s4991, 7
        %s5039 = sld [smem:[#allocation2 + %s5038]]
        %v5040 = vstv %s5039
        %v5041 = vmul.f32 %v5040, %v383
        %v5042 = vmul.f32 %v5040, %v384
        %v5043 = vadd.f32 %v5036, %v5041
        %v5044 = vadd.f32 %v5037, %v5042
        %s5045 = sadd.s32 %s4991, 8
        %s5046 = sld [smem:[#allocation2 + %s5045]]
        %v5047 = vstv %s5046
        %v5048 = vmul.f32 %v5047, %v393
        %v5049 = vmul.f32 %v5047, %v394
        %v5050 = vadd.f32 %v5043, %v5048
        %v5051 = vadd.f32 %v5044, %v5049
        %s5052 = sld [smem:[#allocation4 + %s4990]]
        %v5053 = vstv %s5052
        %v5054 = vadd.f32 %v5050, %v5053
        %v5055 = vadd.f32 %v5051, %v5053
        %v5056 = vmax.f32 %v5054, 0.0
        %v5057 = vmax.f32 %v5055, 0.0
        %5060 = vst [vmem:[#allocation1] ss:$4 sm:$0xff] %v5056
        %s5061 = scalar_lea.vmem [#allocation1], 32
        %5062 = vst [vmem:[%s5061] ss:$4 sm:$0xff] %v5057
        %v5063 = vld.sshfl [vmem:[#allocation1] sm:$0xff pattern:$0x73625140]
        %v5064 = vld.sshfl [vmem:[#allocation1 + $0x8] sm:$0xff pattern:$0x73625140]
        %v5065 = vld.sshfl [vmem:[#allocation1 + $0x10] sm:$0xff pattern:$0x73625140]
        %v5066 = vld.sshfl [vmem:[#allocation1 + $0x18] sm:$0xff pattern:$0x73625140]
        %v5067 = vld.sshfl [vmem:[#allocation1 + $0x20] sm:$0xff pattern:$0x73625140]
        %v5068 = vld.sshfl [vmem:[#allocation1 + $0x28] sm:$0xff pattern:$0x73625140]
        %v5075 = vpack.c.bf16 %v5063, %v5063
        %v5076 = vpack.c.bf16 %v5064, %v5064
        %v5077 = vpack.c.bf16 %v5065, %v5065
        %v5078 = vpack.c.bf16 %v5066, %v5066
        %v5079 = vpack.c.bf16 %v5067, %v5067
        %v5080 = vpack.c.bf16 %v5068, %v5068
        %s5081 = scalar_lea.vmem %s305, 3060
        %v5082 = vld [vmem:[%s5081] sm:$0xf]
        %v5083 = vld [vmem:[%s5081 + $0x4] sm:$0xf]
        %v5084 = vld [vmem:[%s5081 + $0x8] sm:$0xf]
        %v5085 = vld [vmem:[%s5081 + $0xc] sm:$0xf]
        %v5086 = vld [vmem:[%s5081 + $0x10] sm:$0xf]
        %v5087 = vld [vmem:[%s5081 + $0x14] sm:$0xf]
        %v5088 = vld [vmem:[%s5081 + $0x18] sm:$0xf]
        %v5089 = vld [vmem:[%s5081 + $0x1c] sm:$0xf]
        %v5090 = vld [vmem:[%s5081 + $0x20] sm:$0xf]
        %v5091 = vld [vmem:[%s5081 + $0x24] sm:$0xf]
        %v5092 = vld [vmem:[%s5081 + $0x28] sm:$0xf]
        %v5093 = vld [vmem:[%s5081 + $0x2c] sm:$0xf]
        %v5094 = vld [vmem:[%s5081 + $0x30] sm:$0xf]
        %v5095 = vld [vmem:[%s5081 + $0x34] sm:$0xf]
        %v5096 = vld [vmem:[%s5081 + $0x38] sm:$0xf]
        %v5097 = vld [vmem:[%s5081 + $0x3c] sm:$0xf]
        %v5098 = vld [vmem:[%s5081 + $0x40] sm:$0xf]
        %v5099 = vld [vmem:[%s5081 + $0x44] sm:$0xf]
        %v5100 = vld [vmem:[%s5081 + $0x48] sm:$0xf]
        %v5101 = vld [vmem:[%s5081 + $0x4c] sm:$0xf]
        %v5102 = vld [vmem:[%s5081 + $0x50] sm:$0xf]
        %v5103 = vld [vmem:[%s5081 + $0x54] sm:$0xf]
        %v5104 = vld [vmem:[%s5081 + $0x58] sm:$0xf]
        %v5105 = vld [vmem:[%s5081 + $0x5c] sm:$0xf]
        %v5106 = vld [vmem:[%s5081 + $0x60] sm:$0xf]
        %v5107 = vld [vmem:[%s5081 + $0x64] sm:$0xf]
        %v5108 = vld [vmem:[%s5081 + $0x68] sm:$0xf]
        %v5109 = vld [vmem:[%s5081 + $0x6c] sm:$0xf]
        %v5110 = vld [vmem:[%s5081 + $0x70] sm:$0xf]
        %v5111 = vld [vmem:[%s5081 + $0x74] sm:$0xf]
        %v5112 = vld [vmem:[%s5081 + $0x78] sm:$0xf]
        %v5113 = vld [vmem:[%s5081 + $0x7c] sm:$0xf]
        %v5114 = vld [vmem:[%s5081 + $0x80] sm:$0xf]
        %v5115 = vld [vmem:[%s5081 + $0x84] sm:$0xf]
        %v5116 = vld [vmem:[%s5081 + $0x88] sm:$0xf]
        %v5117 = vld [vmem:[%s5081 + $0x8c] sm:$0xf]
        %v5118 = vld [vmem:[%s5081 + $0x90] sm:$0xf]
        %v5119 = vld [vmem:[%s5081 + $0x94] sm:$0xf]
        %v5120 = vld [vmem:[%s5081 + $0x98] sm:$0xf]
        %v5121 = vld [vmem:[%s5081 + $0x9c] sm:$0xf]
        %v5122 = vld [vmem:[%s5081 + $0xa0] sm:$0xf]
        %v5123 = vld [vmem:[%s5081 + $0xa4] sm:$0xf]
        %v5124 = vld [vmem:[%s5081 + $0xa8] sm:$0xf]
        %v5125 = vld [vmem:[%s5081 + $0xac] sm:$0xf]
        %v5126 = vld [vmem:[%s5081 + $0xb0] sm:$0xf]
        %v5127 = vld [vmem:[%s5081 + $0xb4] sm:$0xf]
        %v5128 = vld [vmem:[%s5081 + $0xb8] sm:$0xf]
        %v5129 = vld [vmem:[%s5081 + $0xbc] sm:$0xf]
        %v5130 = vld [vmem:[%s5081 + $0xc0] sm:$0xf]
        %v5131 = vld [vmem:[%s5081 + $0xc4] sm:$0xf]
        %v5132 = vld [vmem:[%s5081 + $0xc8] sm:$0xf]
        %v5133 = vld [vmem:[%s5081 + $0xcc] sm:$0xf]
        %v5134 = vld [vmem:[%s5081 + $0xd0] sm:$0xf]
        %v5135 = vld [vmem:[%s5081 + $0xd4] sm:$0xf]
        %v5136 = vld [vmem:[%s5081 + $0xd8] sm:$0xf]
        %v5137 = vld [vmem:[%s5081 + $0xdc] sm:$0xf]
        %v5138 = vld [vmem:[%s5081 + $0xe0] sm:$0xf]
        %v5139 = vld [vmem:[%s5081 + $0xe4] sm:$0xf]
        %v5140 = vld [vmem:[%s5081 + $0xe8] sm:$0xf]
        %v5141 = vld [vmem:[%s5081 + $0xec] sm:$0xf]
        %v5142 = vld [vmem:[%s5081 + $0xf0] sm:$0xf]
        %v5143 = vld [vmem:[%s5081 + $0xf4] sm:$0xf]
        %v5144 = vld [vmem:[%s5081 + $0xf8] sm:$0xf]
        %v5145 = vld [vmem:[%s5081 + $0xfc] sm:$0xf]
        %v5146 = vld [vmem:[%s5081 + $0x100] sm:$0xf]
        %v5147 = vld [vmem:[%s5081 + $0x104] sm:$0xf]
        %v5148 = vld [vmem:[%s5081 + $0x108] sm:$0xf]
        %v5149 = vld [vmem:[%s5081 + $0x10c] sm:$0xf]
        %v5150 = vld [vmem:[%s5081 + $0x110] sm:$0xf]
        %v5151 = vld [vmem:[%s5081 + $0x114] sm:$0xf]
        %v5152 = vld [vmem:[%s5081 + $0x118] sm:$0xf]
        %v5153 = vld [vmem:[%s5081 + $0x11c] sm:$0xf]
        %v5154 = vld [vmem:[%s5081 + $0x120] sm:$0xf]
        %v5155 = vld [vmem:[%s5081 + $0x124] sm:$0xf]
        %v5156 = vld [vmem:[%s5081 + $0x128] sm:$0xf]
        %v5157 = vld [vmem:[%s5081 + $0x12c] sm:$0xf]
        %v5158 = vld [vmem:[%s5081 + $0x130] sm:$0xf]
        %v5159 = vld [vmem:[%s5081 + $0x134] sm:$0xf]
        %v5160 = vld [vmem:[%s5081 + $0x138] sm:$0xf]
        %v5161 = vld [vmem:[%s5081 + $0x13c] sm:$0xf]
        %v5162 = vld [vmem:[%s5081 + $0x140] sm:$0xf]
        %v5163 = vld [vmem:[%s5081 + $0x144] sm:$0xf]
        %v5164 = vld [vmem:[%s5081 + $0x148] sm:$0xf]
        %v5165 = vld [vmem:[%s5081 + $0x14c] sm:$0xf]
        %v5166 = vld [vmem:[%s5081 + $0x150] sm:$0x3]
        %v5252 = vunpack.c.l.b16 %v5082
        %v5253 = vunpack.c.l.b16 %v5083
        %v5254 = vunpack.c.l.b16 %v5084
        %v5255 = vunpack.c.l.b16 %v5085
        %v5256 = vunpack.c.l.b16 %v5086
        %v5257 = vunpack.c.l.b16 %v5087
        %v5258 = vunpack.c.l.b16 %v5088
        %v5259 = vunpack.c.l.b16 %v5089
        %v5260 = vunpack.c.l.b16 %v5090
        %v5261 = vunpack.c.l.b16 %v5091
        %v5262 = vunpack.c.l.b16 %v5092
        %v5263 = vunpack.c.l.b16 %v5093
        %v5264 = vunpack.c.l.b16 %v5094
        %v5265 = vunpack.c.l.b16 %v5095
        %v5266 = vunpack.c.l.b16 %v5096
        %v5267 = vunpack.c.l.b16 %v5097
        %v5268 = vunpack.c.l.b16 %v5098
        %v5269 = vunpack.c.l.b16 %v5099
        %v5270 = vunpack.c.l.b16 %v5100
        %v5271 = vunpack.c.l.b16 %v5101
        %v5272 = vunpack.c.l.b16 %v5102
        %v5273 = vunpack.c.l.b16 %v5103
        %v5274 = vunpack.c.l.b16 %v5104
        %v5275 = vunpack.c.l.b16 %v5105
        %v5276 = vunpack.c.l.b16 %v5106
        %v5277 = vunpack.c.l.b16 %v5107
        %v5278 = vunpack.c.l.b16 %v5108
        %v5279 = vunpack.c.l.b16 %v5109
        %v5280 = vunpack.c.l.b16 %v5110
        %v5281 = vunpack.c.l.b16 %v5111
        %v5282 = vunpack.c.l.b16 %v5112
        %v5283 = vunpack.c.l.b16 %v5113
        %v5284 = vunpack.c.l.b16 %v5114
        %v5285 = vunpack.c.l.b16 %v5115
        %v5286 = vunpack.c.l.b16 %v5116
        %v5287 = vunpack.c.l.b16 %v5117
        %v5288 = vunpack.c.l.b16 %v5118
        %v5289 = vunpack.c.l.b16 %v5119
        %v5290 = vunpack.c.l.b16 %v5120
        %v5291 = vunpack.c.l.b16 %v5121
        %v5292 = vunpack.c.l.b16 %v5122
        %v5293 = vunpack.c.l.b16 %v5123
        %v5294 = vunpack.c.l.b16 %v5124
        %v5295 = vunpack.c.l.b16 %v5125
        %v5296 = vunpack.c.l.b16 %v5126
        %v5297 = vunpack.c.l.b16 %v5127
        %v5298 = vunpack.c.l.b16 %v5128
        %v5299 = vunpack.c.l.b16 %v5129
        %v5300 = vunpack.c.l.b16 %v5130
        %v5301 = vunpack.c.l.b16 %v5131
        %v5302 = vunpack.c.l.b16 %v5132
        %v5303 = vunpack.c.l.b16 %v5133
        %v5304 = vunpack.c.l.b16 %v5134
        %v5305 = vunpack.c.l.b16 %v5135
        %v5306 = vunpack.c.l.b16 %v5136
        %v5307 = vunpack.c.l.b16 %v5137
        %v5308 = vunpack.c.l.b16 %v5138
        %v5309 = vunpack.c.l.b16 %v5139
        %v5310 = vunpack.c.l.b16 %v5140
        %v5311 = vunpack.c.l.b16 %v5141
        %v5312 = vunpack.c.l.b16 %v5142
        %v5313 = vunpack.c.l.b16 %v5143
        %v5314 = vunpack.c.l.b16 %v5144
        %v5315 = vunpack.c.l.b16 %v5145
        %v5316 = vunpack.c.l.b16 %v5146
        %v5317 = vunpack.c.l.b16 %v5147
        %v5318 = vunpack.c.l.b16 %v5148
        %v5319 = vunpack.c.l.b16 %v5149
        %v5320 = vunpack.c.l.b16 %v5150
        %v5321 = vunpack.c.l.b16 %v5151
        %v5322 = vunpack.c.l.b16 %v5152
        %v5323 = vunpack.c.l.b16 %v5153
        %v5324 = vunpack.c.l.b16 %v5154
        %v5325 = vunpack.c.l.b16 %v5155
        %v5326 = vunpack.c.l.b16 %v5156
        %v5327 = vunpack.c.l.b16 %v5157
        %v5328 = vunpack.c.l.b16 %v5158
        %v5329 = vunpack.c.l.b16 %v5159
        %v5330 = vunpack.c.l.b16 %v5160
        %v5331 = vunpack.c.l.b16 %v5161
        %v5332 = vunpack.c.l.b16 %v5162
        %v5333 = vunpack.c.l.b16 %v5163
        %v5334 = vunpack.c.l.b16 %v5164
        %v5335 = vunpack.c.l.b16 %v5165
        %v5336 = vunpack.c.l.b16 %v5166
        %v5337 = vpack.c.b16 %v5253, %v5252
        %v5338 = vpack.c.b16 %v5255, %v5254
        %v5339 = vpack.c.b16 %v5257, %v5256
        %v5340 = vpack.c.b16 %v5259, %v5258
        %v5341 = vpack.c.b16 %v5261, %v5260
        %v5342 = vpack.c.b16 %v5263, %v5262
        %v5343 = vpack.c.b16 %v5265, %v5264
        %v5344 = vpack.c.b16 %v5267, %v5266
        %v5345 = vpack.c.b16 %v5269, %v5268
        %v5346 = vpack.c.b16 %v5271, %v5270
        %v5347 = vpack.c.b16 %v5273, %v5272
        %v5348 = vpack.c.b16 %v5275, %v5274
        %v5349 = vpack.c.b16 %v5277, %v5276
        %v5350 = vpack.c.b16 %v5279, %v5278
        %v5351 = vpack.c.b16 %v5281, %v5280
        %v5352 = vpack.c.b16 %v5283, %v5282
        %v5353 = vpack.c.b16 %v5285, %v5284
        %v5354 = vpack.c.b16 %v5287, %v5286
        %v5355 = vpack.c.b16 %v5289, %v5288
        %v5356 = vpack.c.b16 %v5291, %v5290
        %v5357 = vpack.c.b16 %v5293, %v5292
        %v5358 = vpack.c.b16 %v5295, %v5294
        %v5359 = vpack.c.b16 %v5297, %v5296
        %v5360 = vpack.c.b16 %v5299, %v5298
        %v5361 = vpack.c.b16 %v5301, %v5300
        %v5362 = vpack.c.b16 %v5303, %v5302
        %v5363 = vpack.c.b16 %v5305, %v5304
        %v5364 = vpack.c.b16 %v5307, %v5306
        %v5365 = vpack.c.b16 %v5309, %v5308
        %v5366 = vpack.c.b16 %v5311, %v5310
        %v5367 = vpack.c.b16 %v5313, %v5312
        %v5368 = vpack.c.b16 %v5315, %v5314
        %v5369 = vpack.c.b16 %v5317, %v5316
        %v5370 = vpack.c.b16 %v5319, %v5318
        %v5371 = vpack.c.b16 %v5321, %v5320
        %v5372 = vpack.c.b16 %v5323, %v5322
        %v5373 = vpack.c.b16 %v5325, %v5324
        %v5374 = vpack.c.b16 %v5327, %v5326
        %v5375 = vpack.c.b16 %v5329, %v5328
        %v5376 = vpack.c.b16 %v5331, %v5330
        %v5377 = vpack.c.b16 %v5333, %v5332
        %v5378 = vpack.c.b16 %v5335, %v5334
        %v5379 = vpack.c.b16 %v5336, %v5336
        %v5423 = vsel %vm946, %v5080, 0
        %v5426 = vsel %vm950, %v5379, 0
        %5428 = vmatpush.bf16.msra.mxu0 %v5344
        %5429 = vmatpush.bf16.msra.mxu0 %v5343
        %5430 = vmatpush.bf16.msra.mxu0 %v5342
        %5431 = vmatpush.bf16.msra.mxu0 %v5341
        %5432 = vmatpush.bf16.msra.mxu0 %v5340
        %5433 = vmatpush.bf16.msra.mxu0 %v5339
        %5434 = vmatpush.bf16.msra.mxu0 %v5338
        %5435 = vmatpush.bf16.msra.mxu0 %v5337
        %5436 = vmatmul.bf16.gmra.mxu0 %v5075
        %v5437 = vpop.f32.mrf.mxu0
        %v5438 = vadd.f32 0.0, %v5437
        %v5439 = vpop.f32.mrf.mxu0
        %5440 = vdwg.mxu0
        %5441 = vmatpush.bf16.msra.mxu0 %v5352
        %5442 = vmatpush.bf16.msra.mxu0 %v5351
        %5443 = vmatpush.bf16.msra.mxu0 %v5350
        %5444 = vmatpush.bf16.msra.mxu0 %v5349
        %5445 = vmatpush.bf16.msra.mxu0 %v5348
        %5446 = vmatpush.bf16.msra.mxu0 %v5347
        %5447 = vmatpush.bf16.msra.mxu0 %v5346
        %5448 = vmatpush.bf16.msra.mxu0 %v5345
        %5449 = vmatmul.bf16.gmra.mxu0 %v5076
        %v5450 = vpop.f32.mrf.mxu0
        %v5451 = vadd.f32 %v5438, %v5450
        %v5452 = vpop.f32.mrf.mxu0
        %5453 = vdwg.mxu0
        %5454 = vmatpush.bf16.msra.mxu0 %v5360
        %5455 = vmatpush.bf16.msra.mxu0 %v5359
        %5456 = vmatpush.bf16.msra.mxu0 %v5358
        %5457 = vmatpush.bf16.msra.mxu0 %v5357
        %5458 = vmatpush.bf16.msra.mxu0 %v5356
        %5459 = vmatpush.bf16.msra.mxu0 %v5355
        %5460 = vmatpush.bf16.msra.mxu0 %v5354
        %5461 = vmatpush.bf16.msra.mxu0 %v5353
        %5462 = vmatmul.bf16.gmra.mxu0 %v5077
        %v5463 = vpop.f32.mrf.mxu0
        %v5464 = vadd.f32 %v5451, %v5463
        %v5465 = vpop.f32.mrf.mxu0
        %5466 = vdwg.mxu0
        %5467 = vmatpush.bf16.msra.mxu0 %v5368
        %5468 = vmatpush.bf16.msra.mxu0 %v5367
        %5469 = vmatpush.bf16.msra.mxu0 %v5366
        %5470 = vmatpush.bf16.msra.mxu0 %v5365
        %5471 = vmatpush.bf16.msra.mxu0 %v5364
        %5472 = vmatpush.bf16.msra.mxu0 %v5363
        %5473 = vmatpush.bf16.msra.mxu0 %v5362
        %5474 = vmatpush.bf16.msra.mxu0 %v5361
        %5475 = vmatmul.bf16.gmra.mxu0 %v5078
        %v5476 = vpop.f32.mrf.mxu0
        %v5477 = vadd.f32 %v5464, %v5476
        %v5478 = vpop.f32.mrf.mxu0
        %5479 = vdwg.mxu0
        %5480 = vmatpush.bf16.msra.mxu0 %v5376
        %5481 = vmatpush.bf16.msra.mxu0 %v5375
        %5482 = vmatpush.bf16.msra.mxu0 %v5374
        %5483 = vmatpush.bf16.msra.mxu0 %v5373
        %5484 = vmatpush.bf16.msra.mxu0 %v5372
        %5485 = vmatpush.bf16.msra.mxu0 %v5371
        %5486 = vmatpush.bf16.msra.mxu0 %v5370
        %5487 = vmatpush.bf16.msra.mxu0 %v5369
        %5488 = vmatmul.bf16.gmra.mxu0 %v5079
        %v5489 = vpop.f32.mrf.mxu0
        %v5490 = vadd.f32 %v5477, %v5489
        %v5491 = vpop.f32.mrf.mxu0
        %5492 = vdwg.mxu0
        %5493 = vmatpush.bf16.msra.mxu0 0
        %5494 = vmatpush.bf16.msra.mxu0 0
        %5495 = vmatpush.bf16.msra.mxu0 0
        %5496 = vmatpush.bf16.msra.mxu0 0
        %5497 = vmatpush.bf16.msra.mxu0 0
        %5498 = vmatpush.bf16.msra.mxu0 %v5426
        %5499 = vmatpush.bf16.msra.mxu0 %v5378
        %5500 = vmatpush.bf16.msra.mxu0 %v5377
        %5501 = vmatmul.bf16.gmra.mxu0 %v5423
        %v5502 = vpop.f32.mrf.mxu0
        %v5503 = vadd.f32 %v5490, %v5502
        %v5504 = vpop.f32.mrf.mxu0
        %5505 = vdwg.mxu0
        %v5506 = vadd.f32 %v4989, %v5503
        %s5507 = sadd.s32 %s312, 10
        %s5508 = smul.u32 %s5507, 128
        %s5509 = sld [smem:[#allocation2 + %s5508]]
        %v5510 = vstv %s5509
        %v5511 = vmul.f32 %v5510, %v315
        %v5512 = vmul.f32 %v5510, %v316
        %s5513 = sadd.s32 %s5508, 1
        %s5514 = sld [smem:[#allocation2 + %s5513]]
        %v5515 = vstv %s5514
        %v5516 = vmul.f32 %v5515, %v323
        %v5517 = vmul.f32 %v5515, %v324
        %v5518 = vadd.f32 %v5511, %v5516
        %v5519 = vadd.f32 %v5512, %v5517
        %s5520 = sadd.s32 %s5508, 2
        %s5521 = sld [smem:[#allocation2 + %s5520]]
        %v5522 = vstv %s5521
        %v5523 = vmul.f32 %v5522, %v333
        %v5524 = vmul.f32 %v5522, %v334
        %v5525 = vadd.f32 %v5518, %v5523
        %v5526 = vadd.f32 %v5519, %v5524
        %s5527 = sadd.s32 %s5508, 3
        %s5528 = sld [smem:[#allocation2 + %s5527]]
        %v5529 = vstv %s5528
        %v5530 = vmul.f32 %v5529, %v343
        %v5531 = vmul.f32 %v5529, %v344
        %v5532 = vadd.f32 %v5525, %v5530
        %v5533 = vadd.f32 %v5526, %v5531
        %s5534 = sadd.s32 %s5508, 4
        %s5535 = sld [smem:[#allocation2 + %s5534]]
        %v5536 = vstv %s5535
        %v5537 = vmul.f32 %v5536, %v353
        %v5538 = vmul.f32 %v5536, %v354
        %v5539 = vadd.f32 %v5532, %v5537
        %v5540 = vadd.f32 %v5533, %v5538
        %s5541 = sadd.s32 %s5508, 5
        %s5542 = sld [smem:[#allocation2 + %s5541]]
        %v5543 = vstv %s5542
        %v5544 = vmul.f32 %v5543, %v363
        %v5545 = vmul.f32 %v5543, %v364
        %v5546 = vadd.f32 %v5539, %v5544
        %v5547 = vadd.f32 %v5540, %v5545
        %s5548 = sadd.s32 %s5508, 6
        %s5549 = sld [smem:[#allocation2 + %s5548]]
        %v5550 = vstv %s5549
        %v5551 = vmul.f32 %v5550, %v373
        %v5552 = vmul.f32 %v5550, %v374
        %v5553 = vadd.f32 %v5546, %v5551
        %v5554 = vadd.f32 %v5547, %v5552
        %s5555 = sadd.s32 %s5508, 7
        %s5556 = sld [smem:[#allocation2 + %s5555]]
        %v5557 = vstv %s5556
        %v5558 = vmul.f32 %v5557, %v383
        %v5559 = vmul.f32 %v5557, %v384
        %v5560 = vadd.f32 %v5553, %v5558
        %v5561 = vadd.f32 %v5554, %v5559
        %s5562 = sadd.s32 %s5508, 8
        %s5563 = sld [smem:[#allocation2 + %s5562]]
        %v5564 = vstv %s5563
        %v5565 = vmul.f32 %v5564, %v393
        %v5566 = vmul.f32 %v5564, %v394
        %v5567 = vadd.f32 %v5560, %v5565
        %v5568 = vadd.f32 %v5561, %v5566
        %s5569 = sld [smem:[#allocation4 + %s5507]]
        %v5570 = vstv %s5569
        %v5571 = vadd.f32 %v5567, %v5570
        %v5572 = vadd.f32 %v5568, %v5570
        %v5573 = vmax.f32 %v5571, 0.0
        %v5574 = vmax.f32 %v5572, 0.0
        %5577 = vst [vmem:[#allocation1] ss:$4 sm:$0xff] %v5573
        %s5578 = scalar_lea.vmem [#allocation1], 32
        %5579 = vst [vmem:[%s5578] ss:$4 sm:$0xff] %v5574
        %v5580 = vld.sshfl [vmem:[#allocation1] sm:$0xff pattern:$0x73625140]
        %v5581 = vld.sshfl [vmem:[#allocation1 + $0x8] sm:$0xff pattern:$0x73625140]
        %v5582 = vld.sshfl [vmem:[#allocation1 + $0x10] sm:$0xff pattern:$0x73625140]
        %v5583 = vld.sshfl [vmem:[#allocation1 + $0x18] sm:$0xff pattern:$0x73625140]
        %v5584 = vld.sshfl [vmem:[#allocation1 + $0x20] sm:$0xff pattern:$0x73625140]
        %v5585 = vld.sshfl [vmem:[#allocation1 + $0x28] sm:$0xff pattern:$0x73625140]
        %v5592 = vpack.c.bf16 %v5580, %v5580
        %v5593 = vpack.c.bf16 %v5581, %v5581
        %v5594 = vpack.c.bf16 %v5582, %v5582
        %v5595 = vpack.c.bf16 %v5583, %v5583
        %v5596 = vpack.c.bf16 %v5584, %v5584
        %v5597 = vpack.c.bf16 %v5585, %v5585
        %s5598 = scalar_lea.vmem %s305, 3400
        %v5599 = vld [vmem:[%s5598] sm:$0xf]
        %v5600 = vld [vmem:[%s5598 + $0x4] sm:$0xf]
        %v5601 = vld [vmem:[%s5598 + $0x8] sm:$0xf]
        %v5602 = vld [vmem:[%s5598 + $0xc] sm:$0xf]
        %v5603 = vld [vmem:[%s5598 + $0x10] sm:$0xf]
        %v5604 = vld [vmem:[%s5598 + $0x14] sm:$0xf]
        %v5605 = vld [vmem:[%s5598 + $0x18] sm:$0xf]
        %v5606 = vld [vmem:[%s5598 + $0x1c] sm:$0xf]
        %v5607 = vld [vmem:[%s5598 + $0x20] sm:$0xf]
        %v5608 = vld [vmem:[%s5598 + $0x24] sm:$0xf]
        %v5609 = vld [vmem:[%s5598 + $0x28] sm:$0xf]
        %v5610 = vld [vmem:[%s5598 + $0x2c] sm:$0xf]
        %v5611 = vld [vmem:[%s5598 + $0x30] sm:$0xf]
        %v5612 = vld [vmem:[%s5598 + $0x34] sm:$0xf]
        %v5613 = vld [vmem:[%s5598 + $0x38] sm:$0xf]
        %v5614 = vld [vmem:[%s5598 + $0x3c] sm:$0xf]
        %v5615 = vld [vmem:[%s5598 + $0x40] sm:$0xf]
        %v5616 = vld [vmem:[%s5598 + $0x44] sm:$0xf]
        %v5617 = vld [vmem:[%s5598 + $0x48] sm:$0xf]
        %v5618 = vld [vmem:[%s5598 + $0x4c] sm:$0xf]
        %v5619 = vld [vmem:[%s5598 + $0x50] sm:$0xf]
        %v5620 = vld [vmem:[%s5598 + $0x54] sm:$0xf]
        %v5621 = vld [vmem:[%s5598 + $0x58] sm:$0xf]
        %v5622 = vld [vmem:[%s5598 + $0x5c] sm:$0xf]
        %v5623 = vld [vmem:[%s5598 + $0x60] sm:$0xf]
        %v5624 = vld [vmem:[%s5598 + $0x64] sm:$0xf]
        %v5625 = vld [vmem:[%s5598 + $0x68] sm:$0xf]
        %v5626 = vld [vmem:[%s5598 + $0x6c] sm:$0xf]
        %v5627 = vld [vmem:[%s5598 + $0x70] sm:$0xf]
        %v5628 = vld [vmem:[%s5598 + $0x74] sm:$0xf]
        %v5629 = vld [vmem:[%s5598 + $0x78] sm:$0xf]
        %v5630 = vld [vmem:[%s5598 + $0x7c] sm:$0xf]
        %v5631 = vld [vmem:[%s5598 + $0x80] sm:$0xf]
        %v5632 = vld [vmem:[%s5598 + $0x84] sm:$0xf]
        %v5633 = vld [vmem:[%s5598 + $0x88] sm:$0xf]
        %v5634 = vld [vmem:[%s5598 + $0x8c] sm:$0xf]
        %v5635 = vld [vmem:[%s5598 + $0x90] sm:$0xf]
        %v5636 = vld [vmem:[%s5598 + $0x94] sm:$0xf]
        %v5637 = vld [vmem:[%s5598 + $0x98] sm:$0xf]
        %v5638 = vld [vmem:[%s5598 + $0x9c] sm:$0xf]
        %v5639 = vld [vmem:[%s5598 + $0xa0] sm:$0xf]
        %v5640 = vld [vmem:[%s5598 + $0xa4] sm:$0xf]
        %v5641 = vld [vmem:[%s5598 + $0xa8] sm:$0xf]
        %v5642 = vld [vmem:[%s5598 + $0xac] sm:$0xf]
        %v5643 = vld [vmem:[%s5598 + $0xb0] sm:$0xf]
        %v5644 = vld [vmem:[%s5598 + $0xb4] sm:$0xf]
        %v5645 = vld [vmem:[%s5598 + $0xb8] sm:$0xf]
        %v5646 = vld [vmem:[%s5598 + $0xbc] sm:$0xf]
        %v5647 = vld [vmem:[%s5598 + $0xc0] sm:$0xf]
        %v5648 = vld [vmem:[%s5598 + $0xc4] sm:$0xf]
        %v5649 = vld [vmem:[%s5598 + $0xc8] sm:$0xf]
        %v5650 = vld [vmem:[%s5598 + $0xcc] sm:$0xf]
        %v5651 = vld [vmem:[%s5598 + $0xd0] sm:$0xf]
        %v5652 = vld [vmem:[%s5598 + $0xd4] sm:$0xf]
        %v5653 = vld [vmem:[%s5598 + $0xd8] sm:$0xf]
        %v5654 = vld [vmem:[%s5598 + $0xdc] sm:$0xf]
        %v5655 = vld [vmem:[%s5598 + $0xe0] sm:$0xf]
        %v5656 = vld [vmem:[%s5598 + $0xe4] sm:$0xf]
        %v5657 = vld [vmem:[%s5598 + $0xe8] sm:$0xf]
        %v5658 = vld [vmem:[%s5598 + $0xec] sm:$0xf]
        %v5659 = vld [vmem:[%s5598 + $0xf0] sm:$0xf]
        %v5660 = vld [vmem:[%s5598 + $0xf4] sm:$0xf]
        %v5661 = vld [vmem:[%s5598 + $0xf8] sm:$0xf]
        %v5662 = vld [vmem:[%s5598 + $0xfc] sm:$0xf]
        %v5663 = vld [vmem:[%s5598 + $0x100] sm:$0xf]
        %v5664 = vld [vmem:[%s5598 + $0x104] sm:$0xf]
        %v5665 = vld [vmem:[%s5598 + $0x108] sm:$0xf]
        %v5666 = vld [vmem:[%s5598 + $0x10c] sm:$0xf]
        %v5667 = vld [vmem:[%s5598 + $0x110] sm:$0xf]
        %v5668 = vld [vmem:[%s5598 + $0x114] sm:$0xf]
        %v5669 = vld [vmem:[%s5598 + $0x118] sm:$0xf]
        %v5670 = vld [vmem:[%s5598 + $0x11c] sm:$0xf]
        %v5671 = vld [vmem:[%s5598 + $0x120] sm:$0xf]
        %v5672 = vld [vmem:[%s5598 + $0x124] sm:$0xf]
        %v5673 = vld [vmem:[%s5598 + $0x128] sm:$0xf]
        %v5674 = vld [vmem:[%s5598 + $0x12c] sm:$0xf]
        %v5675 = vld [vmem:[%s5598 + $0x130] sm:$0xf]
        %v5676 = vld [vmem:[%s5598 + $0x134] sm:$0xf]
        %v5677 = vld [vmem:[%s5598 + $0x138] sm:$0xf]
        %v5678 = vld [vmem:[%s5598 + $0x13c] sm:$0xf]
        %v5679 = vld [vmem:[%s5598 + $0x140] sm:$0xf]
        %v5680 = vld [vmem:[%s5598 + $0x144] sm:$0xf]
        %v5681 = vld [vmem:[%s5598 + $0x148] sm:$0xf]
        %v5682 = vld [vmem:[%s5598 + $0x14c] sm:$0xf]
        %v5683 = vld [vmem:[%s5598 + $0x150] sm:$0x3]
        %v5769 = vunpack.c.l.b16 %v5599
        %v5770 = vunpack.c.l.b16 %v5600
        %v5771 = vunpack.c.l.b16 %v5601
        %v5772 = vunpack.c.l.b16 %v5602
        %v5773 = vunpack.c.l.b16 %v5603
        %v5774 = vunpack.c.l.b16 %v5604
        %v5775 = vunpack.c.l.b16 %v5605
        %v5776 = vunpack.c.l.b16 %v5606
        %v5777 = vunpack.c.l.b16 %v5607
        %v5778 = vunpack.c.l.b16 %v5608
        %v5779 = vunpack.c.l.b16 %v5609
        %v5780 = vunpack.c.l.b16 %v5610
        %v5781 = vunpack.c.l.b16 %v5611
        %v5782 = vunpack.c.l.b16 %v5612
        %v5783 = vunpack.c.l.b16 %v5613
        %v5784 = vunpack.c.l.b16 %v5614
        %v5785 = vunpack.c.l.b16 %v5615
        %v5786 = vunpack.c.l.b16 %v5616
        %v5787 = vunpack.c.l.b16 %v5617
        %v5788 = vunpack.c.l.b16 %v5618
        %v5789 = vunpack.c.l.b16 %v5619
        %v5790 = vunpack.c.l.b16 %v5620
        %v5791 = vunpack.c.l.b16 %v5621
        %v5792 = vunpack.c.l.b16 %v5622
        %v5793 = vunpack.c.l.b16 %v5623
        %v5794 = vunpack.c.l.b16 %v5624
        %v5795 = vunpack.c.l.b16 %v5625
        %v5796 = vunpack.c.l.b16 %v5626
        %v5797 = vunpack.c.l.b16 %v5627
        %v5798 = vunpack.c.l.b16 %v5628
        %v5799 = vunpack.c.l.b16 %v5629
        %v5800 = vunpack.c.l.b16 %v5630
        %v5801 = vunpack.c.l.b16 %v5631
        %v5802 = vunpack.c.l.b16 %v5632
        %v5803 = vunpack.c.l.b16 %v5633
        %v5804 = vunpack.c.l.b16 %v5634
        %v5805 = vunpack.c.l.b16 %v5635
        %v5806 = vunpack.c.l.b16 %v5636
        %v5807 = vunpack.c.l.b16 %v5637
        %v5808 = vunpack.c.l.b16 %v5638
        %v5809 = vunpack.c.l.b16 %v5639
        %v5810 = vunpack.c.l.b16 %v5640
        %v5811 = vunpack.c.l.b16 %v5641
        %v5812 = vunpack.c.l.b16 %v5642
        %v5813 = vunpack.c.l.b16 %v5643
        %v5814 = vunpack.c.l.b16 %v5644
        %v5815 = vunpack.c.l.b16 %v5645
        %v5816 = vunpack.c.l.b16 %v5646
        %v5817 = vunpack.c.l.b16 %v5647
        %v5818 = vunpack.c.l.b16 %v5648
        %v5819 = vunpack.c.l.b16 %v5649
        %v5820 = vunpack.c.l.b16 %v5650
        %v5821 = vunpack.c.l.b16 %v5651
        %v5822 = vunpack.c.l.b16 %v5652
        %v5823 = vunpack.c.l.b16 %v5653
        %v5824 = vunpack.c.l.b16 %v5654
        %v5825 = vunpack.c.l.b16 %v5655
        %v5826 = vunpack.c.l.b16 %v5656
        %v5827 = vunpack.c.l.b16 %v5657
        %v5828 = vunpack.c.l.b16 %v5658
        %v5829 = vunpack.c.l.b16 %v5659
        %v5830 = vunpack.c.l.b16 %v5660
        %v5831 = vunpack.c.l.b16 %v5661
        %v5832 = vunpack.c.l.b16 %v5662
        %v5833 = vunpack.c.l.b16 %v5663
        %v5834 = vunpack.c.l.b16 %v5664
        %v5835 = vunpack.c.l.b16 %v5665
        %v5836 = vunpack.c.l.b16 %v5666
        %v5837 = vunpack.c.l.b16 %v5667
        %v5838 = vunpack.c.l.b16 %v5668
        %v5839 = vunpack.c.l.b16 %v5669
        %v5840 = vunpack.c.l.b16 %v5670
        %v5841 = vunpack.c.l.b16 %v5671
        %v5842 = vunpack.c.l.b16 %v5672
        %v5843 = vunpack.c.l.b16 %v5673
        %v5844 = vunpack.c.l.b16 %v5674
        %v5845 = vunpack.c.l.b16 %v5675
        %v5846 = vunpack.c.l.b16 %v5676
        %v5847 = vunpack.c.l.b16 %v5677
        %v5848 = vunpack.c.l.b16 %v5678
        %v5849 = vunpack.c.l.b16 %v5679
        %v5850 = vunpack.c.l.b16 %v5680
        %v5851 = vunpack.c.l.b16 %v5681
        %v5852 = vunpack.c.l.b16 %v5682
        %v5853 = vunpack.c.l.b16 %v5683
        %v5854 = vpack.c.b16 %v5770, %v5769
        %v5855 = vpack.c.b16 %v5772, %v5771
        %v5856 = vpack.c.b16 %v5774, %v5773
        %v5857 = vpack.c.b16 %v5776, %v5775
        %v5858 = vpack.c.b16 %v5778, %v5777
        %v5859 = vpack.c.b16 %v5780, %v5779
        %v5860 = vpack.c.b16 %v5782, %v5781
        %v5861 = vpack.c.b16 %v5784, %v5783
        %v5862 = vpack.c.b16 %v5786, %v5785
        %v5863 = vpack.c.b16 %v5788, %v5787
        %v5864 = vpack.c.b16 %v5790, %v5789
        %v5865 = vpack.c.b16 %v5792, %v5791
        %v5866 = vpack.c.b16 %v5794, %v5793
        %v5867 = vpack.c.b16 %v5796, %v5795
        %v5868 = vpack.c.b16 %v5798, %v5797
        %v5869 = vpack.c.b16 %v5800, %v5799
        %v5870 = vpack.c.b16 %v5802, %v5801
        %v5871 = vpack.c.b16 %v5804, %v5803
        %v5872 = vpack.c.b16 %v5806, %v5805
        %v5873 = vpack.c.b16 %v5808, %v5807
        %v5874 = vpack.c.b16 %v5810, %v5809
        %v5875 = vpack.c.b16 %v5812, %v5811
        %v5876 = vpack.c.b16 %v5814, %v5813
        %v5877 = vpack.c.b16 %v5816, %v5815
        %v5878 = vpack.c.b16 %v5818, %v5817
        %v5879 = vpack.c.b16 %v5820, %v5819
        %v5880 = vpack.c.b16 %v5822, %v5821
        %v5881 = vpack.c.b16 %v5824, %v5823
        %v5882 = vpack.c.b16 %v5826, %v5825
        %v5883 = vpack.c.b16 %v5828, %v5827
        %v5884 = vpack.c.b16 %v5830, %v5829
        %v5885 = vpack.c.b16 %v5832, %v5831
        %v5886 = vpack.c.b16 %v5834, %v5833
        %v5887 = vpack.c.b16 %v5836, %v5835
        %v5888 = vpack.c.b16 %v5838, %v5837
        %v5889 = vpack.c.b16 %v5840, %v5839
        %v5890 = vpack.c.b16 %v5842, %v5841
        %v5891 = vpack.c.b16 %v5844, %v5843
        %v5892 = vpack.c.b16 %v5846, %v5845
        %v5893 = vpack.c.b16 %v5848, %v5847
        %v5894 = vpack.c.b16 %v5850, %v5849
        %v5895 = vpack.c.b16 %v5852, %v5851
        %v5896 = vpack.c.b16 %v5853, %v5853
        %v5940 = vsel %vm946, %v5597, 0
        %v5943 = vsel %vm950, %v5896, 0
        %5945 = vmatpush.bf16.msra.mxu0 %v5861
        %5946 = vmatpush.bf16.msra.mxu0 %v5860
        %5947 = vmatpush.bf16.msra.mxu0 %v5859
        %5948 = vmatpush.bf16.msra.mxu0 %v5858
        %5949 = vmatpush.bf16.msra.mxu0 %v5857
        %5950 = vmatpush.bf16.msra.mxu0 %v5856
        %5951 = vmatpush.bf16.msra.mxu0 %v5855
        %5952 = vmatpush.bf16.msra.mxu0 %v5854
        %5953 = vmatmul.bf16.gmra.mxu0 %v5592
        %v5954 = vpop.f32.mrf.mxu0
        %v5955 = vadd.f32 0.0, %v5954
        %v5956 = vpop.f32.mrf.mxu0
        %5957 = vdwg.mxu0
        %5958 = vmatpush.bf16.msra.mxu0 %v5869
        %5959 = vmatpush.bf16.msra.mxu0 %v5868
        %5960 = vmatpush.bf16.msra.mxu0 %v5867
        %5961 = vmatpush.bf16.msra.mxu0 %v5866
        %5962 = vmatpush.bf16.msra.mxu0 %v5865
        %5963 = vmatpush.bf16.msra.mxu0 %v5864
        %5964 = vmatpush.bf16.msra.mxu0 %v5863
        %5965 = vmatpush.bf16.msra.mxu0 %v5862
        %5966 = vmatmul.bf16.gmra.mxu0 %v5593
        %v5967 = vpop.f32.mrf.mxu0
        %v5968 = vadd.f32 %v5955, %v5967
        %v5969 = vpop.f32.mrf.mxu0
        %5970 = vdwg.mxu0
        %5971 = vmatpush.bf16.msra.mxu0 %v5877
        %5972 = vmatpush.bf16.msra.mxu0 %v5876
        %5973 = vmatpush.bf16.msra.mxu0 %v5875
        %5974 = vmatpush.bf16.msra.mxu0 %v5874
        %5975 = vmatpush.bf16.msra.mxu0 %v5873
        %5976 = vmatpush.bf16.msra.mxu0 %v5872
        %5977 = vmatpush.bf16.msra.mxu0 %v5871
        %5978 = vmatpush.bf16.msra.mxu0 %v5870
        %5979 = vmatmul.bf16.gmra.mxu0 %v5594
        %v5980 = vpop.f32.mrf.mxu0
        %v5981 = vadd.f32 %v5968, %v5980
        %v5982 = vpop.f32.mrf.mxu0
        %5983 = vdwg.mxu0
        %5984 = vmatpush.bf16.msra.mxu0 %v5885
        %5985 = vmatpush.bf16.msra.mxu0 %v5884
        %5986 = vmatpush.bf16.msra.mxu0 %v5883
        %5987 = vmatpush.bf16.msra.mxu0 %v5882
        %5988 = vmatpush.bf16.msra.mxu0 %v5881
        %5989 = vmatpush.bf16.msra.mxu0 %v5880
        %5990 = vmatpush.bf16.msra.mxu0 %v5879
        %5991 = vmatpush.bf16.msra.mxu0 %v5878
        %5992 = vmatmul.bf16.gmra.mxu0 %v5595
        %v5993 = vpop.f32.mrf.mxu0
        %v5994 = vadd.f32 %v5981, %v5993
        %v5995 = vpop.f32.mrf.mxu0
        %5996 = vdwg.mxu0
        %5997 = vmatpush.bf16.msra.mxu0 %v5893
        %5998 = vmatpush.bf16.msra.mxu0 %v5892
        %5999 = vmatpush.bf16.msra.mxu0 %v5891
        %6000 = vmatpush.bf16.msra.mxu0 %v5890
        %6001 = vmatpush.bf16.msra.mxu0 %v5889
        %6002 = vmatpush.bf16.msra.mxu0 %v5888
        %6003 = vmatpush.bf16.msra.mxu0 %v5887
        %6004 = vmatpush.bf16.msra.mxu0 %v5886
        %6005 = vmatmul.bf16.gmra.mxu0 %v5596
        %v6006 = vpop.f32.mrf.mxu0
        %v6007 = vadd.f32 %v5994, %v6006
        %v6008 = vpop.f32.mrf.mxu0
        %6009 = vdwg.mxu0
        %6010 = vmatpush.bf16.msra.mxu0 0
        %6011 = vmatpush.bf16.msra.mxu0 0
        %6012 = vmatpush.bf16.msra.mxu0 0
        %6013 = vmatpush.bf16.msra.mxu0 0
        %6014 = vmatpush.bf16.msra.mxu0 0
        %6015 = vmatpush.bf16.msra.mxu0 %v5943
        %6016 = vmatpush.bf16.msra.mxu0 %v5895
        %6017 = vmatpush.bf16.msra.mxu0 %v5894
        %6018 = vmatmul.bf16.gmra.mxu0 %v5940
        %v6019 = vpop.f32.mrf.mxu0
        %v6020 = vadd.f32 %v6007, %v6019
        %v6021 = vpop.f32.mrf.mxu0
        %6022 = vdwg.mxu0
        %v6023 = vadd.f32 %v5506, %v6020
        %s6024 = sadd.s32 %s312, 11
        %s6025 = smul.u32 %s6024, 128
        %s6026 = sld [smem:[#allocation2 + %s6025]]
        %v6027 = vstv %s6026
        %v6028 = vmul.f32 %v6027, %v315
        %v6029 = vmul.f32 %v6027, %v316
        %s6030 = sadd.s32 %s6025, 1
        %s6031 = sld [smem:[#allocation2 + %s6030]]
        %v6032 = vstv %s6031
        %v6033 = vmul.f32 %v6032, %v323
        %v6034 = vmul.f32 %v6032, %v324
        %v6035 = vadd.f32 %v6028, %v6033
        %v6036 = vadd.f32 %v6029, %v6034
        %s6037 = sadd.s32 %s6025, 2
        %s6038 = sld [smem:[#allocation2 + %s6037]]
        %v6039 = vstv %s6038
        %v6040 = vmul.f32 %v6039, %v333
        %v6041 = vmul.f32 %v6039, %v334
        %v6042 = vadd.f32 %v6035, %v6040
        %v6043 = vadd.f32 %v6036, %v6041
        %s6044 = sadd.s32 %s6025, 3
        %s6045 = sld [smem:[#allocation2 + %s6044]]
        %v6046 = vstv %s6045
        %v6047 = vmul.f32 %v6046, %v343
        %v6048 = vmul.f32 %v6046, %v344
        %v6049 = vadd.f32 %v6042, %v6047
        %v6050 = vadd.f32 %v6043, %v6048
        %s6051 = sadd.s32 %s6025, 4
        %s6052 = sld [smem:[#allocation2 + %s6051]]
        %v6053 = vstv %s6052
        %v6054 = vmul.f32 %v6053, %v353
        %v6055 = vmul.f32 %v6053, %v354
        %v6056 = vadd.f32 %v6049, %v6054
        %v6057 = vadd.f32 %v6050, %v6055
        %s6058 = sadd.s32 %s6025, 5
        %s6059 = sld [smem:[#allocation2 + %s6058]]
        %v6060 = vstv %s6059
        %v6061 = vmul.f32 %v6060, %v363
        %v6062 = vmul.f32 %v6060, %v364
        %v6063 = vadd.f32 %v6056, %v6061
        %v6064 = vadd.f32 %v6057, %v6062
        %s6065 = sadd.s32 %s6025, 6
        %s6066 = sld [smem:[#allocation2 + %s6065]]
        %v6067 = vstv %s6066
        %v6068 = vmul.f32 %v6067, %v373
        %v6069 = vmul.f32 %v6067, %v374
        %v6070 = vadd.f32 %v6063, %v6068
        %v6071 = vadd.f32 %v6064, %v6069
        %s6072 = sadd.s32 %s6025, 7
        %s6073 = sld [smem:[#allocation2 + %s6072]]
        %v6074 = vstv %s6073
        %v6075 = vmul.f32 %v6074, %v383
        %v6076 = vmul.f32 %v6074, %v384
        %v6077 = vadd.f32 %v6070, %v6075
        %v6078 = vadd.f32 %v6071, %v6076
        %s6079 = sadd.s32 %s6025, 8
        %s6080 = sld [smem:[#allocation2 + %s6079]]
        %v6081 = vstv %s6080
        %v6082 = vmul.f32 %v6081, %v393
        %v6083 = vmul.f32 %v6081, %v394
        %v6084 = vadd.f32 %v6077, %v6082
        %v6085 = vadd.f32 %v6078, %v6083
        %s6086 = sld [smem:[#allocation4 + %s6024]]
        %v6087 = vstv %s6086
        %v6088 = vadd.f32 %v6084, %v6087
        %v6089 = vadd.f32 %v6085, %v6087
        %v6090 = vmax.f32 %v6088, 0.0
        %v6091 = vmax.f32 %v6089, 0.0
        %6094 = vst [vmem:[#allocation1] ss:$4 sm:$0xff] %v6090
        %s6095 = scalar_lea.vmem [#allocation1], 32
        %6096 = vst [vmem:[%s6095] ss:$4 sm:$0xff] %v6091
        %v6097 = vld.sshfl [vmem:[#allocation1] sm:$0xff pattern:$0x73625140]
        %v6098 = vld.sshfl [vmem:[#allocation1 + $0x8] sm:$0xff pattern:$0x73625140]
        %v6099 = vld.sshfl [vmem:[#allocation1 + $0x10] sm:$0xff pattern:$0x73625140]
        %v6100 = vld.sshfl [vmem:[#allocation1 + $0x18] sm:$0xff pattern:$0x73625140]
        %v6101 = vld.sshfl [vmem:[#allocation1 + $0x20] sm:$0xff pattern:$0x73625140]
        %v6102 = vld.sshfl [vmem:[#allocation1 + $0x28] sm:$0xff pattern:$0x73625140]
        %v6109 = vpack.c.bf16 %v6097, %v6097
        %v6110 = vpack.c.bf16 %v6098, %v6098
        %v6111 = vpack.c.bf16 %v6099, %v6099
        %v6112 = vpack.c.bf16 %v6100, %v6100
        %v6113 = vpack.c.bf16 %v6101, %v6101
        %v6114 = vpack.c.bf16 %v6102, %v6102
        %s6115 = scalar_lea.vmem %s305, 3740
        %v6116 = vld [vmem:[%s6115] sm:$0xf]
        %v6117 = vld [vmem:[%s6115 + $0x4] sm:$0xf]
        %v6118 = vld [vmem:[%s6115 + $0x8] sm:$0xf]
        %v6119 = vld [vmem:[%s6115 + $0xc] sm:$0xf]
        %v6120 = vld [vmem:[%s6115 + $0x10] sm:$0xf]
        %v6121 = vld [vmem:[%s6115 + $0x14] sm:$0xf]
        %v6122 = vld [vmem:[%s6115 + $0x18] sm:$0xf]
        %v6123 = vld [vmem:[%s6115 + $0x1c] sm:$0xf]
        %v6124 = vld [vmem:[%s6115 + $0x20] sm:$0xf]
        %v6125 = vld [vmem:[%s6115 + $0x24] sm:$0xf]
        %v6126 = vld [vmem:[%s6115 + $0x28] sm:$0xf]
        %v6127 = vld [vmem:[%s6115 + $0x2c] sm:$0xf]
        %v6128 = vld [vmem:[%s6115 + $0x30] sm:$0xf]
        %v6129 = vld [vmem:[%s6115 + $0x34] sm:$0xf]
        %v6130 = vld [vmem:[%s6115 + $0x38] sm:$0xf]
        %v6131 = vld [vmem:[%s6115 + $0x3c] sm:$0xf]
        %v6132 = vld [vmem:[%s6115 + $0x40] sm:$0xf]
        %v6133 = vld [vmem:[%s6115 + $0x44] sm:$0xf]
        %v6134 = vld [vmem:[%s6115 + $0x48] sm:$0xf]
        %v6135 = vld [vmem:[%s6115 + $0x4c] sm:$0xf]
        %v6136 = vld [vmem:[%s6115 + $0x50] sm:$0xf]
        %v6137 = vld [vmem:[%s6115 + $0x54] sm:$0xf]
        %v6138 = vld [vmem:[%s6115 + $0x58] sm:$0xf]
        %v6139 = vld [vmem:[%s6115 + $0x5c] sm:$0xf]
        %v6140 = vld [vmem:[%s6115 + $0x60] sm:$0xf]
        %v6141 = vld [vmem:[%s6115 + $0x64] sm:$0xf]
        %v6142 = vld [vmem:[%s6115 + $0x68] sm:$0xf]
        %v6143 = vld [vmem:[%s6115 + $0x6c] sm:$0xf]
        %v6144 = vld [vmem:[%s6115 + $0x70] sm:$0xf]
        %v6145 = vld [vmem:[%s6115 + $0x74] sm:$0xf]
        %v6146 = vld [vmem:[%s6115 + $0x78] sm:$0xf]
        %v6147 = vld [vmem:[%s6115 + $0x7c] sm:$0xf]
        %v6148 = vld [vmem:[%s6115 + $0x80] sm:$0xf]
        %v6149 = vld [vmem:[%s6115 + $0x84] sm:$0xf]
        %v6150 = vld [vmem:[%s6115 + $0x88] sm:$0xf]
        %v6151 = vld [vmem:[%s6115 + $0x8c] sm:$0xf]
        %v6152 = vld [vmem:[%s6115 + $0x90] sm:$0xf]
        %v6153 = vld [vmem:[%s6115 + $0x94] sm:$0xf]
        %v6154 = vld [vmem:[%s6115 + $0x98] sm:$0xf]
        %v6155 = vld [vmem:[%s6115 + $0x9c] sm:$0xf]
        %v6156 = vld [vmem:[%s6115 + $0xa0] sm:$0xf]
        %v6157 = vld [vmem:[%s6115 + $0xa4] sm:$0xf]
        %v6158 = vld [vmem:[%s6115 + $0xa8] sm:$0xf]
        %v6159 = vld [vmem:[%s6115 + $0xac] sm:$0xf]
        %v6160 = vld [vmem:[%s6115 + $0xb0] sm:$0xf]
        %v6161 = vld [vmem:[%s6115 + $0xb4] sm:$0xf]
        %v6162 = vld [vmem:[%s6115 + $0xb8] sm:$0xf]
        %v6163 = vld [vmem:[%s6115 + $0xbc] sm:$0xf]
        %v6164 = vld [vmem:[%s6115 + $0xc0] sm:$0xf]
        %v6165 = vld [vmem:[%s6115 + $0xc4] sm:$0xf]
        %v6166 = vld [vmem:[%s6115 + $0xc8] sm:$0xf]
        %v6167 = vld [vmem:[%s6115 + $0xcc] sm:$0xf]
        %v6168 = vld [vmem:[%s6115 + $0xd0] sm:$0xf]
        %v6169 = vld [vmem:[%s6115 + $0xd4] sm:$0xf]
        %v6170 = vld [vmem:[%s6115 + $0xd8] sm:$0xf]
        %v6171 = vld [vmem:[%s6115 + $0xdc] sm:$0xf]
        %v6172 = vld [vmem:[%s6115 + $0xe0] sm:$0xf]
        %v6173 = vld [vmem:[%s6115 + $0xe4] sm:$0xf]
        %v6174 = vld [vmem:[%s6115 + $0xe8] sm:$0xf]
        %v6175 = vld [vmem:[%s6115 + $0xec] sm:$0xf]
        %v6176 = vld [vmem:[%s6115 + $0xf0] sm:$0xf]
        %v6177 = vld [vmem:[%s6115 + $0xf4] sm:$0xf]
        %v6178 = vld [vmem:[%s6115 + $0xf8] sm:$0xf]
        %v6179 = vld [vmem:[%s6115 + $0xfc] sm:$0xf]
        %v6180 = vld [vmem:[%s6115 + $0x100] sm:$0xf]
        %v6181 = vld [vmem:[%s6115 + $0x104] sm:$0xf]
        %v6182 = vld [vmem:[%s6115 + $0x108] sm:$0xf]
        %v6183 = vld [vmem:[%s6115 + $0x10c] sm:$0xf]
        %v6184 = vld [vmem:[%s6115 + $0x110] sm:$0xf]
        %v6185 = vld [vmem:[%s6115 + $0x114] sm:$0xf]
        %v6186 = vld [vmem:[%s6115 + $0x118] sm:$0xf]
        %v6187 = vld [vmem:[%s6115 + $0x11c] sm:$0xf]
        %v6188 = vld [vmem:[%s6115 + $0x120] sm:$0xf]
        %v6189 = vld [vmem:[%s6115 + $0x124] sm:$0xf]
        %v6190 = vld [vmem:[%s6115 + $0x128] sm:$0xf]
        %v6191 = vld [vmem:[%s6115 + $0x12c] sm:$0xf]
        %v6192 = vld [vmem:[%s6115 + $0x130] sm:$0xf]
        %v6193 = vld [vmem:[%s6115 + $0x134] sm:$0xf]
        %v6194 = vld [vmem:[%s6115 + $0x138] sm:$0xf]
        %v6195 = vld [vmem:[%s6115 + $0x13c] sm:$0xf]
        %v6196 = vld [vmem:[%s6115 + $0x140] sm:$0xf]
        %v6197 = vld [vmem:[%s6115 + $0x144] sm:$0xf]
        %v6198 = vld [vmem:[%s6115 + $0x148] sm:$0xf]
        %v6199 = vld [vmem:[%s6115 + $0x14c] sm:$0xf]
        %v6200 = vld [vmem:[%s6115 + $0x150] sm:$0x3]
        %v6286 = vunpack.c.l.b16 %v6116
        %v6287 = vunpack.c.l.b16 %v6117
        %v6288 = vunpack.c.l.b16 %v6118
        %v6289 = vunpack.c.l.b16 %v6119
        %v6290 = vunpack.c.l.b16 %v6120
        %v6291 = vunpack.c.l.b16 %v6121
        %v6292 = vunpack.c.l.b16 %v6122
        %v6293 = vunpack.c.l.b16 %v6123
        %v6294 = vunpack.c.l.b16 %v6124
        %v6295 = vunpack.c.l.b16 %v6125
        %v6296 = vunpack.c.l.b16 %v6126
        %v6297 = vunpack.c.l.b16 %v6127
        %v6298 = vunpack.c.l.b16 %v6128
        %v6299 = vunpack.c.l.b16 %v6129
        %v6300 = vunpack.c.l.b16 %v6130
        %v6301 = vunpack.c.l.b16 %v6131
        %v6302 = vunpack.c.l.b16 %v6132
        %v6303 = vunpack.c.l.b16 %v6133
        %v6304 = vunpack.c.l.b16 %v6134
        %v6305 = vunpack.c.l.b16 %v6135
        %v6306 = vunpack.c.l.b16 %v6136
        %v6307 = vunpack.c.l.b16 %v6137
        %v6308 = vunpack.c.l.b16 %v6138
        %v6309 = vunpack.c.l.b16 %v6139
        %v6310 = vunpack.c.l.b16 %v6140
        %v6311 = vunpack.c.l.b16 %v6141
        %v6312 = vunpack.c.l.b16 %v6142
        %v6313 = vunpack.c.l.b16 %v6143
        %v6314 = vunpack.c.l.b16 %v6144
        %v6315 = vunpack.c.l.b16 %v6145
        %v6316 = vunpack.c.l.b16 %v6146
        %v6317 = vunpack.c.l.b16 %v6147
        %v6318 = vunpack.c.l.b16 %v6148
        %v6319 = vunpack.c.l.b16 %v6149
        %v6320 = vunpack.c.l.b16 %v6150
        %v6321 = vunpack.c.l.b16 %v6151
        %v6322 = vunpack.c.l.b16 %v6152
        %v6323 = vunpack.c.l.b16 %v6153
        %v6324 = vunpack.c.l.b16 %v6154
        %v6325 = vunpack.c.l.b16 %v6155
        %v6326 = vunpack.c.l.b16 %v6156
        %v6327 = vunpack.c.l.b16 %v6157
        %v6328 = vunpack.c.l.b16 %v6158
        %v6329 = vunpack.c.l.b16 %v6159
        %v6330 = vunpack.c.l.b16 %v6160
        %v6331 = vunpack.c.l.b16 %v6161
        %v6332 = vunpack.c.l.b16 %v6162
        %v6333 = vunpack.c.l.b16 %v6163
        %v6334 = vunpack.c.l.b16 %v6164
        %v6335 = vunpack.c.l.b16 %v6165
        %v6336 = vunpack.c.l.b16 %v6166
        %v6337 = vunpack.c.l.b16 %v6167
        %v6338 = vunpack.c.l.b16 %v6168
        %v6339 = vunpack.c.l.b16 %v6169
        %v6340 = vunpack.c.l.b16 %v6170
        %v6341 = vunpack.c.l.b16 %v6171
        %v6342 = vunpack.c.l.b16 %v6172
        %v6343 = vunpack.c.l.b16 %v6173
        %v6344 = vunpack.c.l.b16 %v6174
        %v6345 = vunpack.c.l.b16 %v6175
        %v6346 = vunpack.c.l.b16 %v6176
        %v6347 = vunpack.c.l.b16 %v6177
        %v6348 = vunpack.c.l.b16 %v6178
        %v6349 = vunpack.c.l.b16 %v6179
        %v6350 = vunpack.c.l.b16 %v6180
        %v6351 = vunpack.c.l.b16 %v6181
        %v6352 = vunpack.c.l.b16 %v6182
        %v6353 = vunpack.c.l.b16 %v6183
        %v6354 = vunpack.c.l.b16 %v6184
        %v6355 = vunpack.c.l.b16 %v6185
        %v6356 = vunpack.c.l.b16 %v6186
        %v6357 = vunpack.c.l.b16 %v6187
        %v6358 = vunpack.c.l.b16 %v6188
        %v6359 = vunpack.c.l.b16 %v6189
        %v6360 = vunpack.c.l.b16 %v6190
        %v6361 = vunpack.c.l.b16 %v6191
        %v6362 = vunpack.c.l.b16 %v6192
        %v6363 = vunpack.c.l.b16 %v6193
        %v6364 = vunpack.c.l.b16 %v6194
        %v6365 = vunpack.c.l.b16 %v6195
        %v6366 = vunpack.c.l.b16 %v6196
        %v6367 = vunpack.c.l.b16 %v6197
        %v6368 = vunpack.c.l.b16 %v6198
        %v6369 = vunpack.c.l.b16 %v6199
        %v6370 = vunpack.c.l.b16 %v6200
        %v6371 = vpack.c.b16 %v6287, %v6286
        %v6372 = vpack.c.b16 %v6289, %v6288
        %v6373 = vpack.c.b16 %v6291, %v6290
        %v6374 = vpack.c.b16 %v6293, %v6292
        %v6375 = vpack.c.b16 %v6295, %v6294
        %v6376 = vpack.c.b16 %v6297, %v6296
        %v6377 = vpack.c.b16 %v6299, %v6298
        %v6378 = vpack.c.b16 %v6301, %v6300
        %v6379 = vpack.c.b16 %v6303, %v6302
        %v6380 = vpack.c.b16 %v6305, %v6304
        %v6381 = vpack.c.b16 %v6307, %v6306
        %v6382 = vpack.c.b16 %v6309, %v6308
        %v6383 = vpack.c.b16 %v6311, %v6310
        %v6384 = vpack.c.b16 %v6313, %v6312
        %v6385 = vpack.c.b16 %v6315, %v6314
        %v6386 = vpack.c.b16 %v6317, %v6316
        %v6387 = vpack.c.b16 %v6319, %v6318
        %v6388 = vpack.c.b16 %v6321, %v6320
        %v6389 = vpack.c.b16 %v6323, %v6322
        %v6390 = vpack.c.b16 %v6325, %v6324
        %v6391 = vpack.c.b16 %v6327, %v6326
        %v6392 = vpack.c.b16 %v6329, %v6328
        %v6393 = vpack.c.b16 %v6331, %v6330
        %v6394 = vpack.c.b16 %v6333, %v6332
        %v6395 = vpack.c.b16 %v6335, %v6334
        %v6396 = vpack.c.b16 %v6337, %v6336
        %v6397 = vpack.c.b16 %v6339, %v6338
        %v6398 = vpack.c.b16 %v6341, %v6340
        %v6399 = vpack.c.b16 %v6343, %v6342
        %v6400 = vpack.c.b16 %v6345, %v6344
        %v6401 = vpack.c.b16 %v6347, %v6346
        %v6402 = vpack.c.b16 %v6349, %v6348
        %v6403 = vpack.c.b16 %v6351, %v6350
        %v6404 = vpack.c.b16 %v6353, %v6352
        %v6405 = vpack.c.b16 %v6355, %v6354
        %v6406 = vpack.c.b16 %v6357, %v6356
        %v6407 = vpack.c.b16 %v6359, %v6358
        %v6408 = vpack.c.b16 %v6361, %v6360
        %v6409 = vpack.c.b16 %v6363, %v6362
        %v6410 = vpack.c.b16 %v6365, %v6364
        %v6411 = vpack.c.b16 %v6367, %v6366
        %v6412 = vpack.c.b16 %v6369, %v6368
        %v6413 = vpack.c.b16 %v6370, %v6370
        %v6457 = vsel %vm946, %v6114, 0
        %v6460 = vsel %vm950, %v6413, 0
        %6462 = vmatpush.bf16.msra.mxu0 %v6378
        %6463 = vmatpush.bf16.msra.mxu0 %v6377
        %6464 = vmatpush.bf16.msra.mxu0 %v6376
        %6465 = vmatpush.bf16.msra.mxu0 %v6375
        %6466 = vmatpush.bf16.msra.mxu0 %v6374
        %6467 = vmatpush.bf16.msra.mxu0 %v6373
        %6468 = vmatpush.bf16.msra.mxu0 %v6372
        %6469 = vmatpush.bf16.msra.mxu0 %v6371
        %6470 = vmatmul.bf16.gmra.mxu0 %v6109
        %v6471 = vpop.f32.mrf.mxu0
        %v6472 = vadd.f32 0.0, %v6471
        %v6473 = vpop.f32.mrf.mxu0
        %6474 = vdwg.mxu0
        %6475 = vmatpush.bf16.msra.mxu0 %v6386
        %6476 = vmatpush.bf16.msra.mxu0 %v6385
        %6477 = vmatpush.bf16.msra.mxu0 %v6384
        %6478 = vmatpush.bf16.msra.mxu0 %v6383
        %6479 = vmatpush.bf16.msra.mxu0 %v6382
        %6480 = vmatpush.bf16.msra.mxu0 %v6381
        %6481 = vmatpush.bf16.msra.mxu0 %v6380
        %6482 = vmatpush.bf16.msra.mxu0 %v6379
        %6483 = vmatmul.bf16.gmra.mxu0 %v6110
        %v6484 = vpop.f32.mrf.mxu0
        %v6485 = vadd.f32 %v6472, %v6484
        %v6486 = vpop.f32.mrf.mxu0
        %6487 = vdwg.mxu0
        %6488 = vmatpush.bf16.msra.mxu0 %v6394
        %6489 = vmatpush.bf16.msra.mxu0 %v6393
        %6490 = vmatpush.bf16.msra.mxu0 %v6392
        %6491 = vmatpush.bf16.msra.mxu0 %v6391
        %6492 = vmatpush.bf16.msra.mxu0 %v6390
        %6493 = vmatpush.bf16.msra.mxu0 %v6389
        %6494 = vmatpush.bf16.msra.mxu0 %v6388
        %6495 = vmatpush.bf16.msra.mxu0 %v6387
        %6496 = vmatmul.bf16.gmra.mxu0 %v6111
        %v6497 = vpop.f32.mrf.mxu0
        %v6498 = vadd.f32 %v6485, %v6497
        %v6499 = vpop.f32.mrf.mxu0
        %6500 = vdwg.mxu0
        %6501 = vmatpush.bf16.msra.mxu0 %v6402
        %6502 = vmatpush.bf16.msra.mxu0 %v6401
        %6503 = vmatpush.bf16.msra.mxu0 %v6400
        %6504 = vmatpush.bf16.msra.mxu0 %v6399
        %6505 = vmatpush.bf16.msra.mxu0 %v6398
        %6506 = vmatpush.bf16.msra.mxu0 %v6397
        %6507 = vmatpush.bf16.msra.mxu0 %v6396
        %6508 = vmatpush.bf16.msra.mxu0 %v6395
        %6509 = vmatmul.bf16.gmra.mxu0 %v6112
        %v6510 = vpop.f32.mrf.mxu0
        %v6511 = vadd.f32 %v6498, %v6510
        %v6512 = vpop.f32.mrf.mxu0
        %6513 = vdwg.mxu0
        %6514 = vmatpush.bf16.msra.mxu0 %v6410
        %6515 = vmatpush.bf16.msra.mxu0 %v6409
        %6516 = vmatpush.bf16.msra.mxu0 %v6408
        %6517 = vmatpush.bf16.msra.mxu0 %v6407
        %6518 = vmatpush.bf16.msra.mxu0 %v6406
        %6519 = vmatpush.bf16.msra.mxu0 %v6405
        %6520 = vmatpush.bf16.msra.mxu0 %v6404
        %6521 = vmatpush.bf16.msra.mxu0 %v6403
        %6522 = vmatmul.bf16.gmra.mxu0 %v6113
        %v6523 = vpop.f32.mrf.mxu0
        %v6524 = vadd.f32 %v6511, %v6523
        %v6525 = vpop.f32.mrf.mxu0
        %6526 = vdwg.mxu0
        %6527 = vmatpush.bf16.msra.mxu0 0
        %6528 = vmatpush.bf16.msra.mxu0 0
        %6529 = vmatpush.bf16.msra.mxu0 0
        %6530 = vmatpush.bf16.msra.mxu0 0
        %6531 = vmatpush.bf16.msra.mxu0 0
        %6532 = vmatpush.bf16.msra.mxu0 %v6460
        %6533 = vmatpush.bf16.msra.mxu0 %v6412
        %6534 = vmatpush.bf16.msra.mxu0 %v6411
        %6535 = vmatmul.bf16.gmra.mxu0 %v6457
        %v6536 = vpop.f32.mrf.mxu0
        %v6537 = vadd.f32 %v6524, %v6536
        %v6538 = vpop.f32.mrf.mxu0
        %6539 = vdwg.mxu0
        %v6540 = vadd.f32 %v6023, %v6537
        %s6541 = sadd.s32 %s312, 12
        %s6542 = smul.u32 %s6541, 128
        %s6543 = sld [smem:[#allocation2 + %s6542]]
        %v6544 = vstv %s6543
        %v6545 = vmul.f32 %v6544, %v315
        %v6546 = vmul.f32 %v6544, %v316
        %s6547 = sadd.s32 %s6542, 1
        %s6548 = sld [smem:[#allocation2 + %s6547]]
        %v6549 = vstv %s6548
        %v6550 = vmul.f32 %v6549, %v323
        %v6551 = vmul.f32 %v6549, %v324
        %v6552 = vadd.f32 %v6545, %v6550
        %v6553 = vadd.f32 %v6546, %v6551
        %s6554 = sadd.s32 %s6542, 2
        %s6555 = sld [smem:[#allocation2 + %s6554]]
        %v6556 = vstv %s6555
        %v6557 = vmul.f32 %v6556, %v333
        %v6558 = vmul.f32 %v6556, %v334
        %v6559 = vadd.f32 %v6552, %v6557
        %v6560 = vadd.f32 %v6553, %v6558
        %s6561 = sadd.s32 %s6542, 3
        %s6562 = sld [smem:[#allocation2 + %s6561]]
        %v6563 = vstv %s6562
        %v6564 = vmul.f32 %v6563, %v343
        %v6565 = vmul.f32 %v6563, %v344
        %v6566 = vadd.f32 %v6559, %v6564
        %v6567 = vadd.f32 %v6560, %v6565
        %s6568 = sadd.s32 %s6542, 4
        %s6569 = sld [smem:[#allocation2 + %s6568]]
        %v6570 = vstv %s6569
        %v6571 = vmul.f32 %v6570, %v353
        %v6572 = vmul.f32 %v6570, %v354
        %v6573 = vadd.f32 %v6566, %v6571
        %v6574 = vadd.f32 %v6567, %v6572
        %s6575 = sadd.s32 %s6542, 5
        %s6576 = sld [smem:[#allocation2 + %s6575]]
        %v6577 = vstv %s6576
        %v6578 = vmul.f32 %v6577, %v363
        %v6579 = vmul.f32 %v6577, %v364
        %v6580 = vadd.f32 %v6573, %v6578
        %v6581 = vadd.f32 %v6574, %v6579
        %s6582 = sadd.s32 %s6542, 6
        %s6583 = sld [smem:[#allocation2 + %s6582]]
        %v6584 = vstv %s6583
        %v6585 = vmul.f32 %v6584, %v373
        %v6586 = vmul.f32 %v6584, %v374
        %v6587 = vadd.f32 %v6580, %v6585
        %v6588 = vadd.f32 %v6581, %v6586
        %s6589 = sadd.s32 %s6542, 7
        %s6590 = sld [smem:[#allocation2 + %s6589]]
        %v6591 = vstv %s6590
        %v6592 = vmul.f32 %v6591, %v383
        %v6593 = vmul.f32 %v6591, %v384
        %v6594 = vadd.f32 %v6587, %v6592
        %v6595 = vadd.f32 %v6588, %v6593
        %s6596 = sadd.s32 %s6542, 8
        %s6597 = sld [smem:[#allocation2 + %s6596]]
        %v6598 = vstv %s6597
        %v6599 = vmul.f32 %v6598, %v393
        %v6600 = vmul.f32 %v6598, %v394
        %v6601 = vadd.f32 %v6594, %v6599
        %v6602 = vadd.f32 %v6595, %v6600
        %s6603 = sld [smem:[#allocation4 + %s6541]]
        %v6604 = vstv %s6603
        %v6605 = vadd.f32 %v6601, %v6604
        %v6606 = vadd.f32 %v6602, %v6604
        %v6607 = vmax.f32 %v6605, 0.0
        %v6608 = vmax.f32 %v6606, 0.0
        %6611 = vst [vmem:[#allocation1] ss:$4 sm:$0xff] %v6607
        %s6612 = scalar_lea.vmem [#allocation1], 32
        %6613 = vst [vmem:[%s6612] ss:$4 sm:$0xff] %v6608
        %v6614 = vld.sshfl [vmem:[#allocation1] sm:$0xff pattern:$0x73625140]
        %v6615 = vld.sshfl [vmem:[#allocation1 + $0x8] sm:$0xff pattern:$0x73625140]
        %v6616 = vld.sshfl [vmem:[#allocation1 + $0x10] sm:$0xff pattern:$0x73625140]
        %v6617 = vld.sshfl [vmem:[#allocation1 + $0x18] sm:$0xff pattern:$0x73625140]
        %v6618 = vld.sshfl [vmem:[#allocation1 + $0x20] sm:$0xff pattern:$0x73625140]
        %v6619 = vld.sshfl [vmem:[#allocation1 + $0x28] sm:$0xff pattern:$0x73625140]
        %v6626 = vpack.c.bf16 %v6614, %v6614
        %v6627 = vpack.c.bf16 %v6615, %v6615
        %v6628 = vpack.c.bf16 %v6616, %v6616
        %v6629 = vpack.c.bf16 %v6617, %v6617
        %v6630 = vpack.c.bf16 %v6618, %v6618
        %v6631 = vpack.c.bf16 %v6619, %v6619
        %s6632 = scalar_lea.vmem %s305, 4080
        %v6633 = vld [vmem:[%s6632] sm:$0xf]
        %v6634 = vld [vmem:[%s6632 + $0x4] sm:$0xf]
        %v6635 = vld [vmem:[%s6632 + $0x8] sm:$0xf]
        %v6636 = vld [vmem:[%s6632 + $0xc] sm:$0xf]
        %v6637 = vld [vmem:[%s6632 + $0x10] sm:$0xf]
        %v6638 = vld [vmem:[%s6632 + $0x14] sm:$0xf]
        %v6639 = vld [vmem:[%s6632 + $0x18] sm:$0xf]
        %v6640 = vld [vmem:[%s6632 + $0x1c] sm:$0xf]
        %v6641 = vld [vmem:[%s6632 + $0x20] sm:$0xf]
        %v6642 = vld [vmem:[%s6632 + $0x24] sm:$0xf]
        %v6643 = vld [vmem:[%s6632 + $0x28] sm:$0xf]
        %v6644 = vld [vmem:[%s6632 + $0x2c] sm:$0xf]
        %v6645 = vld [vmem:[%s6632 + $0x30] sm:$0xf]
        %v6646 = vld [vmem:[%s6632 + $0x34] sm:$0xf]
        %v6647 = vld [vmem:[%s6632 + $0x38] sm:$0xf]
        %v6648 = vld [vmem:[%s6632 + $0x3c] sm:$0xf]
        %v6649 = vld [vmem:[%s6632 + $0x40] sm:$0xf]
        %v6650 = vld [vmem:[%s6632 + $0x44] sm:$0xf]
        %v6651 = vld [vmem:[%s6632 + $0x48] sm:$0xf]
        %v6652 = vld [vmem:[%s6632 + $0x4c] sm:$0xf]
        %v6653 = vld [vmem:[%s6632 + $0x50] sm:$0xf]
        %v6654 = vld [vmem:[%s6632 + $0x54] sm:$0xf]
        %v6655 = vld [vmem:[%s6632 + $0x58] sm:$0xf]
        %v6656 = vld [vmem:[%s6632 + $0x5c] sm:$0xf]
        %v6657 = vld [vmem:[%s6632 + $0x60] sm:$0xf]
        %v6658 = vld [vmem:[%s6632 + $0x64] sm:$0xf]
        %v6659 = vld [vmem:[%s6632 + $0x68] sm:$0xf]
        %v6660 = vld [vmem:[%s6632 + $0x6c] sm:$0xf]
        %v6661 = vld [vmem:[%s6632 + $0x70] sm:$0xf]
        %v6662 = vld [vmem:[%s6632 + $0x74] sm:$0xf]
        %v6663 = vld [vmem:[%s6632 + $0x78] sm:$0xf]
        %v6664 = vld [vmem:[%s6632 + $0x7c] sm:$0xf]
        %v6665 = vld [vmem:[%s6632 + $0x80] sm:$0xf]
        %v6666 = vld [vmem:[%s6632 + $0x84] sm:$0xf]
        %v6667 = vld [vmem:[%s6632 + $0x88] sm:$0xf]
        %v6668 = vld [vmem:[%s6632 + $0x8c] sm:$0xf]
        %v6669 = vld [vmem:[%s6632 + $0x90] sm:$0xf]
        %v6670 = vld [vmem:[%s6632 + $0x94] sm:$0xf]
        %v6671 = vld [vmem:[%s6632 + $0x98] sm:$0xf]
        %v6672 = vld [vmem:[%s6632 + $0x9c] sm:$0xf]
        %v6673 = vld [vmem:[%s6632 + $0xa0] sm:$0xf]
        %v6674 = vld [vmem:[%s6632 + $0xa4] sm:$0xf]
        %v6675 = vld [vmem:[%s6632 + $0xa8] sm:$0xf]
        %v6676 = vld [vmem:[%s6632 + $0xac] sm:$0xf]
        %v6677 = vld [vmem:[%s6632 + $0xb0] sm:$0xf]
        %v6678 = vld [vmem:[%s6632 + $0xb4] sm:$0xf]
        %v6679 = vld [vmem:[%s6632 + $0xb8] sm:$0xf]
        %v6680 = vld [vmem:[%s6632 + $0xbc] sm:$0xf]
        %v6681 = vld [vmem:[%s6632 + $0xc0] sm:$0xf]
        %v6682 = vld [vmem:[%s6632 + $0xc4] sm:$0xf]
        %v6683 = vld [vmem:[%s6632 + $0xc8] sm:$0xf]
        %v6684 = vld [vmem:[%s6632 + $0xcc] sm:$0xf]
        %v6685 = vld [vmem:[%s6632 + $0xd0] sm:$0xf]
        %v6686 = vld [vmem:[%s6632 + $0xd4] sm:$0xf]
        %v6687 = vld [vmem:[%s6632 + $0xd8] sm:$0xf]
        %v6688 = vld [vmem:[%s6632 + $0xdc] sm:$0xf]
        %v6689 = vld [vmem:[%s6632 + $0xe0] sm:$0xf]
        %v6690 = vld [vmem:[%s6632 + $0xe4] sm:$0xf]
        %v6691 = vld [vmem:[%s6632 + $0xe8] sm:$0xf]
        %v6692 = vld [vmem:[%s6632 + $0xec] sm:$0xf]
        %v6693 = vld [vmem:[%s6632 + $0xf0] sm:$0xf]
        %v6694 = vld [vmem:[%s6632 + $0xf4] sm:$0xf]
        %v6695 = vld [vmem:[%s6632 + $0xf8] sm:$0xf]
        %v6696 = vld [vmem:[%s6632 + $0xfc] sm:$0xf]
        %v6697 = vld [vmem:[%s6632 + $0x100] sm:$0xf]
        %v6698 = vld [vmem:[%s6632 + $0x104] sm:$0xf]
        %v6699 = vld [vmem:[%s6632 + $0x108] sm:$0xf]
        %v6700 = vld [vmem:[%s6632 + $0x10c] sm:$0xf]
        %v6701 = vld [vmem:[%s6632 + $0x110] sm:$0xf]
        %v6702 = vld [vmem:[%s6632 + $0x114] sm:$0xf]
        %v6703 = vld [vmem:[%s6632 + $0x118] sm:$0xf]
        %v6704 = vld [vmem:[%s6632 + $0x11c] sm:$0xf]
        %v6705 = vld [vmem:[%s6632 + $0x120] sm:$0xf]
        %v6706 = vld [vmem:[%s6632 + $0x124] sm:$0xf]
        %v6707 = vld [vmem:[%s6632 + $0x128] sm:$0xf]
        %v6708 = vld [vmem:[%s6632 + $0x12c] sm:$0xf]
        %v6709 = vld [vmem:[%s6632 + $0x130] sm:$0xf]
        %v6710 = vld [vmem:[%s6632 + $0x134] sm:$0xf]
        %v6711 = vld [vmem:[%s6632 + $0x138] sm:$0xf]
        %v6712 = vld [vmem:[%s6632 + $0x13c] sm:$0xf]
        %v6713 = vld [vmem:[%s6632 + $0x140] sm:$0xf]
        %v6714 = vld [vmem:[%s6632 + $0x144] sm:$0xf]
        %v6715 = vld [vmem:[%s6632 + $0x148] sm:$0xf]
        %v6716 = vld [vmem:[%s6632 + $0x14c] sm:$0xf]
        %v6717 = vld [vmem:[%s6632 + $0x150] sm:$0x3]
        %v6803 = vunpack.c.l.b16 %v6633
        %v6804 = vunpack.c.l.b16 %v6634
        %v6805 = vunpack.c.l.b16 %v6635
        %v6806 = vunpack.c.l.b16 %v6636
        %v6807 = vunpack.c.l.b16 %v6637
        %v6808 = vunpack.c.l.b16 %v6638
        %v6809 = vunpack.c.l.b16 %v6639
        %v6810 = vunpack.c.l.b16 %v6640
        %v6811 = vunpack.c.l.b16 %v6641
        %v6812 = vunpack.c.l.b16 %v6642
        %v6813 = vunpack.c.l.b16 %v6643
        %v6814 = vunpack.c.l.b16 %v6644
        %v6815 = vunpack.c.l.b16 %v6645
        %v6816 = vunpack.c.l.b16 %v6646
        %v6817 = vunpack.c.l.b16 %v6647
        %v6818 = vunpack.c.l.b16 %v6648
        %v6819 = vunpack.c.l.b16 %v6649
        %v6820 = vunpack.c.l.b16 %v6650
        %v6821 = vunpack.c.l.b16 %v6651
        %v6822 = vunpack.c.l.b16 %v6652
        %v6823 = vunpack.c.l.b16 %v6653
        %v6824 = vunpack.c.l.b16 %v6654
        %v6825 = vunpack.c.l.b16 %v6655
        %v6826 = vunpack.c.l.b16 %v6656
        %v6827 = vunpack.c.l.b16 %v6657
        %v6828 = vunpack.c.l.b16 %v6658
        %v6829 = vunpack.c.l.b16 %v6659
        %v6830 = vunpack.c.l.b16 %v6660
        %v6831 = vunpack.c.l.b16 %v6661
        %v6832 = vunpack.c.l.b16 %v6662
        %v6833 = vunpack.c.l.b16 %v6663
        %v6834 = vunpack.c.l.b16 %v6664
        %v6835 = vunpack.c.l.b16 %v6665
        %v6836 = vunpack.c.l.b16 %v6666
        %v6837 = vunpack.c.l.b16 %v6667
        %v6838 = vunpack.c.l.b16 %v6668
        %v6839 = vunpack.c.l.b16 %v6669
        %v6840 = vunpack.c.l.b16 %v6670
        %v6841 = vunpack.c.l.b16 %v6671
        %v6842 = vunpack.c.l.b16 %v6672
        %v6843 = vunpack.c.l.b16 %v6673
        %v6844 = vunpack.c.l.b16 %v6674
        %v6845 = vunpack.c.l.b16 %v6675
        %v6846 = vunpack.c.l.b16 %v6676
        %v6847 = vunpack.c.l.b16 %v6677
        %v6848 = vunpack.c.l.b16 %v6678
        %v6849 = vunpack.c.l.b16 %v6679
        %v6850 = vunpack.c.l.b16 %v6680
        %v6851 = vunpack.c.l.b16 %v6681
        %v6852 = vunpack.c.l.b16 %v6682
        %v6853 = vunpack.c.l.b16 %v6683
        %v6854 = vunpack.c.l.b16 %v6684
        %v6855 = vunpack.c.l.b16 %v6685
        %v6856 = vunpack.c.l.b16 %v6686
        %v6857 = vunpack.c.l.b16 %v6687
        %v6858 = vunpack.c.l.b16 %v6688
        %v6859 = vunpack.c.l.b16 %v6689
        %v6860 = vunpack.c.l.b16 %v6690
        %v6861 = vunpack.c.l.b16 %v6691
        %v6862 = vunpack.c.l.b16 %v6692
        %v6863 = vunpack.c.l.b16 %v6693
        %v6864 = vunpack.c.l.b16 %v6694
        %v6865 = vunpack.c.l.b16 %v6695
        %v6866 = vunpack.c.l.b16 %v6696
        %v6867 = vunpack.c.l.b16 %v6697
        %v6868 = vunpack.c.l.b16 %v6698
        %v6869 = vunpack.c.l.b16 %v6699
        %v6870 = vunpack.c.l.b16 %v6700
        %v6871 = vunpack.c.l.b16 %v6701
        %v6872 = vunpack.c.l.b16 %v6702
        %v6873 = vunpack.c.l.b16 %v6703
        %v6874 = vunpack.c.l.b16 %v6704
        %v6875 = vunpack.c.l.b16 %v6705
        %v6876 = vunpack.c.l.b16 %v6706
        %v6877 = vunpack.c.l.b16 %v6707
        %v6878 = vunpack.c.l.b16 %v6708
        %v6879 = vunpack.c.l.b16 %v6709
        %v6880 = vunpack.c.l.b16 %v6710
        %v6881 = vunpack.c.l.b16 %v6711
        %v6882 = vunpack.c.l.b16 %v6712
        %v6883 = vunpack.c.l.b16 %v6713
        %v6884 = vunpack.c.l.b16 %v6714
        %v6885 = vunpack.c.l.b16 %v6715
        %v6886 = vunpack.c.l.b16 %v6716
        %v6887 = vunpack.c.l.b16 %v6717
        %v6888 = vpack.c.b16 %v6804, %v6803
        %v6889 = vpack.c.b16 %v6806, %v6805
        %v6890 = vpack.c.b16 %v6808, %v6807
        %v6891 = vpack.c.b16 %v6810, %v6809
        %v6892 = vpack.c.b16 %v6812, %v6811
        %v6893 = vpack.c.b16 %v6814, %v6813
        %v6894 = vpack.c.b16 %v6816, %v6815
        %v6895 = vpack.c.b16 %v6818, %v6817
        %v6896 = vpack.c.b16 %v6820, %v6819
        %v6897 = vpack.c.b16 %v6822, %v6821
        %v6898 = vpack.c.b16 %v6824, %v6823
        %v6899 = vpack.c.b16 %v6826, %v6825
        %v6900 = vpack.c.b16 %v6828, %v6827
        %v6901 = vpack.c.b16 %v6830, %v6829
        %v6902 = vpack.c.b16 %v6832, %v6831
        %v6903 = vpack.c.b16 %v6834, %v6833
        %v6904 = vpack.c.b16 %v6836, %v6835
        %v6905 = vpack.c.b16 %v6838, %v6837
        %v6906 = vpack.c.b16 %v6840, %v6839
        %v6907 = vpack.c.b16 %v6842, %v6841
        %v6908 = vpack.c.b16 %v6844, %v6843
        %v6909 = vpack.c.b16 %v6846, %v6845
        %v6910 = vpack.c.b16 %v6848, %v6847
        %v6911 = vpack.c.b16 %v6850, %v6849
        %v6912 = vpack.c.b16 %v6852, %v6851
        %v6913 = vpack.c.b16 %v6854, %v6853
        %v6914 = vpack.c.b16 %v6856, %v6855
        %v6915 = vpack.c.b16 %v6858, %v6857
        %v6916 = vpack.c.b16 %v6860, %v6859
        %v6917 = vpack.c.b16 %v6862, %v6861
        %v6918 = vpack.c.b16 %v6864, %v6863
        %v6919 = vpack.c.b16 %v6866, %v6865
        %v6920 = vpack.c.b16 %v6868, %v6867
        %v6921 = vpack.c.b16 %v6870, %v6869
        %v6922 = vpack.c.b16 %v6872, %v6871
        %v6923 = vpack.c.b16 %v6874, %v6873
        %v6924 = vpack.c.b16 %v6876, %v6875
        %v6925 = vpack.c.b16 %v6878, %v6877
        %v6926 = vpack.c.b16 %v6880, %v6879
        %v6927 = vpack.c.b16 %v6882, %v6881
        %v6928 = vpack.c.b16 %v6884, %v6883
        %v6929 = vpack.c.b16 %v6886, %v6885
        %v6930 = vpack.c.b16 %v6887, %v6887
        %v6974 = vsel %vm946, %v6631, 0
        %v6977 = vsel %vm950, %v6930, 0
        %6979 = vmatpush.bf16.msra.mxu0 %v6895
        %6980 = vmatpush.bf16.msra.mxu0 %v6894
        %6981 = vmatpush.bf16.msra.mxu0 %v6893
        %6982 = vmatpush.bf16.msra.mxu0 %v6892
        %6983 = vmatpush.bf16.msra.mxu0 %v6891
        %6984 = vmatpush.bf16.msra.mxu0 %v6890
        %6985 = vmatpush.bf16.msra.mxu0 %v6889
        %6986 = vmatpush.bf16.msra.mxu0 %v6888
        %6987 = vmatmul.bf16.gmra.mxu0 %v6626
        %v6988 = vpop.f32.mrf.mxu0
        %v6989 = vadd.f32 0.0, %v6988
        %v6990 = vpop.f32.mrf.mxu0
        %6991 = vdwg.mxu0
        %6992 = vmatpush.bf16.msra.mxu0 %v6903
        %6993 = vmatpush.bf16.msra.mxu0 %v6902
        %6994 = vmatpush.bf16.msra.mxu0 %v6901
        %6995 = vmatpush.bf16.msra.mxu0 %v6900
        %6996 = vmatpush.bf16.msra.mxu0 %v6899
        %6997 = vmatpush.bf16.msra.mxu0 %v6898
        %6998 = vmatpush.bf16.msra.mxu0 %v6897
        %6999 = vmatpush.bf16.msra.mxu0 %v6896
        %7000 = vmatmul.bf16.gmra.mxu0 %v6627
        %v7001 = vpop.f32.mrf.mxu0
        %v7002 = vadd.f32 %v6989, %v7001
        %v7003 = vpop.f32.mrf.mxu0
        %7004 = vdwg.mxu0
        %7005 = vmatpush.bf16.msra.mxu0 %v6911
        %7006 = vmatpush.bf16.msra.mxu0 %v6910
        %7007 = vmatpush.bf16.msra.mxu0 %v6909
        %7008 = vmatpush.bf16.msra.mxu0 %v6908
        %7009 = vmatpush.bf16.msra.mxu0 %v6907
        %7010 = vmatpush.bf16.msra.mxu0 %v6906
        %7011 = vmatpush.bf16.msra.mxu0 %v6905
        %7012 = vmatpush.bf16.msra.mxu0 %v6904
        %7013 = vmatmul.bf16.gmra.mxu0 %v6628
        %v7014 = vpop.f32.mrf.mxu0
        %v7015 = vadd.f32 %v7002, %v7014
        %v7016 = vpop.f32.mrf.mxu0
        %7017 = vdwg.mxu0
        %7018 = vmatpush.bf16.msra.mxu0 %v6919
        %7019 = vmatpush.bf16.msra.mxu0 %v6918
        %7020 = vmatpush.bf16.msra.mxu0 %v6917
        %7021 = vmatpush.bf16.msra.mxu0 %v6916
        %7022 = vmatpush.bf16.msra.mxu0 %v6915
        %7023 = vmatpush.bf16.msra.mxu0 %v6914
        %7024 = vmatpush.bf16.msra.mxu0 %v6913
        %7025 = vmatpush.bf16.msra.mxu0 %v6912
        %7026 = vmatmul.bf16.gmra.mxu0 %v6629
        %v7027 = vpop.f32.mrf.mxu0
        %v7028 = vadd.f32 %v7015, %v7027
        %v7029 = vpop.f32.mrf.mxu0
        %7030 = vdwg.mxu0
        %7031 = vmatpush.bf16.msra.mxu0 %v6927
        %7032 = vmatpush.bf16.msra.mxu0 %v6926
        %7033 = vmatpush.bf16.msra.mxu0 %v6925
        %7034 = vmatpush.bf16.msra.mxu0 %v6924
        %7035 = vmatpush.bf16.msra.mxu0 %v6923
        %7036 = vmatpush.bf16.msra.mxu0 %v6922
        %7037 = vmatpush.bf16.msra.mxu0 %v6921
        %7038 = vmatpush.bf16.msra.mxu0 %v6920
        %7039 = vmatmul.bf16.gmra.mxu0 %v6630
        %v7040 = vpop.f32.mrf.mxu0
        %v7041 = vadd.f32 %v7028, %v7040
        %v7042 = vpop.f32.mrf.mxu0
        %7043 = vdwg.mxu0
        %7044 = vmatpush.bf16.msra.mxu0 0
        %7045 = vmatpush.bf16.msra.mxu0 0
        %7046 = vmatpush.bf16.msra.mxu0 0
        %7047 = vmatpush.bf16.msra.mxu0 0
        %7048 = vmatpush.bf16.msra.mxu0 0
        %7049 = vmatpush.bf16.msra.mxu0 %v6977
        %7050 = vmatpush.bf16.msra.mxu0 %v6929
        %7051 = vmatpush.bf16.msra.mxu0 %v6928
        %7052 = vmatmul.bf16.gmra.mxu0 %v6974
        %v7053 = vpop.f32.mrf.mxu0
        %v7054 = vadd.f32 %v7041, %v7053
        %v7055 = vpop.f32.mrf.mxu0
        %7056 = vdwg.mxu0
        %v7057 = vadd.f32 %v6540, %v7054
        %s7058 = sadd.s32 %s312, 13
        %s7059 = smul.u32 %s7058, 128
        %s7060 = sld [smem:[#allocation2 + %s7059]]
        %v7061 = vstv %s7060
        %v7062 = vmul.f32 %v7061, %v315
        %v7063 = vmul.f32 %v7061, %v316
        %s7064 = sadd.s32 %s7059, 1
        %s7065 = sld [smem:[#allocation2 + %s7064]]
        %v7066 = vstv %s7065
        %v7067 = vmul.f32 %v7066, %v323
        %v7068 = vmul.f32 %v7066, %v324
        %v7069 = vadd.f32 %v7062, %v7067
        %v7070 = vadd.f32 %v7063, %v7068
        %s7071 = sadd.s32 %s7059, 2
        %s7072 = sld [smem:[#allocation2 + %s7071]]
        %v7073 = vstv %s7072
        %v7074 = vmul.f32 %v7073, %v333
        %v7075 = vmul.f32 %v7073, %v334
        %v7076 = vadd.f32 %v7069, %v7074
        %v7077 = vadd.f32 %v7070, %v7075
        %s7078 = sadd.s32 %s7059, 3
        %s7079 = sld [smem:[#allocation2 + %s7078]]
        %v7080 = vstv %s7079
        %v7081 = vmul.f32 %v7080, %v343
        %v7082 = vmul.f32 %v7080, %v344
        %v7083 = vadd.f32 %v7076, %v7081
        %v7084 = vadd.f32 %v7077, %v7082
        %s7085 = sadd.s32 %s7059, 4
        %s7086 = sld [smem:[#allocation2 + %s7085]]
        %v7087 = vstv %s7086
        %v7088 = vmul.f32 %v7087, %v353
        %v7089 = vmul.f32 %v7087, %v354
        %v7090 = vadd.f32 %v7083, %v7088
        %v7091 = vadd.f32 %v7084, %v7089
        %s7092 = sadd.s32 %s7059, 5
        %s7093 = sld [smem:[#allocation2 + %s7092]]
        %v7094 = vstv %s7093
        %v7095 = vmul.f32 %v7094, %v363
        %v7096 = vmul.f32 %v7094, %v364
        %v7097 = vadd.f32 %v7090, %v7095
        %v7098 = vadd.f32 %v7091, %v7096
        %s7099 = sadd.s32 %s7059, 6
        %s7100 = sld [smem:[#allocation2 + %s7099]]
        %v7101 = vstv %s7100
        %v7102 = vmul.f32 %v7101, %v373
        %v7103 = vmul.f32 %v7101, %v374
        %v7104 = vadd.f32 %v7097, %v7102
        %v7105 = vadd.f32 %v7098, %v7103
        %s7106 = sadd.s32 %s7059, 7
        %s7107 = sld [smem:[#allocation2 + %s7106]]
        %v7108 = vstv %s7107
        %v7109 = vmul.f32 %v7108, %v383
        %v7110 = vmul.f32 %v7108, %v384
        %v7111 = vadd.f32 %v7104, %v7109
        %v7112 = vadd.f32 %v7105, %v7110
        %s7113 = sadd.s32 %s7059, 8
        %s7114 = sld [smem:[#allocation2 + %s7113]]
        %v7115 = vstv %s7114
        %v7116 = vmul.f32 %v7115, %v393
        %v7117 = vmul.f32 %v7115, %v394
        %v7118 = vadd.f32 %v7111, %v7116
        %v7119 = vadd.f32 %v7112, %v7117
        %s7120 = sld [smem:[#allocation4 + %s7058]]
        %v7121 = vstv %s7120
        %v7122 = vadd.f32 %v7118, %v7121
        %v7123 = vadd.f32 %v7119, %v7121
        %v7124 = vmax.f32 %v7122, 0.0
        %v7125 = vmax.f32 %v7123, 0.0
        %7128 = vst [vmem:[#allocation1] ss:$4 sm:$0xff] %v7124
        %s7129 = scalar_lea.vmem [#allocation1], 32
        %7130 = vst [vmem:[%s7129] ss:$4 sm:$0xff] %v7125
        %v7131 = vld.sshfl [vmem:[#allocation1] sm:$0xff pattern:$0x73625140]
        %v7132 = vld.sshfl [vmem:[#allocation1 + $0x8] sm:$0xff pattern:$0x73625140]
        %v7133 = vld.sshfl [vmem:[#allocation1 + $0x10] sm:$0xff pattern:$0x73625140]
        %v7134 = vld.sshfl [vmem:[#allocation1 + $0x18] sm:$0xff pattern:$0x73625140]
        %v7135 = vld.sshfl [vmem:[#allocation1 + $0x20] sm:$0xff pattern:$0x73625140]
        %v7136 = vld.sshfl [vmem:[#allocation1 + $0x28] sm:$0xff pattern:$0x73625140]
        %v7143 = vpack.c.bf16 %v7131, %v7131
        %v7144 = vpack.c.bf16 %v7132, %v7132
        %v7145 = vpack.c.bf16 %v7133, %v7133
        %v7146 = vpack.c.bf16 %v7134, %v7134
        %v7147 = vpack.c.bf16 %v7135, %v7135
        %v7148 = vpack.c.bf16 %v7136, %v7136
        %s7149 = scalar_lea.vmem %s305, 4420
        %v7150 = vld [vmem:[%s7149] sm:$0xf]
        %v7151 = vld [vmem:[%s7149 + $0x4] sm:$0xf]
        %v7152 = vld [vmem:[%s7149 + $0x8] sm:$0xf]
        %v7153 = vld [vmem:[%s7149 + $0xc] sm:$0xf]
        %v7154 = vld [vmem:[%s7149 + $0x10] sm:$0xf]
        %v7155 = vld [vmem:[%s7149 + $0x14] sm:$0xf]
        %v7156 = vld [vmem:[%s7149 + $0x18] sm:$0xf]
        %v7157 = vld [vmem:[%s7149 + $0x1c] sm:$0xf]
        %v7158 = vld [vmem:[%s7149 + $0x20] sm:$0xf]
        %v7159 = vld [vmem:[%s7149 + $0x24] sm:$0xf]
        %v7160 = vld [vmem:[%s7149 + $0x28] sm:$0xf]
        %v7161 = vld [vmem:[%s7149 + $0x2c] sm:$0xf]
        %v7162 = vld [vmem:[%s7149 + $0x30] sm:$0xf]
        %v7163 = vld [vmem:[%s7149 + $0x34] sm:$0xf]
        %v7164 = vld [vmem:[%s7149 + $0x38] sm:$0xf]
        %v7165 = vld [vmem:[%s7149 + $0x3c] sm:$0xf]
        %v7166 = vld [vmem:[%s7149 + $0x40] sm:$0xf]
        %v7167 = vld [vmem:[%s7149 + $0x44] sm:$0xf]
        %v7168 = vld [vmem:[%s7149 + $0x48] sm:$0xf]
        %v7169 = vld [vmem:[%s7149 + $0x4c] sm:$0xf]
        %v7170 = vld [vmem:[%s7149 + $0x50] sm:$0xf]
        %v7171 = vld [vmem:[%s7149 + $0x54] sm:$0xf]
        %v7172 = vld [vmem:[%s7149 + $0x58] sm:$0xf]
        %v7173 = vld [vmem:[%s7149 + $0x5c] sm:$0xf]
        %v7174 = vld [vmem:[%s7149 + $0x60] sm:$0xf]
        %v7175 = vld [vmem:[%s7149 + $0x64] sm:$0xf]
        %v7176 = vld [vmem:[%s7149 + $0x68] sm:$0xf]
        %v7177 = vld [vmem:[%s7149 + $0x6c] sm:$0xf]
        %v7178 = vld [vmem:[%s7149 + $0x70] sm:$0xf]
        %v7179 = vld [vmem:[%s7149 + $0x74] sm:$0xf]
        %v7180 = vld [vmem:[%s7149 + $0x78] sm:$0xf]
        %v7181 = vld [vmem:[%s7149 + $0x7c] sm:$0xf]
        %v7182 = vld [vmem:[%s7149 + $0x80] sm:$0xf]
        %v7183 = vld [vmem:[%s7149 + $0x84] sm:$0xf]
        %v7184 = vld [vmem:[%s7149 + $0x88] sm:$0xf]
        %v7185 = vld [vmem:[%s7149 + $0x8c] sm:$0xf]
        %v7186 = vld [vmem:[%s7149 + $0x90] sm:$0xf]
        %v7187 = vld [vmem:[%s7149 + $0x94] sm:$0xf]
        %v7188 = vld [vmem:[%s7149 + $0x98] sm:$0xf]
        %v7189 = vld [vmem:[%s7149 + $0x9c] sm:$0xf]
        %v7190 = vld [vmem:[%s7149 + $0xa0] sm:$0xf]
        %v7191 = vld [vmem:[%s7149 + $0xa4] sm:$0xf]
        %v7192 = vld [vmem:[%s7149 + $0xa8] sm:$0xf]
        %v7193 = vld [vmem:[%s7149 + $0xac] sm:$0xf]
        %v7194 = vld [vmem:[%s7149 + $0xb0] sm:$0xf]
        %v7195 = vld [vmem:[%s7149 + $0xb4] sm:$0xf]
        %v7196 = vld [vmem:[%s7149 + $0xb8] sm:$0xf]
        %v7197 = vld [vmem:[%s7149 + $0xbc] sm:$0xf]
        %v7198 = vld [vmem:[%s7149 + $0xc0] sm:$0xf]
        %v7199 = vld [vmem:[%s7149 + $0xc4] sm:$0xf]
        %v7200 = vld [vmem:[%s7149 + $0xc8] sm:$0xf]
        %v7201 = vld [vmem:[%s7149 + $0xcc] sm:$0xf]
        %v7202 = vld [vmem:[%s7149 + $0xd0] sm:$0xf]
        %v7203 = vld [vmem:[%s7149 + $0xd4] sm:$0xf]
        %v7204 = vld [vmem:[%s7149 + $0xd8] sm:$0xf]
        %v7205 = vld [vmem:[%s7149 + $0xdc] sm:$0xf]
        %v7206 = vld [vmem:[%s7149 + $0xe0] sm:$0xf]
        %v7207 = vld [vmem:[%s7149 + $0xe4] sm:$0xf]
        %v7208 = vld [vmem:[%s7149 + $0xe8] sm:$0xf]
        %v7209 = vld [vmem:[%s7149 + $0xec] sm:$0xf]
        %v7210 = vld [vmem:[%s7149 + $0xf0] sm:$0xf]
        %v7211 = vld [vmem:[%s7149 + $0xf4] sm:$0xf]
        %v7212 = vld [vmem:[%s7149 + $0xf8] sm:$0xf]
        %v7213 = vld [vmem:[%s7149 + $0xfc] sm:$0xf]
        %v7214 = vld [vmem:[%s7149 + $0x100] sm:$0xf]
        %v7215 = vld [vmem:[%s7149 + $0x104] sm:$0xf]
        %v7216 = vld [vmem:[%s7149 + $0x108] sm:$0xf]
        %v7217 = vld [vmem:[%s7149 + $0x10c] sm:$0xf]
        %v7218 = vld [vmem:[%s7149 + $0x110] sm:$0xf]
        %v7219 = vld [vmem:[%s7149 + $0x114] sm:$0xf]
        %v7220 = vld [vmem:[%s7149 + $0x118] sm:$0xf]
        %v7221 = vld [vmem:[%s7149 + $0x11c] sm:$0xf]
        %v7222 = vld [vmem:[%s7149 + $0x120] sm:$0xf]
        %v7223 = vld [vmem:[%s7149 + $0x124] sm:$0xf]
        %v7224 = vld [vmem:[%s7149 + $0x128] sm:$0xf]
        %v7225 = vld [vmem:[%s7149 + $0x12c] sm:$0xf]
        %v7226 = vld [vmem:[%s7149 + $0x130] sm:$0xf]
        %v7227 = vld [vmem:[%s7149 + $0x134] sm:$0xf]
        %v7228 = vld [vmem:[%s7149 + $0x138] sm:$0xf]
        %v7229 = vld [vmem:[%s7149 + $0x13c] sm:$0xf]
        %v7230 = vld [vmem:[%s7149 + $0x140] sm:$0xf]
        %v7231 = vld [vmem:[%s7149 + $0x144] sm:$0xf]
        %v7232 = vld [vmem:[%s7149 + $0x148] sm:$0xf]
        %v7233 = vld [vmem:[%s7149 + $0x14c] sm:$0xf]
        %v7234 = vld [vmem:[%s7149 + $0x150] sm:$0x3]
        %v7320 = vunpack.c.l.b16 %v7150
        %v7321 = vunpack.c.l.b16 %v7151
        %v7322 = vunpack.c.l.b16 %v7152
        %v7323 = vunpack.c.l.b16 %v7153
        %v7324 = vunpack.c.l.b16 %v7154
        %v7325 = vunpack.c.l.b16 %v7155
        %v7326 = vunpack.c.l.b16 %v7156
        %v7327 = vunpack.c.l.b16 %v7157
        %v7328 = vunpack.c.l.b16 %v7158
        %v7329 = vunpack.c.l.b16 %v7159
        %v7330 = vunpack.c.l.b16 %v7160
        %v7331 = vunpack.c.l.b16 %v7161
        %v7332 = vunpack.c.l.b16 %v7162
        %v7333 = vunpack.c.l.b16 %v7163
        %v7334 = vunpack.c.l.b16 %v7164
        %v7335 = vunpack.c.l.b16 %v7165
        %v7336 = vunpack.c.l.b16 %v7166
        %v7337 = vunpack.c.l.b16 %v7167
        %v7338 = vunpack.c.l.b16 %v7168
        %v7339 = vunpack.c.l.b16 %v7169
        %v7340 = vunpack.c.l.b16 %v7170
        %v7341 = vunpack.c.l.b16 %v7171
        %v7342 = vunpack.c.l.b16 %v7172
        %v7343 = vunpack.c.l.b16 %v7173
        %v7344 = vunpack.c.l.b16 %v7174
        %v7345 = vunpack.c.l.b16 %v7175
        %v7346 = vunpack.c.l.b16 %v7176
        %v7347 = vunpack.c.l.b16 %v7177
        %v7348 = vunpack.c.l.b16 %v7178
        %v7349 = vunpack.c.l.b16 %v7179
        %v7350 = vunpack.c.l.b16 %v7180
        %v7351 = vunpack.c.l.b16 %v7181
        %v7352 = vunpack.c.l.b16 %v7182
        %v7353 = vunpack.c.l.b16 %v7183
        %v7354 = vunpack.c.l.b16 %v7184
        %v7355 = vunpack.c.l.b16 %v7185
        %v7356 = vunpack.c.l.b16 %v7186
        %v7357 = vunpack.c.l.b16 %v7187
        %v7358 = vunpack.c.l.b16 %v7188
        %v7359 = vunpack.c.l.b16 %v7189
        %v7360 = vunpack.c.l.b16 %v7190
        %v7361 = vunpack.c.l.b16 %v7191
        %v7362 = vunpack.c.l.b16 %v7192
        %v7363 = vunpack.c.l.b16 %v7193
        %v7364 = vunpack.c.l.b16 %v7194
        %v7365 = vunpack.c.l.b16 %v7195
        %v7366 = vunpack.c.l.b16 %v7196
        %v7367 = vunpack.c.l.b16 %v7197
        %v7368 = vunpack.c.l.b16 %v7198
        %v7369 = vunpack.c.l.b16 %v7199
        %v7370 = vunpack.c.l.b16 %v7200
        %v7371 = vunpack.c.l.b16 %v7201
        %v7372 = vunpack.c.l.b16 %v7202
        %v7373 = vunpack.c.l.b16 %v7203
        %v7374 = vunpack.c.l.b16 %v7204
        %v7375 = vunpack.c.l.b16 %v7205
        %v7376 = vunpack.c.l.b16 %v7206
        %v7377 = vunpack.c.l.b16 %v7207
        %v7378 = vunpack.c.l.b16 %v7208
        %v7379 = vunpack.c.l.b16 %v7209
        %v7380 = vunpack.c.l.b16 %v7210
        %v7381 = vunpack.c.l.b16 %v7211
        %v7382 = vunpack.c.l.b16 %v7212
        %v7383 = vunpack.c.l.b16 %v7213
        %v7384 = vunpack.c.l.b16 %v7214
        %v7385 = vunpack.c.l.b16 %v7215
        %v7386 = vunpack.c.l.b16 %v7216
        %v7387 = vunpack.c.l.b16 %v7217
        %v7388 = vunpack.c.l.b16 %v7218
        %v7389 = vunpack.c.l.b16 %v7219
        %v7390 = vunpack.c.l.b16 %v7220
        %v7391 = vunpack.c.l.b16 %v7221
        %v7392 = vunpack.c.l.b16 %v7222
        %v7393 = vunpack.c.l.b16 %v7223
        %v7394 = vunpack.c.l.b16 %v7224
        %v7395 = vunpack.c.l.b16 %v7225
        %v7396 = vunpack.c.l.b16 %v7226
        %v7397 = vunpack.c.l.b16 %v7227
        %v7398 = vunpack.c.l.b16 %v7228
        %v7399 = vunpack.c.l.b16 %v7229
        %v7400 = vunpack.c.l.b16 %v7230
        %v7401 = vunpack.c.l.b16 %v7231
        %v7402 = vunpack.c.l.b16 %v7232
        %v7403 = vunpack.c.l.b16 %v7233
        %v7404 = vunpack.c.l.b16 %v7234
        %v7405 = vpack.c.b16 %v7321, %v7320
        %v7406 = vpack.c.b16 %v7323, %v7322
        %v7407 = vpack.c.b16 %v7325, %v7324
        %v7408 = vpack.c.b16 %v7327, %v7326
        %v7409 = vpack.c.b16 %v7329, %v7328
        %v7410 = vpack.c.b16 %v7331, %v7330
        %v7411 = vpack.c.b16 %v7333, %v7332
        %v7412 = vpack.c.b16 %v7335, %v7334
        %v7413 = vpack.c.b16 %v7337, %v7336
        %v7414 = vpack.c.b16 %v7339, %v7338
        %v7415 = vpack.c.b16 %v7341, %v7340
        %v7416 = vpack.c.b16 %v7343, %v7342
        %v7417 = vpack.c.b16 %v7345, %v7344
        %v7418 = vpack.c.b16 %v7347, %v7346
        %v7419 = vpack.c.b16 %v7349, %v7348
        %v7420 = vpack.c.b16 %v7351, %v7350
        %v7421 = vpack.c.b16 %v7353, %v7352
        %v7422 = vpack.c.b16 %v7355, %v7354
        %v7423 = vpack.c.b16 %v7357, %v7356
        %v7424 = vpack.c.b16 %v7359, %v7358
        %v7425 = vpack.c.b16 %v7361, %v7360
        %v7426 = vpack.c.b16 %v7363, %v7362
        %v7427 = vpack.c.b16 %v7365, %v7364
        %v7428 = vpack.c.b16 %v7367, %v7366
        %v7429 = vpack.c.b16 %v7369, %v7368
        %v7430 = vpack.c.b16 %v7371, %v7370
        %v7431 = vpack.c.b16 %v7373, %v7372
        %v7432 = vpack.c.b16 %v7375, %v7374
        %v7433 = vpack.c.b16 %v7377, %v7376
        %v7434 = vpack.c.b16 %v7379, %v7378
        %v7435 = vpack.c.b16 %v7381, %v7380
        %v7436 = vpack.c.b16 %v7383, %v7382
        %v7437 = vpack.c.b16 %v7385, %v7384
        %v7438 = vpack.c.b16 %v7387, %v7386
        %v7439 = vpack.c.b16 %v7389, %v7388
        %v7440 = vpack.c.b16 %v7391, %v7390
        %v7441 = vpack.c.b16 %v7393, %v7392
        %v7442 = vpack.c.b16 %v7395, %v7394
        %v7443 = vpack.c.b16 %v7397, %v7396
        %v7444 = vpack.c.b16 %v7399, %v7398
        %v7445 = vpack.c.b16 %v7401, %v7400
        %v7446 = vpack.c.b16 %v7403, %v7402
        %v7447 = vpack.c.b16 %v7404, %v7404
        %v7491 = vsel %vm946, %v7148, 0
        %v7494 = vsel %vm950, %v7447, 0
        %7496 = vmatpush.bf16.msra.mxu0 %v7412
        %7497 = vmatpush.bf16.msra.mxu0 %v7411
        %7498 = vmatpush.bf16.msra.mxu0 %v7410
        %7499 = vmatpush.bf16.msra.mxu0 %v7409
        %7500 = vmatpush.bf16.msra.mxu0 %v7408
        %7501 = vmatpush.bf16.msra.mxu0 %v7407
        %7502 = vmatpush.bf16.msra.mxu0 %v7406
        %7503 = vmatpush.bf16.msra.mxu0 %v7405
        %7504 = vmatmul.bf16.gmra.mxu0 %v7143
        %v7505 = vpop.f32.mrf.mxu0
        %v7506 = vadd.f32 0.0, %v7505
        %v7507 = vpop.f32.mrf.mxu0
        %7508 = vdwg.mxu0
        %7509 = vmatpush.bf16.msra.mxu0 %v7420
        %7510 = vmatpush.bf16.msra.mxu0 %v7419
        %7511 = vmatpush.bf16.msra.mxu0 %v7418
        %7512 = vmatpush.bf16.msra.mxu0 %v7417
        %7513 = vmatpush.bf16.msra.mxu0 %v7416
        %7514 = vmatpush.bf16.msra.mxu0 %v7415
        %7515 = vmatpush.bf16.msra.mxu0 %v7414
        %7516 = vmatpush.bf16.msra.mxu0 %v7413
        %7517 = vmatmul.bf16.gmra.mxu0 %v7144
        %v7518 = vpop.f32.mrf.mxu0
        %v7519 = vadd.f32 %v7506, %v7518
        %v7520 = vpop.f32.mrf.mxu0
        %7521 = vdwg.mxu0
        %7522 = vmatpush.bf16.msra.mxu0 %v7428
        %7523 = vmatpush.bf16.msra.mxu0 %v7427
        %7524 = vmatpush.bf16.msra.mxu0 %v7426
        %7525 = vmatpush.bf16.msra.mxu0 %v7425
        %7526 = vmatpush.bf16.msra.mxu0 %v7424
        %7527 = vmatpush.bf16.msra.mxu0 %v7423
        %7528 = vmatpush.bf16.msra.mxu0 %v7422
        %7529 = vmatpush.bf16.msra.mxu0 %v7421
        %7530 = vmatmul.bf16.gmra.mxu0 %v7145
        %v7531 = vpop.f32.mrf.mxu0
        %v7532 = vadd.f32 %v7519, %v7531
        %v7533 = vpop.f32.mrf.mxu0
        %7534 = vdwg.mxu0
        %7535 = vmatpush.bf16.msra.mxu0 %v7436
        %7536 = vmatpush.bf16.msra.mxu0 %v7435
        %7537 = vmatpush.bf16.msra.mxu0 %v7434
        %7538 = vmatpush.bf16.msra.mxu0 %v7433
        %7539 = vmatpush.bf16.msra.mxu0 %v7432
        %7540 = vmatpush.bf16.msra.mxu0 %v7431
        %7541 = vmatpush.bf16.msra.mxu0 %v7430
        %7542 = vmatpush.bf16.msra.mxu0 %v7429
        %7543 = vmatmul.bf16.gmra.mxu0 %v7146
        %v7544 = vpop.f32.mrf.mxu0
        %v7545 = vadd.f32 %v7532, %v7544
        %v7546 = vpop.f32.mrf.mxu0
        %7547 = vdwg.mxu0
        %7548 = vmatpush.bf16.msra.mxu0 %v7444
        %7549 = vmatpush.bf16.msra.mxu0 %v7443
        %7550 = vmatpush.bf16.msra.mxu0 %v7442
        %7551 = vmatpush.bf16.msra.mxu0 %v7441
        %7552 = vmatpush.bf16.msra.mxu0 %v7440
        %7553 = vmatpush.bf16.msra.mxu0 %v7439
        %7554 = vmatpush.bf16.msra.mxu0 %v7438
        %7555 = vmatpush.bf16.msra.mxu0 %v7437
        %7556 = vmatmul.bf16.gmra.mxu0 %v7147
        %v7557 = vpop.f32.mrf.mxu0
        %v7558 = vadd.f32 %v7545, %v7557
        %v7559 = vpop.f32.mrf.mxu0
        %7560 = vdwg.mxu0
        %7561 = vmatpush.bf16.msra.mxu0 0
        %7562 = vmatpush.bf16.msra.mxu0 0
        %7563 = vmatpush.bf16.msra.mxu0 0
        %7564 = vmatpush.bf16.msra.mxu0 0
        %7565 = vmatpush.bf16.msra.mxu0 0
        %7566 = vmatpush.bf16.msra.mxu0 %v7494
        %7567 = vmatpush.bf16.msra.mxu0 %v7446
        %7568 = vmatpush.bf16.msra.mxu0 %v7445
        %7569 = vmatmul.bf16.gmra.mxu0 %v7491
        %v7570 = vpop.f32.mrf.mxu0
        %v7571 = vadd.f32 %v7558, %v7570
        %v7572 = vpop.f32.mrf.mxu0
        %7573 = vdwg.mxu0
        %v7574 = vadd.f32 %v7057, %v7571
        %s7575 = sadd.s32 %s312, 14
        %s7576 = smul.u32 %s7575, 128
        %s7577 = sld [smem:[#allocation2 + %s7576]]
        %v7578 = vstv %s7577
        %v7579 = vmul.f32 %v7578, %v315
        %v7580 = vmul.f32 %v7578, %v316
        %s7581 = sadd.s32 %s7576, 1
        %s7582 = sld [smem:[#allocation2 + %s7581]]
        %v7583 = vstv %s7582
        %v7584 = vmul.f32 %v7583, %v323
        %v7585 = vmul.f32 %v7583, %v324
        %v7586 = vadd.f32 %v7579, %v7584
        %v7587 = vadd.f32 %v7580, %v7585
        %s7588 = sadd.s32 %s7576, 2
        %s7589 = sld [smem:[#allocation2 + %s7588]]
        %v7590 = vstv %s7589
        %v7591 = vmul.f32 %v7590, %v333
        %v7592 = vmul.f32 %v7590, %v334
        %v7593 = vadd.f32 %v7586, %v7591
        %v7594 = vadd.f32 %v7587, %v7592
        %s7595 = sadd.s32 %s7576, 3
        %s7596 = sld [smem:[#allocation2 + %s7595]]
        %v7597 = vstv %s7596
        %v7598 = vmul.f32 %v7597, %v343
        %v7599 = vmul.f32 %v7597, %v344
        %v7600 = vadd.f32 %v7593, %v7598
        %v7601 = vadd.f32 %v7594, %v7599
        %s7602 = sadd.s32 %s7576, 4
        %s7603 = sld [smem:[#allocation2 + %s7602]]
        %v7604 = vstv %s7603
        %v7605 = vmul.f32 %v7604, %v353
        %v7606 = vmul.f32 %v7604, %v354
        %v7607 = vadd.f32 %v7600, %v7605
        %v7608 = vadd.f32 %v7601, %v7606
        %s7609 = sadd.s32 %s7576, 5
        %s7610 = sld [smem:[#allocation2 + %s7609]]
        %v7611 = vstv %s7610
        %v7612 = vmul.f32 %v7611, %v363
        %v7613 = vmul.f32 %v7611, %v364
        %v7614 = vadd.f32 %v7607, %v7612
        %v7615 = vadd.f32 %v7608, %v7613
        %s7616 = sadd.s32 %s7576, 6
        %s7617 = sld [smem:[#allocation2 + %s7616]]
        %v7618 = vstv %s7617
        %v7619 = vmul.f32 %v7618, %v373
        %v7620 = vmul.f32 %v7618, %v374
        %v7621 = vadd.f32 %v7614, %v7619
        %v7622 = vadd.f32 %v7615, %v7620
        %s7623 = sadd.s32 %s7576, 7
        %s7624 = sld [smem:[#allocation2 + %s7623]]
        %v7625 = vstv %s7624
        %v7626 = vmul.f32 %v7625, %v383
        %v7627 = vmul.f32 %v7625, %v384
        %v7628 = vadd.f32 %v7621, %v7626
        %v7629 = vadd.f32 %v7622, %v7627
        %s7630 = sadd.s32 %s7576, 8
        %s7631 = sld [smem:[#allocation2 + %s7630]]
        %v7632 = vstv %s7631
        %v7633 = vmul.f32 %v7632, %v393
        %v7634 = vmul.f32 %v7632, %v394
        %v7635 = vadd.f32 %v7628, %v7633
        %v7636 = vadd.f32 %v7629, %v7634
        %s7637 = sld [smem:[#allocation4 + %s7575]]
        %v7638 = vstv %s7637
        %v7639 = vadd.f32 %v7635, %v7638
        %v7640 = vadd.f32 %v7636, %v7638
        %v7641 = vmax.f32 %v7639, 0.0
        %v7642 = vmax.f32 %v7640, 0.0
        %7645 = vst [vmem:[#allocation1] ss:$4 sm:$0xff] %v7641
        %s7646 = scalar_lea.vmem [#allocation1], 32
        %7647 = vst [vmem:[%s7646] ss:$4 sm:$0xff] %v7642
        %v7648 = vld.sshfl [vmem:[#allocation1] sm:$0xff pattern:$0x73625140]
        %v7649 = vld.sshfl [vmem:[#allocation1 + $0x8] sm:$0xff pattern:$0x73625140]
        %v7650 = vld.sshfl [vmem:[#allocation1 + $0x10] sm:$0xff pattern:$0x73625140]
        %v7651 = vld.sshfl [vmem:[#allocation1 + $0x18] sm:$0xff pattern:$0x73625140]
        %v7652 = vld.sshfl [vmem:[#allocation1 + $0x20] sm:$0xff pattern:$0x73625140]
        %v7653 = vld.sshfl [vmem:[#allocation1 + $0x28] sm:$0xff pattern:$0x73625140]
        %v7660 = vpack.c.bf16 %v7648, %v7648
        %v7661 = vpack.c.bf16 %v7649, %v7649
        %v7662 = vpack.c.bf16 %v7650, %v7650
        %v7663 = vpack.c.bf16 %v7651, %v7651
        %v7664 = vpack.c.bf16 %v7652, %v7652
        %v7665 = vpack.c.bf16 %v7653, %v7653
        %s7666 = scalar_lea.vmem %s305, 4760
        %v7667 = vld [vmem:[%s7666] sm:$0xf]
        %v7668 = vld [vmem:[%s7666 + $0x4] sm:$0xf]
        %v7669 = vld [vmem:[%s7666 + $0x8] sm:$0xf]
        %v7670 = vld [vmem:[%s7666 + $0xc] sm:$0xf]
        %v7671 = vld [vmem:[%s7666 + $0x10] sm:$0xf]
        %v7672 = vld [vmem:[%s7666 + $0x14] sm:$0xf]
        %v7673 = vld [vmem:[%s7666 + $0x18] sm:$0xf]
        %v7674 = vld [vmem:[%s7666 + $0x1c] sm:$0xf]
        %v7675 = vld [vmem:[%s7666 + $0x20] sm:$0xf]
        %v7676 = vld [vmem:[%s7666 + $0x24] sm:$0xf]
        %v7677 = vld [vmem:[%s7666 + $0x28] sm:$0xf]
        %v7678 = vld [vmem:[%s7666 + $0x2c] sm:$0xf]
        %v7679 = vld [vmem:[%s7666 + $0x30] sm:$0xf]
        %v7680 = vld [vmem:[%s7666 + $0x34] sm:$0xf]
        %v7681 = vld [vmem:[%s7666 + $0x38] sm:$0xf]
        %v7682 = vld [vmem:[%s7666 + $0x3c] sm:$0xf]
        %v7683 = vld [vmem:[%s7666 + $0x40] sm:$0xf]
        %v7684 = vld [vmem:[%s7666 + $0x44] sm:$0xf]
        %v7685 = vld [vmem:[%s7666 + $0x48] sm:$0xf]
        %v7686 = vld [vmem:[%s7666 + $0x4c] sm:$0xf]
        %v7687 = vld [vmem:[%s7666 + $0x50] sm:$0xf]
        %v7688 = vld [vmem:[%s7666 + $0x54] sm:$0xf]
        %v7689 = vld [vmem:[%s7666 + $0x58] sm:$0xf]
        %v7690 = vld [vmem:[%s7666 + $0x5c] sm:$0xf]
        %v7691 = vld [vmem:[%s7666 + $0x60] sm:$0xf]
        %v7692 = vld [vmem:[%s7666 + $0x64] sm:$0xf]
        %v7693 = vld [vmem:[%s7666 + $0x68] sm:$0xf]
        %v7694 = vld [vmem:[%s7666 + $0x6c] sm:$0xf]
        %v7695 = vld [vmem:[%s7666 + $0x70] sm:$0xf]
        %v7696 = vld [vmem:[%s7666 + $0x74] sm:$0xf]
        %v7697 = vld [vmem:[%s7666 + $0x78] sm:$0xf]
        %v7698 = vld [vmem:[%s7666 + $0x7c] sm:$0xf]
        %v7699 = vld [vmem:[%s7666 + $0x80] sm:$0xf]
        %v7700 = vld [vmem:[%s7666 + $0x84] sm:$0xf]
        %v7701 = vld [vmem:[%s7666 + $0x88] sm:$0xf]
        %v7702 = vld [vmem:[%s7666 + $0x8c] sm:$0xf]
        %v7703 = vld [vmem:[%s7666 + $0x90] sm:$0xf]
        %v7704 = vld [vmem:[%s7666 + $0x94] sm:$0xf]
        %v7705 = vld [vmem:[%s7666 + $0x98] sm:$0xf]
        %v7706 = vld [vmem:[%s7666 + $0x9c] sm:$0xf]
        %v7707 = vld [vmem:[%s7666 + $0xa0] sm:$0xf]
        %v7708 = vld [vmem:[%s7666 + $0xa4] sm:$0xf]
        %v7709 = vld [vmem:[%s7666 + $0xa8] sm:$0xf]
        %v7710 = vld [vmem:[%s7666 + $0xac] sm:$0xf]
        %v7711 = vld [vmem:[%s7666 + $0xb0] sm:$0xf]
        %v7712 = vld [vmem:[%s7666 + $0xb4] sm:$0xf]
        %v7713 = vld [vmem:[%s7666 + $0xb8] sm:$0xf]
        %v7714 = vld [vmem:[%s7666 + $0xbc] sm:$0xf]
        %v7715 = vld [vmem:[%s7666 + $0xc0] sm:$0xf]
        %v7716 = vld [vmem:[%s7666 + $0xc4] sm:$0xf]
        %v7717 = vld [vmem:[%s7666 + $0xc8] sm:$0xf]
        %v7718 = vld [vmem:[%s7666 + $0xcc] sm:$0xf]
        %v7719 = vld [vmem:[%s7666 + $0xd0] sm:$0xf]
        %v7720 = vld [vmem:[%s7666 + $0xd4] sm:$0xf]
        %v7721 = vld [vmem:[%s7666 + $0xd8] sm:$0xf]
        %v7722 = vld [vmem:[%s7666 + $0xdc] sm:$0xf]
        %v7723 = vld [vmem:[%s7666 + $0xe0] sm:$0xf]
        %v7724 = vld [vmem:[%s7666 + $0xe4] sm:$0xf]
        %v7725 = vld [vmem:[%s7666 + $0xe8] sm:$0xf]
        %v7726 = vld [vmem:[%s7666 + $0xec] sm:$0xf]
        %v7727 = vld [vmem:[%s7666 + $0xf0] sm:$0xf]
        %v7728 = vld [vmem:[%s7666 + $0xf4] sm:$0xf]
        %v7729 = vld [vmem:[%s7666 + $0xf8] sm:$0xf]
        %v7730 = vld [vmem:[%s7666 + $0xfc] sm:$0xf]
        %v7731 = vld [vmem:[%s7666 + $0x100] sm:$0xf]
        %v7732 = vld [vmem:[%s7666 + $0x104] sm:$0xf]
        %v7733 = vld [vmem:[%s7666 + $0x108] sm:$0xf]
        %v7734 = vld [vmem:[%s7666 + $0x10c] sm:$0xf]
        %v7735 = vld [vmem:[%s7666 + $0x110] sm:$0xf]
        %v7736 = vld [vmem:[%s7666 + $0x114] sm:$0xf]
        %v7737 = vld [vmem:[%s7666 + $0x118] sm:$0xf]
        %v7738 = vld [vmem:[%s7666 + $0x11c] sm:$0xf]
        %v7739 = vld [vmem:[%s7666 + $0x120] sm:$0xf]
        %v7740 = vld [vmem:[%s7666 + $0x124] sm:$0xf]
        %v7741 = vld [vmem:[%s7666 + $0x128] sm:$0xf]
        %v7742 = vld [vmem:[%s7666 + $0x12c] sm:$0xf]
        %v7743 = vld [vmem:[%s7666 + $0x130] sm:$0xf]
        %v7744 = vld [vmem:[%s7666 + $0x134] sm:$0xf]
        %v7745 = vld [vmem:[%s7666 + $0x138] sm:$0xf]
        %v7746 = vld [vmem:[%s7666 + $0x13c] sm:$0xf]
        %v7747 = vld [vmem:[%s7666 + $0x140] sm:$0xf]
        %v7748 = vld [vmem:[%s7666 + $0x144] sm:$0xf]
        %v7749 = vld [vmem:[%s7666 + $0x148] sm:$0xf]
        %v7750 = vld [vmem:[%s7666 + $0x14c] sm:$0xf]
        %v7751 = vld [vmem:[%s7666 + $0x150] sm:$0x3]
        %v7837 = vunpack.c.l.b16 %v7667
        %v7838 = vunpack.c.l.b16 %v7668
        %v7839 = vunpack.c.l.b16 %v7669
        %v7840 = vunpack.c.l.b16 %v7670
        %v7841 = vunpack.c.l.b16 %v7671
        %v7842 = vunpack.c.l.b16 %v7672
        %v7843 = vunpack.c.l.b16 %v7673
        %v7844 = vunpack.c.l.b16 %v7674
        %v7845 = vunpack.c.l.b16 %v7675
        %v7846 = vunpack.c.l.b16 %v7676
        %v7847 = vunpack.c.l.b16 %v7677
        %v7848 = vunpack.c.l.b16 %v7678
        %v7849 = vunpack.c.l.b16 %v7679
        %v7850 = vunpack.c.l.b16 %v7680
        %v7851 = vunpack.c.l.b16 %v7681
        %v7852 = vunpack.c.l.b16 %v7682
        %v7853 = vunpack.c.l.b16 %v7683
        %v7854 = vunpack.c.l.b16 %v7684
        %v7855 = vunpack.c.l.b16 %v7685
        %v7856 = vunpack.c.l.b16 %v7686
        %v7857 = vunpack.c.l.b16 %v7687
        %v7858 = vunpack.c.l.b16 %v7688
        %v7859 = vunpack.c.l.b16 %v7689
        %v7860 = vunpack.c.l.b16 %v7690
        %v7861 = vunpack.c.l.b16 %v7691
        %v7862 = vunpack.c.l.b16 %v7692
        %v7863 = vunpack.c.l.b16 %v7693
        %v7864 = vunpack.c.l.b16 %v7694
        %v7865 = vunpack.c.l.b16 %v7695
        %v7866 = vunpack.c.l.b16 %v7696
        %v7867 = vunpack.c.l.b16 %v7697
        %v7868 = vunpack.c.l.b16 %v7698
        %v7869 = vunpack.c.l.b16 %v7699
        %v7870 = vunpack.c.l.b16 %v7700
        %v7871 = vunpack.c.l.b16 %v7701
        %v7872 = vunpack.c.l.b16 %v7702
        %v7873 = vunpack.c.l.b16 %v7703
        %v7874 = vunpack.c.l.b16 %v7704
        %v7875 = vunpack.c.l.b16 %v7705
        %v7876 = vunpack.c.l.b16 %v7706
        %v7877 = vunpack.c.l.b16 %v7707
        %v7878 = vunpack.c.l.b16 %v7708
        %v7879 = vunpack.c.l.b16 %v7709
        %v7880 = vunpack.c.l.b16 %v7710
        %v7881 = vunpack.c.l.b16 %v7711
        %v7882 = vunpack.c.l.b16 %v7712
        %v7883 = vunpack.c.l.b16 %v7713
        %v7884 = vunpack.c.l.b16 %v7714
        %v7885 = vunpack.c.l.b16 %v7715
        %v7886 = vunpack.c.l.b16 %v7716
        %v7887 = vunpack.c.l.b16 %v7717
        %v7888 = vunpack.c.l.b16 %v7718
        %v7889 = vunpack.c.l.b16 %v7719
        %v7890 = vunpack.c.l.b16 %v7720
        %v7891 = vunpack.c.l.b16 %v7721
        %v7892 = vunpack.c.l.b16 %v7722
        %v7893 = vunpack.c.l.b16 %v7723
        %v7894 = vunpack.c.l.b16 %v7724
        %v7895 = vunpack.c.l.b16 %v7725
        %v7896 = vunpack.c.l.b16 %v7726
        %v7897 = vunpack.c.l.b16 %v7727
        %v7898 = vunpack.c.l.b16 %v7728
        %v7899 = vunpack.c.l.b16 %v7729
        %v7900 = vunpack.c.l.b16 %v7730
        %v7901 = vunpack.c.l.b16 %v7731
        %v7902 = vunpack.c.l.b16 %v7732
        %v7903 = vunpack.c.l.b16 %v7733
        %v7904 = vunpack.c.l.b16 %v7734
        %v7905 = vunpack.c.l.b16 %v7735
        %v7906 = vunpack.c.l.b16 %v7736
        %v7907 = vunpack.c.l.b16 %v7737
        %v7908 = vunpack.c.l.b16 %v7738
        %v7909 = vunpack.c.l.b16 %v7739
        %v7910 = vunpack.c.l.b16 %v7740
        %v7911 = vunpack.c.l.b16 %v7741
        %v7912 = vunpack.c.l.b16 %v7742
        %v7913 = vunpack.c.l.b16 %v7743
        %v7914 = vunpack.c.l.b16 %v7744
        %v7915 = vunpack.c.l.b16 %v7745
        %v7916 = vunpack.c.l.b16 %v7746
        %v7917 = vunpack.c.l.b16 %v7747
        %v7918 = vunpack.c.l.b16 %v7748
        %v7919 = vunpack.c.l.b16 %v7749
        %v7920 = vunpack.c.l.b16 %v7750
        %v7921 = vunpack.c.l.b16 %v7751
        %v7922 = vpack.c.b16 %v7838, %v7837
        %v7923 = vpack.c.b16 %v7840, %v7839
        %v7924 = vpack.c.b16 %v7842, %v7841
        %v7925 = vpack.c.b16 %v7844, %v7843
        %v7926 = vpack.c.b16 %v7846, %v7845
        %v7927 = vpack.c.b16 %v7848, %v7847
        %v7928 = vpack.c.b16 %v7850, %v7849
        %v7929 = vpack.c.b16 %v7852, %v7851
        %v7930 = vpack.c.b16 %v7854, %v7853
        %v7931 = vpack.c.b16 %v7856, %v7855
        %v7932 = vpack.c.b16 %v7858, %v7857
        %v7933 = vpack.c.b16 %v7860, %v7859
        %v7934 = vpack.c.b16 %v7862, %v7861
        %v7935 = vpack.c.b16 %v7864, %v7863
        %v7936 = vpack.c.b16 %v7866, %v7865
        %v7937 = vpack.c.b16 %v7868, %v7867
        %v7938 = vpack.c.b16 %v7870, %v7869
        %v7939 = vpack.c.b16 %v7872, %v7871
        %v7940 = vpack.c.b16 %v7874, %v7873
        %v7941 = vpack.c.b16 %v7876, %v7875
        %v7942 = vpack.c.b16 %v7878, %v7877
        %v7943 = vpack.c.b16 %v7880, %v7879
        %v7944 = vpack.c.b16 %v7882, %v7881
        %v7945 = vpack.c.b16 %v7884, %v7883
        %v7946 = vpack.c.b16 %v7886, %v7885
        %v7947 = vpack.c.b16 %v7888, %v7887
        %v7948 = vpack.c.b16 %v7890, %v7889
        %v7949 = vpack.c.b16 %v7892, %v7891
        %v7950 = vpack.c.b16 %v7894, %v7893
        %v7951 = vpack.c.b16 %v7896, %v7895
        %v7952 = vpack.c.b16 %v7898, %v7897
        %v7953 = vpack.c.b16 %v7900, %v7899
        %v7954 = vpack.c.b16 %v7902, %v7901
        %v7955 = vpack.c.b16 %v7904, %v7903
        %v7956 = vpack.c.b16 %v7906, %v7905
        %v7957 = vpack.c.b16 %v7908, %v7907
        %v7958 = vpack.c.b16 %v7910, %v7909
        %v7959 = vpack.c.b16 %v7912, %v7911
        %v7960 = vpack.c.b16 %v7914, %v7913
        %v7961 = vpack.c.b16 %v7916, %v7915
        %v7962 = vpack.c.b16 %v7918, %v7917
        %v7963 = vpack.c.b16 %v7920, %v7919
        %v7964 = vpack.c.b16 %v7921, %v7921
        %v8008 = vsel %vm946, %v7665, 0
        %v8011 = vsel %vm950, %v7964, 0
        %8013 = vmatpush.bf16.msra.mxu0 %v7929
        %8014 = vmatpush.bf16.msra.mxu0 %v7928
        %8015 = vmatpush.bf16.msra.mxu0 %v7927
        %8016 = vmatpush.bf16.msra.mxu0 %v7926
        %8017 = vmatpush.bf16.msra.mxu0 %v7925
        %8018 = vmatpush.bf16.msra.mxu0 %v7924
        %8019 = vmatpush.bf16.msra.mxu0 %v7923
        %8020 = vmatpush.bf16.msra.mxu0 %v7922
        %8021 = vmatmul.bf16.gmra.mxu0 %v7660
        %v8022 = vpop.f32.mrf.mxu0
        %v8023 = vadd.f32 0.0, %v8022
        %v8024 = vpop.f32.mrf.mxu0
        %8025 = vdwg.mxu0
        %8026 = vmatpush.bf16.msra.mxu0 %v7937
        %8027 = vmatpush.bf16.msra.mxu0 %v7936
        %8028 = vmatpush.bf16.msra.mxu0 %v7935
        %8029 = vmatpush.bf16.msra.mxu0 %v7934
        %8030 = vmatpush.bf16.msra.mxu0 %v7933
        %8031 = vmatpush.bf16.msra.mxu0 %v7932
        %8032 = vmatpush.bf16.msra.mxu0 %v7931
        %8033 = vmatpush.bf16.msra.mxu0 %v7930
        %8034 = vmatmul.bf16.gmra.mxu0 %v7661
        %v8035 = vpop.f32.mrf.mxu0
        %v8036 = vadd.f32 %v8023, %v8035
        %v8037 = vpop.f32.mrf.mxu0
        %8038 = vdwg.mxu0
        %8039 = vmatpush.bf16.msra.mxu0 %v7945
        %8040 = vmatpush.bf16.msra.mxu0 %v7944
        %8041 = vmatpush.bf16.msra.mxu0 %v7943
        %8042 = vmatpush.bf16.msra.mxu0 %v7942
        %8043 = vmatpush.bf16.msra.mxu0 %v7941
        %8044 = vmatpush.bf16.msra.mxu0 %v7940
        %8045 = vmatpush.bf16.msra.mxu0 %v7939
        %8046 = vmatpush.bf16.msra.mxu0 %v7938
        %8047 = vmatmul.bf16.gmra.mxu0 %v7662
        %v8048 = vpop.f32.mrf.mxu0
        %v8049 = vadd.f32 %v8036, %v8048
        %v8050 = vpop.f32.mrf.mxu0
        %8051 = vdwg.mxu0
        %8052 = vmatpush.bf16.msra.mxu0 %v7953
        %8053 = vmatpush.bf16.msra.mxu0 %v7952
        %8054 = vmatpush.bf16.msra.mxu0 %v7951
        %8055 = vmatpush.bf16.msra.mxu0 %v7950
        %8056 = vmatpush.bf16.msra.mxu0 %v7949
        %8057 = vmatpush.bf16.msra.mxu0 %v7948
        %8058 = vmatpush.bf16.msra.mxu0 %v7947
        %8059 = vmatpush.bf16.msra.mxu0 %v7946
        %8060 = vmatmul.bf16.gmra.mxu0 %v7663
        %v8061 = vpop.f32.mrf.mxu0
        %v8062 = vadd.f32 %v8049, %v8061
        %v8063 = vpop.f32.mrf.mxu0
        %8064 = vdwg.mxu0
        %8065 = vmatpush.bf16.msra.mxu0 %v7961
        %8066 = vmatpush.bf16.msra.mxu0 %v7960
        %8067 = vmatpush.bf16.msra.mxu0 %v7959
        %8068 = vmatpush.bf16.msra.mxu0 %v7958
        %8069 = vmatpush.bf16.msra.mxu0 %v7957
        %8070 = vmatpush.bf16.msra.mxu0 %v7956
        %8071 = vmatpush.bf16.msra.mxu0 %v7955
        %8072 = vmatpush.bf16.msra.mxu0 %v7954
        %8073 = vmatmul.bf16.gmra.mxu0 %v7664
        %v8074 = vpop.f32.mrf.mxu0
        %v8075 = vadd.f32 %v8062, %v8074
        %v8076 = vpop.f32.mrf.mxu0
        %8077 = vdwg.mxu0
        %8078 = vmatpush.bf16.msra.mxu0 0
        %8079 = vmatpush.bf16.msra.mxu0 0
        %8080 = vmatpush.bf16.msra.mxu0 0
        %8081 = vmatpush.bf16.msra.mxu0 0
        %8082 = vmatpush.bf16.msra.mxu0 0
        %8083 = vmatpush.bf16.msra.mxu0 %v8011
        %8084 = vmatpush.bf16.msra.mxu0 %v7963
        %8085 = vmatpush.bf16.msra.mxu0 %v7962
        %8086 = vmatmul.bf16.gmra.mxu0 %v8008
        %v8087 = vpop.f32.mrf.mxu0
        %v8088 = vadd.f32 %v8075, %v8087
        %v8089 = vpop.f32.mrf.mxu0
        %8090 = vdwg.mxu0
        %v8091 = vadd.f32 %v7574, %v8088
        %s8092 = sadd.s32 %s312, 15
        %s8093 = smul.u32 %s8092, 128
        %s8094 = sld [smem:[#allocation2 + %s8093]]
        %v8095 = vstv %s8094
        %v8096 = vmul.f32 %v8095, %v315
        %v8097 = vmul.f32 %v8095, %v316
        %s8098 = sadd.s32 %s8093, 1
        %s8099 = sld [smem:[#allocation2 + %s8098]]
        %v8100 = vstv %s8099
        %v8101 = vmul.f32 %v8100, %v323
        %v8102 = vmul.f32 %v8100, %v324
        %v8103 = vadd.f32 %v8096, %v8101
        %v8104 = vadd.f32 %v8097, %v8102
        %s8105 = sadd.s32 %s8093, 2
        %s8106 = sld [smem:[#allocation2 + %s8105]]
        %v8107 = vstv %s8106
        %v8108 = vmul.f32 %v8107, %v333
        %v8109 = vmul.f32 %v8107, %v334
        %v8110 = vadd.f32 %v8103, %v8108
        %v8111 = vadd.f32 %v8104, %v8109
        %s8112 = sadd.s32 %s8093, 3
        %s8113 = sld [smem:[#allocation2 + %s8112]]
        %v8114 = vstv %s8113
        %v8115 = vmul.f32 %v8114, %v343
        %v8116 = vmul.f32 %v8114, %v344
        %v8117 = vadd.f32 %v8110, %v8115
        %v8118 = vadd.f32 %v8111, %v8116
        %s8119 = sadd.s32 %s8093, 4
        %s8120 = sld [smem:[#allocation2 + %s8119]]
        %v8121 = vstv %s8120
        %v8122 = vmul.f32 %v8121, %v353
        %v8123 = vmul.f32 %v8121, %v354
        %v8124 = vadd.f32 %v8117, %v8122
        %v8125 = vadd.f32 %v8118, %v8123
        %s8126 = sadd.s32 %s8093, 5
        %s8127 = sld [smem:[#allocation2 + %s8126]]
        %v8128 = vstv %s8127
        %v8129 = vmul.f32 %v8128, %v363
        %v8130 = vmul.f32 %v8128, %v364
        %v8131 = vadd.f32 %v8124, %v8129
        %v8132 = vadd.f32 %v8125, %v8130
        %s8133 = sadd.s32 %s8093, 6
        %s8134 = sld [smem:[#allocation2 + %s8133]]
        %v8135 = vstv %s8134
        %v8136 = vmul.f32 %v8135, %v373
        %v8137 = vmul.f32 %v8135, %v374
        %v8138 = vadd.f32 %v8131, %v8136
        %v8139 = vadd.f32 %v8132, %v8137
        %s8140 = sadd.s32 %s8093, 7
        %s8141 = sld [smem:[#allocation2 + %s8140]]
        %v8142 = vstv %s8141
        %v8143 = vmul.f32 %v8142, %v383
        %v8144 = vmul.f32 %v8142, %v384
        %v8145 = vadd.f32 %v8138, %v8143
        %v8146 = vadd.f32 %v8139, %v8144
        %s8147 = sadd.s32 %s8093, 8
        %s8148 = sld [smem:[#allocation2 + %s8147]]
        %v8149 = vstv %s8148
        %v8150 = vmul.f32 %v8149, %v393
        %v8151 = vmul.f32 %v8149, %v394
        %v8152 = vadd.f32 %v8145, %v8150
        %v8153 = vadd.f32 %v8146, %v8151
        %s8154 = sld [smem:[#allocation4 + %s8092]]
        %v8155 = vstv %s8154
        %v8156 = vadd.f32 %v8152, %v8155
        %v8157 = vadd.f32 %v8153, %v8155
        %v8158 = vmax.f32 %v8156, 0.0
        %v8159 = vmax.f32 %v8157, 0.0
        %8162 = vst [vmem:[#allocation1] ss:$4 sm:$0xff] %v8158
        %s8163 = scalar_lea.vmem [#allocation1], 32
        %8164 = vst [vmem:[%s8163] ss:$4 sm:$0xff] %v8159
        %v8165 = vld.sshfl [vmem:[#allocation1] sm:$0xff pattern:$0x73625140]
        %v8166 = vld.sshfl [vmem:[#allocation1 + $0x8] sm:$0xff pattern:$0x73625140]
        %v8167 = vld.sshfl [vmem:[#allocation1 + $0x10] sm:$0xff pattern:$0x73625140]
        %v8168 = vld.sshfl [vmem:[#allocation1 + $0x18] sm:$0xff pattern:$0x73625140]
        %v8169 = vld.sshfl [vmem:[#allocation1 + $0x20] sm:$0xff pattern:$0x73625140]
        %v8170 = vld.sshfl [vmem:[#allocation1 + $0x28] sm:$0xff pattern:$0x73625140]
        %v8177 = vpack.c.bf16 %v8165, %v8165
        %v8178 = vpack.c.bf16 %v8166, %v8166
        %v8179 = vpack.c.bf16 %v8167, %v8167
        %v8180 = vpack.c.bf16 %v8168, %v8168
        %v8181 = vpack.c.bf16 %v8169, %v8169
        %v8182 = vpack.c.bf16 %v8170, %v8170
        %s8183 = scalar_lea.vmem %s305, 5100
        %v8184 = vld [vmem:[%s8183] sm:$0xf]
        %v8185 = vld [vmem:[%s8183 + $0x4] sm:$0xf]
        %v8186 = vld [vmem:[%s8183 + $0x8] sm:$0xf]
        %v8187 = vld [vmem:[%s8183 + $0xc] sm:$0xf]
        %v8188 = vld [vmem:[%s8183 + $0x10] sm:$0xf]
        %v8189 = vld [vmem:[%s8183 + $0x14] sm:$0xf]
        %v8190 = vld [vmem:[%s8183 + $0x18] sm:$0xf]
        %v8191 = vld [vmem:[%s8183 + $0x1c] sm:$0xf]
        %v8192 = vld [vmem:[%s8183 + $0x20] sm:$0xf]
        %v8193 = vld [vmem:[%s8183 + $0x24] sm:$0xf]
        %v8194 = vld [vmem:[%s8183 + $0x28] sm:$0xf]
        %v8195 = vld [vmem:[%s8183 + $0x2c] sm:$0xf]
        %v8196 = vld [vmem:[%s8183 + $0x30] sm:$0xf]
        %v8197 = vld [vmem:[%s8183 + $0x34] sm:$0xf]
        %v8198 = vld [vmem:[%s8183 + $0x38] sm:$0xf]
        %v8199 = vld [vmem:[%s8183 + $0x3c] sm:$0xf]
        %v8200 = vld [vmem:[%s8183 + $0x40] sm:$0xf]
        %v8201 = vld [vmem:[%s8183 + $0x44] sm:$0xf]
        %v8202 = vld [vmem:[%s8183 + $0x48] sm:$0xf]
        %v8203 = vld [vmem:[%s8183 + $0x4c] sm:$0xf]
        %v8204 = vld [vmem:[%s8183 + $0x50] sm:$0xf]
        %v8205 = vld [vmem:[%s8183 + $0x54] sm:$0xf]
        %v8206 = vld [vmem:[%s8183 + $0x58] sm:$0xf]
        %v8207 = vld [vmem:[%s8183 + $0x5c] sm:$0xf]
        %v8208 = vld [vmem:[%s8183 + $0x60] sm:$0xf]
        %v8209 = vld [vmem:[%s8183 + $0x64] sm:$0xf]
        %v8210 = vld [vmem:[%s8183 + $0x68] sm:$0xf]
        %v8211 = vld [vmem:[%s8183 + $0x6c] sm:$0xf]
        %v8212 = vld [vmem:[%s8183 + $0x70] sm:$0xf]
        %v8213 = vld [vmem:[%s8183 + $0x74] sm:$0xf]
        %v8214 = vld [vmem:[%s8183 + $0x78] sm:$0xf]
        %v8215 = vld [vmem:[%s8183 + $0x7c] sm:$0xf]
        %v8216 = vld [vmem:[%s8183 + $0x80] sm:$0xf]
        %v8217 = vld [vmem:[%s8183 + $0x84] sm:$0xf]
        %v8218 = vld [vmem:[%s8183 + $0x88] sm:$0xf]
        %v8219 = vld [vmem:[%s8183 + $0x8c] sm:$0xf]
        %v8220 = vld [vmem:[%s8183 + $0x90] sm:$0xf]
        %v8221 = vld [vmem:[%s8183 + $0x94] sm:$0xf]
        %v8222 = vld [vmem:[%s8183 + $0x98] sm:$0xf]
        %v8223 = vld [vmem:[%s8183 + $0x9c] sm:$0xf]
        %v8224 = vld [vmem:[%s8183 + $0xa0] sm:$0xf]
        %v8225 = vld [vmem:[%s8183 + $0xa4] sm:$0xf]
        %v8226 = vld [vmem:[%s8183 + $0xa8] sm:$0xf]
        %v8227 = vld [vmem:[%s8183 + $0xac] sm:$0xf]
        %v8228 = vld [vmem:[%s8183 + $0xb0] sm:$0xf]
        %v8229 = vld [vmem:[%s8183 + $0xb4] sm:$0xf]
        %v8230 = vld [vmem:[%s8183 + $0xb8] sm:$0xf]
        %v8231 = vld [vmem:[%s8183 + $0xbc] sm:$0xf]
        %v8232 = vld [vmem:[%s8183 + $0xc0] sm:$0xf]
        %v8233 = vld [vmem:[%s8183 + $0xc4] sm:$0xf]
        %v8234 = vld [vmem:[%s8183 + $0xc8] sm:$0xf]
        %v8235 = vld [vmem:[%s8183 + $0xcc] sm:$0xf]
        %v8236 = vld [vmem:[%s8183 + $0xd0] sm:$0xf]
        %v8237 = vld [vmem:[%s8183 + $0xd4] sm:$0xf]
        %v8238 = vld [vmem:[%s8183 + $0xd8] sm:$0xf]
        %v8239 = vld [vmem:[%s8183 + $0xdc] sm:$0xf]
        %v8240 = vld [vmem:[%s8183 + $0xe0] sm:$0xf]
        %v8241 = vld [vmem:[%s8183 + $0xe4] sm:$0xf]
        %v8242 = vld [vmem:[%s8183 + $0xe8] sm:$0xf]
        %v8243 = vld [vmem:[%s8183 + $0xec] sm:$0xf]
        %v8244 = vld [vmem:[%s8183 + $0xf0] sm:$0xf]
        %v8245 = vld [vmem:[%s8183 + $0xf4] sm:$0xf]
        %v8246 = vld [vmem:[%s8183 + $0xf8] sm:$0xf]
        %v8247 = vld [vmem:[%s8183 + $0xfc] sm:$0xf]
        %v8248 = vld [vmem:[%s8183 + $0x100] sm:$0xf]
        %v8249 = vld [vmem:[%s8183 + $0x104] sm:$0xf]
        %v8250 = vld [vmem:[%s8183 + $0x108] sm:$0xf]
        %v8251 = vld [vmem:[%s8183 + $0x10c] sm:$0xf]
        %v8252 = vld [vmem:[%s8183 + $0x110] sm:$0xf]
        %v8253 = vld [vmem:[%s8183 + $0x114] sm:$0xf]
        %v8254 = vld [vmem:[%s8183 + $0x118] sm:$0xf]
        %v8255 = vld [vmem:[%s8183 + $0x11c] sm:$0xf]
        %v8256 = vld [vmem:[%s8183 + $0x120] sm:$0xf]
        %v8257 = vld [vmem:[%s8183 + $0x124] sm:$0xf]
        %v8258 = vld [vmem:[%s8183 + $0x128] sm:$0xf]
        %v8259 = vld [vmem:[%s8183 + $0x12c] sm:$0xf]
        %v8260 = vld [vmem:[%s8183 + $0x130] sm:$0xf]
        %v8261 = vld [vmem:[%s8183 + $0x134] sm:$0xf]
        %v8262 = vld [vmem:[%s8183 + $0x138] sm:$0xf]
        %v8263 = vld [vmem:[%s8183 + $0x13c] sm:$0xf]
        %v8264 = vld [vmem:[%s8183 + $0x140] sm:$0xf]
        %v8265 = vld [vmem:[%s8183 + $0x144] sm:$0xf]
        %v8266 = vld [vmem:[%s8183 + $0x148] sm:$0xf]
        %v8267 = vld [vmem:[%s8183 + $0x14c] sm:$0xf]
        %v8268 = vld [vmem:[%s8183 + $0x150] sm:$0x3]
        %v8354 = vunpack.c.l.b16 %v8184
        %v8355 = vunpack.c.l.b16 %v8185
        %v8356 = vunpack.c.l.b16 %v8186
        %v8357 = vunpack.c.l.b16 %v8187
        %v8358 = vunpack.c.l.b16 %v8188
        %v8359 = vunpack.c.l.b16 %v8189
        %v8360 = vunpack.c.l.b16 %v8190
        %v8361 = vunpack.c.l.b16 %v8191
        %v8362 = vunpack.c.l.b16 %v8192
        %v8363 = vunpack.c.l.b16 %v8193
        %v8364 = vunpack.c.l.b16 %v8194
        %v8365 = vunpack.c.l.b16 %v8195
        %v8366 = vunpack.c.l.b16 %v8196
        %v8367 = vunpack.c.l.b16 %v8197
        %v8368 = vunpack.c.l.b16 %v8198
        %v8369 = vunpack.c.l.b16 %v8199
        %v8370 = vunpack.c.l.b16 %v8200
        %v8371 = vunpack.c.l.b16 %v8201
        %v8372 = vunpack.c.l.b16 %v8202
        %v8373 = vunpack.c.l.b16 %v8203
        %v8374 = vunpack.c.l.b16 %v8204
        %v8375 = vunpack.c.l.b16 %v8205
        %v8376 = vunpack.c.l.b16 %v8206
        %v8377 = vunpack.c.l.b16 %v8207
        %v8378 = vunpack.c.l.b16 %v8208
        %v8379 = vunpack.c.l.b16 %v8209
        %v8380 = vunpack.c.l.b16 %v8210
        %v8381 = vunpack.c.l.b16 %v8211
        %v8382 = vunpack.c.l.b16 %v8212
        %v8383 = vunpack.c.l.b16 %v8213
        %v8384 = vunpack.c.l.b16 %v8214
        %v8385 = vunpack.c.l.b16 %v8215
        %v8386 = vunpack.c.l.b16 %v8216
        %v8387 = vunpack.c.l.b16 %v8217
        %v8388 = vunpack.c.l.b16 %v8218
        %v8389 = vunpack.c.l.b16 %v8219
        %v8390 = vunpack.c.l.b16 %v8220
        %v8391 = vunpack.c.l.b16 %v8221
        %v8392 = vunpack.c.l.b16 %v8222
        %v8393 = vunpack.c.l.b16 %v8223
        %v8394 = vunpack.c.l.b16 %v8224
        %v8395 = vunpack.c.l.b16 %v8225
        %v8396 = vunpack.c.l.b16 %v8226
        %v8397 = vunpack.c.l.b16 %v8227
        %v8398 = vunpack.c.l.b16 %v8228
        %v8399 = vunpack.c.l.b16 %v8229
        %v8400 = vunpack.c.l.b16 %v8230
        %v8401 = vunpack.c.l.b16 %v8231
        %v8402 = vunpack.c.l.b16 %v8232
        %v8403 = vunpack.c.l.b16 %v8233
        %v8404 = vunpack.c.l.b16 %v8234
        %v8405 = vunpack.c.l.b16 %v8235
        %v8406 = vunpack.c.l.b16 %v8236
        %v8407 = vunpack.c.l.b16 %v8237
        %v8408 = vunpack.c.l.b16 %v8238
        %v8409 = vunpack.c.l.b16 %v8239
        %v8410 = vunpack.c.l.b16 %v8240
        %v8411 = vunpack.c.l.b16 %v8241
        %v8412 = vunpack.c.l.b16 %v8242
        %v8413 = vunpack.c.l.b16 %v8243
        %v8414 = vunpack.c.l.b16 %v8244
        %v8415 = vunpack.c.l.b16 %v8245
        %v8416 = vunpack.c.l.b16 %v8246
        %v8417 = vunpack.c.l.b16 %v8247
        %v8418 = vunpack.c.l.b16 %v8248
        %v8419 = vunpack.c.l.b16 %v8249
        %v8420 = vunpack.c.l.b16 %v8250
        %v8421 = vunpack.c.l.b16 %v8251
        %v8422 = vunpack.c.l.b16 %v8252
        %v8423 = vunpack.c.l.b16 %v8253
        %v8424 = vunpack.c.l.b16 %v8254
        %v8425 = vunpack.c.l.b16 %v8255
        %v8426 = vunpack.c.l.b16 %v8256
        %v8427 = vunpack.c.l.b16 %v8257
        %v8428 = vunpack.c.l.b16 %v8258
        %v8429 = vunpack.c.l.b16 %v8259
        %v8430 = vunpack.c.l.b16 %v8260
        %v8431 = vunpack.c.l.b16 %v8261
        %v8432 = vunpack.c.l.b16 %v8262
        %v8433 = vunpack.c.l.b16 %v8263
        %v8434 = vunpack.c.l.b16 %v8264
        %v8435 = vunpack.c.l.b16 %v8265
        %v8436 = vunpack.c.l.b16 %v8266
        %v8437 = vunpack.c.l.b16 %v8267
        %v8438 = vunpack.c.l.b16 %v8268
        %v8439 = vpack.c.b16 %v8355, %v8354
        %v8440 = vpack.c.b16 %v8357, %v8356
        %v8441 = vpack.c.b16 %v8359, %v8358
        %v8442 = vpack.c.b16 %v8361, %v8360
        %v8443 = vpack.c.b16 %v8363, %v8362
        %v8444 = vpack.c.b16 %v8365, %v8364
        %v8445 = vpack.c.b16 %v8367, %v8366
        %v8446 = vpack.c.b16 %v8369, %v8368
        %v8447 = vpack.c.b16 %v8371, %v8370
        %v8448 = vpack.c.b16 %v8373, %v8372
        %v8449 = vpack.c.b16 %v8375, %v8374
        %v8450 = vpack.c.b16 %v8377, %v8376
        %v8451 = vpack.c.b16 %v8379, %v8378
        %v8452 = vpack.c.b16 %v8381, %v8380
        %v8453 = vpack.c.b16 %v8383, %v8382
        %v8454 = vpack.c.b16 %v8385, %v8384
        %v8455 = vpack.c.b16 %v8387, %v8386
        %v8456 = vpack.c.b16 %v8389, %v8388
        %v8457 = vpack.c.b16 %v8391, %v8390
        %v8458 = vpack.c.b16 %v8393, %v8392
        %v8459 = vpack.c.b16 %v8395, %v8394
        %v8460 = vpack.c.b16 %v8397, %v8396
        %v8461 = vpack.c.b16 %v8399, %v8398
        %v8462 = vpack.c.b16 %v8401, %v8400
        %v8463 = vpack.c.b16 %v8403, %v8402
        %v8464 = vpack.c.b16 %v8405, %v8404
        %v8465 = vpack.c.b16 %v8407, %v8406
        %v8466 = vpack.c.b16 %v8409, %v8408
        %v8467 = vpack.c.b16 %v8411, %v8410
        %v8468 = vpack.c.b16 %v8413, %v8412
        %v8469 = vpack.c.b16 %v8415, %v8414
        %v8470 = vpack.c.b16 %v8417, %v8416
        %v8471 = vpack.c.b16 %v8419, %v8418
        %v8472 = vpack.c.b16 %v8421, %v8420
        %v8473 = vpack.c.b16 %v8423, %v8422
        %v8474 = vpack.c.b16 %v8425, %v8424
        %v8475 = vpack.c.b16 %v8427, %v8426
        %v8476 = vpack.c.b16 %v8429, %v8428
        %v8477 = vpack.c.b16 %v8431, %v8430
        %v8478 = vpack.c.b16 %v8433, %v8432
        %v8479 = vpack.c.b16 %v8435, %v8434
        %v8480 = vpack.c.b16 %v8437, %v8436
        %v8481 = vpack.c.b16 %v8438, %v8438
        %v8525 = vsel %vm946, %v8182, 0
        %v8528 = vsel %vm950, %v8481, 0
        %8530 = vmatpush.bf16.msra.mxu0 %v8446
        %8531 = vmatpush.bf16.msra.mxu0 %v8445
        %8532 = vmatpush.bf16.msra.mxu0 %v8444
        %8533 = vmatpush.bf16.msra.mxu0 %v8443
        %8534 = vmatpush.bf16.msra.mxu0 %v8442
        %8535 = vmatpush.bf16.msra.mxu0 %v8441
        %8536 = vmatpush.bf16.msra.mxu0 %v8440
        %8537 = vmatpush.bf16.msra.mxu0 %v8439
        %8538 = vmatmul.bf16.gmra.mxu0 %v8177
        %v8539 = vpop.f32.mrf.mxu0
        %v8540 = vadd.f32 0.0, %v8539
        %v8541 = vpop.f32.mrf.mxu0
        %8542 = vdwg.mxu0
        %8543 = vmatpush.bf16.msra.mxu0 %v8454
        %8544 = vmatpush.bf16.msra.mxu0 %v8453
        %8545 = vmatpush.bf16.msra.mxu0 %v8452
        %8546 = vmatpush.bf16.msra.mxu0 %v8451
        %8547 = vmatpush.bf16.msra.mxu0 %v8450
        %8548 = vmatpush.bf16.msra.mxu0 %v8449
        %8549 = vmatpush.bf16.msra.mxu0 %v8448
        %8550 = vmatpush.bf16.msra.mxu0 %v8447
        %8551 = vmatmul.bf16.gmra.mxu0 %v8178
        %v8552 = vpop.f32.mrf.mxu0
        %v8553 = vadd.f32 %v8540, %v8552
        %v8554 = vpop.f32.mrf.mxu0
        %8555 = vdwg.mxu0
        %8556 = vmatpush.bf16.msra.mxu0 %v8462
        %8557 = vmatpush.bf16.msra.mxu0 %v8461
        %8558 = vmatpush.bf16.msra.mxu0 %v8460
        %8559 = vmatpush.bf16.msra.mxu0 %v8459
        %8560 = vmatpush.bf16.msra.mxu0 %v8458
        %8561 = vmatpush.bf16.msra.mxu0 %v8457
        %8562 = vmatpush.bf16.msra.mxu0 %v8456
        %8563 = vmatpush.bf16.msra.mxu0 %v8455
        %8564 = vmatmul.bf16.gmra.mxu0 %v8179
        %v8565 = vpop.f32.mrf.mxu0
        %v8566 = vadd.f32 %v8553, %v8565
        %v8567 = vpop.f32.mrf.mxu0
        %8568 = vdwg.mxu0
        %8569 = vmatpush.bf16.msra.mxu0 %v8470
        %8570 = vmatpush.bf16.msra.mxu0 %v8469
        %8571 = vmatpush.bf16.msra.mxu0 %v8468
        %8572 = vmatpush.bf16.msra.mxu0 %v8467
        %8573 = vmatpush.bf16.msra.mxu0 %v8466
        %8574 = vmatpush.bf16.msra.mxu0 %v8465
        %8575 = vmatpush.bf16.msra.mxu0 %v8464
        %8576 = vmatpush.bf16.msra.mxu0 %v8463
        %8577 = vmatmul.bf16.gmra.mxu0 %v8180
        %v8578 = vpop.f32.mrf.mxu0
        %v8579 = vadd.f32 %v8566, %v8578
        %v8580 = vpop.f32.mrf.mxu0
        %8581 = vdwg.mxu0
        %8582 = vmatpush.bf16.msra.mxu0 %v8478
        %8583 = vmatpush.bf16.msra.mxu0 %v8477
        %8584 = vmatpush.bf16.msra.mxu0 %v8476
        %8585 = vmatpush.bf16.msra.mxu0 %v8475
        %8586 = vmatpush.bf16.msra.mxu0 %v8474
        %8587 = vmatpush.bf16.msra.mxu0 %v8473
        %8588 = vmatpush.bf16.msra.mxu0 %v8472
        %8589 = vmatpush.bf16.msra.mxu0 %v8471
        %8590 = vmatmul.bf16.gmra.mxu0 %v8181
        %v8591 = vpop.f32.mrf.mxu0
        %v8592 = vadd.f32 %v8579, %v8591
        %v8593 = vpop.f32.mrf.mxu0
        %8594 = vdwg.mxu0
        %8595 = vmatpush.bf16.msra.mxu0 0
        %8596 = vmatpush.bf16.msra.mxu0 0
        %8597 = vmatpush.bf16.msra.mxu0 0
        %8598 = vmatpush.bf16.msra.mxu0 0
        %8599 = vmatpush.bf16.msra.mxu0 0
        %8600 = vmatpush.bf16.msra.mxu0 %v8528
        %8601 = vmatpush.bf16.msra.mxu0 %v8480
        %8602 = vmatpush.bf16.msra.mxu0 %v8479
        %8603 = vmatmul.bf16.gmra.mxu0 %v8525
        %v8604 = vpop.f32.mrf.mxu0
        %v8605 = vadd.f32 %v8592, %v8604
        %v8606 = vpop.f32.mrf.mxu0
        %8607 = vdwg.mxu0
        %v8608 = vadd.f32 %v8091, %v8605
        %p8609 = scmp.eq.s32.totalorder %s20, 0
        %s8610 = scalar_select %p8609, 1, 0
        %s8611 = scvt.s32.f32 %s8610
        %v8612 = vld [vmem:[%s4] sm:$0x1]
        %v8613 = vstv %s8611
        %v8614 = vmul.f32 %v8613, %v8612
        %v8616 = vperm.slane %v8614, 0
        %v8618 = vadd.f32 %v8608, %v8616
        %v8619 = vld [vmem:[%s5] sm:$0xff]
        %v8620 = vld [vmem:[%s5 + $0x8] sm:$0xff]
        %v8621 = vld [vmem:[%s5 + $0x10] sm:$0xff]
        %v8622 = vld [vmem:[%s5 + $0x18] sm:$0xff]
        %v8623 = vld [vmem:[%s5 + $0x20] sm:$0xff]
        %v8624 = vld [vmem:[%s5 + $0x28] sm:$0xff]
        %v8625 = vld [vmem:[%s5 + $0x30] sm:$0xff]
        %v8626 = vld [vmem:[%s5 + $0x38] sm:$0xff]
        %v8627 = vld [vmem:[%s5 + $0x40] sm:$0xff]
        %v8628 = vld [vmem:[%s5 + $0x48] sm:$0xff]
        %v8629 = vld [vmem:[%s5 + $0x50] sm:$0xff]
        %v8630 = vld [vmem:[%s5 + $0x58] sm:$0xff]
        %v8631 = vld [vmem:[%s5 + $0x60] sm:$0xff]
        %v8632 = vld [vmem:[%s5 + $0x68] sm:$0xff]
        %v8633 = vld [vmem:[%s5 + $0x70] sm:$0xff]
        %v8634 = vld [vmem:[%s5 + $0x78] sm:$0xff]
        %v8635 = vld [vmem:[%s6] sm:$0x1]
        %v8636 = vmul.f32 %v8613, %v8635
        %v8638 = vperm.slane %v8636, 0
        %8640 = vmatpush.msra.mxu0 %v8634
        %8641 = vmatpush.msra.mxu0 %v8633
        %8642 = vmatpush.msra.mxu0 %v8632
        %8643 = vmatpush.msra.mxu0 %v8631
        %8644 = vmatpush.msra.mxu0 %v8630
        %8645 = vmatpush.msra.mxu0 %v8629
        %8646 = vmatpush.msra.mxu0 %v8628
        %8647 = vmatpush.msra.mxu0 %v8627
        %8648 = vmatpush.msra.mxu0 %v8626
        %8649 = vmatpush.msra.mxu0 %v8625
        %8650 = vmatpush.msra.mxu0 %v8624
        %8651 = vmatpush.msra.mxu0 %v8623
        %8652 = vmatpush.msra.mxu0 %v8622
        %8653 = vmatpush.msra.mxu0 %v8621
        %8654 = vmatpush.msra.mxu0 %v8620
        %8655 = vmatpush.msra.mxu0 %v8619
        %8656 = vmatmul.f32.gmra.mxu0 %v8618
        %v8657 = vpop.f32.mrf.mxu0
        %v8658 = vadd.f32 %v8638, %v8657
        %8659 = vdwg.mxu0
        %vm8660 = vcmask 74752
        %8661 = vst.msk [vmem:[%s310] sm:$0x3] %vm8660, %v8658
        %p8662 = scmp.lt.s32.totalorder %s20, 1
        %s8663 = scalar_select %p8662, %s20, 1
        %s8664 = smul.addr %s8663, 2
        %s8665 = scalar_lea.vmem %s7, %s8664
        // Predicated region
        $region57: #{mnist_forward.1} parent=47 // pred_check
          %p8666 = pneg %p190
        $region58: #{mnist_forward.1} parent=47 // pred_check_branch
          %8668 = sbr.rel (%p8666) target = $region60
        $region59: #{mnist_forward.1} parent=47 // pred_region
          _
        $region60: #{mnist_forward.1} parent=47 // pred_fallthru
          _
      $region48: #{mnist_forward.1} parent=5 // pred_fallthru
        _
      %p8669 = scmp.le.s32.totalorder 2, %s15
      // Predicated region
      $region61: #{mnist_forward.1} parent=5 // pred_check
        %p8670 = pneg %p8669
      $region62: #{mnist_forward.1} parent=5 // pred_check_branch
        %8672 = sbr.rel (%p8670) target = $region64
      $region63: #{mnist_forward.1} parent=5 // pred_region
        %s8673 = ssub.s32 %s15, 2
        // Predicated region
        $region65: #{mnist_forward.1} parent=63 // pred_check
          %p8674 = pneg %p196
        $region66: #{mnist_forward.1} parent=63 // pred_check_branch
          %8676 = sbr.rel (%p8674) target = $region68
        $region67: #{mnist_forward.1} parent=63 // pred_region
          %p8677 = scmp.lt.s32.totalorder %s21, 1
          %s8678 = scalar_select %p8677, %s21, 1
          %s8679 = smul.addr %s8678, 2
          %s8680 = scalar_lea.vmem %s7, %s8679
        $region68: #{mnist_forward.1} parent=63 // pred_fallthru
          _
      $region64: #{mnist_forward.1} parent=5 // pred_fallthru
        _
    $region6: #{mnist_forward.1} parent=1 // loop_footer
      %s19 = sadd.s32 1, %s15
    $region7: #{mnist_forward.1} parent=1 // loop_footer_branch
      %14 = sbr.rel target = $region3
    $region8: #{mnist_forward.1} parent=1 // loop_exit
      _
    %8681 = vsyncpa [#allocation3], 1
    %s8682 = scalar_lea.sflag [#allocation3], 1
    %8683 = vsyncpa %s8682, 1
    %8684 = vsyncpa [#allocation5], 1

</llo_original>
